<compile_context>
chip_gen: v7x
topology: tpu7x:2x2x1
jax: 0.10.0
libtpu: 0.0.40
codegen_flags: <defaults>
</compile_context>

<pallas_src>
import functools
import math

import jax
import jax.numpy as jnp
from jax import lax
from jax.experimental import pallas as pl
from jax.experimental.pallas import tpu as pltpu


FIELD_NAMES = ["T", "P", "Vx", "Vy", "O2", "CO2", "H2O", "CO", "H2"]
_LN_EPS = 1e-5  # torch.nn.LayerNorm default


def _full_spec_1arg(arr):
    """Full-array, grid-invariant BlockSpec (array stays VMEM-resident)."""
    nd = arr.ndim
    return pl.BlockSpec(tuple(arr.shape), lambda g, _nd=nd: (0,) * _nd)


# ---------------------------------------------------------------------------
# Kernel 1: PosNet (TrunkNet [2, 50, 50, 50, n_base]), tiled over rows.
# ---------------------------------------------------------------------------

def _posnet_kernel(y_ref, w1_ref, b1_ref, w2_ref, b2_ref, w3_ref, b3_ref,
                   w4_ref, b4_ref, o_ref):
    f32 = jnp.float32
    y = y_ref[...]
    # K = 2 first layer: two broadcast VPU FMAs instead of an MXU matmul.
    h = y[:, 0:1] * w1_ref[0:1, :] + y[:, 1:2] * w1_ref[1:2, :] + b1_ref[...]
    h = jnp.tanh(h)
    h = jnp.tanh(jnp.dot(h, w2_ref[...], preferred_element_type=f32) + b2_ref[...])
    h = jnp.tanh(jnp.dot(h, w3_ref[...], preferred_element_type=f32) + b3_ref[...])
    o_ref[...] = jax.nn.sigmoid(
        jnp.dot(h, w4_ref[...], preferred_element_type=f32) + b4_ref[...])


def posnet_pallas(y2, pn, *, tile_m=512):
    """y2: (B*P, 2) -> (B*P, n_base)."""
    M, ydim = y2.shape
    nb = pn["w4"].shape[-1]
    tm = M if M <= tile_m else tile_m
    weights = [pn["w1"], pn["b1"], pn["w2"], pn["b2"], pn["w3"], pn["b3"],
               pn["w4"], pn["b4"]]
    return pl.pallas_call(
        _posnet_kernel,
        out_shape=jax.ShapeDtypeStruct((M, nb), jnp.float32),
        grid=(pl.cdiv(M, tm),),
        in_specs=[pl.BlockSpec((tm, ydim), lambda i: (i, 0))]
                 + [_full_spec_1arg(a) for a in weights],
        out_specs=pl.BlockSpec((tm, nb), lambda i: (i, 0)),
        compiler_params=pltpu.CompilerParams(dimension_semantics=("parallel",)),
    )(y2, *weights)


# ---------------------------------------------------------------------------
# Kernel 2: fused MapperNet + MultiField attention layers + seq-mean.
# One grid step = one field; all batches are processed inside the step.
# ---------------------------------------------------------------------------

def _compress_kernel(gin_ref, base_ref,
                     mw1b_ref, mw1g_ref, mb1_ref, mw2_ref, mb2_ref,
                     mw3_ref, mb3_ref,
                     wqkv_ref, bqkv_ref, wo_ref, bo_ref,
                     aw1_ref, ab1_ref, aw2_ref, ab2_ref, lng_ref, lnb_ref,
                     out_ref, *, batch, n_points, num_layers, num_heads, ln_eps):
    f32 = jnp.float32
    fi = pl.program_id(0)
    B, P, H, L = batch, n_points, num_heads, num_layers

    base = base_ref[...]        # (B*P, nb)   PosNet output, all batches
    gcol = gin_ref[0]           # (B*P, 1)    this field's Gin column

    # MapperNet (TrunkNet [nb+1, 60, 60, F]); concat([baseF, gin]) @ W1 is folded
    # into base @ W1_base + gin * W1_gin.
    h = (jnp.dot(base, mw1b_ref[fi], preferred_element_type=f32)
         + gcol * mw1g_ref[fi] + mb1_ref[fi])
    h = jnp.tanh(h)
    h = jnp.tanh(jnp.dot(h, mw2_ref[fi], preferred_element_type=f32) + mb2_ref[fi])
    x = jax.nn.sigmoid(
        jnp.dot(h, mw3_ref[fi], preferred_element_type=f32) + mb3_ref[fi])   # (B*P, F)

    F_ = x.shape[-1]
    scale = 1.0 / math.sqrt(F_)       # depth // num_heads == n_field_info
    dn_nt = (((1,), (1,)), ((), ()))  # contract last dims (A @ B.T)

    for l in range(L):
        i = fi * L + l
        # Fused Q/K/V projection for all heads and all batches: one fat matmul.
        qkv = jnp.dot(x, wqkv_ref[i], preferred_element_type=f32) + bqkv_ref[i]  # (B*P, 3*H*F)

        # Attention scores are inherently per-batch; B and H are small & static.
        # TODO(synk): switch to a key-block-tiled online-softmax once P grows
        # enough for the (P, P) score tile to pressure VMEM (v7x: 64 MiB).
        ctx_rows = []
        for b in range(B):
            qkv_b = qkv[b * P:(b + 1) * P, :]
            heads = []
            for hh in range(H):
                qh = qkv_b[:, hh * F_:(hh + 1) * F_]
                kh = qkv_b[:, (H + hh) * F_:(H + hh + 1) * F_]
                vh = qkv_b[:, (2 * H + hh) * F_:(2 * H + hh + 1) * F_]
                s = lax.dot_general(qh, kh, dn_nt, preferred_element_type=f32) * scale
                s = s - jnp.max(s, axis=-1, keepdims=True)
                e = jnp.exp(s)
                pw = e / jnp.sum(e, axis=-1, keepdims=True)
                heads.append(jnp.dot(pw, vh, preferred_element_type=f32))   # (P, F)
            ctx_rows.append(jnp.concatenate(heads, axis=-1))                # (P, H*F)
        ctx = jnp.concatenate(ctx_rows, axis=0)                             # (B*P, H*F)

        # Fused output projection + 2-layer MLP (ReLU) + residual + LayerNorm,
        # each as a single op over all B*P rows.
        attn = jnp.dot(ctx, wo_ref[i], preferred_element_type=f32) + bo_ref[i]
        m = jnp.maximum(
            jnp.dot(attn, aw1_ref[i], preferred_element_type=f32) + ab1_ref[i], 0.0)
        m = jnp.dot(m, aw2_ref[i], preferred_element_type=f32) + ab2_ref[i]
        resid = x + m
        mu = jnp.mean(resid, axis=-1, keepdims=True)
        var = jnp.mean((resid - mu) ** 2, axis=-1, keepdims=True)
        x = (resid - mu) * lax.rsqrt(var + ln_eps) * lng_ref[i] + lnb_ref[i]

    # Per-batch mean over the sequence (P rows each).
    means = jnp.concatenate(
        [jnp.mean(x[b * P:(b + 1) * P, :], axis=0, keepdims=True) for b in range(B)],
        axis=0)                                                              # (B, F)
    out_ref[0] = means


def compress_pallas(gin, base2, mp, ap, *, batch, n_points, num_layers, num_heads):
    """gin:(nF, B*P, 1), base2:(B*P, nb) -> (nF, B, F)."""
    nF = gin.shape[0]
    BP = base2.shape[0]
    f_info = mp["w3"].shape[-1]

    weight_arrays = [
        mp["w1_base"], mp["w1_gin"], mp["b1"], mp["w2"], mp["b2"], mp["w3"], mp["b3"],
        ap["wqkv"], ap["bqkv"], ap["wo"], ap["bo"],
        ap["aw1"], ap["ab1"], ap["aw2"], ap["ab2"], ap["ln_g"], ap["ln_b"],
    ]
    kernel = functools.partial(_compress_kernel, batch=batch, n_points=n_points,
                               num_layers=num_layers, num_heads=num_heads,
                               ln_eps=_LN_EPS)
    return pl.pallas_call(
        kernel,
        out_shape=jax.ShapeDtypeStruct((nF, batch, f_info), jnp.float32),
        grid=(nF,),
        in_specs=[pl.BlockSpec((1, BP, 1), lambda fi: (fi, 0, 0)),   # gin column
                  _full_spec_1arg(base2)]
                 + [_full_spec_1arg(a) for a in weight_arrays],
        out_specs=pl.BlockSpec((1, batch, f_info), lambda fi: (fi, 0, 0)),
        compiler_params=pltpu.CompilerParams(dimension_semantics=("parallel",)),
    )(gin, base2, *weight_arrays)


# ---------------------------------------------------------------------------
# Kernel 3: FinalMerge (AttentionMergeLayer, field_idx=-1) fused with all 9
# BranchNets (block-diagonal) and the coef * baseF contraction.
# One grid step = one batch element.
# ---------------------------------------------------------------------------

def _merge_branch_kernel(u_ref, uflat_ref, basef_ref,
                         fwq_ref, fbq_ref, fwk_ref, fbk_ref, fwv_ref, fbv_ref,
                         bw1_ref, bb1_ref, bw2_ref, bb2_ref, bw3_ref, bb3_ref,
                         gout_ref, goutu_ref, *, n_fields, n_base):
    f32 = jnp.float32
    u = u_ref[0]            # (nF, F)  rows = per-field compressed vectors (U[b].T)
    base = basef_ref[0]     # (P, nb)

    # --- FinalMerge: Linear(nF->F) Q/K/V on U[b] = u.T, softmax attention,
    #     output = unified.mean(-1) + U.mean(-1) (field_idx == -1 branch). ---
    dn0 = (((0,), (0,)), ((), ()))      # contract the field axes (A.T @ B form)
    q = lax.dot_general(u, fwq_ref[...], dn0, preferred_element_type=f32) + fbq_ref[...]
    k = lax.dot_general(u, fwk_ref[...], dn0, preferred_element_type=f32) + fbk_ref[...]
    v = lax.dot_general(u, fwv_ref[...], dn0, preferred_element_type=f32) + fbv_ref[...]
    dn_nt = (((1,), (1,)), ((), ()))
    s = lax.dot_general(q, k, dn_nt, preferred_element_type=f32) * (1.0 / math.sqrt(n_fields))
    s = s - jnp.max(s, axis=-1, keepdims=True)
    e = jnp.exp(s)
    p = e / jnp.sum(e, axis=-1, keepdims=True)
    uni = jnp.dot(p, v, preferred_element_type=f32)                           # (F, F)
    u_uni = (jnp.transpose(jnp.mean(uni, axis=-1, keepdims=True))
             + jnp.mean(u, axis=0, keepdims=True))                            # (1, F)

    # --- All 9 BranchNets for both paths via block-diagonal weights.
    #     Row 0 = per-field inputs (field n at lanes n*F:(n+1)*F),
    #     Row 1 = unified input replicated per field block. ---
    x = jnp.concatenate(
        [uflat_ref[0], jnp.concatenate([u_uni] * n_fields, axis=1)], axis=0)  # (2, nF*F)
    h = jnp.tanh(jnp.dot(x, bw1_ref[...], preferred_element_type=f32) + bb1_ref[...])
    h = jnp.tanh(jnp.dot(h, bw2_ref[...], preferred_element_type=f32) + bb2_ref[...])
    c = jax.nn.sigmoid(
        jnp.dot(h, bw3_ref[...], preferred_element_type=f32) + bb3_ref[...])  # (2, nF*nb)

    coef = jnp.concatenate(
        [c[0:1, n * n_base:(n + 1) * n_base] for n in range(n_fields)], axis=0)   # (nF, nb)
    coefu = jnp.concatenate(
        [c[1:2, n * n_base:(n + 1) * n_base] for n in range(n_fields)], axis=0)   # (nF, nb)

    # Gout[b, n, p] = sum_k coef[n, k] * baseF[b, p, k]   (lane-dense in P)
    gout_ref[0] = lax.dot_general(coef, base, dn_nt, preferred_element_type=f32)
    goutu_ref[0] = lax.dot_general(coefu, base, dn_nt, preferred_element_type=f32)


def merge_branch_pallas(U_bnf, U_flat, baseF, fp, bp):
    """U_bnf:(B,nF,F), U_flat:(B,1,nF*F), baseF:(B,P,nb) -> 2 x (B,nF,P)."""
    B, nF, f_info = U_bnf.shape
    _, P, nb = baseF.shape
    weights = [fp["wq"], fp["bq"], fp["wk"], fp["bk"], fp["wv"], fp["bv"],
               bp["w1"], bp["b1"], bp["w2"], bp["b2"], bp["w3"], bp["b3"]]
    kernel = functools.partial(_merge_branch_kernel, n_fields=nF, n_base=nb)
    gout, goutu = pl.pallas_call(
        kernel,
        out_shape=(jax.ShapeDtypeStruct((B, nF, P), jnp.float32),
                   jax.ShapeDtypeStruct((B, nF, P), jnp.float32)),
        grid=(B,),
        in_specs=[pl.BlockSpec((1, nF, f_info), lambda b: (b, 0, 0)),
                  pl.BlockSpec((1, 1, nF * f_info), lambda b: (b, 0, 0)),
                  pl.BlockSpec((1, P, nb), lambda b: (b, 0, 0))]
                 + [_full_spec_1arg(a) for a in weights],
        out_specs=(pl.BlockSpec((1, nF, P), lambda b: (b, 0, 0)),
                   pl.BlockSpec((1, nF, P), lambda b: (b, 0, 0))),
        compiler_params=pltpu.CompilerParams(dimension_semantics=("parallel",)),
    )(U_bnf, U_flat, baseF, *weights)
    return gout, goutu


# ---------------------------------------------------------------------------
# Parameter initialization (PyTorch-Linear-style uniform; fused/stacked layouts).
# Weights stored (in, out); biases (1, out).
# ---------------------------------------------------------------------------

def init_params(key, n_field_info, n_base, num_heads, num_layers, num_fields):
    F, nb, H, L, nF = n_field_info, n_base, num_heads, num_layers, num_fields
    keys = iter(jax.random.split(key, 64))

    def lin(fan_in, shape):
        bound = 1.0 / math.sqrt(fan_in)
        return jax.random.uniform(next(keys), shape, jnp.float32, -bound, bound)

    def block_diag(stacked):  # (nF, din, dout) -> (nF*din, nF*dout)
        n, din, dout = stacked.shape
        bd = jnp.einsum("nio,nm->nimo", stacked, jnp.eye(n, dtype=stacked.dtype))
        return bd.reshape(n * din, n * dout)

    params = {}
    # PosNet: TrunkNet([2, 50, 50, 50, nb])
    params["posnet"] = {
        "w1": lin(2, (2, 50)),   "b1": lin(2, (1, 50)),
        "w2": lin(50, (50, 50)), "b2": lin(50, (1, 50)),
        "w3": lin(50, (50, 50)), "b3": lin(50, (1, 50)),
        "w4": lin(50, (50, nb)), "b4": lin(50, (1, nb)),
    }
    # MapperNet: TrunkNet([nb+1, 60, 60, F]) per field; first layer split base/gin.
    params["mapper"] = {
        "w1_base": lin(nb + 1, (nF, nb, 60)),
        "w1_gin":  lin(nb + 1, (nF, 1, 60)),
        "b1":      lin(nb + 1, (nF, 1, 60)),
        "w2": lin(60, (nF, 60, 60)), "b2": lin(60, (nF, 1, 60)),
        "w3": lin(60, (nF, 60, F)),  "b3": lin(60, (nF, 1, F)),
    }
    # MultiField attention layers: per-(field, layer) fused QKV / fused O-proj,
    # stacked along one leading axis of size nF*L (index = fi*L + l).
    # QKV column layout: [Q h0..hH-1 | K h0..hH-1 | V h0..hH-1], F lanes per head.
    params["attn"] = {
        "wqkv": lin(F, (nF * L, F, 3 * H * F)), "bqkv": lin(F, (nF * L, 1, 3 * H * F)),
        "wo":   lin(H * F, (nF * L, H * F, F)), "bo":   lin(H * F, (nF * L, 1, F)),
        "aw1":  lin(F, (nF * L, F, 2 * F)),     "ab1":  lin(F, (nF * L, 1, 2 * F)),
        "aw2":  lin(2 * F, (nF * L, 2 * F, F)), "ab2":  lin(2 * F, (nF * L, 1, F)),
        "ln_g": jnp.ones((nF * L, 1, F), jnp.float32),
        "ln_b": jnp.zeros((nF * L, 1, F), jnp.float32),
    }
    # FinalMerge: Linear(nF -> F) x 3 (its mlp/norms are unused in forward).
    params["final"] = {
        "wq": lin(nF, (nF, F)), "bq": lin(nF, (1, F)),
        "wk": lin(nF, (nF, F)), "bk": lin(nF, (1, F)),
        "wv": lin(nF, (nF, F)), "bv": lin(nF, (1, F)),
    }
    # Field BranchNets [F, 50, 50, nb] x 9, pre-packed block-diagonally so all
    # nine run as one lane-dense matmul chain inside the kernel.
    params["branch"] = {
        "w1": block_diag(lin(F, (nF, F, 50))),   "b1": lin(F, (nF, 1, 50)).reshape(1, nF * 50),
        "w2": block_diag(lin(50, (nF, 50, 50))), "b2": lin(50, (nF, 1, 50)).reshape(1, nF * 50),
        "w3": block_diag(lin(50, (nF, 50, nb))), "b3": lin(50, (nF, 1, nb)).reshape(1, nF * nb),
    }
    return params


# ---------------------------------------------------------------------------
# Full forward pass (3 pallas_calls + a few tiny free XLA reshapes/transposes).
# ---------------------------------------------------------------------------

def forward(params, cond, Y, Gin, num_heads):
    del cond  # unused by the reference forward
    B, P, ydim = Y.shape
    nF = Gin.shape[-1]
    pn, mp, ap, fp, bp = (params["posnet"], params["mapper"], params["attn"],
                          params["final"], params["branch"])
    nb = pn["w4"].shape[-1]
    f_info = mp["w3"].shape[-1]
    num_layers = ap["wqkv"].shape[0] // nF

    # 1) baseF = PosNet(Y)
    baseF2 = posnet_pallas(Y.reshape(B * P, ydim), pn)            # (B*P, nb)
    baseF = baseF2.reshape(B, P, nb)

    # 2) _compress_data: mapper + attention layers + seq-mean, grid over fields
    gin = jnp.transpose(Gin, (2, 0, 1)).reshape(nF, B * P, 1)     # (nF, B*P, 1)
    U_nbf = compress_pallas(gin, baseF2, mp, ap, batch=B, n_points=P,
                            num_layers=num_layers, num_heads=num_heads)  # (nF, B, F)
    U_bnf = jnp.transpose(U_nbf, (1, 0, 2))                       # (B, nF, F)
    U_flat = U_bnf.reshape(B, 1, nF * f_info)                     # (B, 1, nF*F)

    # 3) FinalMerge + 9 BranchNets (both paths) + sum_k coef_k * baseF_k
    # TODO(synk): cast the big matmul operands to bf16 (f32 accumulate) once
    # shapes are large enough to be MXU/BW bound; neutral at toy sizes.
    gout_t, goutu_t = merge_branch_pallas(U_bnf, U_flat, baseF, fp, bp)  # (B,nF,P) x2
    Gout = jnp.transpose(gout_t, (0, 2, 1))                       # (B, P, nF)
    Gout_unified = jnp.transpose(goutu_t, (0, 2, 1))
    return [Gout, Gout_unified]


# ---------------------------------------------------------------------------
# Main
# ---------------------------------------------------------------------------

if __name__ == "__main__":
    n_field_info = 16
    n_base = 8
    num_heads = 2
    num_layers = 2
    num_fields = len(FIELD_NAMES)   # 9

    batch = 2
    n_points = 8

    key = jax.random.PRNGKey(0)
    k_param, k_y, k_gin, k_cond = jax.random.split(key, 4)

    params = init_params(k_param, n_field_info, n_base, num_heads, num_layers,
                         num_fields)

    Y = jax.random.normal(k_y, (batch, n_points, 2), jnp.float32)
    Gin = jax.random.normal(k_gin, (batch, n_points, num_fields), jnp.float32)
    cond = jax.random.normal(k_cond, (batch, 4), jnp.float32)     # unused by forward

    fwd = jax.jit(forward, static_argnums=(4,))
    Gout_list = fwd(params, cond, Y, Gin, num_heads)
    Gout_list = jax.block_until_ready(Gout_list)

    assert Gout_list[0].shape == (batch, n_points, num_fields)
    assert Gout_list[1].shape == (batch, n_points, num_fields)
    assert all(bool(jnp.all(jnp.isfinite(g))) for g in Gout_list)
    print("KERNEL_OK")
</pallas_src>

<mosaic_0001>
module attributes {stable_mosaic.version = 11 : i64} {
  func.func @_posnet_kernel(%arg0: i32, %arg1: memref<16x2xf32, #tpu.memory_space<vmem>>, %arg2: memref<2x50xf32, #tpu.memory_space<vmem>>, %arg3: memref<1x50xf32, #tpu.memory_space<vmem>>, %arg4: memref<50x50xf32, #tpu.memory_space<vmem>>, %arg5: memref<1x50xf32, #tpu.memory_space<vmem>>, %arg6: memref<50x50xf32, #tpu.memory_space<vmem>>, %arg7: memref<1x50xf32, #tpu.memory_space<vmem>>, %arg8: memref<50x8xf32, #tpu.memory_space<vmem>>, %arg9: memref<1x8xf32, #tpu.memory_space<vmem>>, %arg10: memref<16x8xf32, #tpu.memory_space<vmem>>) attributes {dimension_semantics = [#tpu.dimension_semantics<parallel>], iteration_bounds = array<i64: 1>, scalar_prefetch = 0 : i64, scratch_operands = 0 : i64, tpu.core_type = #tpu.core_type<tc>, window_params = [{transform_indices = @transform_0, window_bounds = array<i64: 16, 2>}, {pipeline_mode = #tpu.pipeline_mode<synchronous>, transform_indices = @transform_1, window_bounds = array<i64: 2, 50>}, {pipeline_mode = #tpu.pipeline_mode<synchronous>, transform_indices = @transform_2, window_bounds = array<i64: 1, 50>}, {pipeline_mode = #tpu.pipeline_mode<synchronous>, transform_indices = @transform_3, window_bounds = array<i64: 50, 50>}, {pipeline_mode = #tpu.pipeline_mode<synchronous>, transform_indices = @transform_4, window_bounds = array<i64: 1, 50>}, {pipeline_mode = #tpu.pipeline_mode<synchronous>, transform_indices = @transform_5, window_bounds = array<i64: 50, 50>}, {pipeline_mode = #tpu.pipeline_mode<synchronous>, transform_indices = @transform_6, window_bounds = array<i64: 1, 50>}, {pipeline_mode = #tpu.pipeline_mode<synchronous>, transform_indices = @transform_7, window_bounds = array<i64: 50, 8>}, {pipeline_mode = #tpu.pipeline_mode<synchronous>, transform_indices = @transform_8, window_bounds = array<i64: 1, 8>}, {transform_indices = @transform_9, window_bounds = array<i64: 16, 8>}]} {
    %c0 = arith.constant 0 : index
    %c0_0 = arith.constant 0 : index
    %0 = vector.load %arg1[%c0, %c0_0] : memref<16x2xf32, #tpu.memory_space<vmem>>, vector<16x2xf32>
    %1 = vector.extract_strided_slice %0 {offsets = [0, 0], sizes = [16, 1], strides = [1, 1]} : vector<16x2xf32> to vector<16x1xf32>
    %c0_1 = arith.constant 0 : index
    %c0_2 = arith.constant 0 : index
    %2 = vector.load %arg2[%c0_1, %c0_2] : memref<2x50xf32, #tpu.memory_space<vmem>>, vector<1x50xf32>
    %3 = vector.broadcast %1 : vector<16x1xf32> to vector<16x50xf32>
    %4 = vector.broadcast %2 : vector<1x50xf32> to vector<16x50xf32>
    %5 = arith.mulf %3, %4 : vector<16x50xf32>
    %6 = vector.extract_strided_slice %0 {offsets = [0, 1], sizes = [16, 1], strides = [1, 1]} : vector<16x2xf32> to vector<16x1xf32>
    %c1 = arith.constant 1 : index
    %c0_3 = arith.constant 0 : index
    %7 = vector.load %arg2[%c1, %c0_3] : memref<2x50xf32, #tpu.memory_space<vmem>>, vector<1x50xf32>
    %8 = vector.broadcast %6 : vector<16x1xf32> to vector<16x50xf32>
    %9 = vector.broadcast %7 : vector<1x50xf32> to vector<16x50xf32>
    %10 = arith.mulf %8, %9 : vector<16x50xf32>
    %11 = arith.addf %5, %10 : vector<16x50xf32>
    %c0_4 = arith.constant 0 : index
    %c0_5 = arith.constant 0 : index
    %12 = vector.load %arg3[%c0_4, %c0_5] : memref<1x50xf32, #tpu.memory_space<vmem>>, vector<1x50xf32>
    %13 = vector.broadcast %12 : vector<1x50xf32> to vector<16x50xf32>
    %14 = arith.addf %11, %13 : vector<16x50xf32>
    %15 = math.tanh %14 : vector<16x50xf32>
    %c0_6 = arith.constant 0 : index
    %c0_7 = arith.constant 0 : index
    %16 = vector.load %arg4[%c0_6, %c0_7] : memref<50x50xf32, #tpu.memory_space<vmem>>, vector<50x50xf32>
    %cst = arith.constant dense<0.000000e+00> : vector<16x50xf32>
    %17 = tpu.matmul %15, %16, %cst {dimension_numbers = #tpu.dot_dimension_numbers<[1], [0], [0], [1], [0, 0, 1, 1], [], []>} : vector<16x50xf32>, vector<50x50xf32>, vector<16x50xf32> -> vector<16x50xf32>
    %c0_8 = arith.constant 0 : index
    %c0_9 = arith.constant 0 : index
    %18 = vector.load %arg5[%c0_8, %c0_9] : memref<1x50xf32, #tpu.memory_space<vmem>>, vector<1x50xf32>
    %19 = vector.broadcast %18 : vector<1x50xf32> to vector<16x50xf32>
    %20 = arith.addf %17, %19 : vector<16x50xf32>
    %21 = math.tanh %20 : vector<16x50xf32>
    %c0_10 = arith.constant 0 : index
    %c0_11 = arith.constant 0 : index
    %22 = vector.load %arg6[%c0_10, %c0_11] : memref<50x50xf32, #tpu.memory_space<vmem>>, vector<50x50xf32>
    %cst_12 = arith.constant dense<0.000000e+00> : vector<16x50xf32>
    %23 = tpu.matmul %21, %22, %cst_12 {dimension_numbers = #tpu.dot_dimension_numbers<[1], [0], [0], [1], [0, 0, 1, 1], [], []>} : vector<16x50xf32>, vector<50x50xf32>, vector<16x50xf32> -> vector<16x50xf32>
    %c0_13 = arith.constant 0 : index
    %c0_14 = arith.constant 0 : index
    %24 = vector.load %arg7[%c0_13, %c0_14] : memref<1x50xf32, #tpu.memory_space<vmem>>, vector<1x50xf32>
    %25 = vector.broadcast %24 : vector<1x50xf32> to vector<16x50xf32>
    %26 = arith.addf %23, %25 : vector<16x50xf32>
    %27 = math.tanh %26 : vector<16x50xf32>
    %c0_15 = arith.constant 0 : index
    %c0_16 = arith.constant 0 : index
    %28 = vector.load %arg8[%c0_15, %c0_16] : memref<50x8xf32, #tpu.memory_space<vmem>>, vector<50x8xf32>
    %cst_17 = arith.constant dense<0.000000e+00> : vector<16x8xf32>
    %29 = tpu.matmul %27, %28, %cst_17 {dimension_numbers = #tpu.dot_dimension_numbers<[1], [0], [0], [1], [0, 0, 1, 1], [], []>} : vector<16x50xf32>, vector<50x8xf32>, vector<16x8xf32> -> vector<16x8xf32>
    %c0_18 = arith.constant 0 : index
    %c0_19 = arith.constant 0 : index
    %30 = vector.load %arg9[%c0_18, %c0_19] : memref<1x8xf32, #tpu.memory_space<vmem>>, vector<1x8xf32>
    %31 = vector.broadcast %30 : vector<1x8xf32> to vector<16x8xf32>
    %32 = arith.addf %29, %31 : vector<16x8xf32>
    %33 = arith.negf %32 : vector<16x8xf32>
    %34 = math.exp %33 : vector<16x8xf32>
    %cst_20 = arith.constant 1.000000e+00 : f32
    %35 = vector.broadcast %cst_20 : f32 to vector<16x8xf32>
    %36 = arith.addf %35, %34 : vector<16x8xf32>
    %37 = arith.divf %35, %36 : vector<16x8xf32>
    %c0_21 = arith.constant 0 : index
    %c0_22 = arith.constant 0 : index
    %38 = vector.load %arg10[%c0_21, %c0_22] : memref<16x8xf32, #tpu.memory_space<vmem>>, vector<16x8xf32>
    tpu.vector_store %arg10[%c0_21, %c0_22], %37 {strides = array<i32>} : memref<16x8xf32, #tpu.memory_space<vmem>>, vector<16x8xf32>,
    return
  }
  func.func @transform_0(%arg0: i32) -> (i32, i32) {
    %c0_i32 = arith.constant 0 : i32
    %c0_i32_0 = arith.constant 0 : i32
    return %arg0, %c0_i32 : i32, i32
  }
  func.func @transform_1(%arg0: i32) -> (i32, i32) {
    %c0_i32 = arith.constant 0 : i32
    %c0_i32_0 = arith.constant 0 : i32
    %c0_i32_1 = arith.constant 0 : i32
    return %c0_i32, %c0_i32_0 : i32, i32
  }
  func.func @transform_2(%arg0: i32) -> (i32, i32) {
    %c0_i32 = arith.constant 0 : i32
    %c0_i32_0 = arith.constant 0 : i32
    %c0_i32_1 = arith.constant 0 : i32
    return %c0_i32, %c0_i32_0 : i32, i32
  }
  func.func @transform_3(%arg0: i32) -> (i32, i32) {
    %c0_i32 = arith.constant 0 : i32
    %c0_i32_0 = arith.constant 0 : i32
    %c0_i32_1 = arith.constant 0 : i32
    return %c0_i32, %c0_i32_0 : i32, i32
  }
  func.func @transform_4(%arg0: i32) -> (i32, i32) {
    %c0_i32 = arith.constant 0 : i32
    %c0_i32_0 = arith.constant 0 : i32
    %c0_i32_1 = arith.constant 0 : i32
    return %c0_i32, %c0_i32_0 : i32, i32
  }
  func.func @transform_5(%arg0: i32) -> (i32, i32) {
    %c0_i32 = arith.constant 0 : i32
    %c0_i32_0 = arith.constant 0 : i32
    %c0_i32_1 = arith.constant 0 : i32
    return %c0_i32, %c0_i32_0 : i32, i32
  }
  func.func @transform_6(%arg0: i32) -> (i32, i32) {
    %c0_i32 = arith.constant 0 : i32
    %c0_i32_0 = arith.constant 0 : i32
    %c0_i32_1 = arith.constant 0 : i32
    return %c0_i32, %c0_i32_0 : i32, i32
  }
  func.func @transform_7(%arg0: i32) -> (i32, i32) {
    %c0_i32 = arith.constant 0 : i32
    %c0_i32_0 = arith.constant 0 : i32
    %c0_i32_1 = arith.constant 0 : i32
    return %c0_i32, %c0_i32_0 : i32, i32
  }
  func.func @transform_8(%arg0: i32) -> (i32, i32) {
    %c0_i32 = arith.constant 0 : i32
    %c0_i32_0 = arith.constant 0 : i32
    %c0_i32_1 = arith.constant 0 : i32
    return %c0_i32, %c0_i32_0 : i32, i32
  }
  func.func @transform_9(%arg0: i32) -> (i32, i32) {
    %c0_i32 = arith.constant 0 : i32
    %c0_i32_0 = arith.constant 0 : i32
    return %arg0, %c0_i32 : i32, i32
  }
}

module attributes {stable_mosaic.version = 11 : i64} {
  func.func @_compress_kernel(%arg0: i32, %arg1: memref<1x16x1xf32, #tpu.memory_space<vmem>>, %arg2: memref<16x8xf32, #tpu.memory_space<vmem>>, %arg3: memref<9x8x60xf32, #tpu.memory_space<vmem>>, %arg4: memref<9x1x60xf32, #tpu.memory_space<vmem>>, %arg5: memref<9x1x60xf32, #tpu.memory_space<vmem>>, %arg6: memref<9x60x60xf32, #tpu.memory_space<vmem>>, %arg7: memref<9x1x60xf32, #tpu.memory_space<vmem>>, %arg8: memref<9x60x16xf32, #tpu.memory_space<vmem>>, %arg9: memref<9x1x16xf32, #tpu.memory_space<vmem>>, %arg10: memref<18x16x96xf32, #tpu.memory_space<vmem>>, %arg11: memref<18x1x96xf32, #tpu.memory_space<vmem>>, %arg12: memref<18x32x16xf32, #tpu.memory_space<vmem>>, %arg13: memref<18x1x16xf32, #tpu.memory_space<vmem>>, %arg14: memref<18x16x32xf32, #tpu.memory_space<vmem>>, %arg15: memref<18x1x32xf32, #tpu.memory_space<vmem>>, %arg16: memref<18x32x16xf32, #tpu.memory_space<vmem>>, %arg17: memref<18x1x16xf32, #tpu.memory_space<vmem>>, %arg18: memref<18x1x16xf32, #tpu.memory_space<vmem>>, %arg19: memref<18x1x16xf32, #tpu.memory_space<vmem>>, %arg20: memref<1x2x16xf32, #tpu.memory_space<vmem>>) attributes {dimension_semantics = [#tpu.dimension_semantics<parallel>], iteration_bounds = array<i64: 9>, scalar_prefetch = 0 : i64, scratch_operands = 0 : i64, tpu.core_type = #tpu.core_type<tc>, window_params = [{transform_indices = @transform_0, window_bounds = array<i64: 1, 16, 1>}, {pipeline_mode = #tpu.pipeline_mode<synchronous>, transform_indices = @transform_1, window_bounds = array<i64: 16, 8>}, {pipeline_mode = #tpu.pipeline_mode<synchronous>, transform_indices = @transform_2, window_bounds = array<i64: 9, 8, 60>}, {pipeline_mode = #tpu.pipeline_mode<synchronous>, transform_indices = @transform_3, window_bounds = array<i64: 9, 1, 60>}, {pipeline_mode = #tpu.pipeline_mode<synchronous>, transform_indices = @transform_4, window_bounds = array<i64: 9, 1, 60>}, {pipeline_mode = #tpu.pipeline_mode<synchronous>, transform_indices = @transform_5, window_bounds = array<i64: 9, 60, 60>}, {pipeline_mode = #tpu.pipeline_mode<synchronous>, transform_indices = @transform_6, window_bounds = array<i64: 9, 1, 60>}, {pipeline_mode = #tpu.pipeline_mode<synchronous>, transform_indices = @transform_7, window_bounds = array<i64: 9, 60, 16>}, {pipeline_mode = #tpu.pipeline_mode<synchronous>, transform_indices = @transform_8, window_bounds = array<i64: 9, 1, 16>}, {pipeline_mode = #tpu.pipeline_mode<synchronous>, transform_indices = @transform_9, window_bounds = array<i64: 18, 16, 96>}, {pipeline_mode = #tpu.pipeline_mode<synchronous>, transform_indices = @transform_10, window_bounds = array<i64: 18, 1, 96>}, {pipeline_mode = #tpu.pipeline_mode<synchronous>, transform_indices = @transform_11, window_bounds = array<i64: 18, 32, 16>}, {pipeline_mode = #tpu.pipeline_mode<synchronous>, transform_indices = @transform_12, window_bounds = array<i64: 18, 1, 16>}, {pipeline_mode = #tpu.pipeline_mode<synchronous>, transform_indices = @transform_13, window_bounds = array<i64: 18, 16, 32>}, {pipeline_mode = #tpu.pipeline_mode<synchronous>, transform_indices = @transform_14, window_bounds = array<i64: 18, 1, 32>}, {pipeline_mode = #tpu.pipeline_mode<synchronous>, transform_indices = @transform_15, window_bounds = array<i64: 18, 32, 16>}, {pipeline_mode = #tpu.pipeline_mode<synchronous>, transform_indices = @transform_16, window_bounds = array<i64: 18, 1, 16>}, {pipeline_mode = #tpu.pipeline_mode<synchronous>, transform_indices = @transform_17, window_bounds = array<i64: 18, 1, 16>}, {pipeline_mode = #tpu.pipeline_mode<synchronous>, transform_indices = @transform_18, window_bounds = array<i64: 18, 1, 16>}, {transform_indices = @transform_19, window_bounds = array<i64: 1, 2, 16>}]} {
    %c0 = arith.constant 0 : index
    %c0_0 = arith.constant 0 : index
    %0 = vector.load %arg2[%c0, %c0_0] : memref<16x8xf32, #tpu.memory_space<vmem>>, vector<16x8xf32>
    %c0_1 = arith.constant 0 : index
    %c0_2 = arith.constant 0 : index
    %c0_3 = arith.constant 0 : index
    %1 = vector.load %arg1[%c0_1, %c0_2, %c0_3] : memref<1x16x1xf32, #tpu.memory_space<vmem>>, vector<1x16x1xf32>
    %2 = vector.shape_cast %1 : vector<1x16x1xf32> to vector<16x1xf32>
    %3 = arith.index_cast %arg0 : i32 to index
    %c0_4 = arith.constant 0 : index
    %c0_5 = arith.constant 0 : index
    %4 = vector.load %arg3[%3, %c0_4, %c0_5] : memref<9x8x60xf32, #tpu.memory_space<vmem>>, vector<1x8x60xf32>
    %5 = vector.shape_cast %4 : vector<1x8x60xf32> to vector<8x60xf32>
    %cst = arith.constant dense<0.000000e+00> : vector<16x60xf32>
    %6 = tpu.matmul %0, %5, %cst {dimension_numbers = #tpu.dot_dimension_numbers<[1], [0], [0], [1], [0, 0, 1, 1], [], []>} : vector<16x8xf32>, vector<8x60xf32>, vector<16x60xf32> -> vector<16x60xf32>
    %7 = arith.index_cast %arg0 : i32 to index
    %c0_6 = arith.constant 0 : index
    %c0_7 = arith.constant 0 : index
    %8 = vector.load %arg4[%7, %c0_6, %c0_7] : memref<9x1x60xf32, #tpu.memory_space<vmem>>, vector<1x1x60xf32>
    %9 = vector.shape_cast %8 : vector<1x1x60xf32> to vector<1x60xf32>
    %10 = vector.broadcast %2 : vector<16x1xf32> to vector<16x60xf32>
    %11 = vector.broadcast %9 : vector<1x60xf32> to vector<16x60xf32>
    %12 = arith.mulf %10, %11 : vector<16x60xf32>
    %13 = arith.addf %6, %12 : vector<16x60xf32>
    %14 = arith.index_cast %arg0 : i32 to index
    %c0_8 = arith.constant 0 : index
    %c0_9 = arith.constant 0 : index
    %15 = vector.load %arg5[%14, %c0_8, %c0_9] : memref<9x1x60xf32, #tpu.memory_space<vmem>>, vector<1x1x60xf32>
    %16 = vector.shape_cast %15 : vector<1x1x60xf32> to vector<1x60xf32>
    %17 = vector.broadcast %16 : vector<1x60xf32> to vector<16x60xf32>
    %18 = arith.addf %13, %17 : vector<16x60xf32>
    %19 = math.tanh %18 : vector<16x60xf32>
    %20 = arith.index_cast %arg0 : i32 to index
    %c0_10 = arith.constant 0 : index
    %c0_11 = arith.constant 0 : index
    %21 = vector.load %arg6[%20, %c0_10, %c0_11] : memref<9x60x60xf32, #tpu.memory_space<vmem>>, vector<1x60x60xf32>
    %22 = vector.shape_cast %21 : vector<1x60x60xf32> to vector<60x60xf32>
    %cst_12 = arith.constant dense<0.000000e+00> : vector<16x60xf32>
    %23 = tpu.matmul %19, %22, %cst_12 {dimension_numbers = #tpu.dot_dimension_numbers<[1], [0], [0], [1], [0, 0, 1, 1], [], []>} : vector<16x60xf32>, vector<60x60xf32>, vector<16x60xf32> -> vector<16x60xf32>
    %24 = arith.index_cast %arg0 : i32 to index
    %c0_13 = arith.constant 0 : index
    %c0_14 = arith.constant 0 : index
    %25 = vector.load %arg7[%24, %c0_13, %c0_14] : memref<9x1x60xf32, #tpu.memory_space<vmem>>, vector<1x1x60xf32>
    %26 = vector.shape_cast %25 : vector<1x1x60xf32> to vector<1x60xf32>
    %27 = vector.broadcast %26 : vector<1x60xf32> to vector<16x60xf32>
    %28 = arith.addf %23, %27 : vector<16x60xf32>
    %29 = math.tanh %28 : vector<16x60xf32>
    %30 = arith.index_cast %arg0 : i32 to index
    %c0_15 = arith.constant 0 : index
    %c0_16 = arith.constant 0 : index
    %31 = vector.load %arg8[%30, %c0_15, %c0_16] : memref<9x60x16xf32, #tpu.memory_space<vmem>>, vector<1x60x16xf32>
    %32 = vector.shape_cast %31 : vector<1x60x16xf32> to vector<60x16xf32>
    %cst_17 = arith.constant dense<0.000000e+00> : vector<16x16xf32>
    %33 = tpu.matmul %29, %32, %cst_17 {dimension_numbers = #tpu.dot_dimension_numbers<[1], [0], [0], [1], [0, 0, 1, 1], [], []>} : vector<16x60xf32>, vector<60x16xf32>, vector<16x16xf32> -> vector<16x16xf32>
    %34 = arith.index_cast %arg0 : i32 to index
    %c0_18 = arith.constant 0 : index
    %c0_19 = arith.constant 0 : index
    %35 = vector.load %arg9[%34, %c0_18, %c0_19] : memref<9x1x16xf32, #tpu.memory_space<vmem>>, vector<1x1x16xf32>
    %36 = vector.shape_cast %35 : vector<1x1x16xf32> to vector<1x16xf32>
    %37 = vector.broadcast %36 : vector<1x16xf32> to vector<16x16xf32>
    %38 = arith.addf %33, %37 : vector<16x16xf32>
    %39 = arith.negf %38 : vector<16x16xf32>
    %40 = math.exp %39 : vector<16x16xf32>
    %cst_20 = arith.constant 1.000000e+00 : f32
    %41 = vector.broadcast %cst_20 : f32 to vector<16x16xf32>
    %42 = arith.addf %41, %40 : vector<16x16xf32>
    %43 = arith.divf %41, %42 : vector<16x16xf32>
    %c2_i32 = arith.constant 2 : i32
    %44 = arith.muli %arg0, %c2_i32 : i32
    %c0_i32 = arith.constant 0 : i32
    %45 = arith.addi %44, %c0_i32 : i32
    %46 = arith.index_cast %45 : i32 to index
    %c0_21 = arith.constant 0 : index
    %c0_22 = arith.constant 0 : index
    %47 = vector.load %arg10[%46, %c0_21, %c0_22] : memref<18x16x96xf32, #tpu.memory_space<vmem>>, vector<1x16x96xf32>
    %48 = vector.shape_cast %47 : vector<1x16x96xf32> to vector<16x96xf32>
    %cst_23 = arith.constant dense<0.000000e+00> : vector<16x96xf32>
    %49 = tpu.matmul %43, %48, %cst_23 {dimension_numbers = #tpu.dot_dimension_numbers<[1], [0], [0], [1], [0, 0, 1, 1], [], []>} : vector<16x16xf32>, vector<16x96xf32>, vector<16x96xf32> -> vector<16x96xf32>
    %50 = arith.index_cast %45 : i32 to index
    %c0_24 = arith.constant 0 : index
    %c0_25 = arith.constant 0 : index
    %51 = vector.load %arg11[%50, %c0_24, %c0_25] : memref<18x1x96xf32, #tpu.memory_space<vmem>>, vector<1x1x96xf32>
    %52 = vector.shape_cast %51 : vector<1x1x96xf32> to vector<1x96xf32>
    %53 = vector.broadcast %52 : vector<1x96xf32> to vector<16x96xf32>
    %54 = arith.addf %49, %53 : vector<16x96xf32>
    %55 = vector.extract_strided_slice %54 {offsets = [0, 0], sizes = [8, 96], strides = [1, 1]} : vector<16x96xf32> to vector<8x96xf32>
    %56 = vector.extract_strided_slice %55 {offsets = [0, 0], sizes = [8, 16], strides = [1, 1]} : vector<8x96xf32> to vector<8x16xf32>
    %57 = vector.extract_strided_slice %55 {offsets = [0, 32], sizes = [8, 16], strides = [1, 1]} : vector<8x96xf32> to vector<8x16xf32>
    %58 = vector.extract_strided_slice %55 {offsets = [0, 64], sizes = [8, 16], strides = [1, 1]} : vector<8x96xf32> to vector<8x16xf32>
    %cst_26 = arith.constant dense<0.000000e+00> : vector<8x8xf32>
    %59 = tpu.matmul %56, %57, %cst_26 {dimension_numbers = #tpu.dot_dimension_numbers<[1], [1], [0], [0], [0, 0, 1, 0], [], []>} : vector<8x16xf32>, vector<8x16xf32>, vector<8x8xf32> -> vector<8x8xf32>
    %cst_27 = arith.constant 2.500000e-01 : f32
    %60 = vector.broadcast %cst_27 : f32 to vector<8x8xf32>
    %61 = arith.mulf %59, %60 : vector<8x8xf32>
    %cst_28 = arith.constant dense<0xFF800000> : vector<8xf32>
    %62 = vector.multi_reduction <maximumf>, %61, %cst_28 [1] : vector<8x8xf32> to vector<8xf32>
    %63 = vector.shape_cast %62 : vector<8xf32> to vector<8x1xf32>
    %64 = vector.broadcast %63 : vector<8x1xf32> to vector<8x8xf32>
    %65 = arith.subf %61, %64 : vector<8x8xf32>
    %66 = math.exp %65 : vector<8x8xf32>
    %cst_29 = arith.constant dense<0.000000e+00> : vector<8xf32>
    %67 = vector.multi_reduction <add>, %66, %cst_29 [1] : vector<8x8xf32> to vector<8xf32>
    %68 = vector.shape_cast %67 : vector<8xf32> to vector<8x1xf32>
    %69 = vector.broadcast %68 : vector<8x1xf32> to vector<8x8xf32>
    %70 = arith.divf %66, %69 : vector<8x8xf32>
    %cst_30 = arith.constant dense<0.000000e+00> : vector<8x16xf32>
    %71 = tpu.matmul %70, %58, %cst_30 {dimension_numbers = #tpu.dot_dimension_numbers<[1], [0], [0], [1], [0, 0, 1, 1], [], []>} : vector<8x8xf32>, vector<8x16xf32>, vector<8x16xf32> -> vector<8x16xf32>
    %72 = vector.extract_strided_slice %55 {offsets = [0, 16], sizes = [8, 16], strides = [1, 1]} : vector<8x96xf32> to vector<8x16xf32>
    %73 = vector.extract_strided_slice %55 {offsets = [0, 48], sizes = [8, 16], strides = [1, 1]} : vector<8x96xf32> to vector<8x16xf32>
    %74 = vector.extract_strided_slice %55 {offsets = [0, 80], sizes = [8, 16], strides = [1, 1]} : vector<8x96xf32> to vector<8x16xf32>
    %cst_31 = arith.constant dense<0.000000e+00> : vector<8x8xf32>
    %75 = tpu.matmul %72, %73, %cst_31 {dimension_numbers = #tpu.dot_dimension_numbers<[1], [1], [0], [0], [0, 0, 1, 0], [], []>} : vector<8x16xf32>, vector<8x16xf32>, vector<8x8xf32> -> vector<8x8xf32>
    %cst_32 = arith.constant 2.500000e-01 : f32
    %76 = vector.broadcast %cst_32 : f32 to vector<8x8xf32>
    %77 = arith.mulf %75, %76 : vector<8x8xf32>
    %cst_33 = arith.constant dense<0xFF800000> : vector<8xf32>
    %78 = vector.multi_reduction <maximumf>, %77, %cst_33 [1] : vector<8x8xf32> to vector<8xf32>
    %79 = vector.shape_cast %78 : vector<8xf32> to vector<8x1xf32>
    %80 = vector.broadcast %79 : vector<8x1xf32> to vector<8x8xf32>
    %81 = arith.subf %77, %80 : vector<8x8xf32>
    %82 = math.exp %81 : vector<8x8xf32>
    %cst_34 = arith.constant dense<0.000000e+00> : vector<8xf32>
    %83 = vector.multi_reduction <add>, %82, %cst_34 [1] : vector<8x8xf32> to vector<8xf32>
    %84 = vector.shape_cast %83 : vector<8xf32> to vector<8x1xf32>
    %85 = vector.broadcast %84 : vector<8x1xf32> to vector<8x8xf32>
    %86 = arith.divf %82, %85 : vector<8x8xf32>
    %cst_35 = arith.constant dense<0.000000e+00> : vector<8x16xf32>
    %87 = tpu.matmul %86, %74, %cst_35 {dimension_numbers = #tpu.dot_dimension_numbers<[1], [0], [0], [1], [0, 0, 1, 1], [], []>} : vector<8x8xf32>, vector<8x16xf32>, vector<8x16xf32> -> vector<8x16xf32>
    %88 = tpu.concatenate %71, %87 in 1 : vector<8x16xf32>, vector<8x16xf32> -> vector<8x32xf32>
    %89 = vector.extract_strided_slice %54 {offsets = [8, 0], sizes = [8, 96], strides = [1, 1]} : vector<16x96xf32> to vector<8x96xf32>
    %90 = vector.extract_strided_slice %89 {offsets = [0, 0], sizes = [8, 16], strides = [1, 1]} : vector<8x96xf32> to vector<8x16xf32>
    %91 = vector.extract_strided_slice %89 {offsets = [0, 32], sizes = [8, 16], strides = [1, 1]} : vector<8x96xf32> to vector<8x16xf32>
    %92 = vector.extract_strided_slice %89 {offsets = [0, 64], sizes = [8, 16], strides = [1, 1]} : vector<8x96xf32> to vector<8x16xf32>
    %cst_36 = arith.constant dense<0.000000e+00> : vector<8x8xf32>
    %93 = tpu.matmul %90, %91, %cst_36 {dimension_numbers = #tpu.dot_dimension_numbers<[1], [1], [0], [0], [0, 0, 1, 0], [], []>} : vector<8x16xf32>, vector<8x16xf32>, vector<8x8xf32> -> vector<8x8xf32>
    %cst_37 = arith.constant 2.500000e-01 : f32
    %94 = vector.broadcast %cst_37 : f32 to vector<8x8xf32>
    %95 = arith.mulf %93, %94 : vector<8x8xf32>
    %cst_38 = arith.constant dense<0xFF800000> : vector<8xf32>
    %96 = vector.multi_reduction <maximumf>, %95, %cst_38 [1] : vector<8x8xf32> to vector<8xf32>
    %97 = vector.shape_cast %96 : vector<8xf32> to vector<8x1xf32>
    %98 = vector.broadcast %97 : vector<8x1xf32> to vector<8x8xf32>
    %99 = arith.subf %95, %98 : vector<8x8xf32>
    %100 = math.exp %99 : vector<8x8xf32>
    %cst_39 = arith.constant dense<0.000000e+00> : vector<8xf32>
    %101 = vector.multi_reduction <add>, %100, %cst_39 [1] : vector<8x8xf32> to vector<8xf32>
    %102 = vector.shape_cast %101 : vector<8xf32> to vector<8x1xf32>
    %103 = vector.broadcast %102 : vector<8x1xf32> to vector<8x8xf32>
    %104 = arith.divf %100, %103 : vector<8x8xf32>
    %cst_40 = arith.constant dense<0.000000e+00> : vector<8x16xf32>
    %105 = tpu.matmul %104, %92, %cst_40 {dimension_numbers = #tpu.dot_dimension_numbers<[1], [0], [0], [1], [0, 0, 1, 1], [], []>} : vector<8x8xf32>, vector<8x16xf32>, vector<8x16xf32> -> vector<8x16xf32>
    %106 = vector.extract_strided_slice %89 {offsets = [0, 16], sizes = [8, 16], strides = [1, 1]} : vector<8x96xf32> to vector<8x16xf32>
    %107 = vector.extract_strided_slice %89 {offsets = [0, 48], sizes = [8, 16], strides = [1, 1]} : vector<8x96xf32> to vector<8x16xf32>
    %108 = vector.extract_strided_slice %89 {offsets = [0, 80], sizes = [8, 16], strides = [1, 1]} : vector<8x96xf32> to vector<8x16xf32>
    %cst_41 = arith.constant dense<0.000000e+00> : vector<8x8xf32>
    %109 = tpu.matmul %106, %107, %cst_41 {dimension_numbers = #tpu.dot_dimension_numbers<[1], [1], [0], [0], [0, 0, 1, 0], [], []>} : vector<8x16xf32>, vector<8x16xf32>, vector<8x8xf32> -> vector<8x8xf32>
    %cst_42 = arith.constant 2.500000e-01 : f32
    %110 = vector.broadcast %cst_42 : f32 to vector<8x8xf32>
    %111 = arith.mulf %109, %110 : vector<8x8xf32>
    %cst_43 = arith.constant dense<0xFF800000> : vector<8xf32>
    %112 = vector.multi_reduction <maximumf>, %111, %cst_43 [1] : vector<8x8xf32> to vector<8xf32>
    %113 = vector.shape_cast %112 : vector<8xf32> to vector<8x1xf32>
    %114 = vector.broadcast %113 : vector<8x1xf32> to vector<8x8xf32>
    %115 = arith.subf %111, %114 : vector<8x8xf32>
    %116 = math.exp %115 : vector<8x8xf32>
    %cst_44 = arith.constant dense<0.000000e+00> : vector<8xf32>
    %117 = vector.multi_reduction <add>, %116, %cst_44 [1] : vector<8x8xf32> to vector<8xf32>
    %118 = vector.shape_cast %117 : vector<8xf32> to vector<8x1xf32>
    %119 = vector.broadcast %118 : vector<8x1xf32> to vector<8x8xf32>
    %120 = arith.divf %116, %119 : vector<8x8xf32>
    %cst_45 = arith.constant dense<0.000000e+00> : vector<8x16xf32>
    %121 = tpu.matmul %120, %108, %cst_45 {dimension_numbers = #tpu.dot_dimension_numbers<[1], [0], [0], [1], [0, 0, 1, 1], [], []>} : vector<8x8xf32>, vector<8x16xf32>, vector<8x16xf32> -> vector<8x16xf32>
    %122 = tpu.concatenate %105, %121 in 1 : vector<8x16xf32>, vector<8x16xf32> -> vector<8x32xf32>
    %123 = tpu.concatenate %88, %122 in 0 : vector<8x32xf32>, vector<8x32xf32> -> vector<16x32xf32>
    %124 = arith.index_cast %45 : i32 to index
    %c0_46 = arith.constant 0 : index
    %c0_47 = arith.constant 0 : index
    %125 = vector.load %arg12[%124, %c0_46, %c0_47] : memref<18x32x16xf32, #tpu.memory_space<vmem>>, vector<1x32x16xf32>
    %126 = vector.shape_cast %125 : vector<1x32x16xf32> to vector<32x16xf32>
    %cst_48 = arith.constant dense<0.000000e+00> : vector<16x16xf32>
    %127 = tpu.matmul %123, %126, %cst_48 {dimension_numbers = #tpu.dot_dimension_numbers<[1], [0], [0], [1], [0, 0, 1, 1], [], []>} : vector<16x32xf32>, vector<32x16xf32>, vector<16x16xf32> -> vector<16x16xf32>
    %128 = arith.index_cast %45 : i32 to index
    %c0_49 = arith.constant 0 : index
    %c0_50 = arith.constant 0 : index
    %129 = vector.load %arg13[%128, %c0_49, %c0_50] : memref<18x1x16xf32, #tpu.memory_space<vmem>>, vector<1x1x16xf32>
    %130 = vector.shape_cast %129 : vector<1x1x16xf32> to vector<1x16xf32>
    %131 = vector.broadcast %130 : vector<1x16xf32> to vector<16x16xf32>
    %132 = arith.addf %127, %131 : vector<16x16xf32>
    %133 = arith.index_cast %45 : i32 to index
    %c0_51 = arith.constant 0 : index
    %c0_52 = arith.constant 0 : index
    %134 = vector.load %arg14[%133, %c0_51, %c0_52] : memref<18x16x32xf32, #tpu.memory_space<vmem>>, vector<1x16x32xf32>
    %135 = vector.shape_cast %134 : vector<1x16x32xf32> to vector<16x32xf32>
    %cst_53 = arith.constant dense<0.000000e+00> : vector<16x32xf32>
    %136 = tpu.matmul %132, %135, %cst_53 {dimension_numbers = #tpu.dot_dimension_numbers<[1], [0], [0], [1], [0, 0, 1, 1], [], []>} : vector<16x16xf32>, vector<16x32xf32>, vector<16x32xf32> -> vector<16x32xf32>
    %137 = arith.index_cast %45 : i32 to index
    %c0_54 = arith.constant 0 : index
    %c0_55 = arith.constant 0 : index
    %138 = vector.load %arg15[%137, %c0_54, %c0_55] : memref<18x1x32xf32, #tpu.memory_space<vmem>>, vector<1x1x32xf32>
    %139 = vector.shape_cast %138 : vector<1x1x32xf32> to vector<1x32xf32>
    %140 = vector.broadcast %139 : vector<1x32xf32> to vector<16x32xf32>
    %141 = arith.addf %136, %140 : vector<16x32xf32>
    %cst_56 = arith.constant 0.000000e+00 : f32
    %142 = vector.broadcast %cst_56 : f32 to vector<16x32xf32>
    %143 = arith.maximumf %141, %142 : vector<16x32xf32>
    %144 = arith.index_cast %45 : i32 to index
    %c0_57 = arith.constant 0 : index
    %c0_58 = arith.constant 0 : index
    %145 = vector.load %arg16[%144, %c0_57, %c0_58] : memref<18x32x16xf32, #tpu.memory_space<vmem>>, vector<1x32x16xf32>
    %146 = vector.shape_cast %145 : vector<1x32x16xf32> to vector<32x16xf32>
    %cst_59 = arith.constant dense<0.000000e+00> : vector<16x16xf32>
    %147 = tpu.matmul %143, %146, %cst_59 {dimension_numbers = #tpu.dot_dimension_numbers<[1], [0], [0], [1], [0, 0, 1, 1], [], []>} : vector<16x32xf32>, vector<32x16xf32>, vector<16x16xf32> -> vector<16x16xf32>
    %148 = arith.index_cast %45 : i32 to index
    %c0_60 = arith.constant 0 : index
    %c0_61 = arith.constant 0 : index
    %149 = vector.load %arg17[%148, %c0_60, %c0_61] : memref<18x1x16xf32, #tpu.memory_space<vmem>>, vector<1x1x16xf32>
    %150 = vector.shape_cast %149 : vector<1x1x16xf32> to vector<1x16xf32>
    %151 = vector.broadcast %150 : vector<1x16xf32> to vector<16x16xf32>
    %152 = arith.addf %147, %151 : vector<16x16xf32>
    %153 = arith.addf %43, %152 : vector<16x16xf32>
    %cst_62 = arith.constant dense<0.000000e+00> : vector<16xf32>
    %154 = vector.multi_reduction <add>, %153, %cst_62 [1] : vector<16x16xf32> to vector<16xf32>
    %155 = vector.shape_cast %154 : vector<16xf32> to vector<16x1xf32>
    %cst_63 = arith.constant 1.600000e+01 : f32
    %156 = vector.broadcast %cst_63 : f32 to vector<16x1xf32>
    %157 = arith.divf %155, %156 : vector<16x1xf32>
    %158 = vector.broadcast %157 : vector<16x1xf32> to vector<16x16xf32>
    %159 = arith.subf %153, %158 : vector<16x16xf32>
    %160 = arith.mulf %159, %159 : vector<16x16xf32>
    %cst_64 = arith.constant dense<0.000000e+00> : vector<16xf32>
    %161 = vector.multi_reduction <add>, %160, %cst_64 [1] : vector<16x16xf32> to vector<16xf32>
    %162 = vector.shape_cast %161 : vector<16xf32> to vector<16x1xf32>
    %cst_65 = arith.constant 1.600000e+01 : f32
    %163 = vector.broadcast %cst_65 : f32 to vector<16x1xf32>
    %164 = arith.divf %162, %163 : vector<16x1xf32>
    %165 = vector.broadcast %157 : vector<16x1xf32> to vector<16x16xf32>
    %166 = arith.subf %153, %165 : vector<16x16xf32>
    %cst_66 = arith.constant 9.99999974E-6 : f32
    %167 = vector.broadcast %cst_66 : f32 to vector<16x1xf32>
    %168 = arith.addf %164, %167 : vector<16x1xf32>
    %169 = math.rsqrt %168 : vector<16x1xf32>
    %170 = vector.broadcast %169 : vector<16x1xf32> to vector<16x16xf32>
    %171 = arith.mulf %166, %170 : vector<16x16xf32>
    %172 = arith.index_cast %45 : i32 to index
    %c0_67 = arith.constant 0 : index
    %c0_68 = arith.constant 0 : index
    %173 = vector.load %arg18[%172, %c0_67, %c0_68] : memref<18x1x16xf32, #tpu.memory_space<vmem>>, vector<1x1x16xf32>
    %174 = vector.shape_cast %173 : vector<1x1x16xf32> to vector<1x16xf32>
    %175 = vector.broadcast %174 : vector<1x16xf32> to vector<16x16xf32>
    %176 = arith.mulf %171, %175 : vector<16x16xf32>
    %177 = arith.index_cast %45 : i32 to index
    %c0_69 = arith.constant 0 : index
    %c0_70 = arith.constant 0 : index
    %178 = vector.load %arg19[%177, %c0_69, %c0_70] : memref<18x1x16xf32, #tpu.memory_space<vmem>>, vector<1x1x16xf32>
    %179 = vector.shape_cast %178 : vector<1x1x16xf32> to vector<1x16xf32>
    %180 = vector.broadcast %179 : vector<1x16xf32> to vector<16x16xf32>
    %181 = arith.addf %176, %180 : vector<16x16xf32>
    %c2_i32_71 = arith.constant 2 : i32
    %182 = arith.muli %arg0, %c2_i32_71 : i32
    %c1_i32 = arith.constant 1 : i32
    %183 = arith.addi %182, %c1_i32 : i32
    %184 = arith.index_cast %183 : i32 to index
    %c0_72 = arith.constant 0 : index
    %c0_73 = arith.constant 0 : index
    %185 = vector.load %arg10[%184, %c0_72, %c0_73] : memref<18x16x96xf32, #tpu.memory_space<vmem>>, vector<1x16x96xf32>
    %186 = vector.shape_cast %185 : vector<1x16x96xf32> to vector<16x96xf32>
    %cst_74 = arith.constant dense<0.000000e+00> : vector<16x96xf32>
    %187 = tpu.matmul %181, %186, %cst_74 {dimension_numbers = #tpu.dot_dimension_numbers<[1], [0], [0], [1], [0, 0, 1, 1], [], []>} : vector<16x16xf32>, vector<16x96xf32>, vector<16x96xf32> -> vector<16x96xf32>
    %188 = arith.index_cast %183 : i32 to index
    %c0_75 = arith.constant 0 : index
    %c0_76 = arith.constant 0 : index
    %189 = vector.load %arg11[%188, %c0_75, %c0_76] : memref<18x1x96xf32, #tpu.memory_space<vmem>>, vector<1x1x96xf32>
    %190 = vector.shape_cast %189 : vector<1x1x96xf32> to vector<1x96xf32>
    %191 = vector.broadcast %190 : vector<1x96xf32> to vector<16x96xf32>
    %192 = arith.addf %187, %191 : vector<16x96xf32>
    %193 = vector.extract_strided_slice %192 {offsets = [0, 0], sizes = [8, 96], strides = [1, 1]} : vector<16x96xf32> to vector<8x96xf32>
    %194 = vector.extract_strided_slice %193 {offsets = [0, 0], sizes = [8, 16], strides = [1, 1]} : vector<8x96xf32> to vector<8x16xf32>
    %195 = vector.extract_strided_slice %193 {offsets = [0, 32], sizes = [8, 16], strides = [1, 1]} : vector<8x96xf32> to vector<8x16xf32>
    %196 = vector.extract_strided_slice %193 {offsets = [0, 64], sizes = [8, 16], strides = [1, 1]} : vector<8x96xf32> to vector<8x16xf32>
    %cst_77 = arith.constant dense<0.000000e+00> : vector<8x8xf32>
    %197 = tpu.matmul %194, %195, %cst_77 {dimension_numbers = #tpu.dot_dimension_numbers<[1], [1], [0], [0], [0, 0, 1, 0], [], []>} : vector<8x16xf32>, vector<8x16xf32>, vector<8x8xf32> -> vector<8x8xf32>
    %cst_78 = arith.constant 2.500000e-01 : f32
    %198 = vector.broadcast %cst_78 : f32 to vector<8x8xf32>
    %199 = arith.mulf %197, %198 : vector<8x8xf32>
    %cst_79 = arith.constant dense<0xFF800000> : vector<8xf32>
    %200 = vector.multi_reduction <maximumf>, %199, %cst_79 [1] : vector<8x8xf32> to vector<8xf32>
    %201 = vector.shape_cast %200 : vector<8xf32> to vector<8x1xf32>
    %202 = vector.broadcast %201 : vector<8x1xf32> to vector<8x8xf32>
    %203 = arith.subf %199, %202 : vector<8x8xf32>
    %204 = math.exp %203 : vector<8x8xf32>
    %cst_80 = arith.constant dense<0.000000e+00> : vector<8xf32>
    %205 = vector.multi_reduction <add>, %204, %cst_80 [1] : vector<8x8xf32> to vector<8xf32>
    %206 = vector.shape_cast %205 : vector<8xf32> to vector<8x1xf32>
    %207 = vector.broadcast %206 : vector<8x1xf32> to vector<8x8xf32>
    %208 = arith.divf %204, %207 : vector<8x8xf32>
    %cst_81 = arith.constant dense<0.000000e+00> : vector<8x16xf32>
    %209 = tpu.matmul %208, %196, %cst_81 {dimension_numbers = #tpu.dot_dimension_numbers<[1], [0], [0], [1], [0, 0, 1, 1], [], []>} : vector<8x8xf32>, vector<8x16xf32>, vector<8x16xf32> -> vector<8x16xf32>
    %210 = vector.extract_strided_slice %193 {offsets = [0, 16], sizes = [8, 16], strides = [1, 1]} : vector<8x96xf32> to vector<8x16xf32>
    %211 = vector.extract_strided_slice %193 {offsets = [0, 48], sizes = [8, 16], strides = [1, 1]} : vector<8x96xf32> to vector<8x16xf32>
    %212 = vector.extract_strided_slice %193 {offsets = [0, 80], sizes = [8, 16], strides = [1, 1]} : vector<8x96xf32> to vector<8x16xf32>
    %cst_82 = arith.constant dense<0.000000e+00> : vector<8x8xf32>
    %213 = tpu.matmul %210, %211, %cst_82 {dimension_numbers = #tpu.dot_dimension_numbers<[1], [1], [0], [0], [0, 0, 1, 0], [], []>} : vector<8x16xf32>, vector<8x16xf32>, vector<8x8xf32> -> vector<8x8xf32>
    %cst_83 = arith.constant 2.500000e-01 : f32
    %214 = vector.broadcast %cst_83 : f32 to vector<8x8xf32>
    %215 = arith.mulf %213, %214 : vector<8x8xf32>
    %cst_84 = arith.constant dense<0xFF800000> : vector<8xf32>
    %216 = vector.multi_reduction <maximumf>, %215, %cst_84 [1] : vector<8x8xf32> to vector<8xf32>
    %217 = vector.shape_cast %216 : vector<8xf32> to vector<8x1xf32>
    %218 = vector.broadcast %217 : vector<8x1xf32> to vector<8x8xf32>
    %219 = arith.subf %215, %218 : vector<8x8xf32>
    %220 = math.exp %219 : vector<8x8xf32>
    %cst_85 = arith.constant dense<0.000000e+00> : vector<8xf32>
    %221 = vector.multi_reduction <add>, %220, %cst_85 [1] : vector<8x8xf32> to vector<8xf32>
    %222 = vector.shape_cast %221 : vector<8xf32> to vector<8x1xf32>
    %223 = vector.broadcast %222 : vector<8x1xf32> to vector<8x8xf32>
    %224 = arith.divf %220, %223 : vector<8x8xf32>
    %cst_86 = arith.constant dense<0.000000e+00> : vector<8x16xf32>
    %225 = tpu.matmul %224, %212, %cst_86 {dimension_numbers = #tpu.dot_dimension_numbers<[1], [0], [0], [1], [0, 0, 1, 1], [], []>} : vector<8x8xf32>, vector<8x16xf32>, vector<8x16xf32> -> vector<8x16xf32>
    %226 = tpu.concatenate %209, %225 in 1 : vector<8x16xf32>, vector<8x16xf32> -> vector<8x32xf32>
    %227 = vector.extract_strided_slice %192 {offsets = [8, 0], sizes = [8, 96], strides = [1, 1]} : vector<16x96xf32> to vector<8x96xf32>
    %228 = vector.extract_strided_slice %227 {offsets = [0, 0], sizes = [8, 16], strides = [1, 1]} : vector<8x96xf32> to vector<8x16xf32>
    %229 = vector.extract_strided_slice %227 {offsets = [0, 32], sizes = [8, 16], strides = [1, 1]} : vector<8x96xf32> to vector<8x16xf32>
    %230 = vector.extract_strided_slice %227 {offsets = [0, 64], sizes = [8, 16], strides = [1, 1]} : vector<8x96xf32> to vector<8x16xf32>
    %cst_87 = arith.constant dense<0.000000e+00> : vector<8x8xf32>
    %231 = tpu.matmul %228, %229, %cst_87 {dimension_numbers = #tpu.dot_dimension_numbers<[1], [1], [0], [0], [0, 0, 1, 0], [], []>} : vector<8x16xf32>, vector<8x16xf32>, vector<8x8xf32> -> vector<8x8xf32>
    %cst_88 = arith.constant 2.500000e-01 : f32
    %232 = vector.broadcast %cst_88 : f32 to vector<8x8xf32>
    %233 = arith.mulf %231, %232 : vector<8x8xf32>
    %cst_89 = arith.constant dense<0xFF800000> : vector<8xf32>
    %234 = vector.multi_reduction <maximumf>, %233, %cst_89 [1] : vector<8x8xf32> to vector<8xf32>
    %235 = vector.shape_cast %234 : vector<8xf32> to vector<8x1xf32>
    %236 = vector.broadcast %235 : vector<8x1xf32> to vector<8x8xf32>
    %237 = arith.subf %233, %236 : vector<8x8xf32>
    %238 = math.exp %237 : vector<8x8xf32>
    %cst_90 = arith.constant dense<0.000000e+00> : vector<8xf32>
    %239 = vector.multi_reduction <add>, %238, %cst_90 [1] : vector<8x8xf32> to vector<8xf32>
    %240 = vector.shape_cast %239 : vector<8xf32> to vector<8x1xf32>
    %241 = vector.broadcast %240 : vector<8x1xf32> to vector<8x8xf32>
    %242 = arith.divf %238, %241 : vector<8x8xf32>
    %cst_91 = arith.constant dense<0.000000e+00> : vector<8x16xf32>
    %243 = tpu.matmul %242, %230, %cst_91 {dimension_numbers = #tpu.dot_dimension_numbers<[1], [0], [0], [1], [0, 0, 1, 1], [], []>} : vector<8x8xf32>, vector<8x16xf32>, vector<8x16xf32> -> vector<8x16xf32>
    %244 = vector.extract_strided_slice %227 {offsets = [0, 16], sizes = [8, 16], strides = [1, 1]} : vector<8x96xf32> to vector<8x16xf32>
    %245 = vector.extract_strided_slice %227 {offsets = [0, 48], sizes = [8, 16], strides = [1, 1]} : vector<8x96xf32> to vector<8x16xf32>
    %246 = vector.extract_strided_slice %227 {offsets = [0, 80], sizes = [8, 16], strides = [1, 1]} : vector<8x96xf32> to vector<8x16xf32>
    %cst_92 = arith.constant dense<0.000000e+00> : vector<8x8xf32>
    %247 = tpu.matmul %244, %245, %cst_92 {dimension_numbers = #tpu.dot_dimension_numbers<[1], [1], [0], [0], [0, 0, 1, 0], [], []>} : vector<8x16xf32>, vector<8x16xf32>, vector<8x8xf32> -> vector<8x8xf32>
    %cst_93 = arith.constant 2.500000e-01 : f32
    %248 = vector.broadcast %cst_93 : f32 to vector<8x8xf32>
    %249 = arith.mulf %247, %248 : vector<8x8xf32>
    %cst_94 = arith.constant dense<0xFF800000> : vector<8xf32>
    %250 = vector.multi_reduction <maximumf>, %249, %cst_94 [1] : vector<8x8xf32> to vector<8xf32>
    %251 = vector.shape_cast %250 : vector<8xf32> to vector<8x1xf32>
    %252 = vector.broadcast %251 : vector<8x1xf32> to vector<8x8xf32>
    %253 = arith.subf %249, %252 : vector<8x8xf32>
    %254 = math.exp %253 : vector<8x8xf32>
    %cst_95 = arith.constant dense<0.000000e+00> : vector<8xf32>
    %255 = vector.multi_reduction <add>, %254, %cst_95 [1] : vector<8x8xf32> to vector<8xf32>
    %256 = vector.shape_cast %255 : vector<8xf32> to vector<8x1xf32>
    %257 = vector.broadcast %256 : vector<8x1xf32> to vector<8x8xf32>
    %258 = arith.divf %254, %257 : vector<8x8xf32>
    %cst_96 = arith.constant dense<0.000000e+00> : vector<8x16xf32>
    %259 = tpu.matmul %258, %246, %cst_96 {dimension_numbers = #tpu.dot_dimension_numbers<[1], [0], [0], [1], [0, 0, 1, 1], [], []>} : vector<8x8xf32>, vector<8x16xf32>, vector<8x16xf32> -> vector<8x16xf32>
    %260 = tpu.concatenate %243, %259 in 1 : vector<8x16xf32>, vector<8x16xf32> -> vector<8x32xf32>
    %261 = tpu.concatenate %226, %260 in 0 : vector<8x32xf32>, vector<8x32xf32> -> vector<16x32xf32>
    %262 = arith.index_cast %183 : i32 to index
    %c0_97 = arith.constant 0 : index
    %c0_98 = arith.constant 0 : index
    %263 = vector.load %arg12[%262, %c0_97, %c0_98] : memref<18x32x16xf32, #tpu.memory_space<vmem>>, vector<1x32x16xf32>
    %264 = vector.shape_cast %263 : vector<1x32x16xf32> to vector<32x16xf32>
    %cst_99 = arith.constant dense<0.000000e+00> : vector<16x16xf32>
    %265 = tpu.matmul %261, %264, %cst_99 {dimension_numbers = #tpu.dot_dimension_numbers<[1], [0], [0], [1], [0, 0, 1, 1], [], []>} : vector<16x32xf32>, vector<32x16xf32>, vector<16x16xf32> -> vector<16x16xf32>
    %266 = arith.index_cast %183 : i32 to index
    %c0_100 = arith.constant 0 : index
    %c0_101 = arith.constant 0 : index
    %267 = vector.load %arg13[%266, %c0_100, %c0_101] : memref<18x1x16xf32, #tpu.memory_space<vmem>>, vector<1x1x16xf32>
    %268 = vector.shape_cast %267 : vector<1x1x16xf32> to vector<1x16xf32>
    %269 = vector.broadcast %268 : vector<1x16xf32> to vector<16x16xf32>
    %270 = arith.addf %265, %269 : vector<16x16xf32>
    %271 = arith.index_cast %183 : i32 to index
    %c0_102 = arith.constant 0 : index
    %c0_103 = arith.constant 0 : index
    %272 = vector.load %arg14[%271, %c0_102, %c0_103] : memref<18x16x32xf32, #tpu.memory_space<vmem>>, vector<1x16x32xf32>
    %273 = vector.shape_cast %272 : vector<1x16x32xf32> to vector<16x32xf32>
    %cst_104 = arith.constant dense<0.000000e+00> : vector<16x32xf32>
    %274 = tpu.matmul %270, %273, %cst_104 {dimension_numbers = #tpu.dot_dimension_numbers<[1], [0], [0], [1], [0, 0, 1, 1], [], []>} : vector<16x16xf32>, vector<16x32xf32>, vector<16x32xf32> -> vector<16x32xf32>
    %275 = arith.index_cast %183 : i32 to index
    %c0_105 = arith.constant 0 : index
    %c0_106 = arith.constant 0 : index
    %276 = vector.load %arg15[%275, %c0_105, %c0_106] : memref<18x1x32xf32, #tpu.memory_space<vmem>>, vector<1x1x32xf32>
    %277 = vector.shape_cast %276 : vector<1x1x32xf32> to vector<1x32xf32>
    %278 = vector.broadcast %277 : vector<1x32xf32> to vector<16x32xf32>
    %279 = arith.addf %274, %278 : vector<16x32xf32>
    %cst_107 = arith.constant 0.000000e+00 : f32
    %280 = vector.broadcast %cst_107 : f32 to vector<16x32xf32>
    %281 = arith.maximumf %279, %280 : vector<16x32xf32>
    %282 = arith.index_cast %183 : i32 to index
    %c0_108 = arith.constant 0 : index
    %c0_109 = arith.constant 0 : index
    %283 = vector.load %arg16[%282, %c0_108, %c0_109] : memref<18x32x16xf32, #tpu.memory_space<vmem>>, vector<1x32x16xf32>
    %284 = vector.shape_cast %283 : vector<1x32x16xf32> to vector<32x16xf32>
    %cst_110 = arith.constant dense<0.000000e+00> : vector<16x16xf32>
    %285 = tpu.matmul %281, %284, %cst_110 {dimension_numbers = #tpu.dot_dimension_numbers<[1], [0], [0], [1], [0, 0, 1, 1], [], []>} : vector<16x32xf32>, vector<32x16xf32>, vector<16x16xf32> -> vector<16x16xf32>
    %286 = arith.index_cast %183 : i32 to index
    %c0_111 = arith.constant 0 : index
    %c0_112 = arith.constant 0 : index
    %287 = vector.load %arg17[%286, %c0_111, %c0_112] : memref<18x1x16xf32, #tpu.memory_space<vmem>>, vector<1x1x16xf32>
    %288 = vector.shape_cast %287 : vector<1x1x16xf32> to vector<1x16xf32>
    %289 = vector.broadcast %288 : vector<1x16xf32> to vector<16x16xf32>
    %290 = arith.addf %285, %289 : vector<16x16xf32>
    %291 = arith.addf %181, %290 : vector<16x16xf32>
    %cst_113 = arith.constant dense<0.000000e+00> : vector<16xf32>
    %292 = vector.multi_reduction <add>, %291, %cst_113 [1] : vector<16x16xf32> to vector<16xf32>
    %293 = vector.shape_cast %292 : vector<16xf32> to vector<16x1xf32>
    %cst_114 = arith.constant 1.600000e+01 : f32
    %294 = vector.broadcast %cst_114 : f32 to vector<16x1xf32>
    %295 = arith.divf %293, %294 : vector<16x1xf32>
    %296 = vector.broadcast %295 : vector<16x1xf32> to vector<16x16xf32>
    %297 = arith.subf %291, %296 : vector<16x16xf32>
    %298 = arith.mulf %297, %297 : vector<16x16xf32>
    %cst_115 = arith.constant dense<0.000000e+00> : vector<16xf32>
    %299 = vector.multi_reduction <add>, %298, %cst_115 [1] : vector<16x16xf32> to vector<16xf32>
    %300 = vector.shape_cast %299 : vector<16xf32> to vector<16x1xf32>
    %cst_116 = arith.constant 1.600000e+01 : f32
    %301 = vector.broadcast %cst_116 : f32 to vector<16x1xf32>
    %302 = arith.divf %300, %301 : vector<16x1xf32>
    %303 = vector.broadcast %295 : vector<16x1xf32> to vector<16x16xf32>
    %304 = arith.subf %291, %303 : vector<16x16xf32>
    %cst_117 = arith.constant 9.99999974E-6 : f32
    %305 = vector.broadcast %cst_117 : f32 to vector<16x1xf32>
    %306 = arith.addf %302, %305 : vector<16x1xf32>
    %307 = math.rsqrt %306 : vector<16x1xf32>
    %308 = vector.broadcast %307 : vector<16x1xf32> to vector<16x16xf32>
    %309 = arith.mulf %304, %308 : vector<16x16xf32>
    %310 = arith.index_cast %183 : i32 to index
    %c0_118 = arith.constant 0 : index
    %c0_119 = arith.constant 0 : index
    %311 = vector.load %arg18[%310, %c0_118, %c0_119] : memref<18x1x16xf32, #tpu.memory_space<vmem>>, vector<1x1x16xf32>
    %312 = vector.shape_cast %311 : vector<1x1x16xf32> to vector<1x16xf32>
    %313 = vector.broadcast %312 : vector<1x16xf32> to vector<16x16xf32>
    %314 = arith.mulf %309, %313 : vector<16x16xf32>
    %315 = arith.index_cast %183 : i32 to index
    %c0_120 = arith.constant 0 : index
    %c0_121 = arith.constant 0 : index
    %316 = vector.load %arg19[%315, %c0_120, %c0_121] : memref<18x1x16xf32, #tpu.memory_space<vmem>>, vector<1x1x16xf32>
    %317 = vector.shape_cast %316 : vector<1x1x16xf32> to vector<1x16xf32>
    %318 = vector.broadcast %317 : vector<1x16xf32> to vector<16x16xf32>
    %319 = arith.addf %314, %318 : vector<16x16xf32>
    %320 = vector.extract_strided_slice %319 {offsets = [0, 0], sizes = [8, 16], strides = [1, 1]} : vector<16x16xf32> to vector<8x16xf32>
    %cst_122 = arith.constant dense<0.000000e+00> : vector<16xf32>
    %321 = vector.multi_reduction <add>, %320, %cst_122 [0] : vector<8x16xf32> to vector<16xf32>
    %322 = vector.shape_cast %321 : vector<16xf32> to vector<1x16xf32>
    %cst_123 = arith.constant 8.000000e+00 : f32
    %323 = vector.broadcast %cst_123 : f32 to vector<1x16xf32>
    %324 = arith.divf %322, %323 : vector<1x16xf32>
    %325 = vector.extract_strided_slice %319 {offsets = [8, 0], sizes = [8, 16], strides = [1, 1]} : vector<16x16xf32> to vector<8x16xf32>
    %cst_124 = arith.constant dense<0.000000e+00> : vector<16xf32>
    %326 = vector.multi_reduction <add>, %325, %cst_124 [0] : vector<8x16xf32> to vector<16xf32>
    %327 = vector.shape_cast %326 : vector<16xf32> to vector<1x16xf32>
    %cst_125 = arith.constant 8.000000e+00 : f32
    %328 = vector.broadcast %cst_125 : f32 to vector<1x16xf32>
    %329 = arith.divf %327, %328 : vector<1x16xf32>
    %330 = tpu.concatenate %324, %329 in 0 : vector<1x16xf32>, vector<1x16xf32> -> vector<2x16xf32>
    %c0_126 = arith.constant 0 : index
    %c0_127 = arith.constant 0 : index
    %c0_128 = arith.constant 0 : index
    %331 = vector.load %arg20[%c0_126, %c0_127, %c0_128] : memref<1x2x16xf32, #tpu.memory_space<vmem>>, vector<1x2x16xf32>
    %332 = vector.shape_cast %331 : vector<1x2x16xf32> to vector<2x16xf32>
    %333 = vector.shape_cast %330 : vector<2x16xf32> to vector<1x2x16xf32>
    tpu.vector_store %arg20[%c0_126, %c0_127, %c0_128], %333 {strides = array<i32>} : memref<1x2x16xf32, #tpu.memory_space<vmem>>, vector<1x2x16xf32>,
    return
  }
  func.func @transform_0(%arg0: i32) -> (i32, i32, i32) {
    %c0_i32 = arith.constant 0 : i32
    %c0_i32_0 = arith.constant 0 : i32
    %c0_i32_1 = arith.constant 0 : i32
    return %arg0, %c0_i32, %c0_i32_0 : i32, i32, i32
  }
  func.func @transform_1(%arg0: i32) -> (i32, i32) {
    %c0_i32 = arith.constant 0 : i32
    %c0_i32_0 = arith.constant 0 : i32
    %c0_i32_1 = arith.constant 0 : i32
    return %c0_i32, %c0_i32_0 : i32, i32
  }
  func.func @transform_2(%arg0: i32) -> (i32, i32, i32) {
    %c0_i32 = arith.constant 0 : i32
    %c0_i32_0 = arith.constant 0 : i32
    %c0_i32_1 = arith.constant 0 : i32
    %c0_i32_2 = arith.constant 0 : i32
    return %c0_i32, %c0_i32_0, %c0_i32_1 : i32, i32, i32
  }
  func.func @transform_3(%arg0: i32) -> (i32, i32, i32) {
    %c0_i32 = arith.constant 0 : i32
    %c0_i32_0 = arith.constant 0 : i32
    %c0_i32_1 = arith.constant 0 : i32
    %c0_i32_2 = arith.constant 0 : i32
    return %c0_i32, %c0_i32_0, %c0_i32_1 : i32, i32, i32
  }
  func.func @transform_4(%arg0: i32) -> (i32, i32, i32) {
    %c0_i32 = arith.constant 0 : i32
    %c0_i32_0 = arith.constant 0 : i32
    %c0_i32_1 = arith.constant 0 : i32
    %c0_i32_2 = arith.constant 0 : i32
    return %c0_i32, %c0_i32_0, %c0_i32_1 : i32, i32, i32
  }
  func.func @transform_5(%arg0: i32) -> (i32, i32, i32) {
    %c0_i32 = arith.constant 0 : i32
    %c0_i32_0 = arith.constant 0 : i32
    %c0_i32_1 = arith.constant 0 : i32
    %c0_i32_2 = arith.constant 0 : i32
    return %c0_i32, %c0_i32_0, %c0_i32_1 : i32, i32, i32
  }
  func.func @transform_6(%arg0: i32) -> (i32, i32, i32) {
    %c0_i32 = arith.constant 0 : i32
    %c0_i32_0 = arith.constant 0 : i32
    %c0_i32_1 = arith.constant 0 : i32
    %c0_i32_2 = arith.constant 0 : i32
    return %c0_i32, %c0_i32_0, %c0_i32_1 : i32, i32, i32
  }
  func.func @transform_7(%arg0: i32) -> (i32, i32, i32) {
    %c0_i32 = arith.constant 0 : i32
    %c0_i32_0 = arith.constant 0 : i32
    %c0_i32_1 = arith.constant 0 : i32
    %c0_i32_2 = arith.constant 0 : i32
    return %c0_i32, %c0_i32_0, %c0_i32_1 : i32, i32, i32
  }
  func.func @transform_8(%arg0: i32) -> (i32, i32, i32) {
    %c0_i32 = arith.constant 0 : i32
    %c0_i32_0 = arith.constant 0 : i32
    %c0_i32_1 = arith.constant 0 : i32
    %c0_i32_2 = arith.constant 0 : i32
    return %c0_i32, %c0_i32_0, %c0_i32_1 : i32, i32, i32
  }
  func.func @transform_9(%arg0: i32) -> (i32, i32, i32) {
    %c0_i32 = arith.constant 0 : i32
    %c0_i32_0 = arith.constant 0 : i32
    %c0_i32_1 = arith.constant 0 : i32
    %c0_i32_2 = arith.constant 0 : i32
    return %c0_i32, %c0_i32_0, %c0_i32_1 : i32, i32, i32
  }
  func.func @transform_10(%arg0: i32) -> (i32, i32, i32) {
    %c0_i32 = arith.constant 0 : i32
    %c0_i32_0 = arith.constant 0 : i32
    %c0_i32_1 = arith.constant 0 : i32
    %c0_i32_2 = arith.constant 0 : i32
    return %c0_i32, %c0_i32_0, %c0_i32_1 : i32, i32, i32
  }
  func.func @transform_11(%arg0: i32) -> (i32, i32, i32) {
    %c0_i32 = arith.constant 0 : i32
    %c0_i32_0 = arith.constant 0 : i32
    %c0_i32_1 = arith.constant 0 : i32
    %c0_i32_2 = arith.constant 0 : i32
    return %c0_i32, %c0_i32_0, %c0_i32_1 : i32, i32, i32
  }
  func.func @transform_12(%arg0: i32) -> (i32, i32, i32) {
    %c0_i32 = arith.constant 0 : i32
    %c0_i32_0 = arith.constant 0 : i32
    %c0_i32_1 = arith.constant 0 : i32
    %c0_i32_2 = arith.constant 0 : i32
    return %c0_i32, %c0_i32_0, %c0_i32_1 : i32, i32, i32
  }
  func.func @transform_13(%arg0: i32) -> (i32, i32, i32) {
    %c0_i32 = arith.constant 0 : i32
    %c0_i32_0 = arith.constant 0 : i32
    %c0_i32_1 = arith.constant 0 : i32
    %c0_i32_2 = arith.constant 0 : i32
    return %c0_i32, %c0_i32_0, %c0_i32_1 : i32, i32, i32
  }
  func.func @transform_14(%arg0: i32) -> (i32, i32, i32) {
    %c0_i32 = arith.constant 0 : i32
    %c0_i32_0 = arith.constant 0 : i32
    %c0_i32_1 = arith.constant 0 : i32
    %c0_i32_2 = arith.constant 0 : i32
    return %c0_i32, %c0_i32_0, %c0_i32_1 : i32, i32, i32
  }
  func.func @transform_15(%arg0: i32) -> (i32, i32, i32) {
    %c0_i32 = arith.constant 0 : i32
    %c0_i32_0 = arith.constant 0 : i32
    %c0_i32_1 = arith.constant 0 : i32
    %c0_i32_2 = arith.constant 0 : i32
    return %c0_i32, %c0_i32_0, %c0_i32_1 : i32, i32, i32
  }
  func.func @transform_16(%arg0: i32) -> (i32, i32, i32) {
    %c0_i32 = arith.constant 0 : i32
    %c0_i32_0 = arith.constant 0 : i32
    %c0_i32_1 = arith.constant 0 : i32
    %c0_i32_2 = arith.constant 0 : i32
    return %c0_i32, %c0_i32_0, %c0_i32_1 : i32, i32, i32
  }
  func.func @transform_17(%arg0: i32) -> (i32, i32, i32) {
    %c0_i32 = arith.constant 0 : i32
    %c0_i32_0 = arith.constant 0 : i32
    %c0_i32_1 = arith.constant 0 : i32
    %c0_i32_2 = arith.constant 0 : i32
    return %c0_i32, %c0_i32_0, %c0_i32_1 : i32, i32, i32
  }
  func.func @transform_18(%arg0: i32) -> (i32, i32, i32) {
    %c0_i32 = arith.constant 0 : i32
    %c0_i32_0 = arith.constant 0 : i32
    %c0_i32_1 = arith.constant 0 : i32
    %c0_i32_2 = arith.constant 0 : i32
    return %c0_i32, %c0_i32_0, %c0_i32_1 : i32, i32, i32
  }
  func.func @transform_19(%arg0: i32) -> (i32, i32, i32) {
    %c0_i32 = arith.constant 0 : i32
    %c0_i32_0 = arith.constant 0 : i32
    %c0_i32_1 = arith.constant 0 : i32
    return %arg0, %c0_i32, %c0_i32_0 : i32, i32, i32
  }
}

module attributes {stable_mosaic.version = 11 : i64} {
  func.func @_merge_branch_kernel(%arg0: i32, %arg1: memref<1x9x16xf32, #tpu.memory_space<vmem>>, %arg2: memref<1x1x144xf32, #tpu.memory_space<vmem>>, %arg3: memref<1x8x8xf32, #tpu.memory_space<vmem>>, %arg4: memref<9x16xf32, #tpu.memory_space<vmem>>, %arg5: memref<1x16xf32, #tpu.memory_space<vmem>>, %arg6: memref<9x16xf32, #tpu.memory_space<vmem>>, %arg7: memref<1x16xf32, #tpu.memory_space<vmem>>, %arg8: memref<9x16xf32, #tpu.memory_space<vmem>>, %arg9: memref<1x16xf32, #tpu.memory_space<vmem>>, %arg10: memref<144x450xf32, #tpu.memory_space<vmem>>, %arg11: memref<1x450xf32, #tpu.memory_space<vmem>>, %arg12: memref<450x450xf32, #tpu.memory_space<vmem>>, %arg13: memref<1x450xf32, #tpu.memory_space<vmem>>, %arg14: memref<450x72xf32, #tpu.memory_space<vmem>>, %arg15: memref<1x72xf32, #tpu.memory_space<vmem>>, %arg16: memref<1x9x8xf32, #tpu.memory_space<vmem>>, %arg17: memref<1x9x8xf32, #tpu.memory_space<vmem>>) attributes {dimension_semantics = [#tpu.dimension_semantics<parallel>], iteration_bounds = array<i64: 2>, scalar_prefetch = 0 : i64, scratch_operands = 0 : i64, tpu.core_type = #tpu.core_type<tc>, window_params = [{transform_indices = @transform_0, window_bounds = array<i64: 1, 9, 16>}, {transform_indices = @transform_1, window_bounds = array<i64: 1, 1, 144>}, {transform_indices = @transform_2, window_bounds = array<i64: 1, 8, 8>}, {pipeline_mode = #tpu.pipeline_mode<synchronous>, transform_indices = @transform_3, window_bounds = array<i64: 9, 16>}, {pipeline_mode = #tpu.pipeline_mode<synchronous>, transform_indices = @transform_4, window_bounds = array<i64: 1, 16>}, {pipeline_mode = #tpu.pipeline_mode<synchronous>, transform_indices = @transform_5, window_bounds = array<i64: 9, 16>}, {pipeline_mode = #tpu.pipeline_mode<synchronous>, transform_indices = @transform_6, window_bounds = array<i64: 1, 16>}, {pipeline_mode = #tpu.pipeline_mode<synchronous>, transform_indices = @transform_7, window_bounds = array<i64: 9, 16>}, {pipeline_mode = #tpu.pipeline_mode<synchronous>, transform_indices = @transform_8, window_bounds = array<i64: 1, 16>}, {pipeline_mode = #tpu.pipeline_mode<synchronous>, transform_indices = @transform_9, window_bounds = array<i64: 144, 450>}, {pipeline_mode = #tpu.pipeline_mode<synchronous>, transform_indices = @transform_10, window_bounds = array<i64: 1, 450>}, {pipeline_mode = #tpu.pipeline_mode<synchronous>, transform_indices = @transform_11, window_bounds = array<i64: 450, 450>}, {pipeline_mode = #tpu.pipeline_mode<synchronous>, transform_indices = @transform_12, window_bounds = array<i64: 1, 450>}, {pipeline_mode = #tpu.pipeline_mode<synchronous>, transform_indices = @transform_13, window_bounds = array<i64: 450, 72>}, {pipeline_mode = #tpu.pipeline_mode<synchronous>, transform_indices = @transform_14, window_bounds = array<i64: 1, 72>}, {transform_indices = @transform_15, window_bounds = array<i64: 1, 9, 8>}, {transform_indices = @transform_16, window_bounds = array<i64: 1, 9, 8>}]} {
    %c0 = arith.constant 0 : index
    %c0_0 = arith.constant 0 : index
    %c0_1 = arith.constant 0 : index
    %0 = vector.load %arg1[%c0, %c0_0, %c0_1] : memref<1x9x16xf32, #tpu.memory_space<vmem>>, vector<1x9x16xf32>
    %1 = vector.shape_cast %0 : vector<1x9x16xf32> to vector<9x16xf32>
    %c0_2 = arith.constant 0 : index
    %c0_3 = arith.constant 0 : index
    %c0_4 = arith.constant 0 : index
    %2 = vector.load %arg3[%c0_2, %c0_3, %c0_4] : memref<1x8x8xf32, #tpu.memory_space<vmem>>, vector<1x8x8xf32>
    %3 = vector.shape_cast %2 : vector<1x8x8xf32> to vector<8x8xf32>
    %c0_5 = arith.constant 0 : index
    %c0_6 = arith.constant 0 : index
    %4 = vector.load %arg4[%c0_5, %c0_6] : memref<9x16xf32, #tpu.memory_space<vmem>>, vector<9x16xf32>
    %cst = arith.constant dense<0.000000e+00> : vector<16x16xf32>
    %5 = tpu.matmul %1, %4, %cst {dimension_numbers = #tpu.dot_dimension_numbers<[0], [0], [1], [1], [0, 1, 1, 1], [], []>} : vector<9x16xf32>, vector<9x16xf32>, vector<16x16xf32> -> vector<16x16xf32>
    %c0_7 = arith.constant 0 : index
    %c0_8 = arith.constant 0 : index
    %6 = vector.load %arg5[%c0_7, %c0_8] : memref<1x16xf32, #tpu.memory_space<vmem>>, vector<1x16xf32>
    %7 = vector.broadcast %6 : vector<1x16xf32> to vector<16x16xf32>
    %8 = arith.addf %5, %7 : vector<16x16xf32>
    %c0_9 = arith.constant 0 : index
    %c0_10 = arith.constant 0 : index
    %9 = vector.load %arg6[%c0_9, %c0_10] : memref<9x16xf32, #tpu.memory_space<vmem>>, vector<9x16xf32>
    %cst_11 = arith.constant dense<0.000000e+00> : vector<16x16xf32>
    %10 = tpu.matmul %1, %9, %cst_11 {dimension_numbers = #tpu.dot_dimension_numbers<[0], [0], [1], [1], [0, 1, 1, 1], [], []>} : vector<9x16xf32>, vector<9x16xf32>, vector<16x16xf32> -> vector<16x16xf32>
    %c0_12 = arith.constant 0 : index
    %c0_13 = arith.constant 0 : index
    %11 = vector.load %arg7[%c0_12, %c0_13] : memref<1x16xf32, #tpu.memory_space<vmem>>, vector<1x16xf32>
    %12 = vector.broadcast %11 : vector<1x16xf32> to vector<16x16xf32>
    %13 = arith.addf %10, %12 : vector<16x16xf32>
    %c0_14 = arith.constant 0 : index
    %c0_15 = arith.constant 0 : index
    %14 = vector.load %arg8[%c0_14, %c0_15] : memref<9x16xf32, #tpu.memory_space<vmem>>, vector<9x16xf32>
    %cst_16 = arith.constant dense<0.000000e+00> : vector<16x16xf32>
    %15 = tpu.matmul %1, %14, %cst_16 {dimension_numbers = #tpu.dot_dimension_numbers<[0], [0], [1], [1], [0, 1, 1, 1], [], []>} : vector<9x16xf32>, vector<9x16xf32>, vector<16x16xf32> -> vector<16x16xf32>
    %c0_17 = arith.constant 0 : index
    %c0_18 = arith.constant 0 : index
    %16 = vector.load %arg9[%c0_17, %c0_18] : memref<1x16xf32, #tpu.memory_space<vmem>>, vector<1x16xf32>
    %17 = vector.broadcast %16 : vector<1x16xf32> to vector<16x16xf32>
    %18 = arith.addf %15, %17 : vector<16x16xf32>
    %cst_19 = arith.constant dense<0.000000e+00> : vector<16x16xf32>
    %19 = tpu.matmul %8, %13, %cst_19 {dimension_numbers = #tpu.dot_dimension_numbers<[1], [1], [0], [0], [0, 0, 1, 0], [], []>} : vector<16x16xf32>, vector<16x16xf32>, vector<16x16xf32> -> vector<16x16xf32>
    %cst_20 = arith.constant 0.333333343 : f32
    %20 = vector.broadcast %cst_20 : f32 to vector<16x16xf32>
    %21 = arith.mulf %19, %20 : vector<16x16xf32>
    %cst_21 = arith.constant dense<0xFF800000> : vector<16xf32>
    %22 = vector.multi_reduction <maximumf>, %21, %cst_21 [1] : vector<16x16xf32> to vector<16xf32>
    %23 = vector.shape_cast %22 : vector<16xf32> to vector<16x1xf32>
    %24 = vector.broadcast %23 : vector<16x1xf32> to vector<16x16xf32>
    %25 = arith.subf %21, %24 : vector<16x16xf32>
    %26 = math.exp %25 : vector<16x16xf32>
    %cst_22 = arith.constant dense<0.000000e+00> : vector<16xf32>
    %27 = vector.multi_reduction <add>, %26, %cst_22 [1] : vector<16x16xf32> to vector<16xf32>
    %28 = vector.shape_cast %27 : vector<16xf32> to vector<16x1xf32>
    %29 = vector.broadcast %28 : vector<16x1xf32> to vector<16x16xf32>
    %30 = arith.divf %26, %29 : vector<16x16xf32>
    %cst_23 = arith.constant dense<0.000000e+00> : vector<16x16xf32>
    %31 = tpu.matmul %30, %18, %cst_23 {dimension_numbers = #tpu.dot_dimension_numbers<[1], [0], [0], [1], [0, 0, 1, 1], [], []>} : vector<16x16xf32>, vector<16x16xf32>, vector<16x16xf32> -> vector<16x16xf32>
    %cst_24 = arith.constant dense<0.000000e+00> : vector<16xf32>
    %32 = vector.multi_reduction <add>, %31, %cst_24 [1] : vector<16x16xf32> to vector<16xf32>
    %33 = vector.shape_cast %32 : vector<16xf32> to vector<16x1xf32>
    %cst_25 = arith.constant 1.600000e+01 : f32
    %34 = vector.broadcast %cst_25 : f32 to vector<16x1xf32>
    %35 = arith.divf %33, %34 : vector<16x1xf32>
    %36 = tpu.transpose %35, [1, 0] : vector<16x1xf32> -> vector<1x16xf32>
    %cst_26 = arith.constant dense<0.000000e+00> : vector<16xf32>
    %37 = vector.multi_reduction <add>, %1, %cst_26 [0] : vector<9x16xf32> to vector<16xf32>
    %38 = vector.shape_cast %37 : vector<16xf32> to vector<1x16xf32>
    %cst_27 = arith.constant 9.000000e+00 : f32
    %39 = vector.broadcast %cst_27 : f32 to vector<1x16xf32>
    %40 = arith.divf %38, %39 : vector<1x16xf32>
    %41 = arith.addf %36, %40 : vector<1x16xf32>
    %c0_28 = arith.constant 0 : index
    %c0_29 = arith.constant 0 : index
    %c0_30 = arith.constant 0 : index
    %42 = vector.load %arg2[%c0_28, %c0_29, %c0_30] : memref<1x1x144xf32, #tpu.memory_space<vmem>>, vector<1x1x144xf32>
    %43 = vector.shape_cast %42 : vector<1x1x144xf32> to vector<1x144xf32>
    %44 = tpu.concatenate %41, %41, %41, %41, %41, %41, %41, %41, %41 in 1 : vector<1x16xf32>, vector<1x16xf32>, vector<1x16xf32>, vector<1x16xf32>, vector<1x16xf32>, vector<1x16xf32>, vector<1x16xf32>, vector<1x16xf32>, vector<1x16xf32> -> vector<1x144xf32>
    %45 = tpu.concatenate %43, %44 in 0 : vector<1x144xf32>, vector<1x144xf32> -> vector<2x144xf32>
    %c0_31 = arith.constant 0 : index
    %c0_32 = arith.constant 0 : index
    %46 = vector.load %arg10[%c0_31, %c0_32] : memref<144x450xf32, #tpu.memory_space<vmem>>, vector<144x450xf32>
    %cst_33 = arith.constant dense<0.000000e+00> : vector<2x450xf32>
    %47 = tpu.matmul %45, %46, %cst_33 {dimension_numbers = #tpu.dot_dimension_numbers<[1], [0], [0], [1], [0, 0, 1, 1], [], []>} : vector<2x144xf32>, vector<144x450xf32>, vector<2x450xf32> -> vector<2x450xf32>
    %c0_34 = arith.constant 0 : index
    %c0_35 = arith.constant 0 : index
    %48 = vector.load %arg11[%c0_34, %c0_35] : memref<1x450xf32, #tpu.memory_space<vmem>>, vector<1x450xf32>
    %49 = vector.broadcast %48 : vector<1x450xf32> to vector<2x450xf32>
    %50 = arith.addf %47, %49 : vector<2x450xf32>
    %51 = math.tanh %50 : vector<2x450xf32>
    %c0_36 = arith.constant 0 : index
    %c0_37 = arith.constant 0 : index
    %52 = vector.load %arg12[%c0_36, %c0_37] : memref<450x450xf32, #tpu.memory_space<vmem>>, vector<450x450xf32>
    %cst_38 = arith.constant dense<0.000000e+00> : vector<2x450xf32>
    %53 = tpu.matmul %51, %52, %cst_38 {dimension_numbers = #tpu.dot_dimension_numbers<[1], [0], [0], [1], [0, 0, 1, 1], [], []>} : vector<2x450xf32>, vector<450x450xf32>, vector<2x450xf32> -> vector<2x450xf32>
    %c0_39 = arith.constant 0 : index
    %c0_40 = arith.constant 0 : index
    %54 = vector.load %arg13[%c0_39, %c0_40] : memref<1x450xf32, #tpu.memory_space<vmem>>, vector<1x450xf32>
    %55 = vector.broadcast %54 : vector<1x450xf32> to vector<2x450xf32>
    %56 = arith.addf %53, %55 : vector<2x450xf32>
    %57 = math.tanh %56 : vector<2x450xf32>
    %c0_41 = arith.constant 0 : index
    %c0_42 = arith.constant 0 : index
    %58 = vector.load %arg14[%c0_41, %c0_42] : memref<450x72xf32, #tpu.memory_space<vmem>>, vector<450x72xf32>
    %cst_43 = arith.constant dense<0.000000e+00> : vector<2x72xf32>
    %59 = tpu.matmul %57, %58, %cst_43 {dimension_numbers = #tpu.dot_dimension_numbers<[1], [0], [0], [1], [0, 0, 1, 1], [], []>} : vector<2x450xf32>, vector<450x72xf32>, vector<2x72xf32> -> vector<2x72xf32>
    %c0_44 = arith.constant 0 : index
    %c0_45 = arith.constant 0 : index
    %60 = vector.load %arg15[%c0_44, %c0_45] : memref<1x72xf32, #tpu.memory_space<vmem>>, vector<1x72xf32>
    %61 = vector.broadcast %60 : vector<1x72xf32> to vector<2x72xf32>
    %62 = arith.addf %59, %61 : vector<2x72xf32>
    %63 = arith.negf %62 : vector<2x72xf32>
    %64 = math.exp %63 : vector<2x72xf32>
    %cst_46 = arith.constant 1.000000e+00 : f32
    %65 = vector.broadcast %cst_46 : f32 to vector<2x72xf32>
    %66 = arith.addf %65, %64 : vector<2x72xf32>
    %67 = arith.divf %65, %66 : vector<2x72xf32>
    %68 = vector.extract_strided_slice %67 {offsets = [0, 0], sizes = [1, 8], strides = [1, 1]} : vector<2x72xf32> to vector<1x8xf32>
    %69 = vector.extract_strided_slice %67 {offsets = [0, 8], sizes = [1, 8], strides = [1, 1]} : vector<2x72xf32> to vector<1x8xf32>
    %70 = vector.extract_strided_slice %67 {offsets = [0, 16], sizes = [1, 8], strides = [1, 1]} : vector<2x72xf32> to vector<1x8xf32>
    %71 = vector.extract_strided_slice %67 {offsets = [0, 24], sizes = [1, 8], strides = [1, 1]} : vector<2x72xf32> to vector<1x8xf32>
    %72 = vector.extract_strided_slice %67 {offsets = [0, 32], sizes = [1, 8], strides = [1, 1]} : vector<2x72xf32> to vector<1x8xf32>
    %73 = vector.extract_strided_slice %67 {offsets = [0, 40], sizes = [1, 8], strides = [1, 1]} : vector<2x72xf32> to vector<1x8xf32>
    %74 = vector.extract_strided_slice %67 {offsets = [0, 48], sizes = [1, 8], strides = [1, 1]} : vector<2x72xf32> to vector<1x8xf32>
    %75 = vector.extract_strided_slice %67 {offsets = [0, 56], sizes = [1, 8], strides = [1, 1]} : vector<2x72xf32> to vector<1x8xf32>
    %76 = vector.extract_strided_slice %67 {offsets = [0, 64], sizes = [1, 8], strides = [1, 1]} : vector<2x72xf32> to vector<1x8xf32>
    %77 = tpu.concatenate %68, %69, %70, %71, %72, %73, %74, %75, %76 in 0 : vector<1x8xf32>, vector<1x8xf32>, vector<1x8xf32>, vector<1x8xf32>, vector<1x8xf32>, vector<1x8xf32>, vector<1x8xf32>, vector<1x8xf32>, vector<1x8xf32> -> vector<9x8xf32>
    %78 = vector.extract_strided_slice %67 {offsets = [1, 0], sizes = [1, 8], strides = [1, 1]} : vector<2x72xf32> to vector<1x8xf32>
    %79 = vector.extract_strided_slice %67 {offsets = [1, 8], sizes = [1, 8], strides = [1, 1]} : vector<2x72xf32> to vector<1x8xf32>
    %80 = vector.extract_strided_slice %67 {offsets = [1, 16], sizes = [1, 8], strides = [1, 1]} : vector<2x72xf32> to vector<1x8xf32>
    %81 = vector.extract_strided_slice %67 {offsets = [1, 24], sizes = [1, 8], strides = [1, 1]} : vector<2x72xf32> to vector<1x8xf32>
    %82 = vector.extract_strided_slice %67 {offsets = [1, 32], sizes = [1, 8], strides = [1, 1]} : vector<2x72xf32> to vector<1x8xf32>
    %83 = vector.extract_strided_slice %67 {offsets = [1, 40], sizes = [1, 8], strides = [1, 1]} : vector<2x72xf32> to vector<1x8xf32>
    %84 = vector.extract_strided_slice %67 {offsets = [1, 48], sizes = [1, 8], strides = [1, 1]} : vector<2x72xf32> to vector<1x8xf32>
    %85 = vector.extract_strided_slice %67 {offsets = [1, 56], sizes = [1, 8], strides = [1, 1]} : vector<2x72xf32> to vector<1x8xf32>
    %86 = vector.extract_strided_slice %67 {offsets = [1, 64], sizes = [1, 8], strides = [1, 1]} : vector<2x72xf32> to vector<1x8xf32>
    %87 = tpu.concatenate %78, %79, %80, %81, %82, %83, %84, %85, %86 in 0 : vector<1x8xf32>, vector<1x8xf32>, vector<1x8xf32>, vector<1x8xf32>, vector<1x8xf32>, vector<1x8xf32>, vector<1x8xf32>, vector<1x8xf32>, vector<1x8xf32> -> vector<9x8xf32>
    %cst_47 = arith.constant dense<0.000000e+00> : vector<9x8xf32>
    %88 = tpu.matmul %77, %3, %cst_47 {dimension_numbers = #tpu.dot_dimension_numbers<[1], [1], [0], [0], [0, 0, 1, 0], [], []>} : vector<9x8xf32>, vector<8x8xf32>, vector<9x8xf32> -> vector<9x8xf32>
    %c0_48 = arith.constant 0 : index
    %c0_49 = arith.constant 0 : index
    %c0_50 = arith.constant 0 : index
    %89 = vector.load %arg16[%c0_48, %c0_49, %c0_50] : memref<1x9x8xf32, #tpu.memory_space<vmem>>, vector<1x9x8xf32>
    %90 = vector.shape_cast %89 : vector<1x9x8xf32> to vector<9x8xf32>
    %91 = vector.shape_cast %88 : vector<9x8xf32> to vector<1x9x8xf32>
    tpu.vector_store %arg16[%c0_48, %c0_49, %c0_50], %91 {strides = array<i32>} : memref<1x9x8xf32, #tpu.memory_space<vmem>>, vector<1x9x8xf32>,
    %cst_51 = arith.constant dense<0.000000e+00> : vector<9x8xf32>
    %92 = tpu.matmul %87, %3, %cst_51 {dimension_numbers = #tpu.dot_dimension_numbers<[1], [1], [0], [0], [0, 0, 1, 0], [], []>} : vector<9x8xf32>, vector<8x8xf32>, vector<9x8xf32> -> vector<9x8xf32>
    %c0_52 = arith.constant 0 : index
    %c0_53 = arith.constant 0 : index
    %c0_54 = arith.constant 0 : index
    %93 = vector.load %arg17[%c0_52, %c0_53, %c0_54] : memref<1x9x8xf32, #tpu.memory_space<vmem>>, vector<1x9x8xf32>
    %94 = vector.shape_cast %93 : vector<1x9x8xf32> to vector<9x8xf32>
    %95 = vector.shape_cast %92 : vector<9x8xf32> to vector<1x9x8xf32>
    tpu.vector_store %arg17[%c0_52, %c0_53, %c0_54], %95 {strides = array<i32>} : memref<1x9x8xf32, #tpu.memory_space<vmem>>, vector<1x9x8xf32>,
    return
  }
  func.func @transform_0(%arg0: i32) -> (i32, i32, i32) {
    %c0_i32 = arith.constant 0 : i32
    %c0_i32_0 = arith.constant 0 : i32
    %c0_i32_1 = arith.constant 0 : i32
    return %arg0, %c0_i32, %c0_i32_0 : i32, i32, i32
  }
  func.func @transform_1(%arg0: i32) -> (i32, i32, i32) {
    %c0_i32 = arith.constant 0 : i32
    %c0_i32_0 = arith.constant 0 : i32
    %c0_i32_1 = arith.constant 0 : i32
    return %arg0, %c0_i32, %c0_i32_0 : i32, i32, i32
  }
  func.func @transform_2(%arg0: i32) -> (i32, i32, i32) {
    %c0_i32 = arith.constant 0 : i32
    %c0_i32_0 = arith.constant 0 : i32
    %c0_i32_1 = arith.constant 0 : i32
    return %arg0, %c0_i32, %c0_i32_0 : i32, i32, i32
  }
  func.func @transform_3(%arg0: i32) -> (i32, i32) {
    %c0_i32 = arith.constant 0 : i32
    %c0_i32_0 = arith.constant 0 : i32
    %c0_i32_1 = arith.constant 0 : i32
    return %c0_i32, %c0_i32_0 : i32, i32
  }
  func.func @transform_4(%arg0: i32) -> (i32, i32) {
    %c0_i32 = arith.constant 0 : i32
    %c0_i32_0 = arith.constant 0 : i32
    %c0_i32_1 = arith.constant 0 : i32
    return %c0_i32, %c0_i32_0 : i32, i32
  }
  func.func @transform_5(%arg0: i32) -> (i32, i32) {
    %c0_i32 = arith.constant 0 : i32
    %c0_i32_0 = arith.constant 0 : i32
    %c0_i32_1 = arith.constant 0 : i32
    return %c0_i32, %c0_i32_0 : i32, i32
  }
  func.func @transform_6(%arg0: i32) -> (i32, i32) {
    %c0_i32 = arith.constant 0 : i32
    %c0_i32_0 = arith.constant 0 : i32
    %c0_i32_1 = arith.constant 0 : i32
    return %c0_i32, %c0_i32_0 : i32, i32
  }
  func.func @transform_7(%arg0: i32) -> (i32, i32) {
    %c0_i32 = arith.constant 0 : i32
    %c0_i32_0 = arith.constant 0 : i32
    %c0_i32_1 = arith.constant 0 : i32
    return %c0_i32, %c0_i32_0 : i32, i32
  }
  func.func @transform_8(%arg0: i32) -> (i32, i32) {
    %c0_i32 = arith.constant 0 : i32
    %c0_i32_0 = arith.constant 0 : i32
    %c0_i32_1 = arith.constant 0 : i32
    return %c0_i32, %c0_i32_0 : i32, i32
  }
  func.func @transform_9(%arg0: i32) -> (i32, i32) {
    %c0_i32 = arith.constant 0 : i32
    %c0_i32_0 = arith.constant 0 : i32
    %c0_i32_1 = arith.constant 0 : i32
    return %c0_i32, %c0_i32_0 : i32, i32
  }
  func.func @transform_10(%arg0: i32) -> (i32, i32) {
    %c0_i32 = arith.constant 0 : i32
    %c0_i32_0 = arith.constant 0 : i32
    %c0_i32_1 = arith.constant 0 : i32
    return %c0_i32, %c0_i32_0 : i32, i32
  }
  func.func @transform_11(%arg0: i32) -> (i32, i32) {
    %c0_i32 = arith.constant 0 : i32
    %c0_i32_0 = arith.constant 0 : i32
    %c0_i32_1 = arith.constant 0 : i32
    return %c0_i32, %c0_i32_0 : i32, i32
  }
  func.func @transform_12(%arg0: i32) -> (i32, i32) {
    %c0_i32 = arith.constant 0 : i32
    %c0_i32_0 = arith.constant 0 : i32
    %c0_i32_1 = arith.constant 0 : i32
    return %c0_i32, %c0_i32_0 : i32, i32
  }
  func.func @transform_13(%arg0: i32) -> (i32, i32) {
    %c0_i32 = arith.constant 0 : i32
    %c0_i32_0 = arith.constant 0 : i32
    %c0_i32_1 = arith.constant 0 : i32
    return %c0_i32, %c0_i32_0 : i32, i32
  }
  func.func @transform_14(%arg0: i32) -> (i32, i32) {
    %c0_i32 = arith.constant 0 : i32
    %c0_i32_0 = arith.constant 0 : i32
    %c0_i32_1 = arith.constant 0 : i32
    return %c0_i32, %c0_i32_0 : i32, i32
  }
  func.func @transform_15(%arg0: i32) -> (i32, i32, i32) {
    %c0_i32 = arith.constant 0 : i32
    %c0_i32_0 = arith.constant 0 : i32
    %c0_i32_1 = arith.constant 0 : i32
    return %arg0, %c0_i32, %c0_i32_0 : i32, i32, i32
  }
  func.func @transform_16(%arg0: i32) -> (i32, i32, i32) {
    %c0_i32 = arith.constant 0 : i32
    %c0_i32_0 = arith.constant 0 : i32
    %c0_i32_1 = arith.constant 0 : i32
    return %arg0, %c0_i32, %c0_i32_0 : i32, i32, i32
  }
}

</mosaic_0001>

<llo_original>
// kernel: forward.3
$region0: #{forward.3}
  #allocation0 [shape = 'u32[]', space=smem, size = 0x4, offset = 0x4, fixed_abs, tag = 'smem constant byte address 0x4 - core index']
  #allocation1 [shape = 'u32[144,128]{1,0:T(1,128)}', space=vmem, size = 0x12000, scoped, tag = 'internal scratch']
  %s0 = inlined_call_operand.vmem [shape: f32[16,2], index: 0, kind: input, shape index: {}]
  %s1 = inlined_call_operand.vmem [shape: f32[2,50], index: 1, kind: input, shape index: {}]
  %s2 = inlined_call_operand.vmem [shape: f32[1,50], index: 2, kind: input, shape index: {}]
  %s3 = inlined_call_operand.vmem [shape: f32[50,50], index: 3, kind: input, shape index: {}]
  %s4 = inlined_call_operand.vmem [shape: f32[1,50], index: 4, kind: input, shape index: {}]
  %s5 = inlined_call_operand.vmem [shape: f32[50,50], index: 5, kind: input, shape index: {}]
  %s6 = inlined_call_operand.vmem [shape: f32[1,50], index: 6, kind: input, shape index: {}]
  %s7 = inlined_call_operand.vmem [shape: f32[50,8], index: 7, kind: input, shape index: {}]
  %s8 = inlined_call_operand.vmem [shape: f32[1,8], index: 8, kind: input, shape index: {}]
  %s9 = inlined_call_operand.vmem [shape: f32[16,8], index: 9, kind: output, shape index: {}]
  %s10 = sld [smem:[#allocation0]]
  $region46: #{forward.3} parent=0
    _
  %s12 = ssub.s32 1, %s10
  %s13 = scalar_select 0, %s12, %s10
  // Predicated region
  $region2: #{forward.3} parent=0 // pred_check
    _
  $region3: #{forward.3} parent=0 // pred_check_branch
    %15 = sbr.rel (0) target = $region5
  $region4: #{forward.3} parent=0 // pred_region
    _
  $region5: #{forward.3} parent=0 // pred_fallthru
    _
  // Predicated region
  $region6: #{forward.3} parent=0 // pred_check
    _
  $region7: #{forward.3} parent=0 // pred_check_branch
    %17 = sbr.rel (0) target = $region9
  $region8: #{forward.3} parent=0 // pred_region
    _
  $region9: #{forward.3} parent=0 // pred_fallthru
    _
  // Predicated region
  $region10: #{forward.3} parent=0 // pred_check
    _
  $region11: #{forward.3} parent=0 // pred_check_branch
    %19 = sbr.rel (0) target = $region13
  $region12: #{forward.3} parent=0 // pred_region
    _
  $region13: #{forward.3} parent=0 // pred_fallthru
    _
  // Predicated region
  $region14: #{forward.3} parent=0 // pred_check
    _
  $region15: #{forward.3} parent=0 // pred_check_branch
    %21 = sbr.rel (0) target = $region17
  $region16: #{forward.3} parent=0 // pred_region
    _
  $region17: #{forward.3} parent=0 // pred_fallthru
    _
  // Predicated region
  $region18: #{forward.3} parent=0 // pred_check
    _
  $region19: #{forward.3} parent=0 // pred_check_branch
    %23 = sbr.rel (0) target = $region21
  $region20: #{forward.3} parent=0 // pred_region
    _
  $region21: #{forward.3} parent=0 // pred_fallthru
    _
  // Predicated region
  $region22: #{forward.3} parent=0 // pred_check
    _
  $region23: #{forward.3} parent=0 // pred_check_branch
    %25 = sbr.rel (0) target = $region25
  $region24: #{forward.3} parent=0 // pred_region
    _
  $region25: #{forward.3} parent=0 // pred_fallthru
    _
  // Predicated region
  $region26: #{forward.3} parent=0 // pred_check
    _
  $region27: #{forward.3} parent=0 // pred_check_branch
    %27 = sbr.rel (0) target = $region29
  $region28: #{forward.3} parent=0 // pred_region
    _
  $region29: #{forward.3} parent=0 // pred_fallthru
    _
  // Predicated region
  $region30: #{forward.3} parent=0 // pred_check
    _
  $region31: #{forward.3} parent=0 // pred_check_branch
    %29 = sbr.rel (0) target = $region33
  $region32: #{forward.3} parent=0 // pred_region
    _
  $region33: #{forward.3} parent=0 // pred_fallthru
    _
  // Predicated region
  $region34: #{forward.3} parent=0 // pred_check
    _
  $region35: #{forward.3} parent=0 // pred_check_branch
    %31 = sbr.rel (0) target = $region37
  $region36: #{forward.3} parent=0 // pred_region
    _
  $region37: #{forward.3} parent=0 // pred_fallthru
    _
  %v32 = vld [vmem:[%s0] sm:$0xff]
  %v33 = vld [vmem:[%s0 + $0x8] sm:$0xff]
  %v34 = vld [vmem:[%s1] sm:$0x1]
  %36 = vset.pattern.permute.xlu0 0
  %37 = vperm.xlu0 %36, %v32
  %v38 = vpop.permute.xlu0 %37
  %41 = vset.pattern.permute.xlu0 0
  %42 = vperm.xlu0 %41, %v33
  %v43 = vpop.permute.xlu0 %42
  %v45 = vlaneseq
  %v46 = vshrl.u32 %v45, 7
  %v47 = vsub.s32 0, %v46
  %v48 = vrot.slane %v34, %v47
  %v49 = vmul.f32 %v38, %v48
  %v50 = vmul.f32 %v43, %v48
  %v51 = vld [vmem:[%s1 + $0x1] sm:$0x1]
  %52 = vset.pattern.permute.xlu0 1
  %53 = vperm.xlu0 %52, %v32
  %v54 = vpop.permute.xlu0 %53
  %56 = vset.pattern.permute.xlu0 1
  %57 = vperm.xlu0 %56, %v33
  %v58 = vpop.permute.xlu0 %57
  %v60 = vlaneseq
  %v61 = vshrl.u32 %v60, 7
  %v62 = vsub.s32 0, %v61
  %v63 = vrot.slane %v51, %v62
  %v64 = vmul.f32 %v54, %v63
  %v65 = vmul.f32 %v58, %v63
  %v66 = vadd.f32 %v49, %v64
  %v67 = vadd.f32 %v50, %v65
  %v68 = vld [vmem:[%s2] sm:$0x1]
  %v70 = vlaneseq
  %v71 = vshrl.u32 %v70, 7
  %v72 = vsub.s32 0, %v71
  %v73 = vrot.slane %v68, %v72
  %v75 = vadd.f32 %v66, %v73
  %v76 = vadd.f32 %v67, %v73
  %v77 = vtanh.pop %v75
  %v78 = vtanh.pop %v76
  %v79 = vld [vmem:[%s3] sm:$0xff]
  %v80 = vld [vmem:[%s3 + $0x8] sm:$0xff]
  %v81 = vld [vmem:[%s3 + $0x10] sm:$0xff]
  %v82 = vld [vmem:[%s3 + $0x18] sm:$0xff]
  %v83 = vld [vmem:[%s3 + $0x20] sm:$0xff]
  %v84 = vld [vmem:[%s3 + $0x28] sm:$0xff]
  %v85 = vld [vmem:[%s3 + $0x30] sm:$0x3]
  %v86 = vld [vmem:[%s4] sm:$0x1]
  %v88 = vlaneseq
  %v89 = vshrl.u32 %v88, 7
  %v90 = vsub.s32 0, %v89
  %v91 = vrot.slane %v86, %v90
  %vm93 = vcmask 408576
  %v95 = vsel %vm93, %v77, 0
  %v98 = vsel %vm93, %v78, 0
  %vm100 = vcmask 1041408
  %v102 = vsel %vm100, %v85, 0
  %104 = vmatprep.subr.mxu0 0.0
  %105 = vmatpush1.msra.mxu0 %v79
  %106 = vmatprep.subr.mxu0 0.0
  %107 = vmatpush1.msra.mxu0 %v80
  %108 = vmatprep.subr.mxu0 0.0
  %109 = vmatpush1.msra.mxu0 %v81
  %110 = vmatprep.subr.mxu0 0.0
  %111 = vmatpush1.msra.mxu0 %v82
  %112 = vmatprep.subr.mxu0 0.0
  %113 = vmatpush1.msra.mxu0 %v83
  %114 = vmatprep.subr.mxu0 0.0
  %115 = vmatpush1.msra.mxu0 %v84
  %116 = vmatprep.subr.mxu0 0.0
  %117 = vmatpush1.msra.mxu0 %v102
  %118 = vmatprep.subr.mxu0 0.0
  %119 = vmatpush1.msra.mxu0 0.0
  %120 = vmatprep.subr.mxu0 0.0
  %121 = vmatpush1.msra.mxu0 0.0
  %122 = vmatprep.subr.mxu0 0.0
  %123 = vmatpush1.msra.mxu0 0.0
  %124 = vmatprep.subr.mxu0 0.0
  %125 = vmatpush1.msra.mxu0 0.0
  %126 = vmatprep.subr.mxu0 0.0
  %127 = vmatpush1.msra.mxu0 0.0
  %128 = vmatprep.subr.mxu0 0.0
  %129 = vmatpush1.msra.mxu0 0.0
  %130 = vmatprep.subr.mxu0 0.0
  %131 = vmatpush1.msra.mxu0 0.0
  %132 = vmatprep.subr.mxu0 0.0
  %133 = vmatpush1.msra.mxu0 0.0
  %134 = vmatprep.subr.mxu0 0.0
  %135 = vmatpush1.msra.mxu0 0.0
  %136 = vmatprep.subr.mxu0 0.0
  %137 = vmatpush1.msra.mxu0 0.0
  %138 = vmatprep.subr.mxu0 0.0
  %139 = vmatpush1.msra.mxu0 0.0
  %140 = vmatprep.subr.mxu0 0.0
  %141 = vmatpush1.msra.mxu0 0.0
  %142 = vmatprep.subr.mxu0 0.0
  %143 = vmatpush1.msra.mxu0 0.0
  %144 = vmatprep.subr.mxu0 0.0
  %145 = vmatpush1.msra.mxu0 0.0
  %146 = vmatprep.subr.mxu0 0.0
  %147 = vmatpush1.msra.mxu0 0.0
  %148 = vmatprep.subr.mxu0 0.0
  %149 = vmatpush1.msra.mxu0 0.0
  %150 = vmatprep.subr.mxu0 0.0
  %151 = vmatpush1.msra.mxu0 0.0
  %152 = vmatprep.subr.mxu0 0.0
  %153 = vmatpush1.msra.mxu0 0.0
  %154 = vmatprep.subr.mxu0 0.0
  %155 = vmatpush1.msra.mxu0 0.0
  %156 = vmatprep.subr.mxu0 0.0
  %157 = vmatpush1.msra.mxu0 0.0
  %158 = vmatprep.subr.mxu0 0.0
  %159 = vmatpush1.msra.mxu0 0.0
  %160 = vmatprep.subr.mxu0 0.0
  %161 = vmatpush1.msra.mxu0 0.0
  %162 = vmatprep.subr.mxu0 0.0
  %163 = vmatpush1.msra.mxu0 0.0
  %164 = vmatprep.subr.mxu0 0.0
  %165 = vmatpush1.msra.mxu0 0.0
  %166 = vmatprep.subr.mxu0 0.0
  %167 = vmatpush1.msra.mxu0 0.0
  %168 = vmatprep.mubr.f32.mxu0 0.0
  %169 = vmatmul.mubr.f32.gmra.mrb[0].mxu0 %v95
  %v170 = vpop.f32.mrb[0].mxu0
  %v171 = vadd.f32 %v91, %v170
  %v172 = vpop.f32.mrb[0].mxu0
  %173 = vmatprep.mubr.f32.mxu0 0.0
  %174 = vmatmul.mubr.f32.gmra.mrb[0].mxu0 %v98
  %v175 = vpop.f32.mrb[0].mxu0
  %v176 = vadd.f32 %v91, %v175
  %v177 = vpop.f32.mrb[0].mxu0
  %178 = vdwg.mxu0
  %v179 = vtanh.pop %v171
  %v180 = vtanh.pop %v176
  %v181 = vld [vmem:[%s5] sm:$0xff]
  %v182 = vld [vmem:[%s5 + $0x8] sm:$0xff]
  %v183 = vld [vmem:[%s5 + $0x10] sm:$0xff]
  %v184 = vld [vmem:[%s5 + $0x18] sm:$0xff]
  %v185 = vld [vmem:[%s5 + $0x20] sm:$0xff]
  %v186 = vld [vmem:[%s5 + $0x28] sm:$0xff]
  %v187 = vld [vmem:[%s5 + $0x30] sm:$0x3]
  %v188 = vld [vmem:[%s6] sm:$0x1]
  %v190 = vlaneseq
  %v191 = vshrl.u32 %v190, 7
  %v192 = vsub.s32 0, %v191
  %v193 = vrot.slane %v188, %v192
  %v196 = vsel %vm93, %v179, 0
  %v199 = vsel %vm93, %v180, 0
  %v202 = vsel %vm100, %v187, 0
  %204 = vmatprep.subr.mxu0 0.0
  %205 = vmatpush1.msra.mxu0 %v181
  %206 = vmatprep.subr.mxu0 0.0
  %207 = vmatpush1.msra.mxu0 %v182
  %208 = vmatprep.subr.mxu0 0.0
  %209 = vmatpush1.msra.mxu0 %v183
  %210 = vmatprep.subr.mxu0 0.0
  %211 = vmatpush1.msra.mxu0 %v184
  %212 = vmatprep.subr.mxu0 0.0
  %213 = vmatpush1.msra.mxu0 %v185
  %214 = vmatprep.subr.mxu0 0.0
  %215 = vmatpush1.msra.mxu0 %v186
  %216 = vmatprep.subr.mxu0 0.0
  %217 = vmatpush1.msra.mxu0 %v202
  %218 = vmatprep.subr.mxu0 0.0
  %219 = vmatpush1.msra.mxu0 0.0
  %220 = vmatprep.subr.mxu0 0.0
  %221 = vmatpush1.msra.mxu0 0.0
  %222 = vmatprep.subr.mxu0 0.0
  %223 = vmatpush1.msra.mxu0 0.0
  %224 = vmatprep.subr.mxu0 0.0
  %225 = vmatpush1.msra.mxu0 0.0
  %226 = vmatprep.subr.mxu0 0.0
  %227 = vmatpush1.msra.mxu0 0.0
  %228 = vmatprep.subr.mxu0 0.0
  %229 = vmatpush1.msra.mxu0 0.0
  %230 = vmatprep.subr.mxu0 0.0
  %231 = vmatpush1.msra.mxu0 0.0
  %232 = vmatprep.subr.mxu0 0.0
  %233 = vmatpush1.msra.mxu0 0.0
  %234 = vmatprep.subr.mxu0 0.0
  %235 = vmatpush1.msra.mxu0 0.0
  %236 = vmatprep.subr.mxu0 0.0
  %237 = vmatpush1.msra.mxu0 0.0
  %238 = vmatprep.subr.mxu0 0.0
  %239 = vmatpush1.msra.mxu0 0.0
  %240 = vmatprep.subr.mxu0 0.0
  %241 = vmatpush1.msra.mxu0 0.0
  %242 = vmatprep.subr.mxu0 0.0
  %243 = vmatpush1.msra.mxu0 0.0
  %244 = vmatprep.subr.mxu0 0.0
  %245 = vmatpush1.msra.mxu0 0.0
  %246 = vmatprep.subr.mxu0 0.0
  %247 = vmatpush1.msra.mxu0 0.0
  %248 = vmatprep.subr.mxu0 0.0
  %249 = vmatpush1.msra.mxu0 0.0
  %250 = vmatprep.subr.mxu0 0.0
  %251 = vmatpush1.msra.mxu0 0.0
  %252 = vmatprep.subr.mxu0 0.0
  %253 = vmatpush1.msra.mxu0 0.0
  %254 = vmatprep.subr.mxu0 0.0
  %255 = vmatpush1.msra.mxu0 0.0
  %256 = vmatprep.subr.mxu0 0.0
  %257 = vmatpush1.msra.mxu0 0.0
  %258 = vmatprep.subr.mxu0 0.0
  %259 = vmatpush1.msra.mxu0 0.0
  %260 = vmatprep.subr.mxu0 0.0
  %261 = vmatpush1.msra.mxu0 0.0
  %262 = vmatprep.subr.mxu0 0.0
  %263 = vmatpush1.msra.mxu0 0.0
  %264 = vmatprep.subr.mxu0 0.0
  %265 = vmatpush1.msra.mxu0 0.0
  %266 = vmatprep.subr.mxu0 0.0
  %267 = vmatpush1.msra.mxu0 0.0
  %268 = vmatprep.mubr.f32.mxu0 0.0
  %269 = vmatmul.mubr.f32.gmra.mrb[0].mxu0 %v196
  %v270 = vpop.f32.mrb[0].mxu0
  %v271 = vadd.f32 %v193, %v270
  %v272 = vpop.f32.mrb[0].mxu0
  %273 = vmatprep.mubr.f32.mxu0 0.0
  %274 = vmatmul.mubr.f32.gmra.mrb[0].mxu0 %v199
  %v275 = vpop.f32.mrb[0].mxu0
  %v276 = vadd.f32 %v193, %v275
  %v277 = vpop.f32.mrb[0].mxu0
  %278 = vdwg.mxu0
  %v279 = vtanh.pop %v271
  %v280 = vtanh.pop %v276
  %v281 = vld [vmem:[%s7] sm:$0xff]
  %v282 = vld [vmem:[%s7 + $0x8] sm:$0xff]
  %v283 = vld [vmem:[%s7 + $0x10] sm:$0xff]
  %v284 = vld [vmem:[%s7 + $0x18] sm:$0xff]
  %v285 = vld [vmem:[%s7 + $0x20] sm:$0xff]
  %v286 = vld [vmem:[%s7 + $0x28] sm:$0xff]
  %v287 = vld [vmem:[%s7 + $0x30] sm:$0x3]
  %v288 = vld [vmem:[%s8] sm:$0x1]
  %v290 = vlaneseq
  %v291 = vshrl.u32 %v290, 7
  %v292 = vsub.s32 0, %v291
  %v293 = vrot.slane %v288, %v292
  %v296 = vsel %vm93, %v279, 0
  %v299 = vsel %vm93, %v280, 0
  %v302 = vsel %vm100, %v287, 0
  %304 = vmatprep.subr.mxu0 0.0
  %305 = vmatpush1.msra.mxu0 %v281
  %306 = vmatprep.subr.mxu0 0.0
  %307 = vmatpush1.msra.mxu0 %v282
  %308 = vmatprep.subr.mxu0 0.0
  %309 = vmatpush1.msra.mxu0 %v283
  %310 = vmatprep.subr.mxu0 0.0
  %311 = vmatpush1.msra.mxu0 %v284
  %312 = vmatprep.subr.mxu0 0.0
  %313 = vmatpush1.msra.mxu0 %v285
  %314 = vmatprep.subr.mxu0 0.0
  %315 = vmatpush1.msra.mxu0 %v286
  %316 = vmatprep.subr.mxu0 0.0
  %317 = vmatpush1.msra.mxu0 %v302
  %318 = vmatprep.subr.mxu0 0.0
  %319 = vmatpush1.msra.mxu0 0.0
  %320 = vmatprep.subr.mxu0 0.0
  %321 = vmatpush1.msra.mxu0 0.0
  %322 = vmatprep.subr.mxu0 0.0
  %323 = vmatpush1.msra.mxu0 0.0
  %324 = vmatprep.subr.mxu0 0.0
  %325 = vmatpush1.msra.mxu0 0.0
  %326 = vmatprep.subr.mxu0 0.0
  %327 = vmatpush1.msra.mxu0 0.0
  %328 = vmatprep.subr.mxu0 0.0
  %329 = vmatpush1.msra.mxu0 0.0
  %330 = vmatprep.subr.mxu0 0.0
  %331 = vmatpush1.msra.mxu0 0.0
  %332 = vmatprep.subr.mxu0 0.0
  %333 = vmatpush1.msra.mxu0 0.0
  %334 = vmatprep.subr.mxu0 0.0
  %335 = vmatpush1.msra.mxu0 0.0
  %336 = vmatprep.subr.mxu0 0.0
  %337 = vmatpush1.msra.mxu0 0.0
  %338 = vmatprep.subr.mxu0 0.0
  %339 = vmatpush1.msra.mxu0 0.0
  %340 = vmatprep.subr.mxu0 0.0
  %341 = vmatpush1.msra.mxu0 0.0
  %342 = vmatprep.subr.mxu0 0.0
  %343 = vmatpush1.msra.mxu0 0.0
  %344 = vmatprep.subr.mxu0 0.0
  %345 = vmatpush1.msra.mxu0 0.0
  %346 = vmatprep.subr.mxu0 0.0
  %347 = vmatpush1.msra.mxu0 0.0
  %348 = vmatprep.subr.mxu0 0.0
  %349 = vmatpush1.msra.mxu0 0.0
  %350 = vmatprep.subr.mxu0 0.0
  %351 = vmatpush1.msra.mxu0 0.0
  %352 = vmatprep.subr.mxu0 0.0
  %353 = vmatpush1.msra.mxu0 0.0
  %354 = vmatprep.subr.mxu0 0.0
  %355 = vmatpush1.msra.mxu0 0.0
  %356 = vmatprep.subr.mxu0 0.0
  %357 = vmatpush1.msra.mxu0 0.0
  %358 = vmatprep.subr.mxu0 0.0
  %359 = vmatpush1.msra.mxu0 0.0
  %360 = vmatprep.subr.mxu0 0.0
  %361 = vmatpush1.msra.mxu0 0.0
  %362 = vmatprep.subr.mxu0 0.0
  %363 = vmatpush1.msra.mxu0 0.0
  %364 = vmatprep.subr.mxu0 0.0
  %365 = vmatpush1.msra.mxu0 0.0
  %366 = vmatprep.subr.mxu0 0.0
  %367 = vmatpush1.msra.mxu0 0.0
  %368 = vmatprep.mubr.f32.mxu0 0.0
  %369 = vmatmul.mubr.f32.gmra.mrb[0].mxu0 %v296
  %v370 = vpop.f32.mrb[0].mxu0
  %v371 = vadd.f32 %v293, %v370
  %v372 = vpop.f32.mrb[0].mxu0
  %373 = vmatprep.mubr.f32.mxu0 0.0
  %374 = vmatmul.mubr.f32.gmra.mrb[0].mxu0 %v299
  %v375 = vpop.f32.mrb[0].mxu0
  %v376 = vadd.f32 %v293, %v375
  %v377 = vpop.f32.mrb[0].mxu0
  %378 = vdwg.mxu0
  %v379 = vxor.u32 %v371, 2147483648
  %v380 = vxor.u32 %v376, 2147483648
  %v381 = vmul.f32 %v379, 1.442695
  %v382 = vpow.pop %v381
  %v383 = vmul.f32 %v380, 1.442695
  %v384 = vpow.pop %v383
  %v385 = vadd.f32 %v382, 1.0
  %v386 = vadd.f32 %v384, 1.0
  %v387 = vrcp.pop %v385
  %v388 = vmul.f32 1.0, %v387
  %v389 = vrcp.pop %v386
  %v390 = vmul.f32 1.0, %v389
  %vm391 = vcmask 64512
  %392 = vst.msk [vmem:[%s9] sm:$0xff] %vm391, %v388
  %393 = vst.msk [vmem:[%s9 + $0x8] sm:$0xff] %vm391, %v390
  // Predicated region
  $region38: #{forward.3} parent=0 // pred_check
    _
  $region39: #{forward.3} parent=0 // pred_check_branch
    %395 = sbr.rel (0) target = $region41
  $region40: #{forward.3} parent=0 // pred_region
    _
  $region41: #{forward.3} parent=0 // pred_fallthru
    _
  // Predicated region
  $region42: #{forward.3} parent=0 // pred_check
    _
  $region43: #{forward.3} parent=0 // pred_check_branch
    %397 = sbr.rel (0) target = $region45
  $region44: #{forward.3} parent=0 // pred_region
    _
  $region45: #{forward.3} parent=0 // pred_fallthru
    _

// kernel: forward.5
$region0: #{forward.5}
  #allocation0 [shape = 'u32[]', space=smem, size = 0x4, offset = 0x4, fixed_abs, tag = 'smem constant byte address 0x4 - core index']
  #allocation1 [shape = 'u32[144,128]{1,0:T(1,128)}', space=vmem, size = 0x12000, scoped, tag = 'internal scratch']
  %s0 = inlined_call_operand.vmem [shape: f32[2,9,16], index: 0, kind: input, shape index: {}]
  %s1 = inlined_call_operand.vmem [shape: f32[2,1,144], index: 1, kind: input, shape index: {}]
  %s2 = inlined_call_operand.vmem [shape: f32[2,8,8], index: 2, kind: input, shape index: {}]
  %s3 = inlined_call_operand.vmem [shape: f32[9,16], index: 3, kind: input, shape index: {}]
  %s4 = inlined_call_operand.vmem [shape: f32[1,16], index: 4, kind: input, shape index: {}]
  %s5 = inlined_call_operand.vmem [shape: f32[9,16], index: 5, kind: input, shape index: {}]
  %s6 = inlined_call_operand.vmem [shape: f32[1,16], index: 6, kind: input, shape index: {}]
  %s7 = inlined_call_operand.vmem [shape: f32[9,16], index: 7, kind: input, shape index: {}]
  %s8 = inlined_call_operand.vmem [shape: f32[1,16], index: 8, kind: input, shape index: {}]
  %s9 = inlined_call_operand.vmem [shape: f32[144,450], index: 9, kind: input, shape index: {}]
  %s10 = inlined_call_operand.vmem [shape: f32[1,450], index: 10, kind: input, shape index: {}]
  %s11 = inlined_call_operand.vmem [shape: f32[450,450], index: 11, kind: input, shape index: {}]
  %s12 = inlined_call_operand.vmem [shape: f32[1,450], index: 12, kind: input, shape index: {}]
  %s13 = inlined_call_operand.vmem [shape: f32[450,72], index: 13, kind: input, shape index: {}]
  %s14 = inlined_call_operand.vmem [shape: f32[1,72], index: 14, kind: input, shape index: {}]
  %s15 = inlined_call_operand.vmem [shape: f32[2,9,8], index: 15, kind: output, shape index: {0}]
  %s16 = inlined_call_operand.vmem [shape: f32[2,9,8], index: 16, kind: output, shape index: {1}]
  %17 = xla_tuple %s15, %s16
  %s18 = sld [smem:[#allocation0]]
  $region101: #{forward.5} parent=0
    _
  %s20 = ssub.s32 1, %s18
  %s21 = scalar_select 0, %s20, %s18
  loop: start=0, step=1, limit=4
  $region2: #{forward.5} parent=0 // loop_pre_header
    _
  $region3: #{forward.5} parent=0 // loop_header
    %s23 = sphi 0, %s27
    %p24 = scmp.ge.s32.totalorder %s23, 4
    %s33 = sphi 0, %s35
    %s36 = sphi 0, %s33
    %s37 = sphi 0, %s36
    %s53 = sphi 0, %s37
    %s59 = sphi 0, %s61
    %s62 = sphi 0, %s59
    %s63 = sphi 0, %s62
    %s79 = sphi 0, %s63
    %s85 = sphi 0, %s87
    %s88 = sphi 0, %s85
    %s89 = sphi 0, %s88
    %s105 = sphi 0, %s89
    %s109 = sphi 0, %s109
    %s111 = sphi 0, %s109
    %s112 = sphi 0, %s111
    %s126 = sphi 0, %s112
    %s130 = sphi 0, %s130
    %s132 = sphi 0, %s130
    %s133 = sphi 0, %s132
    %s147 = sphi 0, %s133
    %s151 = sphi 0, %s151
    %s153 = sphi 0, %s151
    %s154 = sphi 0, %s153
    %s168 = sphi 0, %s154
    %s172 = sphi 0, %s172
    %s174 = sphi 0, %s172
    %s175 = sphi 0, %s174
    %s189 = sphi 0, %s175
    %s193 = sphi 0, %s193
    %s195 = sphi 0, %s193
    %s196 = sphi 0, %s195
    %s210 = sphi 0, %s196
    %s214 = sphi 0, %s214
    %s216 = sphi 0, %s214
    %s217 = sphi 0, %s216
    %s231 = sphi 0, %s217
    %s235 = sphi 0, %s235
    %s237 = sphi 0, %s235
    %s238 = sphi 0, %s237
    %s252 = sphi 0, %s238
    %s256 = sphi 0, %s256
    %s258 = sphi 0, %s256
    %s259 = sphi 0, %s258
    %s273 = sphi 0, %s259
    %s277 = sphi 0, %s277
    %s279 = sphi 0, %s277
    %s280 = sphi 0, %s279
    %s294 = sphi 0, %s280
    %s298 = sphi 0, %s298
    %s300 = sphi 0, %s298
    %s301 = sphi 0, %s300
    %s315 = sphi 0, %s301
    %s319 = sphi 0, %s319
    %s321 = sphi 0, %s319
    %s322 = sphi 0, %s321
    %s336 = sphi 0, %s322
    %s340 = sphi 0, %s340
    %s342 = sphi 0, %s340
    %s343 = sphi 0, %s342
    %s357 = sphi 0, %s343
    %s363 = sphi 0, %s365
    %s366 = sphi 0, %s363
    %s367 = sphi 0, %s366
    %s383 = sphi 0, %s367
    %s389 = sphi 0, %s391
    %s392 = sphi 0, %s389
    %s393 = sphi 0, %s392
    %s409 = sphi 0, %s393
  $region4: #{forward.5} parent=0 // loop_header_branch
    %26 = sbr.rel (%p24) target = $region8
  $region5: #{forward.5} parent=0 // loop_body
    %s28 = ssub.s32 %s23, 1
    %s29 = ssub.s32 %s23, 2
    %s30 = sadd.s32 %s23, 1
    %s31 = ssub.s32 %s23, %s30
    %p32 = scmp.eq.s32.totalorder %s31, 0
    %s34 = sadd.s32 %s33, 1
    %s35 = scalar_select %p32, %s33, %s34
    %p38 = pneg %p32
    %p39 = scmp.eq.s32.totalorder %s23, 1
    %p40 = por %p38, %p39
    %p41 = scmp.ne.s32.totalorder %s33, %s36
    %p42 = scmp.eq.s32.totalorder %s23, 0
    %p43 = por %p41, %p42
    %p44 = scmp.ne.s32.totalorder %s33, %s36
    %p45 = scmp.eq.s32.totalorder %s28, 1
    %p46 = por %p44, %p45
    %p47 = scmp.ne.s32.totalorder %s36, %s37
    %p48 = scmp.eq.s32.totalorder %s28, 0
    %p49 = por %p47, %p48
    %p50 = scmp.ne.s32.totalorder %s36, %s37
    %p51 = scmp.eq.s32.totalorder %s29, 1
    %p52 = por %p50, %p51
    %p54 = scmp.ne.s32.totalorder %s37, %s53
    %p55 = scmp.eq.s32.totalorder %s29, 0
    %p56 = por %p54, %p55
    %s57 = ssub.s32 %s23, %s30
    %p58 = scmp.eq.s32.totalorder %s57, 0
    %s60 = sadd.s32 %s59, 1
    %s61 = scalar_select %p58, %s59, %s60
    %p64 = pneg %p58
    %p65 = scmp.eq.s32.totalorder %s23, 1
    %p66 = por %p64, %p65
    %p67 = scmp.ne.s32.totalorder %s59, %s62
    %p68 = scmp.eq.s32.totalorder %s23, 0
    %p69 = por %p67, %p68
    %p70 = scmp.ne.s32.totalorder %s59, %s62
    %p71 = scmp.eq.s32.totalorder %s28, 1
    %p72 = por %p70, %p71
    %p73 = scmp.ne.s32.totalorder %s62, %s63
    %p74 = scmp.eq.s32.totalorder %s28, 0
    %p75 = por %p73, %p74
    %p76 = scmp.ne.s32.totalorder %s62, %s63
    %p77 = scmp.eq.s32.totalorder %s29, 1
    %p78 = por %p76, %p77
    %p80 = scmp.ne.s32.totalorder %s63, %s79
    %p81 = scmp.eq.s32.totalorder %s29, 0
    %p82 = por %p80, %p81
    %s83 = ssub.s32 %s23, %s30
    %p84 = scmp.eq.s32.totalorder %s83, 0
    %s86 = sadd.s32 %s85, 1
    %s87 = scalar_select %p84, %s85, %s86
    %p90 = pneg %p84
    %p91 = scmp.eq.s32.totalorder %s23, 1
    %p92 = por %p90, %p91
    %p93 = scmp.ne.s32.totalorder %s85, %s88
    %p94 = scmp.eq.s32.totalorder %s23, 0
    %p95 = por %p93, %p94
    %p96 = scmp.ne.s32.totalorder %s85, %s88
    %p97 = scmp.eq.s32.totalorder %s28, 1
    %p98 = por %p96, %p97
    %p99 = scmp.ne.s32.totalorder %s88, %s89
    %p100 = scmp.eq.s32.totalorder %s28, 0
    %p101 = por %p99, %p100
    %p102 = scmp.ne.s32.totalorder %s88, %s89
    %p103 = scmp.eq.s32.totalorder %s29, 1
    %p104 = por %p102, %p103
    %p106 = scmp.ne.s32.totalorder %s89, %s105
    %p107 = scmp.eq.s32.totalorder %s29, 0
    %p108 = por %p106, %p107
    %s110 = sadd.s32 %s109, 1
    %p113 = scmp.eq.s32.totalorder %s23, 1
    %p114 = scmp.ne.s32.totalorder %s109, %s111
    %p115 = scmp.eq.s32.totalorder %s23, 0
    %p116 = por %p114, %p115
    %p117 = scmp.ne.s32.totalorder %s109, %s111
    %p118 = scmp.eq.s32.totalorder %s28, 1
    %p119 = por %p117, %p118
    %p120 = scmp.ne.s32.totalorder %s111, %s112
    %p121 = scmp.eq.s32.totalorder %s28, 0
    %p122 = por %p120, %p121
    %p123 = scmp.ne.s32.totalorder %s111, %s112
    %p124 = scmp.eq.s32.totalorder %s29, 1
    %p125 = por %p123, %p124
    %p127 = scmp.ne.s32.totalorder %s112, %s126
    %p128 = scmp.eq.s32.totalorder %s29, 0
    %p129 = por %p127, %p128
    %s131 = sadd.s32 %s130, 1
    %p134 = scmp.eq.s32.totalorder %s23, 1
    %p135 = scmp.ne.s32.totalorder %s130, %s132
    %p136 = scmp.eq.s32.totalorder %s23, 0
    %p137 = por %p135, %p136
    %p138 = scmp.ne.s32.totalorder %s130, %s132
    %p139 = scmp.eq.s32.totalorder %s28, 1
    %p140 = por %p138, %p139
    %p141 = scmp.ne.s32.totalorder %s132, %s133
    %p142 = scmp.eq.s32.totalorder %s28, 0
    %p143 = por %p141, %p142
    %p144 = scmp.ne.s32.totalorder %s132, %s133
    %p145 = scmp.eq.s32.totalorder %s29, 1
    %p146 = por %p144, %p145
    %p148 = scmp.ne.s32.totalorder %s133, %s147
    %p149 = scmp.eq.s32.totalorder %s29, 0
    %p150 = por %p148, %p149
    %s152 = sadd.s32 %s151, 1
    %p155 = scmp.eq.s32.totalorder %s23, 1
    %p156 = scmp.ne.s32.totalorder %s151, %s153
    %p157 = scmp.eq.s32.totalorder %s23, 0
    %p158 = por %p156, %p157
    %p159 = scmp.ne.s32.totalorder %s151, %s153
    %p160 = scmp.eq.s32.totalorder %s28, 1
    %p161 = por %p159, %p160
    %p162 = scmp.ne.s32.totalorder %s153, %s154
    %p163 = scmp.eq.s32.totalorder %s28, 0
    %p164 = por %p162, %p163
    %p165 = scmp.ne.s32.totalorder %s153, %s154
    %p166 = scmp.eq.s32.totalorder %s29, 1
    %p167 = por %p165, %p166
    %p169 = scmp.ne.s32.totalorder %s154, %s168
    %p170 = scmp.eq.s32.totalorder %s29, 0
    %p171 = por %p169, %p170
    %s173 = sadd.s32 %s172, 1
    %p176 = scmp.eq.s32.totalorder %s23, 1
    %p177 = scmp.ne.s32.totalorder %s172, %s174
    %p178 = scmp.eq.s32.totalorder %s23, 0
    %p179 = por %p177, %p178
    %p180 = scmp.ne.s32.totalorder %s172, %s174
    %p181 = scmp.eq.s32.totalorder %s28, 1
    %p182 = por %p180, %p181
    %p183 = scmp.ne.s32.totalorder %s174, %s175
    %p184 = scmp.eq.s32.totalorder %s28, 0
    %p185 = por %p183, %p184
    %p186 = scmp.ne.s32.totalorder %s174, %s175
    %p187 = scmp.eq.s32.totalorder %s29, 1
    %p188 = por %p186, %p187
    %p190 = scmp.ne.s32.totalorder %s175, %s189
    %p191 = scmp.eq.s32.totalorder %s29, 0
    %p192 = por %p190, %p191
    %s194 = sadd.s32 %s193, 1
    %p197 = scmp.eq.s32.totalorder %s23, 1
    %p198 = scmp.ne.s32.totalorder %s193, %s195
    %p199 = scmp.eq.s32.totalorder %s23, 0
    %p200 = por %p198, %p199
    %p201 = scmp.ne.s32.totalorder %s193, %s195
    %p202 = scmp.eq.s32.totalorder %s28, 1
    %p203 = por %p201, %p202
    %p204 = scmp.ne.s32.totalorder %s195, %s196
    %p205 = scmp.eq.s32.totalorder %s28, 0
    %p206 = por %p204, %p205
    %p207 = scmp.ne.s32.totalorder %s195, %s196
    %p208 = scmp.eq.s32.totalorder %s29, 1
    %p209 = por %p207, %p208
    %p211 = scmp.ne.s32.totalorder %s196, %s210
    %p212 = scmp.eq.s32.totalorder %s29, 0
    %p213 = por %p211, %p212
    %s215 = sadd.s32 %s214, 1
    %p218 = scmp.eq.s32.totalorder %s23, 1
    %p219 = scmp.ne.s32.totalorder %s214, %s216
    %p220 = scmp.eq.s32.totalorder %s23, 0
    %p221 = por %p219, %p220
    %p222 = scmp.ne.s32.totalorder %s214, %s216
    %p223 = scmp.eq.s32.totalorder %s28, 1
    %p224 = por %p222, %p223
    %p225 = scmp.ne.s32.totalorder %s216, %s217
    %p226 = scmp.eq.s32.totalorder %s28, 0
    %p227 = por %p225, %p226
    %p228 = scmp.ne.s32.totalorder %s216, %s217
    %p229 = scmp.eq.s32.totalorder %s29, 1
    %p230 = por %p228, %p229
    %p232 = scmp.ne.s32.totalorder %s217, %s231
    %p233 = scmp.eq.s32.totalorder %s29, 0
    %p234 = por %p232, %p233
    %s236 = sadd.s32 %s235, 1
    %p239 = scmp.eq.s32.totalorder %s23, 1
    %p240 = scmp.ne.s32.totalorder %s235, %s237
    %p241 = scmp.eq.s32.totalorder %s23, 0
    %p242 = por %p240, %p241
    %p243 = scmp.ne.s32.totalorder %s235, %s237
    %p244 = scmp.eq.s32.totalorder %s28, 1
    %p245 = por %p243, %p244
    %p246 = scmp.ne.s32.totalorder %s237, %s238
    %p247 = scmp.eq.s32.totalorder %s28, 0
    %p248 = por %p246, %p247
    %p249 = scmp.ne.s32.totalorder %s237, %s238
    %p250 = scmp.eq.s32.totalorder %s29, 1
    %p251 = por %p249, %p250
    %p253 = scmp.ne.s32.totalorder %s238, %s252
    %p254 = scmp.eq.s32.totalorder %s29, 0
    %p255 = por %p253, %p254
    %s257 = sadd.s32 %s256, 1
    %p260 = scmp.eq.s32.totalorder %s23, 1
    %p261 = scmp.ne.s32.totalorder %s256, %s258
    %p262 = scmp.eq.s32.totalorder %s23, 0
    %p263 = por %p261, %p262
    %p264 = scmp.ne.s32.totalorder %s256, %s258
    %p265 = scmp.eq.s32.totalorder %s28, 1
    %p266 = por %p264, %p265
    %p267 = scmp.ne.s32.totalorder %s258, %s259
    %p268 = scmp.eq.s32.totalorder %s28, 0
    %p269 = por %p267, %p268
    %p270 = scmp.ne.s32.totalorder %s258, %s259
    %p271 = scmp.eq.s32.totalorder %s29, 1
    %p272 = por %p270, %p271
    %p274 = scmp.ne.s32.totalorder %s259, %s273
    %p275 = scmp.eq.s32.totalorder %s29, 0
    %p276 = por %p274, %p275
    %s278 = sadd.s32 %s277, 1
    %p281 = scmp.eq.s32.totalorder %s23, 1
    %p282 = scmp.ne.s32.totalorder %s277, %s279
    %p283 = scmp.eq.s32.totalorder %s23, 0
    %p284 = por %p282, %p283
    %p285 = scmp.ne.s32.totalorder %s277, %s279
    %p286 = scmp.eq.s32.totalorder %s28, 1
    %p287 = por %p285, %p286
    %p288 = scmp.ne.s32.totalorder %s279, %s280
    %p289 = scmp.eq.s32.totalorder %s28, 0
    %p290 = por %p288, %p289
    %p291 = scmp.ne.s32.totalorder %s279, %s280
    %p292 = scmp.eq.s32.totalorder %s29, 1
    %p293 = por %p291, %p292
    %p295 = scmp.ne.s32.totalorder %s280, %s294
    %p296 = scmp.eq.s32.totalorder %s29, 0
    %p297 = por %p295, %p296
    %s299 = sadd.s32 %s298, 1
    %p302 = scmp.eq.s32.totalorder %s23, 1
    %p303 = scmp.ne.s32.totalorder %s298, %s300
    %p304 = scmp.eq.s32.totalorder %s23, 0
    %p305 = por %p303, %p304
    %p306 = scmp.ne.s32.totalorder %s298, %s300
    %p307 = scmp.eq.s32.totalorder %s28, 1
    %p308 = por %p306, %p307
    %p309 = scmp.ne.s32.totalorder %s300, %s301
    %p310 = scmp.eq.s32.totalorder %s28, 0
    %p311 = por %p309, %p310
    %p312 = scmp.ne.s32.totalorder %s300, %s301
    %p313 = scmp.eq.s32.totalorder %s29, 1
    %p314 = por %p312, %p313
    %p316 = scmp.ne.s32.totalorder %s301, %s315
    %p317 = scmp.eq.s32.totalorder %s29, 0
    %p318 = por %p316, %p317
    %s320 = sadd.s32 %s319, 1
    %p323 = scmp.eq.s32.totalorder %s23, 1
    %p324 = scmp.ne.s32.totalorder %s319, %s321
    %p325 = scmp.eq.s32.totalorder %s23, 0
    %p326 = por %p324, %p325
    %p327 = scmp.ne.s32.totalorder %s319, %s321
    %p328 = scmp.eq.s32.totalorder %s28, 1
    %p329 = por %p327, %p328
    %p330 = scmp.ne.s32.totalorder %s321, %s322
    %p331 = scmp.eq.s32.totalorder %s28, 0
    %p332 = por %p330, %p331
    %p333 = scmp.ne.s32.totalorder %s321, %s322
    %p334 = scmp.eq.s32.totalorder %s29, 1
    %p335 = por %p333, %p334
    %p337 = scmp.ne.s32.totalorder %s322, %s336
    %p338 = scmp.eq.s32.totalorder %s29, 0
    %p339 = por %p337, %p338
    %s341 = sadd.s32 %s340, 1
    %p344 = scmp.eq.s32.totalorder %s23, 1
    %p345 = scmp.ne.s32.totalorder %s340, %s342
    %p346 = scmp.eq.s32.totalorder %s23, 0
    %p347 = por %p345, %p346
    %p348 = scmp.ne.s32.totalorder %s340, %s342
    %p349 = scmp.eq.s32.totalorder %s28, 1
    %p350 = por %p348, %p349
    %p351 = scmp.ne.s32.totalorder %s342, %s343
    %p352 = scmp.eq.s32.totalorder %s28, 0
    %p353 = por %p351, %p352
    %p354 = scmp.ne.s32.totalorder %s342, %s343
    %p355 = scmp.eq.s32.totalorder %s29, 1
    %p356 = por %p354, %p355
    %p358 = scmp.ne.s32.totalorder %s343, %s357
    %p359 = scmp.eq.s32.totalorder %s29, 0
    %p360 = por %p358, %p359
    %s361 = ssub.s32 %s23, %s30
    %p362 = scmp.eq.s32.totalorder %s361, 0
    %s364 = sadd.s32 %s363, 1
    %s365 = scalar_select %p362, %s363, %s364
    %p368 = pneg %p362
    %p369 = scmp.eq.s32.totalorder %s23, 1
    %p370 = por %p368, %p369
    %p371 = scmp.ne.s32.totalorder %s363, %s366
    %p372 = scmp.eq.s32.totalorder %s23, 0
    %p373 = por %p371, %p372
    %p374 = scmp.ne.s32.totalorder %s363, %s366
    %p375 = scmp.eq.s32.totalorder %s28, 1
    %p376 = por %p374, %p375
    %p377 = scmp.ne.s32.totalorder %s366, %s367
    %p378 = scmp.eq.s32.totalorder %s28, 0
    %p379 = por %p377, %p378
    %p380 = scmp.ne.s32.totalorder %s366, %s367
    %p381 = scmp.eq.s32.totalorder %s29, 1
    %p382 = por %p380, %p381
    %p384 = scmp.ne.s32.totalorder %s367, %s383
    %p385 = scmp.eq.s32.totalorder %s29, 0
    %p386 = por %p384, %p385
    %s387 = ssub.s32 %s23, %s30
    %p388 = scmp.eq.s32.totalorder %s387, 0
    %s390 = sadd.s32 %s389, 1
    %s391 = scalar_select %p388, %s389, %s390
    %p394 = pneg %p388
    %p395 = scmp.eq.s32.totalorder %s23, 1
    %p396 = por %p394, %p395
    %p397 = scmp.ne.s32.totalorder %s389, %s392
    %p398 = scmp.eq.s32.totalorder %s23, 0
    %p399 = por %p397, %p398
    %p400 = scmp.ne.s32.totalorder %s389, %s392
    %p401 = scmp.eq.s32.totalorder %s28, 1
    %p402 = por %p400, %p401
    %p403 = scmp.ne.s32.totalorder %s392, %s393
    %p404 = scmp.eq.s32.totalorder %s28, 0
    %p405 = por %p403, %p404
    %p406 = scmp.ne.s32.totalorder %s392, %s393
    %p407 = scmp.eq.s32.totalorder %s29, 1
    %p408 = por %p406, %p407
    %p410 = scmp.ne.s32.totalorder %s393, %s409
    %p411 = scmp.eq.s32.totalorder %s29, 0
    %p412 = por %p410, %p411
    %p413 = scmp.le.s32.totalorder 1, %s23
    %p414 = scmp.lt.s32.totalorder %s23, 3
    %p415 = pnand %p413, %p414
    %p416 = pneg %p415
    // Predicated region
    $region9: #{forward.5} parent=5 // pred_check
      _
    $region10: #{forward.5} parent=5 // pred_check_branch
      %418 = sbr.rel (%p415) target = $region12
    $region11: #{forward.5} parent=5 // pred_region
      %s419 = ssub.s32 %s23, 1
      // Predicated region
      $region13: #{forward.5} parent=11 // pred_check
        %p420 = pneg %p122
      $region14: #{forward.5} parent=11 // pred_check_branch
        %422 = sbr.rel (%p420) target = $region16
      $region15: #{forward.5} parent=11 // pred_region
        _
      $region16: #{forward.5} parent=11 // pred_fallthru
        _
      // Predicated region
      $region17: #{forward.5} parent=11 // pred_check
        %p423 = pneg %p143
      $region18: #{forward.5} parent=11 // pred_check_branch
        %425 = sbr.rel (%p423) target = $region20
      $region19: #{forward.5} parent=11 // pred_region
        _
      $region20: #{forward.5} parent=11 // pred_fallthru
        _
      // Predicated region
      $region21: #{forward.5} parent=11 // pred_check
        %p426 = pneg %p164
      $region22: #{forward.5} parent=11 // pred_check_branch
        %428 = sbr.rel (%p426) target = $region24
      $region23: #{forward.5} parent=11 // pred_region
        _
      $region24: #{forward.5} parent=11 // pred_fallthru
        _
      // Predicated region
      $region25: #{forward.5} parent=11 // pred_check
        %p429 = pneg %p185
      $region26: #{forward.5} parent=11 // pred_check_branch
        %431 = sbr.rel (%p429) target = $region28
      $region27: #{forward.5} parent=11 // pred_region
        _
      $region28: #{forward.5} parent=11 // pred_fallthru
        _
      // Predicated region
      $region29: #{forward.5} parent=11 // pred_check
        %p432 = pneg %p206
      $region30: #{forward.5} parent=11 // pred_check_branch
        %434 = sbr.rel (%p432) target = $region32
      $region31: #{forward.5} parent=11 // pred_region
        _
      $region32: #{forward.5} parent=11 // pred_fallthru
        _
      // Predicated region
      $region33: #{forward.5} parent=11 // pred_check
        %p435 = pneg %p227
      $region34: #{forward.5} parent=11 // pred_check_branch
        %437 = sbr.rel (%p435) target = $region36
      $region35: #{forward.5} parent=11 // pred_region
        _
      $region36: #{forward.5} parent=11 // pred_fallthru
        _
      // Predicated region
      $region37: #{forward.5} parent=11 // pred_check
        %p438 = pneg %p248
      $region38: #{forward.5} parent=11 // pred_check_branch
        %440 = sbr.rel (%p438) target = $region40
      $region39: #{forward.5} parent=11 // pred_region
        _
      $region40: #{forward.5} parent=11 // pred_fallthru
        _
      // Predicated region
      $region41: #{forward.5} parent=11 // pred_check
        %p441 = pneg %p269
      $region42: #{forward.5} parent=11 // pred_check_branch
        %443 = sbr.rel (%p441) target = $region44
      $region43: #{forward.5} parent=11 // pred_region
        _
      $region44: #{forward.5} parent=11 // pred_fallthru
        _
      // Predicated region
      $region45: #{forward.5} parent=11 // pred_check
        %p444 = pneg %p290
      $region46: #{forward.5} parent=11 // pred_check_branch
        %446 = sbr.rel (%p444) target = $region48
      $region47: #{forward.5} parent=11 // pred_region
        _
      $region48: #{forward.5} parent=11 // pred_fallthru
        _
      // Predicated region
      $region49: #{forward.5} parent=11 // pred_check
        %p447 = pneg %p311
      $region50: #{forward.5} parent=11 // pred_check_branch
        %449 = sbr.rel (%p447) target = $region52
      $region51: #{forward.5} parent=11 // pred_region
        _
      $region52: #{forward.5} parent=11 // pred_fallthru
        _
      // Predicated region
      $region53: #{forward.5} parent=11 // pred_check
        %p450 = pneg %p332
      $region54: #{forward.5} parent=11 // pred_check_branch
        %452 = sbr.rel (%p450) target = $region56
      $region55: #{forward.5} parent=11 // pred_region
        _
      $region56: #{forward.5} parent=11 // pred_fallthru
        _
      // Predicated region
      $region57: #{forward.5} parent=11 // pred_check
        %p453 = pneg %p353
      $region58: #{forward.5} parent=11 // pred_check_branch
        %455 = sbr.rel (%p453) target = $region60
      $region59: #{forward.5} parent=11 // pred_region
        _
      $region60: #{forward.5} parent=11 // pred_fallthru
        _
    $region12: #{forward.5} parent=5 // pred_fallthru
      _
    %p456 = scmp.lt.s32.totalorder %s23, 2
    // Predicated region
    $region61: #{forward.5} parent=5 // pred_check
      %p457 = pneg %p456
    $region62: #{forward.5} parent=5 // pred_check_branch
      %459 = sbr.rel (%p457) target = $region64
    $region63: #{forward.5} parent=5 // pred_region
      // Predicated region
      $region65: #{forward.5} parent=63 // pred_check
        %p460 = pneg %p43
      $region66: #{forward.5} parent=63 // pred_check_branch
        %462 = sbr.rel (%p460) target = $region68
      $region67: #{forward.5} parent=63 // pred_region
        %p463 = scmp.lt.s32.totalorder %s23, 1
        %s464 = scalar_select %p463, %s23, 1
        %s465 = smul.addr %s464, 2
        %s466 = smul.addr %s465, 8
        %s467 = scalar_lea.vmem %s0, %s466
      $region68: #{forward.5} parent=63 // pred_fallthru
        _
      // Predicated region
      $region69: #{forward.5} parent=63 // pred_check
        %p468 = pneg %p69
      $region70: #{forward.5} parent=63 // pred_check_branch
        %470 = sbr.rel (%p468) target = $region72
      $region71: #{forward.5} parent=63 // pred_region
        %p471 = scmp.lt.s32.totalorder %s23, 1
        %s472 = scalar_select %p471, %s23, 1
        %s473 = smul.addr %s472, 2
        %s474 = scalar_lea.vmem %s1, %s473
      $region72: #{forward.5} parent=63 // pred_fallthru
        _
      // Predicated region
      $region73: #{forward.5} parent=63 // pred_check
        %p475 = pneg %p95
      $region74: #{forward.5} parent=63 // pred_check_branch
        %477 = sbr.rel (%p475) target = $region76
      $region75: #{forward.5} parent=63 // pred_region
        %p478 = scmp.lt.s32.totalorder %s23, 1
        %s479 = scalar_select %p478, %s23, 1
        %s480 = smul.addr %s479, 8
        %s481 = scalar_lea.vmem %s2, %s480
      $region76: #{forward.5} parent=63 // pred_fallthru
        _
    $region64: #{forward.5} parent=5 // pred_fallthru
      _
    %p482 = scmp.le.s32.totalorder 1, %s23
    %p483 = scmp.lt.s32.totalorder %s23, 3
    %p484 = pnand %p482, %p483
    %p485 = pneg %p484
    // Predicated region
    $region77: #{forward.5} parent=5 // pred_check
      _
    $region78: #{forward.5} parent=5 // pred_check_branch
      %487 = sbr.rel (%p484) target = $region80
    $region79: #{forward.5} parent=5 // pred_region
      %s488 = ssub.s32 %s23, 1
      %p489 = scmp.lt.s32.totalorder %s28, 1
      %s490 = scalar_select %p489, %s28, 1
      %s491 = smul.addr %s490, 2
      %s492 = smul.addr %s491, 8
      %s493 = scalar_lea.vmem %s0, %s492
      %p494 = pneg %p49
      %p495 = pneg %p46
      %p496 = scmp.lt.s32.totalorder %s28, 1
      %s497 = scalar_select %p496, %s28, 1
      %s498 = smul.addr %s497, 2
      %s499 = scalar_lea.vmem %s1, %s498
      %p500 = pneg %p75
      %p501 = pneg %p72
      %p502 = scmp.lt.s32.totalorder %s28, 1
      %s503 = scalar_select %p502, %s28, 1
      %s504 = smul.addr %s503, 8
      %s505 = scalar_lea.vmem %s2, %s504
      %p506 = pneg %p101
      %p507 = pneg %p98
      %p508 = pneg %p122
      %p509 = pneg %p119
      %p510 = pneg %p143
      %p511 = pneg %p140
      %p512 = pneg %p164
      %p513 = pneg %p161
      %p514 = pneg %p185
      %p515 = pneg %p182
      %p516 = pneg %p206
      %p517 = pneg %p203
      %p518 = pneg %p227
      %p519 = pneg %p224
      %p520 = pneg %p248
      %p521 = pneg %p245
      %p522 = pneg %p269
      %p523 = pneg %p266
      %p524 = pneg %p290
      %p525 = pneg %p287
      %p526 = pneg %p311
      %p527 = pneg %p308
      %p528 = pneg %p332
      %p529 = pneg %p329
      %p530 = pneg %p353
      %p531 = pneg %p350
      %p532 = pneg %p379
      %p533 = pneg %p376
      %p534 = scmp.lt.s32.totalorder %s28, 1
      %s535 = scalar_select %p534, %s28, 1
      %s536 = smul.addr %s535, 2
      %s537 = smul.addr %s536, 8
      %s538 = scalar_lea.vmem %s15, %s537
      %p539 = pneg %p405
      %p540 = pneg %p402
      %p541 = scmp.lt.s32.totalorder %s28, 1
      %s542 = scalar_select %p541, %s28, 1
      %s543 = smul.addr %s542, 2
      %s544 = smul.addr %s543, 8
      %s545 = scalar_lea.vmem %s16, %s544
      %p546 = scmp.lt.s32.totalorder %s28, 1
      %s547 = scalar_select %p546, %s28, 1
      %s548 = smul.addr %s547, 2
      %s549 = smul.addr %s548, 8
      %s550 = scalar_lea.vmem %s0, %s549
      %p551 = scmp.lt.s32.totalorder %s28, 1
      %s552 = scalar_select %p551, %s28, 1
      %s553 = smul.addr %s552, 2
      %s554 = scalar_lea.vmem %s1, %s553
      %p555 = scmp.lt.s32.totalorder %s28, 1
      %s556 = scalar_select %p555, %s28, 1
      %s557 = smul.addr %s556, 8
      %s558 = scalar_lea.vmem %s2, %s557
      %p559 = scmp.lt.s32.totalorder %s28, 1
      %s560 = scalar_select %p559, %s28, 1
      %s561 = smul.addr %s560, 2
      %s562 = smul.addr %s561, 8
      %s563 = scalar_lea.vmem %s15, %s562
      %p564 = scmp.lt.s32.totalorder %s28, 1
      %s565 = scalar_select %p564, %s28, 1
      %s566 = smul.addr %s565, 2
      %s567 = smul.addr %s566, 8
      %s568 = scalar_lea.vmem %s16, %s567
      %v569 = vld [vmem:[%s550] sm:$0xff]
      %v570 = vld [vmem:[%s550 + $0x8] sm:$0x1]
      %v571 = vld [vmem:[%s558] sm:$0xff]
      %v572 = vld [vmem:[%s3] sm:$0xff]
      %v573 = vld [vmem:[%s3 + $0x8] sm:$0x1]
      %v574 = vld [vmem:[%s4] sm:$0x1]
      %v576 = vlaneseq
      %v577 = vshrl.u32 %v576, 7
      %v578 = vsub.s32 0, %v577
      %v579 = vrot.slane %v574, %v578
      %581 = vxpose.xlu0.b32.start [1/16] %v569, 128
      %582 = vxpose.xlu0.b32.cont [2/16] %v570, 128
      %583 = vxpose.xlu0.b32.cont [3/16] 0.0, 128
      %584 = vxpose.xlu0.b32.cont [4/16] 0.0, 128
      %585 = vxpose.xlu0.b32.cont [5/16] 0.0, 128
      %586 = vxpose.xlu0.b32.cont [6/16] 0.0, 128
      %587 = vxpose.xlu0.b32.cont [7/16] 0.0, 128
      %588 = vxpose.xlu0.b32.cont [8/16] 0.0, 128
      %589 = vxpose.xlu0.b32.cont [9/16] 0.0, 128
      %590 = vxpose.xlu0.b32.cont [10/16] 0.0, 128
      %591 = vxpose.xlu0.b32.cont [11/16] 0.0, 128
      %592 = vxpose.xlu0.b32.cont [12/16] 0.0, 128
      %593 = vxpose.xlu0.b32.cont [13/16] 0.0, 128
      %594 = vxpose.xlu0.b32.cont [14/16] 0.0, 128
      %595 = vxpose.xlu0.b32.cont [15/16] 0.0, 128
      %596 = vxpose.xlu0.b32.end [16/16] 0.0, 128
      %v597 = vpop.trf.xlu0
      %v598 = vpop.trf.xlu0
      %v599 = vpop.trf.xlu0
      %v600 = vpop.trf.xlu0
      %v601 = vpop.trf.xlu0
      %v602 = vpop.trf.xlu0
      %v603 = vpop.trf.xlu0
      %v604 = vpop.trf.xlu0
      %v605 = vpop.trf.xlu0
      %v606 = vpop.trf.xlu0
      %v607 = vpop.trf.xlu0
      %v608 = vpop.trf.xlu0
      %v609 = vpop.trf.xlu0
      %v610 = vpop.trf.xlu0
      %v611 = vpop.trf.xlu0
      %v612 = vpop.trf.xlu0
      %vm613 = vcmask 72704
      %v615 = vsel %vm613, %v597, 0
      %v618 = vsel %vm613, %v598, 0
      %vm620 = vcmask 1040384
      %v622 = vsel %vm620, %v573, 0
      %624 = vmatprep.subr.mxu0 0.0
      %625 = vmatpush1.msra.mxu0 %v572
      %626 = vmatprep.subr.mxu0 0.0
      %627 = vmatpush1.msra.mxu0 %v622
      %628 = vmatprep.subr.mxu0 0.0
      %629 = vmatpush1.msra.mxu0 0.0
      %630 = vmatprep.subr.mxu0 0.0
      %631 = vmatpush1.msra.mxu0 0.0
      %632 = vmatprep.subr.mxu0 0.0
      %633 = vmatpush1.msra.mxu0 0.0
      %634 = vmatprep.subr.mxu0 0.0
      %635 = vmatpush1.msra.mxu0 0.0
      %636 = vmatprep.subr.mxu0 0.0
      %637 = vmatpush1.msra.mxu0 0.0
      %638 = vmatprep.subr.mxu0 0.0
      %639 = vmatpush1.msra.mxu0 0.0
      %640 = vmatprep.subr.mxu0 0.0
      %641 = vmatpush1.msra.mxu0 0.0
      %642 = vmatprep.subr.mxu0 0.0
      %643 = vmatpush1.msra.mxu0 0.0
      %644 = vmatprep.subr.mxu0 0.0
      %645 = vmatpush1.msra.mxu0 0.0
      %646 = vmatprep.subr.mxu0 0.0
      %647 = vmatpush1.msra.mxu0 0.0
      %648 = vmatprep.subr.mxu0 0.0
      %649 = vmatpush1.msra.mxu0 0.0
      %650 = vmatprep.subr.mxu0 0.0
      %651 = vmatpush1.msra.mxu0 0.0
      %652 = vmatprep.subr.mxu0 0.0
      %653 = vmatpush1.msra.mxu0 0.0
      %654 = vmatprep.subr.mxu0 0.0
      %655 = vmatpush1.msra.mxu0 0.0
      %656 = vmatprep.subr.mxu0 0.0
      %657 = vmatpush1.msra.mxu0 0.0
      %658 = vmatprep.subr.mxu0 0.0
      %659 = vmatpush1.msra.mxu0 0.0
      %660 = vmatprep.subr.mxu0 0.0
      %661 = vmatpush1.msra.mxu0 0.0
      %662 = vmatprep.subr.mxu0 0.0
      %663 = vmatpush1.msra.mxu0 0.0
      %664 = vmatprep.subr.mxu0 0.0
      %665 = vmatpush1.msra.mxu0 0.0
      %666 = vmatprep.subr.mxu0 0.0
      %667 = vmatpush1.msra.mxu0 0.0
      %668 = vmatprep.subr.mxu0 0.0
      %669 = vmatpush1.msra.mxu0 0.0
      %670 = vmatprep.subr.mxu0 0.0
      %671 = vmatpush1.msra.mxu0 0.0
      %672 = vmatprep.subr.mxu0 0.0
      %673 = vmatpush1.msra.mxu0 0.0
      %674 = vmatprep.subr.mxu0 0.0
      %675 = vmatpush1.msra.mxu0 0.0
      %676 = vmatprep.subr.mxu0 0.0
      %677 = vmatpush1.msra.mxu0 0.0
      %678 = vmatprep.subr.mxu0 0.0
      %679 = vmatpush1.msra.mxu0 0.0
      %680 = vmatprep.subr.mxu0 0.0
      %681 = vmatpush1.msra.mxu0 0.0
      %682 = vmatprep.subr.mxu0 0.0
      %683 = vmatpush1.msra.mxu0 0.0
      %684 = vmatprep.subr.mxu0 0.0
      %685 = vmatpush1.msra.mxu0 0.0
      %686 = vmatprep.subr.mxu0 0.0
      %687 = vmatpush1.msra.mxu0 0.0
      %688 = vmatprep.mubr.f32.mxu0 0.0
      %689 = vmatmul.mubr.f32.gmra.mrb[0].mxu0 %v615
      %v690 = vpop.f32.mrb[0].mxu0
      %v691 = vadd.f32 %v579, %v690
      %v692 = vpop.f32.mrb[0].mxu0
      %693 = vmatprep.mubr.f32.mxu0 0.0
      %694 = vmatmul.mubr.f32.gmra.mrb[0].mxu0 %v618
      %v695 = vpop.f32.mrb[0].mxu0
      %v696 = vadd.f32 %v579, %v695
      %v697 = vpop.f32.mrb[0].mxu0
      %698 = vdwg.mxu0
      %v699 = vld [vmem:[%s5] sm:$0xff]
      %v700 = vld [vmem:[%s5 + $0x8] sm:$0x1]
      %v701 = vld [vmem:[%s6] sm:$0x1]
      %v703 = vlaneseq
      %v704 = vshrl.u32 %v703, 7
      %v705 = vsub.s32 0, %v704
      %v706 = vrot.slane %v701, %v705
      %v709 = vsel %vm620, %v700, 0
      %711 = vmatprep.subr.mxu0 0.0
      %712 = vmatpush1.msra.mxu0 %v699
      %713 = vmatprep.subr.mxu0 0.0
      %714 = vmatpush1.msra.mxu0 %v709
      %715 = vmatprep.subr.mxu0 0.0
      %716 = vmatpush1.msra.mxu0 0.0
      %717 = vmatprep.subr.mxu0 0.0
      %718 = vmatpush1.msra.mxu0 0.0
      %719 = vmatprep.subr.mxu0 0.0
      %720 = vmatpush1.msra.mxu0 0.0
      %721 = vmatprep.subr.mxu0 0.0
      %722 = vmatpush1.msra.mxu0 0.0
      %723 = vmatprep.subr.mxu0 0.0
      %724 = vmatpush1.msra.mxu0 0.0
      %725 = vmatprep.subr.mxu0 0.0
      %726 = vmatpush1.msra.mxu0 0.0
      %727 = vmatprep.subr.mxu0 0.0
      %728 = vmatpush1.msra.mxu0 0.0
      %729 = vmatprep.subr.mxu0 0.0
      %730 = vmatpush1.msra.mxu0 0.0
      %731 = vmatprep.subr.mxu0 0.0
      %732 = vmatpush1.msra.mxu0 0.0
      %733 = vmatprep.subr.mxu0 0.0
      %734 = vmatpush1.msra.mxu0 0.0
      %735 = vmatprep.subr.mxu0 0.0
      %736 = vmatpush1.msra.mxu0 0.0
      %737 = vmatprep.subr.mxu0 0.0
      %738 = vmatpush1.msra.mxu0 0.0
      %739 = vmatprep.subr.mxu0 0.0
      %740 = vmatpush1.msra.mxu0 0.0
      %741 = vmatprep.subr.mxu0 0.0
      %742 = vmatpush1.msra.mxu0 0.0
      %743 = vmatprep.subr.mxu0 0.0
      %744 = vmatpush1.msra.mxu0 0.0
      %745 = vmatprep.subr.mxu0 0.0
      %746 = vmatpush1.msra.mxu0 0.0
      %747 = vmatprep.subr.mxu0 0.0
      %748 = vmatpush1.msra.mxu0 0.0
      %749 = vmatprep.subr.mxu0 0.0
      %750 = vmatpush1.msra.mxu0 0.0
      %751 = vmatprep.subr.mxu0 0.0
      %752 = vmatpush1.msra.mxu0 0.0
      %753 = vmatprep.subr.mxu0 0.0
      %754 = vmatpush1.msra.mxu0 0.0
      %755 = vmatprep.subr.mxu0 0.0
      %756 = vmatpush1.msra.mxu0 0.0
      %757 = vmatprep.subr.mxu0 0.0
      %758 = vmatpush1.msra.mxu0 0.0
      %759 = vmatprep.subr.mxu0 0.0
      %760 = vmatpush1.msra.mxu0 0.0
      %761 = vmatprep.subr.mxu0 0.0
      %762 = vmatpush1.msra.mxu0 0.0
      %763 = vmatprep.subr.mxu0 0.0
      %764 = vmatpush1.msra.mxu0 0.0
      %765 = vmatprep.subr.mxu0 0.0
      %766 = vmatpush1.msra.mxu0 0.0
      %767 = vmatprep.subr.mxu0 0.0
      %768 = vmatpush1.msra.mxu0 0.0
      %769 = vmatprep.subr.mxu0 0.0
      %770 = vmatpush1.msra.mxu0 0.0
      %771 = vmatprep.subr.mxu0 0.0
      %772 = vmatpush1.msra.mxu0 0.0
      %773 = vmatprep.subr.mxu0 0.0
      %774 = vmatpush1.msra.mxu0 0.0
      %775 = vmatprep.mubr.f32.mxu0 0.0
      %776 = vmatmul.mubr.f32.gmra.mrb[0].mxu0 %v615
      %v777 = vpop.f32.mrb[0].mxu0
      %v778 = vadd.f32 %v706, %v777
      %v779 = vpop.f32.mrb[0].mxu0
      %780 = vmatprep.mubr.f32.mxu0 0.0
      %781 = vmatmul.mubr.f32.gmra.mrb[0].mxu0 %v618
      %v782 = vpop.f32.mrb[0].mxu0
      %v783 = vadd.f32 %v706, %v782
      %v784 = vpop.f32.mrb[0].mxu0
      %785 = vdwg.mxu0
      %v786 = vld [vmem:[%s7] sm:$0xff]
      %v787 = vld [vmem:[%s7 + $0x8] sm:$0x1]
      %v788 = vld [vmem:[%s8] sm:$0x1]
      %v790 = vlaneseq
      %v791 = vshrl.u32 %v790, 7
      %v792 = vsub.s32 0, %v791
      %v793 = vrot.slane %v788, %v792
      %v796 = vsel %vm620, %v787, 0
      %798 = vmatprep.subr.mxu0 0.0
      %799 = vmatpush1.msra.mxu0 %v786
      %800 = vmatprep.subr.mxu0 0.0
      %801 = vmatpush1.msra.mxu0 %v796
      %802 = vmatprep.subr.mxu0 0.0
      %803 = vmatpush1.msra.mxu0 0.0
      %804 = vmatprep.subr.mxu0 0.0
      %805 = vmatpush1.msra.mxu0 0.0
      %806 = vmatprep.subr.mxu0 0.0
      %807 = vmatpush1.msra.mxu0 0.0
      %808 = vmatprep.subr.mxu0 0.0
      %809 = vmatpush1.msra.mxu0 0.0
      %810 = vmatprep.subr.mxu0 0.0
      %811 = vmatpush1.msra.mxu0 0.0
      %812 = vmatprep.subr.mxu0 0.0
      %813 = vmatpush1.msra.mxu0 0.0
      %814 = vmatprep.subr.mxu0 0.0
      %815 = vmatpush1.msra.mxu0 0.0
      %816 = vmatprep.subr.mxu0 0.0
      %817 = vmatpush1.msra.mxu0 0.0
      %818 = vmatprep.subr.mxu0 0.0
      %819 = vmatpush1.msra.mxu0 0.0
      %820 = vmatprep.subr.mxu0 0.0
      %821 = vmatpush1.msra.mxu0 0.0
      %822 = vmatprep.subr.mxu0 0.0
      %823 = vmatpush1.msra.mxu0 0.0
      %824 = vmatprep.subr.mxu0 0.0
      %825 = vmatpush1.msra.mxu0 0.0
      %826 = vmatprep.subr.mxu0 0.0
      %827 = vmatpush1.msra.mxu0 0.0
      %828 = vmatprep.subr.mxu0 0.0
      %829 = vmatpush1.msra.mxu0 0.0
      %830 = vmatprep.subr.mxu0 0.0
      %831 = vmatpush1.msra.mxu0 0.0
      %832 = vmatprep.subr.mxu0 0.0
      %833 = vmatpush1.msra.mxu0 0.0
      %834 = vmatprep.subr.mxu0 0.0
      %835 = vmatpush1.msra.mxu0 0.0
      %836 = vmatprep.subr.mxu0 0.0
      %837 = vmatpush1.msra.mxu0 0.0
      %838 = vmatprep.subr.mxu0 0.0
      %839 = vmatpush1.msra.mxu0 0.0
      %840 = vmatprep.subr.mxu0 0.0
      %841 = vmatpush1.msra.mxu0 0.0
      %842 = vmatprep.subr.mxu0 0.0
      %843 = vmatpush1.msra.mxu0 0.0
      %844 = vmatprep.subr.mxu0 0.0
      %845 = vmatpush1.msra.mxu0 0.0
      %846 = vmatprep.subr.mxu0 0.0
      %847 = vmatpush1.msra.mxu0 0.0
      %848 = vmatprep.subr.mxu0 0.0
      %849 = vmatpush1.msra.mxu0 0.0
      %850 = vmatprep.subr.mxu0 0.0
      %851 = vmatpush1.msra.mxu0 0.0
      %852 = vmatprep.subr.mxu0 0.0
      %853 = vmatpush1.msra.mxu0 0.0
      %854 = vmatprep.subr.mxu0 0.0
      %855 = vmatpush1.msra.mxu0 0.0
      %856 = vmatprep.subr.mxu0 0.0
      %857 = vmatpush1.msra.mxu0 0.0
      %858 = vmatprep.subr.mxu0 0.0
      %859 = vmatpush1.msra.mxu0 0.0
      %860 = vmatprep.subr.mxu0 0.0
      %861 = vmatpush1.msra.mxu0 0.0
      %862 = vmatprep.mubr.f32.mxu0 0.0
      %863 = vmatmul.mubr.f32.gmra.mrb[0].mxu0 %v615
      %v864 = vpop.f32.mrb[0].mxu0
      %v865 = vadd.f32 %v793, %v864
      %v866 = vpop.f32.mrb[0].mxu0
      %867 = vmatprep.mubr.f32.mxu0 0.0
      %868 = vmatmul.mubr.f32.gmra.mrb[0].mxu0 %v618
      %v869 = vpop.f32.mrb[0].mxu0
      %v870 = vadd.f32 %v793, %v869
      %v871 = vpop.f32.mrb[0].mxu0
      %872 = vdwg.mxu0
      %vm873 = vcmask 130048
      %v875 = vsel %vm873, %v691, 0
      %v878 = vsel %vm873, %v696, 0
      %v881 = vsel %vm873, %v778, 0
      %v884 = vsel %vm873, %v783, 0
      %886 = vmatprep.subr.mxu0 0.0
      %887 = vmatpush1.xpose.msra.mxu0 %v881
      %888 = vmatprep.subr.mxu0 0.0
      %889 = vmatpush1.xpose.msra.mxu0 %v884
      %890 = vmatprep.subr.mxu0 0.0
      %891 = vmatpush1.xpose.msra.mxu0 0.0
      %892 = vmatprep.subr.mxu0 0.0
      %893 = vmatpush1.xpose.msra.mxu0 0.0
      %894 = vmatprep.subr.mxu0 0.0
      %895 = vmatpush1.xpose.msra.mxu0 0.0
      %896 = vmatprep.subr.mxu0 0.0
      %897 = vmatpush1.xpose.msra.mxu0 0.0
      %898 = vmatprep.subr.mxu0 0.0
      %899 = vmatpush1.xpose.msra.mxu0 0.0
      %900 = vmatprep.subr.mxu0 0.0
      %901 = vmatpush1.xpose.msra.mxu0 0.0
      %902 = vmatprep.subr.mxu0 0.0
      %903 = vmatpush1.xpose.msra.mxu0 0.0
      %904 = vmatprep.subr.mxu0 0.0
      %905 = vmatpush1.xpose.msra.mxu0 0.0
      %906 = vmatprep.subr.mxu0 0.0
      %907 = vmatpush1.xpose.msra.mxu0 0.0
      %908 = vmatprep.subr.mxu0 0.0
      %909 = vmatpush1.xpose.msra.mxu0 0.0
      %910 = vmatprep.subr.mxu0 0.0
      %911 = vmatpush1.xpose.msra.mxu0 0.0
      %912 = vmatprep.subr.mxu0 0.0
      %913 = vmatpush1.xpose.msra.mxu0 0.0
      %914 = vmatprep.subr.mxu0 0.0
      %915 = vmatpush1.xpose.msra.mxu0 0.0
      %916 = vmatprep.subr.mxu0 0.0
      %917 = vmatpush1.xpose.msra.mxu0 0.0
      %918 = vmatprep.subr.mxu0 0.0
      %919 = vmatpush1.xpose.msra.mxu0 0.0
      %920 = vmatprep.subr.mxu0 0.0
      %921 = vmatpush1.xpose.msra.mxu0 0.0
      %922 = vmatprep.subr.mxu0 0.0
      %923 = vmatpush1.xpose.msra.mxu0 0.0
      %924 = vmatprep.subr.mxu0 0.0
      %925 = vmatpush1.xpose.msra.mxu0 0.0
      %926 = vmatprep.subr.mxu0 0.0
      %927 = vmatpush1.xpose.msra.mxu0 0.0
      %928 = vmatprep.subr.mxu0 0.0
      %929 = vmatpush1.xpose.msra.mxu0 0.0
      %930 = vmatprep.subr.mxu0 0.0
      %931 = vmatpush1.xpose.msra.mxu0 0.0
      %932 = vmatprep.subr.mxu0 0.0
      %933 = vmatpush1.xpose.msra.mxu0 0.0
      %934 = vmatprep.subr.mxu0 0.0
      %935 = vmatpush1.xpose.msra.mxu0 0.0
      %936 = vmatprep.subr.mxu0 0.0
      %937 = vmatpush1.xpose.msra.mxu0 0.0
      %938 = vmatprep.subr.mxu0 0.0
      %939 = vmatpush1.xpose.msra.mxu0 0.0
      %940 = vmatprep.subr.mxu0 0.0
      %941 = vmatpush1.xpose.msra.mxu0 0.0
      %942 = vmatprep.subr.mxu0 0.0
      %943 = vmatpush1.xpose.msra.mxu0 0.0
      %944 = vmatprep.subr.mxu0 0.0
      %945 = vmatpush1.xpose.msra.mxu0 0.0
      %946 = vmatprep.subr.mxu0 0.0
      %947 = vmatpush1.xpose.msra.mxu0 0.0
      %948 = vmatprep.subr.mxu0 0.0
      %949 = vmatpush1.xpose.msra.mxu0 0.0
      %950 = vmatprep.mubr.f32.mxu0 0.0
      %951 = vmatmul.mubr.f32.gmra.mrb[0].mxu0 %v875
      %v952 = vpop.f32.mrb[0].mxu0
      %v953 = vadd.f32 0.0, %v952
      %v954 = vpop.f32.mrb[0].mxu0
      %955 = vmatprep.mubr.f32.mxu0 0.0
      %956 = vmatmul.mubr.f32.gmra.mrb[0].mxu0 %v878
      %v957 = vpop.f32.mrb[0].mxu0
      %v958 = vadd.f32 0.0, %v957
      %v959 = vpop.f32.mrb[0].mxu0
      %960 = vdwg.mxu0
      %v961 = vmul.f32 %v953, 0.33333334
      %v962 = vmul.f32 %v958, 0.33333334
      %v963 = vsel %vm873, %v961, -inf
      %964 = vmax.xlane.f32.xlu0 %v963
      %v965 = vpop.xlane.xlu0 %964
      %v966 = vsel %vm873, %v962, -inf
      %967 = vmax.xlane.f32.xlu0 %v966
      %v968 = vpop.xlane.xlu0 %967
      %v969 = vsub.f32 %v961, %v965
      %v970 = vsub.f32 %v962, %v968
      %v971 = vmul.f32 %v969, 1.442695
      %v972 = vpow.pop %v971
      %v973 = vmul.f32 %v970, 1.442695
      %v974 = vpow.pop %v973
      %v975 = vsel %vm873, %v972, 0.0
      %976 = vadd.xlane.f32.xlu0 %v975
      %v977 = vpop.xlane.xlu0 %976
      %v978 = vsel %vm873, %v974, 0.0
      %979 = vadd.xlane.f32.xlu0 %v978
      %v980 = vpop.xlane.xlu0 %979
      %v981 = vrcp.pop %v977
      %v982 = vmul.f32 %v972, %v981
      %v983 = vrcp.pop %v980
      %v984 = vmul.f32 %v974, %v983
      %v986 = vsel %vm873, %v982, 0
      %v989 = vsel %vm873, %v984, 0
      %991 = vmatprep.subr.mxu0 0.0
      %992 = vmatpush1.msra.mxu0 %v865
      %993 = vmatprep.subr.mxu0 0.0
      %994 = vmatpush1.msra.mxu0 %v870
      %995 = vmatprep.subr.mxu0 0.0
      %996 = vmatpush1.msra.mxu0 0.0
      %997 = vmatprep.subr.mxu0 0.0
      %998 = vmatpush1.msra.mxu0 0.0
      %999 = vmatprep.subr.mxu0 0.0
      %1000 = vmatpush1.msra.mxu0 0.0
      %1001 = vmatprep.subr.mxu0 0.0
      %1002 = vmatpush1.msra.mxu0 0.0
      %1003 = vmatprep.subr.mxu0 0.0
      %1004 = vmatpush1.msra.mxu0 0.0
      %1005 = vmatprep.subr.mxu0 0.0
      %1006 = vmatpush1.msra.mxu0 0.0
      %1007 = vmatprep.subr.mxu0 0.0
      %1008 = vmatpush1.msra.mxu0 0.0
      %1009 = vmatprep.subr.mxu0 0.0
      %1010 = vmatpush1.msra.mxu0 0.0
      %1011 = vmatprep.subr.mxu0 0.0
      %1012 = vmatpush1.msra.mxu0 0.0
      %1013 = vmatprep.subr.mxu0 0.0
      %1014 = vmatpush1.msra.mxu0 0.0
      %1015 = vmatprep.subr.mxu0 0.0
      %1016 = vmatpush1.msra.mxu0 0.0
      %1017 = vmatprep.subr.mxu0 0.0
      %1018 = vmatpush1.msra.mxu0 0.0
      %1019 = vmatprep.subr.mxu0 0.0
      %1020 = vmatpush1.msra.mxu0 0.0
      %1021 = vmatprep.subr.mxu0 0.0
      %1022 = vmatpush1.msra.mxu0 0.0
      %1023 = vmatprep.subr.mxu0 0.0
      %1024 = vmatpush1.msra.mxu0 0.0
      %1025 = vmatprep.subr.mxu0 0.0
      %1026 = vmatpush1.msra.mxu0 0.0
      %1027 = vmatprep.subr.mxu0 0.0
      %1028 = vmatpush1.msra.mxu0 0.0
      %1029 = vmatprep.subr.mxu0 0.0
      %1030 = vmatpush1.msra.mxu0 0.0
      %1031 = vmatprep.subr.mxu0 0.0
      %1032 = vmatpush1.msra.mxu0 0.0
      %1033 = vmatprep.subr.mxu0 0.0
      %1034 = vmatpush1.msra.mxu0 0.0
      %1035 = vmatprep.subr.mxu0 0.0
      %1036 = vmatpush1.msra.mxu0 0.0
      %1037 = vmatprep.subr.mxu0 0.0
      %1038 = vmatpush1.msra.mxu0 0.0
      %1039 = vmatprep.subr.mxu0 0.0
      %1040 = vmatpush1.msra.mxu0 0.0
      %1041 = vmatprep.subr.mxu0 0.0
      %1042 = vmatpush1.msra.mxu0 0.0
      %1043 = vmatprep.subr.mxu0 0.0
      %1044 = vmatpush1.msra.mxu0 0.0
      %1045 = vmatprep.subr.mxu0 0.0
      %1046 = vmatpush1.msra.mxu0 0.0
      %1047 = vmatprep.subr.mxu0 0.0
      %1048 = vmatpush1.msra.mxu0 0.0
      %1049 = vmatprep.subr.mxu0 0.0
      %1050 = vmatpush1.msra.mxu0 0.0
      %1051 = vmatprep.subr.mxu0 0.0
      %1052 = vmatpush1.msra.mxu0 0.0
      %1053 = vmatprep.subr.mxu0 0.0
      %1054 = vmatpush1.msra.mxu0 0.0
      %1055 = vmatprep.mubr.f32.mxu0 0.0
      %1056 = vmatmul.mubr.f32.gmra.mrb[0].mxu0 %v986
      %v1057 = vpop.f32.mrb[0].mxu0
      %v1058 = vadd.f32 0.0, %v1057
      %v1059 = vpop.f32.mrb[0].mxu0
      %1060 = vmatprep.mubr.f32.mxu0 0.0
      %1061 = vmatmul.mubr.f32.gmra.mrb[0].mxu0 %v989
      %v1062 = vpop.f32.mrb[0].mxu0
      %v1063 = vadd.f32 0.0, %v1062
      %v1064 = vpop.f32.mrb[0].mxu0
      %1065 = vdwg.mxu0
      %v1066 = vsel %vm873, %v1058, 0.0
      %1067 = vadd.xlane.f32.xlu0 %v1066
      %v1068 = vpop.xlane.xlu0 %1067
      %v1069 = vsel %vm873, %v1063, 0.0
      %1070 = vadd.xlane.f32.xlu0 %v1069
      %v1071 = vpop.xlane.xlu0 %1070
      %v1072 = vrcp.pop 16.0
      %v1073 = vmul.f32 %v1068, %v1072
      %v1074 = vmul.f32 %v1071, %v1072
      %1075 = vxpose.xlu0.b32.start [1/16] %v1073, 128
      %1076 = vxpose.xlu0.b32.cont [2/16] %v1074, 128
      %1077 = vxpose.xlu0.b32.cont [3/16] 0.0, 128
      %1078 = vxpose.xlu0.b32.cont [4/16] 0.0, 128
      %1079 = vxpose.xlu0.b32.cont [5/16] 0.0, 128
      %1080 = vxpose.xlu0.b32.cont [6/16] 0.0, 128
      %1081 = vxpose.xlu0.b32.cont [7/16] 0.0, 128
      %1082 = vxpose.xlu0.b32.cont [8/16] 0.0, 128
      %1083 = vxpose.xlu0.b32.cont [9/16] 0.0, 128
      %1084 = vxpose.xlu0.b32.cont [10/16] 0.0, 128
      %1085 = vxpose.xlu0.b32.cont [11/16] 0.0, 128
      %1086 = vxpose.xlu0.b32.cont [12/16] 0.0, 128
      %1087 = vxpose.xlu0.b32.cont [13/16] 0.0, 128
      %1088 = vxpose.xlu0.b32.cont [14/16] 0.0, 128
      %1089 = vxpose.xlu0.b32.cont [15/16] 0.0, 128
      %1090 = vxpose.xlu0.b32.end [16/16] 0.0, 128
      %v1091 = vpop.trf.xlu0
      %v1092 = vpop.trf.xlu0
      %v1093 = vpop.trf.xlu0
      %v1094 = vpop.trf.xlu0
      %v1095 = vpop.trf.xlu0
      %v1096 = vpop.trf.xlu0
      %v1097 = vpop.trf.xlu0
      %v1098 = vpop.trf.xlu0
      %v1099 = vpop.trf.xlu0
      %v1100 = vpop.trf.xlu0
      %v1101 = vpop.trf.xlu0
      %v1102 = vpop.trf.xlu0
      %v1103 = vpop.trf.xlu0
      %v1104 = vpop.trf.xlu0
      %v1105 = vpop.trf.xlu0
      %v1106 = vpop.trf.xlu0
      %v1107 = vsel %vm873, %v569, 0.0
      %vm1108 = vcmask 122880
      %v1109 = vsel %vm1108, %v570, 0.0
      %v1110 = vadd.f32 %v1107, %v1109
      %v1111 = vrot.slane %v1110, 4
      %v1112 = vadd.f32 %v1110, %v1111
      %v1113 = vrot.slane %v1112, 2
      %v1114 = vadd.f32 %v1112, %v1113
      %v1115 = vrot.slane %v1114, 1
      %v1116 = vadd.f32 %v1114, %v1115
      %v1117 = vrcp.pop 9.0
      %v1118 = vmul.f32 %v1116, %v1117
      %v1119 = vadd.f32 %v1091, %v1118
      %v1120 = vld [vmem:[%s554] sm:$0x3]
      %1122 = vrot.lane.b32.xlu0 %v1119, 16
      %v1123 = vpop.permute.xlu0 %1122
      %1125 = vrot.lane.b32.xlu0 %v1119, 32
      %v1126 = vpop.permute.xlu0 %1125
      %1128 = vrot.lane.b32.xlu0 %v1119, 48
      %v1129 = vpop.permute.xlu0 %1128
      %1131 = vrot.lane.b32.xlu0 %v1119, 64
      %v1132 = vpop.permute.xlu0 %1131
      %1134 = vrot.lane.b32.xlu0 %v1119, 80
      %v1135 = vpop.permute.xlu0 %1134
      %1137 = vrot.lane.b32.xlu0 %v1119, 96
      %v1138 = vpop.permute.xlu0 %1137
      %1140 = vrot.lane.b32.xlu0 %v1119, 112
      %v1141 = vpop.permute.xlu0 %1140
      %v1143 = vsel %vm873, %v1119, %v1123
      %vm1144 = vcmask 261120
      %v1145 = vsel %vm1144, %v1143, %v1126
      %vm1146 = vcmask 392192
      %v1147 = vsel %vm1146, %v1145, %v1129
      %vm1148 = vcmask 523264
      %v1149 = vsel %vm1148, %v1147, %v1132
      %vm1150 = vcmask 654336
      %v1151 = vsel %vm1150, %v1149, %v1135
      %vm1152 = vcmask 785408
      %v1153 = vsel %vm1152, %v1151, %v1138
      %vm1154 = vcmask 916480
      %v1155 = vsel %vm1154, %v1153, %v1141
      %v1157 = vlaneseq
      %v1158 = vshrl.u32 %v1157, 7
      %v1159 = vsub.s32 0, %v1158
      %v1160 = vrot.slane %v1120, %v1159
      %v1161 = vlaneseq
      %v1162 = vshrl.u32 %v1161, 7
      %v1163 = vsub.s32 1, %v1162
      %v1164 = vrot.slane %v1120, %v1163
      %v1168 = vrot.slane %v1155, 7
      %v1169 = vrot.slane %v1119, 7
      %v1172 = vsel %vm620, %v1160, %v1168
      %v1173 = vsel %vm620, %v1164, %v1169
      %v1174 = vld [vmem:[%s9] sm:$0xff]
      %v1175 = vld [vmem:[%s9 + $0x8] sm:$0xff]
      %v1176 = vld [vmem:[%s9 + $0x10] sm:$0xff]
      %v1177 = vld [vmem:[%s9 + $0x18] sm:$0xff]
      %v1178 = vld [vmem:[%s9 + $0x20] sm:$0xff]
      %v1179 = vld [vmem:[%s9 + $0x28] sm:$0xff]
      %v1180 = vld [vmem:[%s9 + $0x30] sm:$0xff]
      %v1181 = vld [vmem:[%s9 + $0x38] sm:$0xff]
      %v1182 = vld [vmem:[%s9 + $0x40] sm:$0xff]
      %v1183 = vld [vmem:[%s9 + $0x48] sm:$0xff]
      %v1184 = vld [vmem:[%s9 + $0x50] sm:$0xff]
      %v1185 = vld [vmem:[%s9 + $0x58] sm:$0xff]
      %v1186 = vld [vmem:[%s9 + $0x60] sm:$0xff]
      %v1187 = vld [vmem:[%s9 + $0x68] sm:$0xff]
      %v1188 = vld [vmem:[%s9 + $0x70] sm:$0xff]
      %v1189 = vld [vmem:[%s9 + $0x78] sm:$0xff]
      %v1190 = vld [vmem:[%s9 + $0x80] sm:$0xff]
      %v1191 = vld [vmem:[%s9 + $0x88] sm:$0xff]
      %v1192 = vld [vmem:[%s9 + $0x90] sm:$0xff]
      %v1193 = vld [vmem:[%s9 + $0x98] sm:$0xff]
      %v1194 = vld [vmem:[%s9 + $0xa0] sm:$0xff]
      %v1195 = vld [vmem:[%s9 + $0xa8] sm:$0xff]
      %v1196 = vld [vmem:[%s9 + $0xb0] sm:$0xff]
      %v1197 = vld [vmem:[%s9 + $0xb8] sm:$0xff]
      %v1198 = vld [vmem:[%s9 + $0xc0] sm:$0xff]
      %v1199 = vld [vmem:[%s9 + $0xc8] sm:$0xff]
      %v1200 = vld [vmem:[%s9 + $0xd0] sm:$0xff]
      %v1201 = vld [vmem:[%s9 + $0xd8] sm:$0xff]
      %v1202 = vld [vmem:[%s9 + $0xe0] sm:$0xff]
      %v1203 = vld [vmem:[%s9 + $0xe8] sm:$0xff]
      %v1204 = vld [vmem:[%s9 + $0xf0] sm:$0xff]
      %v1205 = vld [vmem:[%s9 + $0xf8] sm:$0xff]
      %v1206 = vld [vmem:[%s9 + $0x100] sm:$0xff]
      %v1207 = vld [vmem:[%s9 + $0x108] sm:$0xff]
      %v1208 = vld [vmem:[%s9 + $0x110] sm:$0xff]
      %v1209 = vld [vmem:[%s9 + $0x118] sm:$0xff]
      %v1210 = vld [vmem:[%s9 + $0x120] sm:$0xff]
      %v1211 = vld [vmem:[%s9 + $0x128] sm:$0xff]
      %v1212 = vld [vmem:[%s9 + $0x130] sm:$0xff]
      %v1213 = vld [vmem:[%s9 + $0x138] sm:$0xff]
      %v1214 = vld [vmem:[%s9 + $0x140] sm:$0xff]
      %v1215 = vld [vmem:[%s9 + $0x148] sm:$0xff]
      %v1216 = vld [vmem:[%s9 + $0x150] sm:$0xff]
      %v1217 = vld [vmem:[%s9 + $0x158] sm:$0xff]
      %v1218 = vld [vmem:[%s9 + $0x160] sm:$0xff]
      %v1219 = vld [vmem:[%s9 + $0x168] sm:$0xff]
      %v1220 = vld [vmem:[%s9 + $0x170] sm:$0xff]
      %v1221 = vld [vmem:[%s9 + $0x178] sm:$0xff]
      %v1222 = vld [vmem:[%s9 + $0x180] sm:$0xff]
      %v1223 = vld [vmem:[%s9 + $0x188] sm:$0xff]
      %v1224 = vld [vmem:[%s9 + $0x190] sm:$0xff]
      %v1225 = vld [vmem:[%s9 + $0x198] sm:$0xff]
      %v1226 = vld [vmem:[%s9 + $0x1a0] sm:$0xff]
      %v1227 = vld [vmem:[%s9 + $0x1a8] sm:$0xff]
      %v1228 = vld [vmem:[%s9 + $0x1b0] sm:$0xff]
      %v1229 = vld [vmem:[%s9 + $0x1b8] sm:$0xff]
      %v1230 = vld [vmem:[%s9 + $0x1c0] sm:$0xff]
      %v1231 = vld [vmem:[%s9 + $0x1c8] sm:$0xff]
      %v1232 = vld [vmem:[%s9 + $0x1d0] sm:$0xff]
      %v1233 = vld [vmem:[%s9 + $0x1d8] sm:$0xff]
      %v1234 = vld [vmem:[%s9 + $0x1e0] sm:$0xff]
      %v1235 = vld [vmem:[%s9 + $0x1e8] sm:$0xff]
      %v1236 = vld [vmem:[%s9 + $0x1f0] sm:$0xff]
      %v1237 = vld [vmem:[%s9 + $0x1f8] sm:$0xff]
      %v1238 = vld [vmem:[%s9 + $0x200] sm:$0xff]
      %v1239 = vld [vmem:[%s9 + $0x208] sm:$0xff]
      %v1240 = vld [vmem:[%s9 + $0x210] sm:$0xff]
      %v1241 = vld [vmem:[%s9 + $0x218] sm:$0xff]
      %v1242 = vld [vmem:[%s9 + $0x220] sm:$0xff]
      %v1243 = vld [vmem:[%s9 + $0x228] sm:$0xff]
      %v1244 = vld [vmem:[%s9 + $0x230] sm:$0xff]
      %v1245 = vld [vmem:[%s9 + $0x238] sm:$0xff]
      %v1246 = vld [vmem:[%s10] sm:$0xf]
      %v1248 = vlaneseq
      %v1249 = vshrl.u32 %v1248, 7
      %v1250 = vsub.s32 0, %v1249
      %v1251 = vrot.slane %v1246, %v1250
      %v1252 = vlaneseq
      %v1253 = vshrl.u32 %v1252, 7
      %v1254 = vsub.s32 1, %v1253
      %v1255 = vrot.slane %v1246, %v1254
      %v1256 = vlaneseq
      %v1257 = vshrl.u32 %v1256, 7
      %v1258 = vsub.s32 2, %v1257
      %v1259 = vrot.slane %v1246, %v1258
      %v1260 = vlaneseq
      %v1261 = vshrl.u32 %v1260, 7
      %v1262 = vsub.s32 3, %v1261
      %v1263 = vrot.slane %v1246, %v1262
      %v1269 = vsel %vm873, %v1173, 0
      %1271 = vmatprep.subr.mxu0 %v1175
      %1272 = vmatpush1.msra.mxu0 %v1174
      %1273 = vmatprep.subr.mxu0 %v1179
      %1274 = vmatpush1.msra.mxu0 %v1178
      %1275 = vmatprep.subr.mxu0 %v1183
      %1276 = vmatpush1.msra.mxu0 %v1182
      %1277 = vmatprep.subr.mxu0 %v1187
      %1278 = vmatpush1.msra.mxu0 %v1186
      %1279 = vmatprep.subr.mxu0 %v1191
      %1280 = vmatpush1.msra.mxu0 %v1190
      %1281 = vmatprep.subr.mxu0 %v1195
      %1282 = vmatpush1.msra.mxu0 %v1194
      %1283 = vmatprep.subr.mxu0 %v1199
      %1284 = vmatpush1.msra.mxu0 %v1198
      %1285 = vmatprep.subr.mxu0 %v1203
      %1286 = vmatpush1.msra.mxu0 %v1202
      %1287 = vmatprep.subr.mxu0 %v1207
      %1288 = vmatpush1.msra.mxu0 %v1206
      %1289 = vmatprep.subr.mxu0 %v1211
      %1290 = vmatpush1.msra.mxu0 %v1210
      %1291 = vmatprep.subr.mxu0 %v1215
      %1292 = vmatpush1.msra.mxu0 %v1214
      %1293 = vmatprep.subr.mxu0 %v1219
      %1294 = vmatpush1.msra.mxu0 %v1218
      %1295 = vmatprep.subr.mxu0 %v1223
      %1296 = vmatpush1.msra.mxu0 %v1222
      %1297 = vmatprep.subr.mxu0 %v1227
      %1298 = vmatpush1.msra.mxu0 %v1226
      %1299 = vmatprep.subr.mxu0 %v1231
      %1300 = vmatpush1.msra.mxu0 %v1230
      %1301 = vmatprep.subr.mxu0 %v1235
      %1302 = vmatpush1.msra.mxu0 %v1234
      %1303 = vmatprep.subr.mxu0 %v1239
      %1304 = vmatpush1.msra.mxu0 %v1238
      %1305 = vmatprep.subr.mxu0 %v1243
      %1306 = vmatpush1.msra.mxu0 %v1242
      %1307 = vmatprep.subr.mxu0 0.0
      %1308 = vmatpush1.msra.mxu0 0.0
      %1309 = vmatprep.subr.mxu0 0.0
      %1310 = vmatpush1.msra.mxu0 0.0
      %1311 = vmatprep.subr.mxu0 0.0
      %1312 = vmatpush1.msra.mxu0 0.0
      %1313 = vmatprep.subr.mxu0 0.0
      %1314 = vmatpush1.msra.mxu0 0.0
      %1315 = vmatprep.subr.mxu0 0.0
      %1316 = vmatpush1.msra.mxu0 0.0
      %1317 = vmatprep.subr.mxu0 0.0
      %1318 = vmatpush1.msra.mxu0 0.0
      %1319 = vmatprep.subr.mxu0 0.0
      %1320 = vmatpush1.msra.mxu0 0.0
      %1321 = vmatprep.subr.mxu0 0.0
      %1322 = vmatpush1.msra.mxu0 0.0
      %1323 = vmatprep.subr.mxu0 0.0
      %1324 = vmatpush1.msra.mxu0 0.0
      %1325 = vmatprep.subr.mxu0 0.0
      %1326 = vmatpush1.msra.mxu0 0.0
      %1327 = vmatprep.subr.mxu0 0.0
      %1328 = vmatpush1.msra.mxu0 0.0
      %1329 = vmatprep.subr.mxu0 0.0
      %1330 = vmatpush1.msra.mxu0 0.0
      %1331 = vmatprep.subr.mxu0 0.0
      %1332 = vmatpush1.msra.mxu0 0.0
      %1333 = vmatprep.subr.mxu0 0.0
      %1334 = vmatpush1.msra.mxu0 0.0
      %1335 = vmatprep.mubr.f32.mxu0 %v1269
      %1336 = vmatmul.mubr.f32.gmra.mrb[0].mxu0 %v1172
      %v1337 = vpop.f32.mrb[0].mxu0
      %v1338 = vadd.f32 %v1251, %v1337
      %v1339 = vpop.f32.mrb[0].mxu0
      %v1340 = vadd.f32 %v1255, %v1339
      %1341 = vdwg.mxu0
      %1342 = vmatprep.subr.mxu0 %v1177
      %1343 = vmatpush1.msra.mxu0 %v1176
      %1344 = vmatprep.subr.mxu0 %v1181
      %1345 = vmatpush1.msra.mxu0 %v1180
      %1346 = vmatprep.subr.mxu0 %v1185
      %1347 = vmatpush1.msra.mxu0 %v1184
      %1348 = vmatprep.subr.mxu0 %v1189
      %1349 = vmatpush1.msra.mxu0 %v1188
      %1350 = vmatprep.subr.mxu0 %v1193
      %1351 = vmatpush1.msra.mxu0 %v1192
      %1352 = vmatprep.subr.mxu0 %v1197
      %1353 = vmatpush1.msra.mxu0 %v1196
      %1354 = vmatprep.subr.mxu0 %v1201
      %1355 = vmatpush1.msra.mxu0 %v1200
      %1356 = vmatprep.subr.mxu0 %v1205
      %1357 = vmatpush1.msra.mxu0 %v1204
      %1358 = vmatprep.subr.mxu0 %v1209
      %1359 = vmatpush1.msra.mxu0 %v1208
      %1360 = vmatprep.subr.mxu0 %v1213
      %1361 = vmatpush1.msra.mxu0 %v1212
      %1362 = vmatprep.subr.mxu0 %v1217
      %1363 = vmatpush1.msra.mxu0 %v1216
      %1364 = vmatprep.subr.mxu0 %v1221
      %1365 = vmatpush1.msra.mxu0 %v1220
      %1366 = vmatprep.subr.mxu0 %v1225
      %1367 = vmatpush1.msra.mxu0 %v1224
      %1368 = vmatprep.subr.mxu0 %v1229
      %1369 = vmatpush1.msra.mxu0 %v1228
      %1370 = vmatprep.subr.mxu0 %v1233
      %1371 = vmatpush1.msra.mxu0 %v1232
      %1372 = vmatprep.subr.mxu0 %v1237
      %1373 = vmatpush1.msra.mxu0 %v1236
      %1374 = vmatprep.subr.mxu0 %v1241
      %1375 = vmatpush1.msra.mxu0 %v1240
      %1376 = vmatprep.subr.mxu0 %v1245
      %1377 = vmatpush1.msra.mxu0 %v1244
      %1378 = vmatprep.subr.mxu0 0.0
      %1379 = vmatpush1.msra.mxu0 0.0
      %1380 = vmatprep.subr.mxu0 0.0
      %1381 = vmatpush1.msra.mxu0 0.0
      %1382 = vmatprep.subr.mxu0 0.0
      %1383 = vmatpush1.msra.mxu0 0.0
      %1384 = vmatprep.subr.mxu0 0.0
      %1385 = vmatpush1.msra.mxu0 0.0
      %1386 = vmatprep.subr.mxu0 0.0
      %1387 = vmatpush1.msra.mxu0 0.0
      %1388 = vmatprep.subr.mxu0 0.0
      %1389 = vmatpush1.msra.mxu0 0.0
      %1390 = vmatprep.subr.mxu0 0.0
      %1391 = vmatpush1.msra.mxu0 0.0
      %1392 = vmatprep.subr.mxu0 0.0
      %1393 = vmatpush1.msra.mxu0 0.0
      %1394 = vmatprep.subr.mxu0 0.0
      %1395 = vmatpush1.msra.mxu0 0.0
      %1396 = vmatprep.subr.mxu0 0.0
      %1397 = vmatpush1.msra.mxu0 0.0
      %1398 = vmatprep.subr.mxu0 0.0
      %1399 = vmatpush1.msra.mxu0 0.0
      %1400 = vmatprep.subr.mxu0 0.0
      %1401 = vmatpush1.msra.mxu0 0.0
      %1402 = vmatprep.subr.mxu0 0.0
      %1403 = vmatpush1.msra.mxu0 0.0
      %1404 = vmatprep.subr.mxu0 0.0
      %1405 = vmatpush1.msra.mxu0 0.0
      %1406 = vmatprep.mubr.f32.mxu0 %v1269
      %1407 = vmatmul.mubr.f32.gmra.mrb[0].mxu0 %v1172
      %v1408 = vpop.f32.mrb[0].mxu0
      %v1409 = vadd.f32 %v1259, %v1408
      %v1410 = vpop.f32.mrb[0].mxu0
      %v1411 = vadd.f32 %v1263, %v1410
      %1412 = vdwg.mxu0
      %v1413 = vtanh.pop %v1338
      %v1414 = vtanh.pop %v1340
      %v1415 = vtanh.pop %v1409
      %v1416 = vtanh.pop %v1411
      %v1417 = vld [vmem:[%s11] sm:$0xff]
      %v1418 = vld [vmem:[%s11 + $0x8] sm:$0xff]
      %v1419 = vld [vmem:[%s11 + $0x10] sm:$0xff]
      %v1420 = vld [vmem:[%s11 + $0x18] sm:$0xff]
      %v1421 = vld [vmem:[%s11 + $0x20] sm:$0xff]
      %v1422 = vld [vmem:[%s11 + $0x28] sm:$0xff]
      %v1423 = vld [vmem:[%s11 + $0x30] sm:$0xff]
      %v1424 = vld [vmem:[%s11 + $0x38] sm:$0xff]
      %v1425 = vld [vmem:[%s11 + $0x40] sm:$0xff]
      %v1426 = vld [vmem:[%s11 + $0x48] sm:$0xff]
      %v1427 = vld [vmem:[%s11 + $0x50] sm:$0xff]
      %v1428 = vld [vmem:[%s11 + $0x58] sm:$0xff]
      %v1429 = vld [vmem:[%s11 + $0x60] sm:$0xff]
      %v1430 = vld [vmem:[%s11 + $0x68] sm:$0xff]
      %v1431 = vld [vmem:[%s11 + $0x70] sm:$0xff]
      %v1432 = vld [vmem:[%s11 + $0x78] sm:$0xff]
      %v1433 = vld [vmem:[%s11 + $0x80] sm:$0xff]
      %v1434 = vld [vmem:[%s11 + $0x88] sm:$0xff]
      %v1435 = vld [vmem:[%s11 + $0x90] sm:$0xff]
      %v1436 = vld [vmem:[%s11 + $0x98] sm:$0xff]
      %v1437 = vld [vmem:[%s11 + $0xa0] sm:$0xff]
      %v1438 = vld [vmem:[%s11 + $0xa8] sm:$0xff]
      %v1439 = vld [vmem:[%s11 + $0xb0] sm:$0xff]
      %v1440 = vld [vmem:[%s11 + $0xb8] sm:$0xff]
      %v1441 = vld [vmem:[%s11 + $0xc0] sm:$0xff]
      %v1442 = vld [vmem:[%s11 + $0xc8] sm:$0xff]
      %v1443 = vld [vmem:[%s11 + $0xd0] sm:$0xff]
      %v1444 = vld [vmem:[%s11 + $0xd8] sm:$0xff]
      %v1445 = vld [vmem:[%s11 + $0xe0] sm:$0xff]
      %v1446 = vld [vmem:[%s11 + $0xe8] sm:$0xff]
      %v1447 = vld [vmem:[%s11 + $0xf0] sm:$0xff]
      %v1448 = vld [vmem:[%s11 + $0xf8] sm:$0xff]
      %v1449 = vld [vmem:[%s11 + $0x100] sm:$0xff]
      %v1450 = vld [vmem:[%s11 + $0x108] sm:$0xff]
      %v1451 = vld [vmem:[%s11 + $0x110] sm:$0xff]
      %v1452 = vld [vmem:[%s11 + $0x118] sm:$0xff]
      %v1453 = vld [vmem:[%s11 + $0x120] sm:$0xff]
      %v1454 = vld [vmem:[%s11 + $0x128] sm:$0xff]
      %v1455 = vld [vmem:[%s11 + $0x130] sm:$0xff]
      %v1456 = vld [vmem:[%s11 + $0x138] sm:$0xff]
      %v1457 = vld [vmem:[%s11 + $0x140] sm:$0xff]
      %v1458 = vld [vmem:[%s11 + $0x148] sm:$0xff]
      %v1459 = vld [vmem:[%s11 + $0x150] sm:$0xff]
      %v1460 = vld [vmem:[%s11 + $0x158] sm:$0xff]
      %v1461 = vld [vmem:[%s11 + $0x160] sm:$0xff]
      %v1462 = vld [vmem:[%s11 + $0x168] sm:$0xff]
      %v1463 = vld [vmem:[%s11 + $0x170] sm:$0xff]
      %v1464 = vld [vmem:[%s11 + $0x178] sm:$0xff]
      %v1465 = vld [vmem:[%s11 + $0x180] sm:$0xff]
      %v1466 = vld [vmem:[%s11 + $0x188] sm:$0xff]
      %v1467 = vld [vmem:[%s11 + $0x190] sm:$0xff]
      %v1468 = vld [vmem:[%s11 + $0x198] sm:$0xff]
      %v1469 = vld [vmem:[%s11 + $0x1a0] sm:$0xff]
      %v1470 = vld [vmem:[%s11 + $0x1a8] sm:$0xff]
      %v1471 = vld [vmem:[%s11 + $0x1b0] sm:$0xff]
      %v1472 = vld [vmem:[%s11 + $0x1b8] sm:$0xff]
      %v1473 = vld [vmem:[%s11 + $0x1c0] sm:$0xff]
      %v1474 = vld [vmem:[%s11 + $0x1c8] sm:$0xff]
      %v1475 = vld [vmem:[%s11 + $0x1d0] sm:$0xff]
      %v1476 = vld [vmem:[%s11 + $0x1d8] sm:$0xff]
      %v1477 = vld [vmem:[%s11 + $0x1e0] sm:$0xff]
      %v1478 = vld [vmem:[%s11 + $0x1e8] sm:$0xff]
      %v1479 = vld [vmem:[%s11 + $0x1f0] sm:$0xff]
      %v1480 = vld [vmem:[%s11 + $0x1f8] sm:$0xff]
      %v1481 = vld [vmem:[%s11 + $0x200] sm:$0xff]
      %v1482 = vld [vmem:[%s11 + $0x208] sm:$0xff]
      %v1483 = vld [vmem:[%s11 + $0x210] sm:$0xff]
      %v1484 = vld [vmem:[%s11 + $0x218] sm:$0xff]
      %v1485 = vld [vmem:[%s11 + $0x220] sm:$0xff]
      %v1486 = vld [vmem:[%s11 + $0x228] sm:$0xff]
      %v1487 = vld [vmem:[%s11 + $0x230] sm:$0xff]
      %v1488 = vld [vmem:[%s11 + $0x238] sm:$0xff]
      %v1489 = vld [vmem:[%s11 + $0x240] sm:$0xff]
      %v1490 = vld [vmem:[%s11 + $0x248] sm:$0xff]
      %v1491 = vld [vmem:[%s11 + $0x250] sm:$0xff]
      %v1492 = vld [vmem:[%s11 + $0x258] sm:$0xff]
      %v1493 = vld [vmem:[%s11 + $0x260] sm:$0xff]
      %v1494 = vld [vmem:[%s11 + $0x268] sm:$0xff]
      %v1495 = vld [vmem:[%s11 + $0x270] sm:$0xff]
      %v1496 = vld [vmem:[%s11 + $0x278] sm:$0xff]
      %v1497 = vld [vmem:[%s11 + $0x280] sm:$0xff]
      %v1498 = vld [vmem:[%s11 + $0x288] sm:$0xff]
      %v1499 = vld [vmem:[%s11 + $0x290] sm:$0xff]
      %v1500 = vld [vmem:[%s11 + $0x298] sm:$0xff]
      %v1501 = vld [vmem:[%s11 + $0x2a0] sm:$0xff]
      %v1502 = vld [vmem:[%s11 + $0x2a8] sm:$0xff]
      %v1503 = vld [vmem:[%s11 + $0x2b0] sm:$0xff]
      %v1504 = vld [vmem:[%s11 + $0x2b8] sm:$0xff]
      %v1505 = vld [vmem:[%s11 + $0x2c0] sm:$0xff]
      %v1506 = vld [vmem:[%s11 + $0x2c8] sm:$0xff]
      %v1507 = vld [vmem:[%s11 + $0x2d0] sm:$0xff]
      %v1508 = vld [vmem:[%s11 + $0x2d8] sm:$0xff]
      %v1509 = vld [vmem:[%s11 + $0x2e0] sm:$0xff]
      %v1510 = vld [vmem:[%s11 + $0x2e8] sm:$0xff]
      %v1511 = vld [vmem:[%s11 + $0x2f0] sm:$0xff]
      %v1512 = vld [vmem:[%s11 + $0x2f8] sm:$0xff]
      %v1513 = vld [vmem:[%s11 + $0x300] sm:$0xff]
      %v1514 = vld [vmem:[%s11 + $0x308] sm:$0xff]
      %v1515 = vld [vmem:[%s11 + $0x310] sm:$0xff]
      %v1516 = vld [vmem:[%s11 + $0x318] sm:$0xff]
      %v1517 = vld [vmem:[%s11 + $0x320] sm:$0xff]
      %v1518 = vld [vmem:[%s11 + $0x328] sm:$0xff]
      %v1519 = vld [vmem:[%s11 + $0x330] sm:$0xff]
      %v1520 = vld [vmem:[%s11 + $0x338] sm:$0xff]
      %v1521 = vld [vmem:[%s11 + $0x340] sm:$0xff]
      %v1522 = vld [vmem:[%s11 + $0x348] sm:$0xff]
      %v1523 = vld [vmem:[%s11 + $0x350] sm:$0xff]
      %v1524 = vld [vmem:[%s11 + $0x358] sm:$0xff]
      %v1525 = vld [vmem:[%s11 + $0x360] sm:$0xff]
      %v1526 = vld [vmem:[%s11 + $0x368] sm:$0xff]
      %v1527 = vld [vmem:[%s11 + $0x370] sm:$0xff]
      %v1528 = vld [vmem:[%s11 + $0x378] sm:$0xff]
      %v1529 = vld [vmem:[%s11 + $0x380] sm:$0xff]
      %v1530 = vld [vmem:[%s11 + $0x388] sm:$0xff]
      %v1531 = vld [vmem:[%s11 + $0x390] sm:$0xff]
      %v1532 = vld [vmem:[%s11 + $0x398] sm:$0xff]
      %v1533 = vld [vmem:[%s11 + $0x3a0] sm:$0xff]
      %v1534 = vld [vmem:[%s11 + $0x3a8] sm:$0xff]
      %v1535 = vld [vmem:[%s11 + $0x3b0] sm:$0xff]
      %v1536 = vld [vmem:[%s11 + $0x3b8] sm:$0xff]
      %v1537 = vld [vmem:[%s11 + $0x3c0] sm:$0xff]
      %v1538 = vld [vmem:[%s11 + $0x3c8] sm:$0xff]
      %v1539 = vld [vmem:[%s11 + $0x3d0] sm:$0xff]
      %v1540 = vld [vmem:[%s11 + $0x3d8] sm:$0xff]
      %v1541 = vld [vmem:[%s11 + $0x3e0] sm:$0xff]
      %v1542 = vld [vmem:[%s11 + $0x3e8] sm:$0xff]
      %v1543 = vld [vmem:[%s11 + $0x3f0] sm:$0xff]
      %v1544 = vld [vmem:[%s11 + $0x3f8] sm:$0xff]
      %v1545 = vld [vmem:[%s11 + $0x400] sm:$0xff]
      %v1546 = vld [vmem:[%s11 + $0x408] sm:$0xff]
      %v1547 = vld [vmem:[%s11 + $0x410] sm:$0xff]
      %v1548 = vld [vmem:[%s11 + $0x418] sm:$0xff]
      %v1549 = vld [vmem:[%s11 + $0x420] sm:$0xff]
      %v1550 = vld [vmem:[%s11 + $0x428] sm:$0xff]
      %v1551 = vld [vmem:[%s11 + $0x430] sm:$0xff]
      %v1552 = vld [vmem:[%s11 + $0x438] sm:$0xff]
      %v1553 = vld [vmem:[%s11 + $0x440] sm:$0xff]
      %v1554 = vld [vmem:[%s11 + $0x448] sm:$0xff]
      %v1555 = vld [vmem:[%s11 + $0x450] sm:$0xff]
      %v1556 = vld [vmem:[%s11 + $0x458] sm:$0xff]
      %v1557 = vld [vmem:[%s11 + $0x460] sm:$0xff]
      %v1558 = vld [vmem:[%s11 + $0x468] sm:$0xff]
      %v1559 = vld [vmem:[%s11 + $0x470] sm:$0xff]
      %v1560 = vld [vmem:[%s11 + $0x478] sm:$0xff]
      %v1561 = vld [vmem:[%s11 + $0x480] sm:$0xff]
      %v1562 = vld [vmem:[%s11 + $0x488] sm:$0xff]
      %v1563 = vld [vmem:[%s11 + $0x490] sm:$0xff]
      %v1564 = vld [vmem:[%s11 + $0x498] sm:$0xff]
      %v1565 = vld [vmem:[%s11 + $0x4a0] sm:$0xff]
      %v1566 = vld [vmem:[%s11 + $0x4a8] sm:$0xff]
      %v1567 = vld [vmem:[%s11 + $0x4b0] sm:$0xff]
      %v1568 = vld [vmem:[%s11 + $0x4b8] sm:$0xff]
      %v1569 = vld [vmem:[%s11 + $0x4c0] sm:$0xff]
      %v1570 = vld [vmem:[%s11 + $0x4c8] sm:$0xff]
      %v1571 = vld [vmem:[%s11 + $0x4d0] sm:$0xff]
      %v1572 = vld [vmem:[%s11 + $0x4d8] sm:$0xff]
      %v1573 = vld [vmem:[%s11 + $0x4e0] sm:$0xff]
      %v1574 = vld [vmem:[%s11 + $0x4e8] sm:$0xff]
      %v1575 = vld [vmem:[%s11 + $0x4f0] sm:$0xff]
      %v1576 = vld [vmem:[%s11 + $0x4f8] sm:$0xff]
      %v1577 = vld [vmem:[%s11 + $0x500] sm:$0xff]
      %v1578 = vld [vmem:[%s11 + $0x508] sm:$0xff]
      %v1579 = vld [vmem:[%s11 + $0x510] sm:$0xff]
      %v1580 = vld [vmem:[%s11 + $0x518] sm:$0xff]
      %v1581 = vld [vmem:[%s11 + $0x520] sm:$0xff]
      %v1582 = vld [vmem:[%s11 + $0x528] sm:$0xff]
      %v1583 = vld [vmem:[%s11 + $0x530] sm:$0xff]
      %v1584 = vld [vmem:[%s11 + $0x538] sm:$0xff]
      %v1585 = vld [vmem:[%s11 + $0x540] sm:$0xff]
      %v1586 = vld [vmem:[%s11 + $0x548] sm:$0xff]
      %v1587 = vld [vmem:[%s11 + $0x550] sm:$0xff]
      %v1588 = vld [vmem:[%s11 + $0x558] sm:$0xff]
      %v1589 = vld [vmem:[%s11 + $0x560] sm:$0xff]
      %v1590 = vld [vmem:[%s11 + $0x568] sm:$0xff]
      %v1591 = vld [vmem:[%s11 + $0x570] sm:$0xff]
      %v1592 = vld [vmem:[%s11 + $0x578] sm:$0xff]
      %v1593 = vld [vmem:[%s11 + $0x580] sm:$0xff]
      %v1594 = vld [vmem:[%s11 + $0x588] sm:$0xff]
      %v1595 = vld [vmem:[%s11 + $0x590] sm:$0xff]
      %v1596 = vld [vmem:[%s11 + $0x598] sm:$0xff]
      %v1597 = vld [vmem:[%s11 + $0x5a0] sm:$0xff]
      %v1598 = vld [vmem:[%s11 + $0x5a8] sm:$0xff]
      %v1599 = vld [vmem:[%s11 + $0x5b0] sm:$0xff]
      %v1600 = vld [vmem:[%s11 + $0x5b8] sm:$0xff]
      %v1601 = vld [vmem:[%s11 + $0x5c0] sm:$0xff]
      %v1602 = vld [vmem:[%s11 + $0x5c8] sm:$0xff]
      %v1603 = vld [vmem:[%s11 + $0x5d0] sm:$0xff]
      %v1604 = vld [vmem:[%s11 + $0x5d8] sm:$0xff]
      %v1605 = vld [vmem:[%s11 + $0x5e0] sm:$0xff]
      %v1606 = vld [vmem:[%s11 + $0x5e8] sm:$0xff]
      %v1607 = vld [vmem:[%s11 + $0x5f0] sm:$0xff]
      %v1608 = vld [vmem:[%s11 + $0x5f8] sm:$0xff]
      %v1609 = vld [vmem:[%s11 + $0x600] sm:$0xff]
      %v1610 = vld [vmem:[%s11 + $0x608] sm:$0xff]
      %v1611 = vld [vmem:[%s11 + $0x610] sm:$0xff]
      %v1612 = vld [vmem:[%s11 + $0x618] sm:$0xff]
      %v1613 = vld [vmem:[%s11 + $0x620] sm:$0xff]
      %v1614 = vld [vmem:[%s11 + $0x628] sm:$0xff]
      %v1615 = vld [vmem:[%s11 + $0x630] sm:$0xff]
      %v1616 = vld [vmem:[%s11 + $0x638] sm:$0xff]
      %v1617 = vld [vmem:[%s11 + $0x640] sm:$0xff]
      %v1618 = vld [vmem:[%s11 + $0x648] sm:$0xff]
      %v1619 = vld [vmem:[%s11 + $0x650] sm:$0xff]
      %v1620 = vld [vmem:[%s11 + $0x658] sm:$0xff]
      %v1621 = vld [vmem:[%s11 + $0x660] sm:$0xff]
      %v1622 = vld [vmem:[%s11 + $0x668] sm:$0xff]
      %v1623 = vld [vmem:[%s11 + $0x670] sm:$0xff]
      %v1624 = vld [vmem:[%s11 + $0x678] sm:$0xff]
      %v1625 = vld [vmem:[%s11 + $0x680] sm:$0xff]
      %v1626 = vld [vmem:[%s11 + $0x688] sm:$0xff]
      %v1627 = vld [vmem:[%s11 + $0x690] sm:$0xff]
      %v1628 = vld [vmem:[%s11 + $0x698] sm:$0xff]
      %v1629 = vld [vmem:[%s11 + $0x6a0] sm:$0xff]
      %v1630 = vld [vmem:[%s11 + $0x6a8] sm:$0xff]
      %v1631 = vld [vmem:[%s11 + $0x6b0] sm:$0xff]
      %v1632 = vld [vmem:[%s11 + $0x6b8] sm:$0xff]
      %v1633 = vld [vmem:[%s11 + $0x6c0] sm:$0xff]
      %v1634 = vld [vmem:[%s11 + $0x6c8] sm:$0xff]
      %v1635 = vld [vmem:[%s11 + $0x6d0] sm:$0xff]
      %v1636 = vld [vmem:[%s11 + $0x6d8] sm:$0xff]
      %v1637 = vld [vmem:[%s11 + $0x6e0] sm:$0xff]
      %v1638 = vld [vmem:[%s11 + $0x6e8] sm:$0xff]
      %v1639 = vld [vmem:[%s11 + $0x6f0] sm:$0xff]
      %v1640 = vld [vmem:[%s11 + $0x6f8] sm:$0xff]
      %v1641 = vld [vmem:[%s11 + $0x700] sm:$0x3]
      %v1642 = vld [vmem:[%s11 + $0x708] sm:$0x3]
      %v1643 = vld [vmem:[%s11 + $0x710] sm:$0x3]
      %v1644 = vld [vmem:[%s11 + $0x718] sm:$0x3]
      %v1645 = vld [vmem:[%s12] sm:$0xf]
      %v1647 = vlaneseq
      %v1648 = vshrl.u32 %v1647, 7
      %v1649 = vsub.s32 0, %v1648
      %v1650 = vrot.slane %v1645, %v1649
      %v1651 = vlaneseq
      %v1652 = vshrl.u32 %v1651, 7
      %v1653 = vsub.s32 1, %v1652
      %v1654 = vrot.slane %v1645, %v1653
      %v1655 = vlaneseq
      %v1656 = vshrl.u32 %v1655, 7
      %v1657 = vsub.s32 2, %v1656
      %v1658 = vrot.slane %v1645, %v1657
      %v1659 = vlaneseq
      %v1660 = vshrl.u32 %v1659, 7
      %v1661 = vsub.s32 3, %v1660
      %v1662 = vrot.slane %v1645, %v1661
      %vm1667 = vcmask 539648
      %v1669 = vsel %vm1667, %v1416, 0
      %vm1671 = vcmask 1041408
      %v1673 = vsel %vm1671, %v1641, 0
      %v1676 = vsel %vm1671, %v1642, 0
      %v1679 = vsel %vm1671, %v1643, 0
      %v1682 = vsel %vm1671, %v1644, 0
      %1684 = vmatprep.subr.mxu0 %v1418
      %1685 = vmatpush1.msra.mxu0 %v1417
      %1686 = vmatprep.subr.mxu0 %v1422
      %1687 = vmatpush1.msra.mxu0 %v1421
      %1688 = vmatprep.subr.mxu0 %v1426
      %1689 = vmatpush1.msra.mxu0 %v1425
      %1690 = vmatprep.subr.mxu0 %v1430
      %1691 = vmatpush1.msra.mxu0 %v1429
      %1692 = vmatprep.subr.mxu0 %v1434
      %1693 = vmatpush1.msra.mxu0 %v1433
      %1694 = vmatprep.subr.mxu0 %v1438
      %1695 = vmatpush1.msra.mxu0 %v1437
      %1696 = vmatprep.subr.mxu0 %v1442
      %1697 = vmatpush1.msra.mxu0 %v1441
      %1698 = vmatprep.subr.mxu0 %v1446
      %1699 = vmatpush1.msra.mxu0 %v1445
      %1700 = vmatprep.subr.mxu0 %v1450
      %1701 = vmatpush1.msra.mxu0 %v1449
      %1702 = vmatprep.subr.mxu0 %v1454
      %1703 = vmatpush1.msra.mxu0 %v1453
      %1704 = vmatprep.subr.mxu0 %v1458
      %1705 = vmatpush1.msra.mxu0 %v1457
      %1706 = vmatprep.subr.mxu0 %v1462
      %1707 = vmatpush1.msra.mxu0 %v1461
      %1708 = vmatprep.subr.mxu0 %v1466
      %1709 = vmatpush1.msra.mxu0 %v1465
      %1710 = vmatprep.subr.mxu0 %v1470
      %1711 = vmatpush1.msra.mxu0 %v1469
      %1712 = vmatprep.subr.mxu0 %v1474
      %1713 = vmatpush1.msra.mxu0 %v1473
      %1714 = vmatprep.subr.mxu0 %v1478
      %1715 = vmatpush1.msra.mxu0 %v1477
      %1716 = vmatprep.subr.mxu0 %v1482
      %1717 = vmatpush1.msra.mxu0 %v1481
      %1718 = vmatprep.subr.mxu0 %v1486
      %1719 = vmatpush1.msra.mxu0 %v1485
      %1720 = vmatprep.subr.mxu0 %v1490
      %1721 = vmatpush1.msra.mxu0 %v1489
      %1722 = vmatprep.subr.mxu0 %v1494
      %1723 = vmatpush1.msra.mxu0 %v1493
      %1724 = vmatprep.subr.mxu0 %v1498
      %1725 = vmatpush1.msra.mxu0 %v1497
      %1726 = vmatprep.subr.mxu0 %v1502
      %1727 = vmatpush1.msra.mxu0 %v1501
      %1728 = vmatprep.subr.mxu0 %v1506
      %1729 = vmatpush1.msra.mxu0 %v1505
      %1730 = vmatprep.subr.mxu0 %v1510
      %1731 = vmatpush1.msra.mxu0 %v1509
      %1732 = vmatprep.subr.mxu0 %v1514
      %1733 = vmatpush1.msra.mxu0 %v1513
      %1734 = vmatprep.subr.mxu0 %v1518
      %1735 = vmatpush1.msra.mxu0 %v1517
      %1736 = vmatprep.subr.mxu0 %v1522
      %1737 = vmatpush1.msra.mxu0 %v1521
      %1738 = vmatprep.subr.mxu0 %v1526
      %1739 = vmatpush1.msra.mxu0 %v1525
      %1740 = vmatprep.subr.mxu0 %v1530
      %1741 = vmatpush1.msra.mxu0 %v1529
      %1742 = vmatprep.subr.mxu0 %v1534
      %1743 = vmatpush1.msra.mxu0 %v1533
      %1744 = vmatprep.subr.mxu0 %v1538
      %1745 = vmatpush1.msra.mxu0 %v1537
      %1746 = vmatprep.subr.mxu0 %v1542
      %1747 = vmatpush1.msra.mxu0 %v1541
      %1748 = vmatprep.mubr.f32.mxu0 %v1414
      %1749 = vmatmul.mubr.f32.gmra.mrb[0].mxu0 %v1413
      %v1750 = vpop.f32.mrb[0].mxu0
      %v1751 = vadd.f32 %v1650, %v1750
      %v1752 = vpop.f32.mrb[0].mxu0
      %v1753 = vadd.f32 %v1654, %v1752
      %1754 = vdwg.mxu0
      %1755 = vmatprep.subr.mxu0 %v1546
      %1756 = vmatpush1.msra.mxu0 %v1545
      %1757 = vmatprep.subr.mxu0 %v1550
      %1758 = vmatpush1.msra.mxu0 %v1549
      %1759 = vmatprep.subr.mxu0 %v1554
      %1760 = vmatpush1.msra.mxu0 %v1553
      %1761 = vmatprep.subr.mxu0 %v1558
      %1762 = vmatpush1.msra.mxu0 %v1557
      %1763 = vmatprep.subr.mxu0 %v1562
      %1764 = vmatpush1.msra.mxu0 %v1561
      %1765 = vmatprep.subr.mxu0 %v1566
      %1766 = vmatpush1.msra.mxu0 %v1565
      %1767 = vmatprep.subr.mxu0 %v1570
      %1768 = vmatpush1.msra.mxu0 %v1569
      %1769 = vmatprep.subr.mxu0 %v1574
      %1770 = vmatpush1.msra.mxu0 %v1573
      %1771 = vmatprep.subr.mxu0 %v1578
      %1772 = vmatpush1.msra.mxu0 %v1577
      %1773 = vmatprep.subr.mxu0 %v1582
      %1774 = vmatpush1.msra.mxu0 %v1581
      %1775 = vmatprep.subr.mxu0 %v1586
      %1776 = vmatpush1.msra.mxu0 %v1585
      %1777 = vmatprep.subr.mxu0 %v1590
      %1778 = vmatpush1.msra.mxu0 %v1589
      %1779 = vmatprep.subr.mxu0 %v1594
      %1780 = vmatpush1.msra.mxu0 %v1593
      %1781 = vmatprep.subr.mxu0 %v1598
      %1782 = vmatpush1.msra.mxu0 %v1597
      %1783 = vmatprep.subr.mxu0 %v1602
      %1784 = vmatpush1.msra.mxu0 %v1601
      %1785 = vmatprep.subr.mxu0 %v1606
      %1786 = vmatpush1.msra.mxu0 %v1605
      %1787 = vmatprep.subr.mxu0 %v1610
      %1788 = vmatpush1.msra.mxu0 %v1609
      %1789 = vmatprep.subr.mxu0 %v1614
      %1790 = vmatpush1.msra.mxu0 %v1613
      %1791 = vmatprep.subr.mxu0 %v1618
      %1792 = vmatpush1.msra.mxu0 %v1617
      %1793 = vmatprep.subr.mxu0 %v1622
      %1794 = vmatpush1.msra.mxu0 %v1621
      %1795 = vmatprep.subr.mxu0 %v1626
      %1796 = vmatpush1.msra.mxu0 %v1625
      %1797 = vmatprep.subr.mxu0 %v1630
      %1798 = vmatpush1.msra.mxu0 %v1629
      %1799 = vmatprep.subr.mxu0 %v1634
      %1800 = vmatpush1.msra.mxu0 %v1633
      %1801 = vmatprep.subr.mxu0 %v1638
      %1802 = vmatpush1.msra.mxu0 %v1637
      %1803 = vmatprep.subr.mxu0 %v1676
      %1804 = vmatpush1.msra.mxu0 %v1673
      %1805 = vmatprep.subr.mxu0 0.0
      %1806 = vmatpush1.msra.mxu0 0.0
      %1807 = vmatprep.subr.mxu0 0.0
      %1808 = vmatpush1.msra.mxu0 0.0
      %1809 = vmatprep.subr.mxu0 0.0
      %1810 = vmatpush1.msra.mxu0 0.0
      %1811 = vmatprep.subr.mxu0 0.0
      %1812 = vmatpush1.msra.mxu0 0.0
      %1813 = vmatprep.subr.mxu0 0.0
      %1814 = vmatpush1.msra.mxu0 0.0
      %1815 = vmatprep.subr.mxu0 0.0
      %1816 = vmatpush1.msra.mxu0 0.0
      %1817 = vmatprep.subr.mxu0 0.0
      %1818 = vmatpush1.msra.mxu0 0.0
      %1819 = vmatprep.mubr.f32.mxu0 %v1669
      %1820 = vmatmul.mubr.f32.gmra.mrb[0].mxu0 %v1415
      %v1821 = vpop.f32.mrb[0].mxu0
      %v1822 = vadd.f32 %v1751, %v1821
      %v1823 = vpop.f32.mrb[0].mxu0
      %v1824 = vadd.f32 %v1753, %v1823
      %1825 = vdwg.mxu0
      %1826 = vmatprep.subr.mxu0 %v1420
      %1827 = vmatpush1.msra.mxu0 %v1419
      %1828 = vmatprep.subr.mxu0 %v1424
      %1829 = vmatpush1.msra.mxu0 %v1423
      %1830 = vmatprep.subr.mxu0 %v1428
      %1831 = vmatpush1.msra.mxu0 %v1427
      %1832 = vmatprep.subr.mxu0 %v1432
      %1833 = vmatpush1.msra.mxu0 %v1431
      %1834 = vmatprep.subr.mxu0 %v1436
      %1835 = vmatpush1.msra.mxu0 %v1435
      %1836 = vmatprep.subr.mxu0 %v1440
      %1837 = vmatpush1.msra.mxu0 %v1439
      %1838 = vmatprep.subr.mxu0 %v1444
      %1839 = vmatpush1.msra.mxu0 %v1443
      %1840 = vmatprep.subr.mxu0 %v1448
      %1841 = vmatpush1.msra.mxu0 %v1447
      %1842 = vmatprep.subr.mxu0 %v1452
      %1843 = vmatpush1.msra.mxu0 %v1451
      %1844 = vmatprep.subr.mxu0 %v1456
      %1845 = vmatpush1.msra.mxu0 %v1455
      %1846 = vmatprep.subr.mxu0 %v1460
      %1847 = vmatpush1.msra.mxu0 %v1459
      %1848 = vmatprep.subr.mxu0 %v1464
      %1849 = vmatpush1.msra.mxu0 %v1463
      %1850 = vmatprep.subr.mxu0 %v1468
      %1851 = vmatpush1.msra.mxu0 %v1467
      %1852 = vmatprep.subr.mxu0 %v1472
      %1853 = vmatpush1.msra.mxu0 %v1471
      %1854 = vmatprep.subr.mxu0 %v1476
      %1855 = vmatpush1.msra.mxu0 %v1475
      %1856 = vmatprep.subr.mxu0 %v1480
      %1857 = vmatpush1.msra.mxu0 %v1479
      %1858 = vmatprep.subr.mxu0 %v1484
      %1859 = vmatpush1.msra.mxu0 %v1483
      %1860 = vmatprep.subr.mxu0 %v1488
      %1861 = vmatpush1.msra.mxu0 %v1487
      %1862 = vmatprep.subr.mxu0 %v1492
      %1863 = vmatpush1.msra.mxu0 %v1491
      %1864 = vmatprep.subr.mxu0 %v1496
      %1865 = vmatpush1.msra.mxu0 %v1495
      %1866 = vmatprep.subr.mxu0 %v1500
      %1867 = vmatpush1.msra.mxu0 %v1499
      %1868 = vmatprep.subr.mxu0 %v1504
      %1869 = vmatpush1.msra.mxu0 %v1503
      %1870 = vmatprep.subr.mxu0 %v1508
      %1871 = vmatpush1.msra.mxu0 %v1507
      %1872 = vmatprep.subr.mxu0 %v1512
      %1873 = vmatpush1.msra.mxu0 %v1511
      %1874 = vmatprep.subr.mxu0 %v1516
      %1875 = vmatpush1.msra.mxu0 %v1515
      %1876 = vmatprep.subr.mxu0 %v1520
      %1877 = vmatpush1.msra.mxu0 %v1519
      %1878 = vmatprep.subr.mxu0 %v1524
      %1879 = vmatpush1.msra.mxu0 %v1523
      %1880 = vmatprep.subr.mxu0 %v1528
      %1881 = vmatpush1.msra.mxu0 %v1527
      %1882 = vmatprep.subr.mxu0 %v1532
      %1883 = vmatpush1.msra.mxu0 %v1531
      %1884 = vmatprep.subr.mxu0 %v1536
      %1885 = vmatpush1.msra.mxu0 %v1535
      %1886 = vmatprep.subr.mxu0 %v1540
      %1887 = vmatpush1.msra.mxu0 %v1539
      %1888 = vmatprep.subr.mxu0 %v1544
      %1889 = vmatpush1.msra.mxu0 %v1543
      %1890 = vmatprep.mubr.f32.mxu0 %v1414
      %1891 = vmatmul.mubr.f32.gmra.mrb[0].mxu0 %v1413
      %v1892 = vpop.f32.mrb[0].mxu0
      %v1893 = vadd.f32 %v1658, %v1892
      %v1894 = vpop.f32.mrb[0].mxu0
      %v1895 = vadd.f32 %v1662, %v1894
      %1896 = vdwg.mxu0
      %1897 = vmatprep.subr.mxu0 %v1548
      %1898 = vmatpush1.msra.mxu0 %v1547
      %1899 = vmatprep.subr.mxu0 %v1552
      %1900 = vmatpush1.msra.mxu0 %v1551
      %1901 = vmatprep.subr.mxu0 %v1556
      %1902 = vmatpush1.msra.mxu0 %v1555
      %1903 = vmatprep.subr.mxu0 %v1560
      %1904 = vmatpush1.msra.mxu0 %v1559
      %1905 = vmatprep.subr.mxu0 %v1564
      %1906 = vmatpush1.msra.mxu0 %v1563
      %1907 = vmatprep.subr.mxu0 %v1568
      %1908 = vmatpush1.msra.mxu0 %v1567
      %1909 = vmatprep.subr.mxu0 %v1572
      %1910 = vmatpush1.msra.mxu0 %v1571
      %1911 = vmatprep.subr.mxu0 %v1576
      %1912 = vmatpush1.msra.mxu0 %v1575
      %1913 = vmatprep.subr.mxu0 %v1580
      %1914 = vmatpush1.msra.mxu0 %v1579
      %1915 = vmatprep.subr.mxu0 %v1584
      %1916 = vmatpush1.msra.mxu0 %v1583
      %1917 = vmatprep.subr.mxu0 %v1588
      %1918 = vmatpush1.msra.mxu0 %v1587
      %1919 = vmatprep.subr.mxu0 %v1592
      %1920 = vmatpush1.msra.mxu0 %v1591
      %1921 = vmatprep.subr.mxu0 %v1596
      %1922 = vmatpush1.msra.mxu0 %v1595
      %1923 = vmatprep.subr.mxu0 %v1600
      %1924 = vmatpush1.msra.mxu0 %v1599
      %1925 = vmatprep.subr.mxu0 %v1604
      %1926 = vmatpush1.msra.mxu0 %v1603
      %1927 = vmatprep.subr.mxu0 %v1608
      %1928 = vmatpush1.msra.mxu0 %v1607
      %1929 = vmatprep.subr.mxu0 %v1612
      %1930 = vmatpush1.msra.mxu0 %v1611
      %1931 = vmatprep.subr.mxu0 %v1616
      %1932 = vmatpush1.msra.mxu0 %v1615
      %1933 = vmatprep.subr.mxu0 %v1620
      %1934 = vmatpush1.msra.mxu0 %v1619
      %1935 = vmatprep.subr.mxu0 %v1624
      %1936 = vmatpush1.msra.mxu0 %v1623
      %1937 = vmatprep.subr.mxu0 %v1628
      %1938 = vmatpush1.msra.mxu0 %v1627
      %1939 = vmatprep.subr.mxu0 %v1632
      %1940 = vmatpush1.msra.mxu0 %v1631
      %1941 = vmatprep.subr.mxu0 %v1636
      %1942 = vmatpush1.msra.mxu0 %v1635
      %1943 = vmatprep.subr.mxu0 %v1640
      %1944 = vmatpush1.msra.mxu0 %v1639
      %1945 = vmatprep.subr.mxu0 %v1682
      %1946 = vmatpush1.msra.mxu0 %v1679
      %1947 = vmatprep.subr.mxu0 0.0
      %1948 = vmatpush1.msra.mxu0 0.0
      %1949 = vmatprep.subr.mxu0 0.0
      %1950 = vmatpush1.msra.mxu0 0.0
      %1951 = vmatprep.subr.mxu0 0.0
      %1952 = vmatpush1.msra.mxu0 0.0
      %1953 = vmatprep.subr.mxu0 0.0
      %1954 = vmatpush1.msra.mxu0 0.0
      %1955 = vmatprep.subr.mxu0 0.0
      %1956 = vmatpush1.msra.mxu0 0.0
      %1957 = vmatprep.subr.mxu0 0.0
      %1958 = vmatpush1.msra.mxu0 0.0
      %1959 = vmatprep.subr.mxu0 0.0
      %1960 = vmatpush1.msra.mxu0 0.0
      %1961 = vmatprep.mubr.f32.mxu0 %v1669
      %1962 = vmatmul.mubr.f32.gmra.mrb[0].mxu0 %v1415
      %v1963 = vpop.f32.mrb[0].mxu0
      %v1964 = vadd.f32 %v1893, %v1963
      %v1965 = vpop.f32.mrb[0].mxu0
      %v1966 = vadd.f32 %v1895, %v1965
      %1967 = vdwg.mxu0
      %v1968 = vtanh.pop %v1822
      %v1969 = vtanh.pop %v1824
      %v1970 = vtanh.pop %v1964
      %v1971 = vtanh.pop %v1966
      %v1972 = vld [vmem:[%s13] sm:$0xff]
      %v1973 = vld [vmem:[%s13 + $0x8] sm:$0xff]
      %v1974 = vld [vmem:[%s13 + $0x10] sm:$0xff]
      %v1975 = vld [vmem:[%s13 + $0x18] sm:$0xff]
      %v1976 = vld [vmem:[%s13 + $0x20] sm:$0xff]
      %v1977 = vld [vmem:[%s13 + $0x28] sm:$0xff]
      %v1978 = vld [vmem:[%s13 + $0x30] sm:$0xff]
      %v1979 = vld [vmem:[%s13 + $0x38] sm:$0xff]
      %v1980 = vld [vmem:[%s13 + $0x40] sm:$0xff]
      %v1981 = vld [vmem:[%s13 + $0x48] sm:$0xff]
      %v1982 = vld [vmem:[%s13 + $0x50] sm:$0xff]
      %v1983 = vld [vmem:[%s13 + $0x58] sm:$0xff]
      %v1984 = vld [vmem:[%s13 + $0x60] sm:$0xff]
      %v1985 = vld [vmem:[%s13 + $0x68] sm:$0xff]
      %v1986 = vld [vmem:[%s13 + $0x70] sm:$0xff]
      %v1987 = vld [vmem:[%s13 + $0x78] sm:$0xff]
      %v1988 = vld [vmem:[%s13 + $0x80] sm:$0xff]
      %v1989 = vld [vmem:[%s13 + $0x88] sm:$0xff]
      %v1990 = vld [vmem:[%s13 + $0x90] sm:$0xff]
      %v1991 = vld [vmem:[%s13 + $0x98] sm:$0xff]
      %v1992 = vld [vmem:[%s13 + $0xa0] sm:$0xff]
      %v1993 = vld [vmem:[%s13 + $0xa8] sm:$0xff]
      %v1994 = vld [vmem:[%s13 + $0xb0] sm:$0xff]
      %v1995 = vld [vmem:[%s13 + $0xb8] sm:$0xff]
      %v1996 = vld [vmem:[%s13 + $0xc0] sm:$0xff]
      %v1997 = vld [vmem:[%s13 + $0xc8] sm:$0xff]
      %v1998 = vld [vmem:[%s13 + $0xd0] sm:$0xff]
      %v1999 = vld [vmem:[%s13 + $0xd8] sm:$0xff]
      %v2000 = vld [vmem:[%s13 + $0xe0] sm:$0xff]
      %v2001 = vld [vmem:[%s13 + $0xe8] sm:$0xff]
      %v2002 = vld [vmem:[%s13 + $0xf0] sm:$0xff]
      %v2003 = vld [vmem:[%s13 + $0xf8] sm:$0xff]
      %v2004 = vld [vmem:[%s13 + $0x100] sm:$0xff]
      %v2005 = vld [vmem:[%s13 + $0x108] sm:$0xff]
      %v2006 = vld [vmem:[%s13 + $0x110] sm:$0xff]
      %v2007 = vld [vmem:[%s13 + $0x118] sm:$0xff]
      %v2008 = vld [vmem:[%s13 + $0x120] sm:$0xff]
      %v2009 = vld [vmem:[%s13 + $0x128] sm:$0xff]
      %v2010 = vld [vmem:[%s13 + $0x130] sm:$0xff]
      %v2011 = vld [vmem:[%s13 + $0x138] sm:$0xff]
      %v2012 = vld [vmem:[%s13 + $0x140] sm:$0xff]
      %v2013 = vld [vmem:[%s13 + $0x148] sm:$0xff]
      %v2014 = vld [vmem:[%s13 + $0x150] sm:$0xff]
      %v2015 = vld [vmem:[%s13 + $0x158] sm:$0xff]
      %v2016 = vld [vmem:[%s13 + $0x160] sm:$0xff]
      %v2017 = vld [vmem:[%s13 + $0x168] sm:$0xff]
      %v2018 = vld [vmem:[%s13 + $0x170] sm:$0xff]
      %v2019 = vld [vmem:[%s13 + $0x178] sm:$0xff]
      %v2020 = vld [vmem:[%s13 + $0x180] sm:$0xff]
      %v2021 = vld [vmem:[%s13 + $0x188] sm:$0xff]
      %v2022 = vld [vmem:[%s13 + $0x190] sm:$0xff]
      %v2023 = vld [vmem:[%s13 + $0x198] sm:$0xff]
      %v2024 = vld [vmem:[%s13 + $0x1a0] sm:$0xff]
      %v2025 = vld [vmem:[%s13 + $0x1a8] sm:$0xff]
      %v2026 = vld [vmem:[%s13 + $0x1b0] sm:$0xff]
      %v2027 = vld [vmem:[%s13 + $0x1b8] sm:$0xff]
      %v2028 = vld [vmem:[%s13 + $0x1c0] sm:$0x3]
      %v2029 = vld [vmem:[%s14] sm:$0x1]
      %v2031 = vlaneseq
      %v2032 = vshrl.u32 %v2031, 7
      %v2033 = vsub.s32 0, %v2032
      %v2034 = vrot.slane %v2029, %v2033
      %v2037 = vsel %vm1667, %v1971, 0
      %v2040 = vsel %vm1671, %v2028, 0
      %2042 = vmatprep.subr.mxu0 0.0
      %2043 = vmatpush1.msra.mxu0 %v1972
      %2044 = vmatprep.subr.mxu0 0.0
      %2045 = vmatpush1.msra.mxu0 %v1973
      %2046 = vmatprep.subr.mxu0 0.0
      %2047 = vmatpush1.msra.mxu0 %v1974
      %2048 = vmatprep.subr.mxu0 0.0
      %2049 = vmatpush1.msra.mxu0 %v1975
      %2050 = vmatprep.subr.mxu0 0.0
      %2051 = vmatpush1.msra.mxu0 %v1976
      %2052 = vmatprep.subr.mxu0 0.0
      %2053 = vmatpush1.msra.mxu0 %v1977
      %2054 = vmatprep.subr.mxu0 0.0
      %2055 = vmatpush1.msra.mxu0 %v1978
      %2056 = vmatprep.subr.mxu0 0.0
      %2057 = vmatpush1.msra.mxu0 %v1979
      %2058 = vmatprep.subr.mxu0 0.0
      %2059 = vmatpush1.msra.mxu0 %v1980
      %2060 = vmatprep.subr.mxu0 0.0
      %2061 = vmatpush1.msra.mxu0 %v1981
      %2062 = vmatprep.subr.mxu0 0.0
      %2063 = vmatpush1.msra.mxu0 %v1982
      %2064 = vmatprep.subr.mxu0 0.0
      %2065 = vmatpush1.msra.mxu0 %v1983
      %2066 = vmatprep.subr.mxu0 0.0
      %2067 = vmatpush1.msra.mxu0 %v1984
      %2068 = vmatprep.subr.mxu0 0.0
      %2069 = vmatpush1.msra.mxu0 %v1985
      %2070 = vmatprep.subr.mxu0 0.0
      %2071 = vmatpush1.msra.mxu0 %v1986
      %2072 = vmatprep.subr.mxu0 0.0
      %2073 = vmatpush1.msra.mxu0 %v1987
      %2074 = vmatprep.subr.mxu0 0.0
      %2075 = vmatpush1.msra.mxu0 %v1988
      %2076 = vmatprep.subr.mxu0 0.0
      %2077 = vmatpush1.msra.mxu0 %v1989
      %2078 = vmatprep.subr.mxu0 0.0
      %2079 = vmatpush1.msra.mxu0 %v1990
      %2080 = vmatprep.subr.mxu0 0.0
      %2081 = vmatpush1.msra.mxu0 %v1991
      %2082 = vmatprep.subr.mxu0 0.0
      %2083 = vmatpush1.msra.mxu0 %v1992
      %2084 = vmatprep.subr.mxu0 0.0
      %2085 = vmatpush1.msra.mxu0 %v1993
      %2086 = vmatprep.subr.mxu0 0.0
      %2087 = vmatpush1.msra.mxu0 %v1994
      %2088 = vmatprep.subr.mxu0 0.0
      %2089 = vmatpush1.msra.mxu0 %v1995
      %2090 = vmatprep.subr.mxu0 0.0
      %2091 = vmatpush1.msra.mxu0 %v1996
      %2092 = vmatprep.subr.mxu0 0.0
      %2093 = vmatpush1.msra.mxu0 %v1997
      %2094 = vmatprep.subr.mxu0 0.0
      %2095 = vmatpush1.msra.mxu0 %v1998
      %2096 = vmatprep.subr.mxu0 0.0
      %2097 = vmatpush1.msra.mxu0 %v1999
      %2098 = vmatprep.subr.mxu0 0.0
      %2099 = vmatpush1.msra.mxu0 %v2000
      %2100 = vmatprep.subr.mxu0 0.0
      %2101 = vmatpush1.msra.mxu0 %v2001
      %2102 = vmatprep.subr.mxu0 0.0
      %2103 = vmatpush1.msra.mxu0 %v2002
      %2104 = vmatprep.subr.mxu0 0.0
      %2105 = vmatpush1.msra.mxu0 %v2003
      %2106 = vmatprep.mubr.f32.mxu0 %v1969
      %2107 = vmatmul.mubr.f32.gmra.mrb[0].mxu0 %v1968
      %v2108 = vpop.f32.mrb[0].mxu0
      %v2109 = vadd.f32 %v2034, %v2108
      %v2110 = vpop.f32.mrb[0].mxu0
      %2111 = vdwg.mxu0
      %2112 = vmatprep.subr.mxu0 0.0
      %2113 = vmatpush1.msra.mxu0 %v2004
      %2114 = vmatprep.subr.mxu0 0.0
      %2115 = vmatpush1.msra.mxu0 %v2005
      %2116 = vmatprep.subr.mxu0 0.0
      %2117 = vmatpush1.msra.mxu0 %v2006
      %2118 = vmatprep.subr.mxu0 0.0
      %2119 = vmatpush1.msra.mxu0 %v2007
      %2120 = vmatprep.subr.mxu0 0.0
      %2121 = vmatpush1.msra.mxu0 %v2008
      %2122 = vmatprep.subr.mxu0 0.0
      %2123 = vmatpush1.msra.mxu0 %v2009
      %2124 = vmatprep.subr.mxu0 0.0
      %2125 = vmatpush1.msra.mxu0 %v2010
      %2126 = vmatprep.subr.mxu0 0.0
      %2127 = vmatpush1.msra.mxu0 %v2011
      %2128 = vmatprep.subr.mxu0 0.0
      %2129 = vmatpush1.msra.mxu0 %v2012
      %2130 = vmatprep.subr.mxu0 0.0
      %2131 = vmatpush1.msra.mxu0 %v2013
      %2132 = vmatprep.subr.mxu0 0.0
      %2133 = vmatpush1.msra.mxu0 %v2014
      %2134 = vmatprep.subr.mxu0 0.0
      %2135 = vmatpush1.msra.mxu0 %v2015
      %2136 = vmatprep.subr.mxu0 0.0
      %2137 = vmatpush1.msra.mxu0 %v2016
      %2138 = vmatprep.subr.mxu0 0.0
      %2139 = vmatpush1.msra.mxu0 %v2017
      %2140 = vmatprep.subr.mxu0 0.0
      %2141 = vmatpush1.msra.mxu0 %v2018
      %2142 = vmatprep.subr.mxu0 0.0
      %2143 = vmatpush1.msra.mxu0 %v2019
      %2144 = vmatprep.subr.mxu0 0.0
      %2145 = vmatpush1.msra.mxu0 %v2020
      %2146 = vmatprep.subr.mxu0 0.0
      %2147 = vmatpush1.msra.mxu0 %v2021
      %2148 = vmatprep.subr.mxu0 0.0
      %2149 = vmatpush1.msra.mxu0 %v2022
      %2150 = vmatprep.subr.mxu0 0.0
      %2151 = vmatpush1.msra.mxu0 %v2023
      %2152 = vmatprep.subr.mxu0 0.0
      %2153 = vmatpush1.msra.mxu0 %v2024
      %2154 = vmatprep.subr.mxu0 0.0
      %2155 = vmatpush1.msra.mxu0 %v2025
      %2156 = vmatprep.subr.mxu0 0.0
      %2157 = vmatpush1.msra.mxu0 %v2026
      %2158 = vmatprep.subr.mxu0 0.0
      %2159 = vmatpush1.msra.mxu0 %v2027
      %2160 = vmatprep.subr.mxu0 0.0
      %2161 = vmatpush1.msra.mxu0 %v2040
      %2162 = vmatprep.subr.mxu0 0.0
      %2163 = vmatpush1.msra.mxu0 0.0
      %2164 = vmatprep.subr.mxu0 0.0
      %2165 = vmatpush1.msra.mxu0 0.0
      %2166 = vmatprep.subr.mxu0 0.0
      %2167 = vmatpush1.msra.mxu0 0.0
      %2168 = vmatprep.subr.mxu0 0.0
      %2169 = vmatpush1.msra.mxu0 0.0
      %2170 = vmatprep.subr.mxu0 0.0
      %2171 = vmatpush1.msra.mxu0 0.0
      %2172 = vmatprep.subr.mxu0 0.0
      %2173 = vmatpush1.msra.mxu0 0.0
      %2174 = vmatprep.subr.mxu0 0.0
      %2175 = vmatpush1.msra.mxu0 0.0
      %2176 = vmatprep.mubr.f32.mxu0 %v2037
      %2177 = vmatmul.mubr.f32.gmra.mrb[0].mxu0 %v1970
      %v2178 = vpop.f32.mrb[0].mxu0
      %v2179 = vadd.f32 %v2109, %v2178
      %v2180 = vpop.f32.mrb[0].mxu0
      %2181 = vdwg.mxu0
      %v2182 = vxor.u32 %v2179, 2147483648
      %v2183 = vmul.f32 %v2182, 1.442695
      %v2184 = vpow.pop %v2183
      %v2185 = vadd.f32 %v2184, 1.0
      %v2186 = vrcp.pop %v2185
      %v2187 = vmul.f32 1.0, %v2186
      %v2189 = vrot.slane %v2187, 7
      %2190 = vrot.lane.b32.xlu0 %v2189, 120
      %v2191 = vpop.permute.xlu0 %2190
      %v2193 = vrot.slane %v2187, 6
      %2194 = vrot.lane.b32.xlu0 %v2193, 112
      %v2195 = vpop.permute.xlu0 %2194
      %v2197 = vrot.slane %v2187, 5
      %2198 = vrot.lane.b32.xlu0 %v2197, 104
      %v2199 = vpop.permute.xlu0 %2198
      %v2201 = vrot.slane %v2187, 4
      %2202 = vrot.lane.b32.xlu0 %v2201, 96
      %v2203 = vpop.permute.xlu0 %2202
      %v2205 = vrot.slane %v2187, 3
      %2206 = vrot.lane.b32.xlu0 %v2205, 88
      %v2207 = vpop.permute.xlu0 %2206
      %v2209 = vrot.slane %v2187, 2
      %2210 = vrot.lane.b32.xlu0 %v2209, 80
      %v2211 = vpop.permute.xlu0 %2210
      %v2213 = vrot.slane %v2187, 1
      %2214 = vrot.lane.b32.xlu0 %v2213, 72
      %v2215 = vpop.permute.xlu0 %2214
      %2217 = vrot.lane.b32.xlu0 %v2187, 64
      %v2218 = vpop.permute.xlu0 %2217
      %v2219 = vsel %vm620, %v2187, %v2191
      %v2220 = vsel %vm1671, %v2219, %v2195
      %vm2221 = vcmask 1042432
      %v2222 = vsel %vm2221, %v2220, %v2199
      %vm2223 = vcmask 1043456
      %v2224 = vsel %vm2223, %v2222, %v2203
      %vm2225 = vcmask 1044480
      %v2226 = vsel %vm2225, %v2224, %v2207
      %vm2227 = vcmask 1045504
      %v2228 = vsel %vm2227, %v2226, %v2211
      %vm2229 = vcmask 1046528
      %v2230 = vsel %vm2229, %v2228, %v2215
      %2232 = vrot.lane.b32.xlu0 %v2187, 120
      %v2233 = vpop.permute.xlu0 %2232
      %2235 = vrot.lane.b32.xlu0 %v2189, 112
      %v2236 = vpop.permute.xlu0 %2235
      %2238 = vrot.lane.b32.xlu0 %v2193, 104
      %v2239 = vpop.permute.xlu0 %2238
      %2241 = vrot.lane.b32.xlu0 %v2197, 96
      %v2242 = vpop.permute.xlu0 %2241
      %2244 = vrot.lane.b32.xlu0 %v2201, 88
      %v2245 = vpop.permute.xlu0 %2244
      %2247 = vrot.lane.b32.xlu0 %v2205, 80
      %v2248 = vpop.permute.xlu0 %2247
      %2250 = vrot.lane.b32.xlu0 %v2209, 72
      %v2251 = vpop.permute.xlu0 %2250
      %2253 = vrot.lane.b32.xlu0 %v2213, 64
      %v2254 = vpop.permute.xlu0 %2253
      %v2255 = vsel %vm620, %v2213, %v2233
      %v2256 = vsel %vm1671, %v2255, %v2236
      %v2257 = vsel %vm2221, %v2256, %v2239
      %v2258 = vsel %vm2223, %v2257, %v2242
      %v2259 = vsel %vm2225, %v2258, %v2245
      %v2260 = vsel %vm2227, %v2259, %v2248
      %v2261 = vsel %vm2229, %v2260, %v2251
      %vm2262 = vcmask 64512
      %v2264 = vsel %vm2262, %v2230, 0
      %v2266 = vsel %vm2262, %v2218, 0
      %v2269 = vsel %vm2262, %v571, 0
      %2271 = vmatprep.subr.mxu0 0.0
      %2272 = vmatpush1.xpose.msra.mxu0 %v2269
      %2273 = vmatprep.subr.mxu0 0.0
      %2274 = vmatpush1.xpose.msra.mxu0 0.0
      %2275 = vmatprep.subr.mxu0 0.0
      %2276 = vmatpush1.xpose.msra.mxu0 0.0
      %2277 = vmatprep.subr.mxu0 0.0
      %2278 = vmatpush1.xpose.msra.mxu0 0.0
      %2279 = vmatprep.subr.mxu0 0.0
      %2280 = vmatpush1.xpose.msra.mxu0 0.0
      %2281 = vmatprep.subr.mxu0 0.0
      %2282 = vmatpush1.xpose.msra.mxu0 0.0
      %2283 = vmatprep.subr.mxu0 0.0
      %2284 = vmatpush1.xpose.msra.mxu0 0.0
      %2285 = vmatprep.subr.mxu0 0.0
      %2286 = vmatpush1.xpose.msra.mxu0 0.0
      %2287 = vmatprep.subr.mxu0 0.0
      %2288 = vmatpush1.xpose.msra.mxu0 0.0
      %2289 = vmatprep.subr.mxu0 0.0
      %2290 = vmatpush1.xpose.msra.mxu0 0.0
      %2291 = vmatprep.subr.mxu0 0.0
      %2292 = vmatpush1.xpose.msra.mxu0 0.0
      %2293 = vmatprep.subr.mxu0 0.0
      %2294 = vmatpush1.xpose.msra.mxu0 0.0
      %2295 = vmatprep.subr.mxu0 0.0
      %2296 = vmatpush1.xpose.msra.mxu0 0.0
      %2297 = vmatprep.subr.mxu0 0.0
      %2298 = vmatpush1.xpose.msra.mxu0 0.0
      %2299 = vmatprep.subr.mxu0 0.0
      %2300 = vmatpush1.xpose.msra.mxu0 0.0
      %2301 = vmatprep.subr.mxu0 0.0
      %2302 = vmatpush1.xpose.msra.mxu0 0.0
      %2303 = vmatprep.subr.mxu0 0.0
      %2304 = vmatpush1.xpose.msra.mxu0 0.0
      %2305 = vmatprep.subr.mxu0 0.0
      %2306 = vmatpush1.xpose.msra.mxu0 0.0
      %2307 = vmatprep.subr.mxu0 0.0
      %2308 = vmatpush1.xpose.msra.mxu0 0.0
      %2309 = vmatprep.subr.mxu0 0.0
      %2310 = vmatpush1.xpose.msra.mxu0 0.0
      %2311 = vmatprep.subr.mxu0 0.0
      %2312 = vmatpush1.xpose.msra.mxu0 0.0
      %2313 = vmatprep.subr.mxu0 0.0
      %2314 = vmatpush1.xpose.msra.mxu0 0.0
      %2315 = vmatprep.subr.mxu0 0.0
      %2316 = vmatpush1.xpose.msra.mxu0 0.0
      %2317 = vmatprep.subr.mxu0 0.0
      %2318 = vmatpush1.xpose.msra.mxu0 0.0
      %2319 = vmatprep.subr.mxu0 0.0
      %2320 = vmatpush1.xpose.msra.mxu0 0.0
      %2321 = vmatprep.subr.mxu0 0.0
      %2322 = vmatpush1.xpose.msra.mxu0 0.0
      %2323 = vmatprep.subr.mxu0 0.0
      %2324 = vmatpush1.xpose.msra.mxu0 0.0
      %2325 = vmatprep.subr.mxu0 0.0
      %2326 = vmatpush1.xpose.msra.mxu0 0.0
      %2327 = vmatprep.subr.mxu0 0.0
      %2328 = vmatpush1.xpose.msra.mxu0 0.0
      %2329 = vmatprep.subr.mxu0 0.0
      %2330 = vmatpush1.xpose.msra.mxu0 0.0
      %2331 = vmatprep.subr.mxu0 0.0
      %2332 = vmatpush1.xpose.msra.mxu0 0.0
      %2333 = vmatprep.subr.mxu0 0.0
      %2334 = vmatpush1.xpose.msra.mxu0 0.0
      %2335 = vmatprep.mubr.f32.mxu0 0.0
      %2336 = vmatmul.mubr.f32.gmra.mrb[0].mxu0 %v2264
      %v2337 = vpop.f32.mrb[0].mxu0
      %v2338 = vadd.f32 0.0, %v2337
      %v2339 = vpop.f32.mrb[0].mxu0
      %2340 = vmatprep.mubr.f32.mxu0 0.0
      %2341 = vmatmul.mubr.f32.gmra.mrb[0].mxu0 %v2266
      %v2342 = vpop.f32.mrb[0].mxu0
      %v2343 = vadd.f32 0.0, %v2342
      %v2344 = vpop.f32.mrb[0].mxu0
      %2345 = vdwg.mxu0
      %2346 = vst.msk [vmem:[%s563] sm:$0xff] %vm2262, %v2338
      %vm2347 = vcmask 57344
      %2348 = vst.msk [vmem:[%s563 + $0x8] sm:$0x1] %vm2347, %v2343
      %v2350 = vsel %vm2262, %v2261, 0
      %v2352 = vsel %vm2262, %v2254, 0
      %2354 = vmatprep.subr.mxu0 0.0
      %2355 = vmatpush1.xpose.msra.mxu0 %v2269
      %2356 = vmatprep.subr.mxu0 0.0
      %2357 = vmatpush1.xpose.msra.mxu0 0.0
      %2358 = vmatprep.subr.mxu0 0.0
      %2359 = vmatpush1.xpose.msra.mxu0 0.0
      %2360 = vmatprep.subr.mxu0 0.0
      %2361 = vmatpush1.xpose.msra.mxu0 0.0
      %2362 = vmatprep.subr.mxu0 0.0
      %2363 = vmatpush1.xpose.msra.mxu0 0.0
      %2364 = vmatprep.subr.mxu0 0.0
      %2365 = vmatpush1.xpose.msra.mxu0 0.0
      %2366 = vmatprep.subr.mxu0 0.0
      %2367 = vmatpush1.xpose.msra.mxu0 0.0
      %2368 = vmatprep.subr.mxu0 0.0
      %2369 = vmatpush1.xpose.msra.mxu0 0.0
      %2370 = vmatprep.subr.mxu0 0.0
      %2371 = vmatpush1.xpose.msra.mxu0 0.0
      %2372 = vmatprep.subr.mxu0 0.0
      %2373 = vmatpush1.xpose.msra.mxu0 0.0
      %2374 = vmatprep.subr.mxu0 0.0
      %2375 = vmatpush1.xpose.msra.mxu0 0.0
      %2376 = vmatprep.subr.mxu0 0.0
      %2377 = vmatpush1.xpose.msra.mxu0 0.0
      %2378 = vmatprep.subr.mxu0 0.0
      %2379 = vmatpush1.xpose.msra.mxu0 0.0
      %2380 = vmatprep.subr.mxu0 0.0
      %2381 = vmatpush1.xpose.msra.mxu0 0.0
      %2382 = vmatprep.subr.mxu0 0.0
      %2383 = vmatpush1.xpose.msra.mxu0 0.0
      %2384 = vmatprep.subr.mxu0 0.0
      %2385 = vmatpush1.xpose.msra.mxu0 0.0
      %2386 = vmatprep.subr.mxu0 0.0
      %2387 = vmatpush1.xpose.msra.mxu0 0.0
      %2388 = vmatprep.subr.mxu0 0.0
      %2389 = vmatpush1.xpose.msra.mxu0 0.0
      %2390 = vmatprep.subr.mxu0 0.0
      %2391 = vmatpush1.xpose.msra.mxu0 0.0
      %2392 = vmatprep.subr.mxu0 0.0
      %2393 = vmatpush1.xpose.msra.mxu0 0.0
      %2394 = vmatprep.subr.mxu0 0.0
      %2395 = vmatpush1.xpose.msra.mxu0 0.0
      %2396 = vmatprep.subr.mxu0 0.0
      %2397 = vmatpush1.xpose.msra.mxu0 0.0
      %2398 = vmatprep.subr.mxu0 0.0
      %2399 = vmatpush1.xpose.msra.mxu0 0.0
      %2400 = vmatprep.subr.mxu0 0.0
      %2401 = vmatpush1.xpose.msra.mxu0 0.0
      %2402 = vmatprep.subr.mxu0 0.0
      %2403 = vmatpush1.xpose.msra.mxu0 0.0
      %2404 = vmatprep.subr.mxu0 0.0
      %2405 = vmatpush1.xpose.msra.mxu0 0.0
      %2406 = vmatprep.subr.mxu0 0.0
      %2407 = vmatpush1.xpose.msra.mxu0 0.0
      %2408 = vmatprep.subr.mxu0 0.0
      %2409 = vmatpush1.xpose.msra.mxu0 0.0
      %2410 = vmatprep.subr.mxu0 0.0
      %2411 = vmatpush1.xpose.msra.mxu0 0.0
      %2412 = vmatprep.subr.mxu0 0.0
      %2413 = vmatpush1.xpose.msra.mxu0 0.0
      %2414 = vmatprep.subr.mxu0 0.0
      %2415 = vmatpush1.xpose.msra.mxu0 0.0
      %2416 = vmatprep.subr.mxu0 0.0
      %2417 = vmatpush1.xpose.msra.mxu0 0.0
      %2418 = vmatprep.mubr.f32.mxu0 0.0
      %2419 = vmatmul.mubr.f32.gmra.mrb[0].mxu0 %v2350
      %v2420 = vpop.f32.mrb[0].mxu0
      %v2421 = vadd.f32 0.0, %v2420
      %v2422 = vpop.f32.mrb[0].mxu0
      %2423 = vmatprep.mubr.f32.mxu0 0.0
      %2424 = vmatmul.mubr.f32.gmra.mrb[0].mxu0 %v2352
      %v2425 = vpop.f32.mrb[0].mxu0
      %v2426 = vadd.f32 0.0, %v2425
      %v2427 = vpop.f32.mrb[0].mxu0
      %2428 = vdwg.mxu0
      %2429 = vst.msk [vmem:[%s568] sm:$0xff] %vm2262, %v2421
      %2430 = vst.msk [vmem:[%s568 + $0x8] sm:$0x1] %vm2347, %v2426
      %p2431 = scmp.lt.s32.totalorder %s28, 1
      %s2432 = scalar_select %p2431, %s28, 1
      %s2433 = smul.addr %s2432, 2
      %s2434 = smul.addr %s2433, 8
      %s2435 = scalar_lea.vmem %s15, %s2434
      %p2436 = scmp.lt.s32.totalorder %s28, 1
      %s2437 = scalar_select %p2436, %s28, 1
      %s2438 = smul.addr %s2437, 2
      %s2439 = smul.addr %s2438, 8
      %s2440 = scalar_lea.vmem %s16, %s2439
      // Predicated region
      $region81: #{forward.5} parent=79 // pred_check
        %p2441 = pneg %p376
      $region82: #{forward.5} parent=79 // pred_check_branch
        %2443 = sbr.rel (%p2441) target = $region84
      $region83: #{forward.5} parent=79 // pred_region
        _
      $region84: #{forward.5} parent=79 // pred_fallthru
        _
      // Predicated region
      $region85: #{forward.5} parent=79 // pred_check
        %p2444 = pneg %p402
      $region86: #{forward.5} parent=79 // pred_check_branch
        %2446 = sbr.rel (%p2444) target = $region88
      $region87: #{forward.5} parent=79 // pred_region
        _
      $region88: #{forward.5} parent=79 // pred_fallthru
        _
    $region80: #{forward.5} parent=5 // pred_fallthru
      _
    %p2447 = scmp.le.s32.totalorder 2, %s23
    // Predicated region
    $region89: #{forward.5} parent=5 // pred_check
      %p2448 = pneg %p2447
    $region90: #{forward.5} parent=5 // pred_check_branch
      %2450 = sbr.rel (%p2448) target = $region92
    $region91: #{forward.5} parent=5 // pred_region
      %s2451 = ssub.s32 %s23, 2
      // Predicated region
      $region93: #{forward.5} parent=91 // pred_check
        %p2452 = pneg %p382
      $region94: #{forward.5} parent=91 // pred_check_branch
        %2454 = sbr.rel (%p2452) target = $region96
      $region95: #{forward.5} parent=91 // pred_region
        %p2455 = scmp.lt.s32.totalorder %s29, 1
        %s2456 = scalar_select %p2455, %s29, 1
        %s2457 = smul.addr %s2456, 2
        %s2458 = smul.addr %s2457, 8
        %s2459 = scalar_lea.vmem %s15, %s2458
      $region96: #{forward.5} parent=91 // pred_fallthru
        _
      // Predicated region
      $region97: #{forward.5} parent=91 // pred_check
        %p2460 = pneg %p408
      $region98: #{forward.5} parent=91 // pred_check_branch
        %2462 = sbr.rel (%p2460) target = $region100
      $region99: #{forward.5} parent=91 // pred_region
        %p2463 = scmp.lt.s32.totalorder %s29, 1
        %s2464 = scalar_select %p2463, %s29, 1
        %s2465 = smul.addr %s2464, 2
        %s2466 = smul.addr %s2465, 8
        %s2467 = scalar_lea.vmem %s16, %s2466
      $region100: #{forward.5} parent=91 // pred_fallthru
        _
    $region92: #{forward.5} parent=5 // pred_fallthru
      _
  $region6: #{forward.5} parent=0 // loop_footer
    %s27 = sadd.s32 1, %s23
  $region7: #{forward.5} parent=0 // loop_footer_branch
    %22 = sbr.rel target = $region3
  $region8: #{forward.5} parent=0 // loop_exit
    _

// kernel: forward.4
$region0: #{forward.4}
  #allocation0 [shape = 'u32[]', space=smem, size = 0x4, offset = 0x4, fixed_abs, tag = 'smem constant byte address 0x4 - core index']
  #allocation1 [shape = 'u32[144,128]{1,0:T(1,128)}', space=vmem, size = 0x12000, scoped, tag = 'internal scratch']
  %s0 = inlined_call_operand.vmem [shape: f32[9,16,1], index: 0, kind: input, shape index: {}]
  %s1 = inlined_call_operand.vmem [shape: f32[16,8], index: 1, kind: input, shape index: {}]
  %s2 = inlined_call_operand.vmem [shape: f32[9,8,60], index: 2, kind: input, shape index: {}]
  %s3 = inlined_call_operand.vmem [shape: f32[9,1,60], index: 3, kind: input, shape index: {}]
  %s4 = inlined_call_operand.vmem [shape: f32[9,1,60], index: 4, kind: input, shape index: {}]
  %s5 = inlined_call_operand.vmem [shape: f32[9,60,60], index: 5, kind: input, shape index: {}]
  %s6 = inlined_call_operand.vmem [shape: f32[9,1,60], index: 6, kind: input, shape index: {}]
  %s7 = inlined_call_operand.vmem [shape: f32[9,60,16], index: 7, kind: input, shape index: {}]
  %s8 = inlined_call_operand.vmem [shape: f32[9,1,16], index: 8, kind: input, shape index: {}]
  %s9 = inlined_call_operand.vmem [shape: f32[18,16,96], index: 9, kind: input, shape index: {}]
  %s10 = inlined_call_operand.vmem [shape: f32[18,1,96], index: 10, kind: input, shape index: {}]
  %s11 = inlined_call_operand.vmem [shape: f32[18,32,16], index: 11, kind: input, shape index: {}]
  %s12 = inlined_call_operand.vmem [shape: f32[18,1,16], index: 12, kind: input, shape index: {}]
  %s13 = inlined_call_operand.vmem [shape: f32[18,16,32], index: 13, kind: input, shape index: {}]
  %s14 = inlined_call_operand.vmem [shape: f32[18,1,32], index: 14, kind: input, shape index: {}]
  %s15 = inlined_call_operand.vmem [shape: f32[18,32,16], index: 15, kind: input, shape index: {}]
  %s16 = inlined_call_operand.vmem [shape: f32[18,1,16], index: 16, kind: input, shape index: {}]
  %s17 = inlined_call_operand.vmem [shape: f32[18,1,16], index: 17, kind: input, shape index: {}]
  %s18 = inlined_call_operand.vmem [shape: f32[18,1,16], index: 18, kind: input, shape index: {}]
  %s19 = inlined_call_operand.vmem [shape: f32[9,2,16], index: 19, kind: output, shape index: {}]
  %s20 = sld [smem:[#allocation0]]
  $region109: #{forward.4} parent=0
    _
  %s22 = ssub.s32 1, %s20
  %s23 = scalar_select 0, %s22, %s20
  loop: start=0, step=1, limit=11
  $region2: #{forward.4} parent=0 // loop_pre_header
    _
  $region3: #{forward.4} parent=0 // loop_header
    %s25 = sphi 0, %s29
    %p26 = scmp.ge.s32.totalorder %s25, 11
    %s35 = sphi 0, %s37
    %s38 = sphi 0, %s35
    %s39 = sphi 0, %s38
    %s55 = sphi 0, %s39
    %s59 = sphi 0, %s59
    %s61 = sphi 0, %s59
    %s62 = sphi 0, %s61
    %s76 = sphi 0, %s62
    %s80 = sphi 0, %s80
    %s82 = sphi 0, %s80
    %s83 = sphi 0, %s82
    %s97 = sphi 0, %s83
    %s101 = sphi 0, %s101
    %s103 = sphi 0, %s101
    %s104 = sphi 0, %s103
    %s118 = sphi 0, %s104
    %s122 = sphi 0, %s122
    %s124 = sphi 0, %s122
    %s125 = sphi 0, %s124
    %s139 = sphi 0, %s125
    %s143 = sphi 0, %s143
    %s145 = sphi 0, %s143
    %s146 = sphi 0, %s145
    %s160 = sphi 0, %s146
    %s164 = sphi 0, %s164
    %s166 = sphi 0, %s164
    %s167 = sphi 0, %s166
    %s181 = sphi 0, %s167
    %s185 = sphi 0, %s185
    %s187 = sphi 0, %s185
    %s188 = sphi 0, %s187
    %s202 = sphi 0, %s188
    %s206 = sphi 0, %s206
    %s208 = sphi 0, %s206
    %s209 = sphi 0, %s208
    %s223 = sphi 0, %s209
    %s227 = sphi 0, %s227
    %s229 = sphi 0, %s227
    %s230 = sphi 0, %s229
    %s244 = sphi 0, %s230
    %s248 = sphi 0, %s248
    %s250 = sphi 0, %s248
    %s251 = sphi 0, %s250
    %s265 = sphi 0, %s251
    %s269 = sphi 0, %s269
    %s271 = sphi 0, %s269
    %s272 = sphi 0, %s271
    %s286 = sphi 0, %s272
    %s290 = sphi 0, %s290
    %s292 = sphi 0, %s290
    %s293 = sphi 0, %s292
    %s307 = sphi 0, %s293
    %s311 = sphi 0, %s311
    %s313 = sphi 0, %s311
    %s314 = sphi 0, %s313
    %s328 = sphi 0, %s314
    %s332 = sphi 0, %s332
    %s334 = sphi 0, %s332
    %s335 = sphi 0, %s334
    %s349 = sphi 0, %s335
    %s353 = sphi 0, %s353
    %s355 = sphi 0, %s353
    %s356 = sphi 0, %s355
    %s370 = sphi 0, %s356
    %s374 = sphi 0, %s374
    %s376 = sphi 0, %s374
    %s377 = sphi 0, %s376
    %s391 = sphi 0, %s377
    %s395 = sphi 0, %s395
    %s397 = sphi 0, %s395
    %s398 = sphi 0, %s397
    %s412 = sphi 0, %s398
    %s416 = sphi 0, %s416
    %s418 = sphi 0, %s416
    %s419 = sphi 0, %s418
    %s433 = sphi 0, %s419
    %s439 = sphi 0, %s441
    %s442 = sphi 0, %s439
    %s443 = sphi 0, %s442
    %s459 = sphi 0, %s443
  $region4: #{forward.4} parent=0 // loop_header_branch
    %28 = sbr.rel (%p26) target = $region8
  $region5: #{forward.4} parent=0 // loop_body
    %s30 = ssub.s32 %s25, 1
    %s31 = ssub.s32 %s25, 2
    %s32 = sadd.s32 %s25, 1
    %s33 = ssub.s32 %s25, %s32
    %p34 = scmp.eq.s32.totalorder %s33, 0
    %s36 = sadd.s32 %s35, 1
    %s37 = scalar_select %p34, %s35, %s36
    %p40 = pneg %p34
    %p41 = scmp.eq.s32.totalorder %s25, 8
    %p42 = por %p40, %p41
    %p43 = scmp.ne.s32.totalorder %s35, %s38
    %p44 = scmp.eq.s32.totalorder %s25, 0
    %p45 = por %p43, %p44
    %p46 = scmp.ne.s32.totalorder %s35, %s38
    %p47 = scmp.eq.s32.totalorder %s30, 8
    %p48 = por %p46, %p47
    %p49 = scmp.ne.s32.totalorder %s38, %s39
    %p50 = scmp.eq.s32.totalorder %s30, 0
    %p51 = por %p49, %p50
    %p52 = scmp.ne.s32.totalorder %s38, %s39
    %p53 = scmp.eq.s32.totalorder %s31, 8
    %p54 = por %p52, %p53
    %p56 = scmp.ne.s32.totalorder %s39, %s55
    %p57 = scmp.eq.s32.totalorder %s31, 0
    %p58 = por %p56, %p57
    %s60 = sadd.s32 %s59, 1
    %p63 = scmp.eq.s32.totalorder %s25, 8
    %p64 = scmp.ne.s32.totalorder %s59, %s61
    %p65 = scmp.eq.s32.totalorder %s25, 0
    %p66 = por %p64, %p65
    %p67 = scmp.ne.s32.totalorder %s59, %s61
    %p68 = scmp.eq.s32.totalorder %s30, 8
    %p69 = por %p67, %p68
    %p70 = scmp.ne.s32.totalorder %s61, %s62
    %p71 = scmp.eq.s32.totalorder %s30, 0
    %p72 = por %p70, %p71
    %p73 = scmp.ne.s32.totalorder %s61, %s62
    %p74 = scmp.eq.s32.totalorder %s31, 8
    %p75 = por %p73, %p74
    %p77 = scmp.ne.s32.totalorder %s62, %s76
    %p78 = scmp.eq.s32.totalorder %s31, 0
    %p79 = por %p77, %p78
    %s81 = sadd.s32 %s80, 1
    %p84 = scmp.eq.s32.totalorder %s25, 8
    %p85 = scmp.ne.s32.totalorder %s80, %s82
    %p86 = scmp.eq.s32.totalorder %s25, 0
    %p87 = por %p85, %p86
    %p88 = scmp.ne.s32.totalorder %s80, %s82
    %p89 = scmp.eq.s32.totalorder %s30, 8
    %p90 = por %p88, %p89
    %p91 = scmp.ne.s32.totalorder %s82, %s83
    %p92 = scmp.eq.s32.totalorder %s30, 0
    %p93 = por %p91, %p92
    %p94 = scmp.ne.s32.totalorder %s82, %s83
    %p95 = scmp.eq.s32.totalorder %s31, 8
    %p96 = por %p94, %p95
    %p98 = scmp.ne.s32.totalorder %s83, %s97
    %p99 = scmp.eq.s32.totalorder %s31, 0
    %p100 = por %p98, %p99
    %s102 = sadd.s32 %s101, 1
    %p105 = scmp.eq.s32.totalorder %s25, 8
    %p106 = scmp.ne.s32.totalorder %s101, %s103
    %p107 = scmp.eq.s32.totalorder %s25, 0
    %p108 = por %p106, %p107
    %p109 = scmp.ne.s32.totalorder %s101, %s103
    %p110 = scmp.eq.s32.totalorder %s30, 8
    %p111 = por %p109, %p110
    %p112 = scmp.ne.s32.totalorder %s103, %s104
    %p113 = scmp.eq.s32.totalorder %s30, 0
    %p114 = por %p112, %p113
    %p115 = scmp.ne.s32.totalorder %s103, %s104
    %p116 = scmp.eq.s32.totalorder %s31, 8
    %p117 = por %p115, %p116
    %p119 = scmp.ne.s32.totalorder %s104, %s118
    %p120 = scmp.eq.s32.totalorder %s31, 0
    %p121 = por %p119, %p120
    %s123 = sadd.s32 %s122, 1
    %p126 = scmp.eq.s32.totalorder %s25, 8
    %p127 = scmp.ne.s32.totalorder %s122, %s124
    %p128 = scmp.eq.s32.totalorder %s25, 0
    %p129 = por %p127, %p128
    %p130 = scmp.ne.s32.totalorder %s122, %s124
    %p131 = scmp.eq.s32.totalorder %s30, 8
    %p132 = por %p130, %p131
    %p133 = scmp.ne.s32.totalorder %s124, %s125
    %p134 = scmp.eq.s32.totalorder %s30, 0
    %p135 = por %p133, %p134
    %p136 = scmp.ne.s32.totalorder %s124, %s125
    %p137 = scmp.eq.s32.totalorder %s31, 8
    %p138 = por %p136, %p137
    %p140 = scmp.ne.s32.totalorder %s125, %s139
    %p141 = scmp.eq.s32.totalorder %s31, 0
    %p142 = por %p140, %p141
    %s144 = sadd.s32 %s143, 1
    %p147 = scmp.eq.s32.totalorder %s25, 8
    %p148 = scmp.ne.s32.totalorder %s143, %s145
    %p149 = scmp.eq.s32.totalorder %s25, 0
    %p150 = por %p148, %p149
    %p151 = scmp.ne.s32.totalorder %s143, %s145
    %p152 = scmp.eq.s32.totalorder %s30, 8
    %p153 = por %p151, %p152
    %p154 = scmp.ne.s32.totalorder %s145, %s146
    %p155 = scmp.eq.s32.totalorder %s30, 0
    %p156 = por %p154, %p155
    %p157 = scmp.ne.s32.totalorder %s145, %s146
    %p158 = scmp.eq.s32.totalorder %s31, 8
    %p159 = por %p157, %p158
    %p161 = scmp.ne.s32.totalorder %s146, %s160
    %p162 = scmp.eq.s32.totalorder %s31, 0
    %p163 = por %p161, %p162
    %s165 = sadd.s32 %s164, 1
    %p168 = scmp.eq.s32.totalorder %s25, 8
    %p169 = scmp.ne.s32.totalorder %s164, %s166
    %p170 = scmp.eq.s32.totalorder %s25, 0
    %p171 = por %p169, %p170
    %p172 = scmp.ne.s32.totalorder %s164, %s166
    %p173 = scmp.eq.s32.totalorder %s30, 8
    %p174 = por %p172, %p173
    %p175 = scmp.ne.s32.totalorder %s166, %s167
    %p176 = scmp.eq.s32.totalorder %s30, 0
    %p177 = por %p175, %p176
    %p178 = scmp.ne.s32.totalorder %s166, %s167
    %p179 = scmp.eq.s32.totalorder %s31, 8
    %p180 = por %p178, %p179
    %p182 = scmp.ne.s32.totalorder %s167, %s181
    %p183 = scmp.eq.s32.totalorder %s31, 0
    %p184 = por %p182, %p183
    %s186 = sadd.s32 %s185, 1
    %p189 = scmp.eq.s32.totalorder %s25, 8
    %p190 = scmp.ne.s32.totalorder %s185, %s187
    %p191 = scmp.eq.s32.totalorder %s25, 0
    %p192 = por %p190, %p191
    %p193 = scmp.ne.s32.totalorder %s185, %s187
    %p194 = scmp.eq.s32.totalorder %s30, 8
    %p195 = por %p193, %p194
    %p196 = scmp.ne.s32.totalorder %s187, %s188
    %p197 = scmp.eq.s32.totalorder %s30, 0
    %p198 = por %p196, %p197
    %p199 = scmp.ne.s32.totalorder %s187, %s188
    %p200 = scmp.eq.s32.totalorder %s31, 8
    %p201 = por %p199, %p200
    %p203 = scmp.ne.s32.totalorder %s188, %s202
    %p204 = scmp.eq.s32.totalorder %s31, 0
    %p205 = por %p203, %p204
    %s207 = sadd.s32 %s206, 1
    %p210 = scmp.eq.s32.totalorder %s25, 8
    %p211 = scmp.ne.s32.totalorder %s206, %s208
    %p212 = scmp.eq.s32.totalorder %s25, 0
    %p213 = por %p211, %p212
    %p214 = scmp.ne.s32.totalorder %s206, %s208
    %p215 = scmp.eq.s32.totalorder %s30, 8
    %p216 = por %p214, %p215
    %p217 = scmp.ne.s32.totalorder %s208, %s209
    %p218 = scmp.eq.s32.totalorder %s30, 0
    %p219 = por %p217, %p218
    %p220 = scmp.ne.s32.totalorder %s208, %s209
    %p221 = scmp.eq.s32.totalorder %s31, 8
    %p222 = por %p220, %p221
    %p224 = scmp.ne.s32.totalorder %s209, %s223
    %p225 = scmp.eq.s32.totalorder %s31, 0
    %p226 = por %p224, %p225
    %s228 = sadd.s32 %s227, 1
    %p231 = scmp.eq.s32.totalorder %s25, 8
    %p232 = scmp.ne.s32.totalorder %s227, %s229
    %p233 = scmp.eq.s32.totalorder %s25, 0
    %p234 = por %p232, %p233
    %p235 = scmp.ne.s32.totalorder %s227, %s229
    %p236 = scmp.eq.s32.totalorder %s30, 8
    %p237 = por %p235, %p236
    %p238 = scmp.ne.s32.totalorder %s229, %s230
    %p239 = scmp.eq.s32.totalorder %s30, 0
    %p240 = por %p238, %p239
    %p241 = scmp.ne.s32.totalorder %s229, %s230
    %p242 = scmp.eq.s32.totalorder %s31, 8
    %p243 = por %p241, %p242
    %p245 = scmp.ne.s32.totalorder %s230, %s244
    %p246 = scmp.eq.s32.totalorder %s31, 0
    %p247 = por %p245, %p246
    %s249 = sadd.s32 %s248, 1
    %p252 = scmp.eq.s32.totalorder %s25, 8
    %p253 = scmp.ne.s32.totalorder %s248, %s250
    %p254 = scmp.eq.s32.totalorder %s25, 0
    %p255 = por %p253, %p254
    %p256 = scmp.ne.s32.totalorder %s248, %s250
    %p257 = scmp.eq.s32.totalorder %s30, 8
    %p258 = por %p256, %p257
    %p259 = scmp.ne.s32.totalorder %s250, %s251
    %p260 = scmp.eq.s32.totalorder %s30, 0
    %p261 = por %p259, %p260
    %p262 = scmp.ne.s32.totalorder %s250, %s251
    %p263 = scmp.eq.s32.totalorder %s31, 8
    %p264 = por %p262, %p263
    %p266 = scmp.ne.s32.totalorder %s251, %s265
    %p267 = scmp.eq.s32.totalorder %s31, 0
    %p268 = por %p266, %p267
    %s270 = sadd.s32 %s269, 1
    %p273 = scmp.eq.s32.totalorder %s25, 8
    %p274 = scmp.ne.s32.totalorder %s269, %s271
    %p275 = scmp.eq.s32.totalorder %s25, 0
    %p276 = por %p274, %p275
    %p277 = scmp.ne.s32.totalorder %s269, %s271
    %p278 = scmp.eq.s32.totalorder %s30, 8
    %p279 = por %p277, %p278
    %p280 = scmp.ne.s32.totalorder %s271, %s272
    %p281 = scmp.eq.s32.totalorder %s30, 0
    %p282 = por %p280, %p281
    %p283 = scmp.ne.s32.totalorder %s271, %s272
    %p284 = scmp.eq.s32.totalorder %s31, 8
    %p285 = por %p283, %p284
    %p287 = scmp.ne.s32.totalorder %s272, %s286
    %p288 = scmp.eq.s32.totalorder %s31, 0
    %p289 = por %p287, %p288
    %s291 = sadd.s32 %s290, 1
    %p294 = scmp.eq.s32.totalorder %s25, 8
    %p295 = scmp.ne.s32.totalorder %s290, %s292
    %p296 = scmp.eq.s32.totalorder %s25, 0
    %p297 = por %p295, %p296
    %p298 = scmp.ne.s32.totalorder %s290, %s292
    %p299 = scmp.eq.s32.totalorder %s30, 8
    %p300 = por %p298, %p299
    %p301 = scmp.ne.s32.totalorder %s292, %s293
    %p302 = scmp.eq.s32.totalorder %s30, 0
    %p303 = por %p301, %p302
    %p304 = scmp.ne.s32.totalorder %s292, %s293
    %p305 = scmp.eq.s32.totalorder %s31, 8
    %p306 = por %p304, %p305
    %p308 = scmp.ne.s32.totalorder %s293, %s307
    %p309 = scmp.eq.s32.totalorder %s31, 0
    %p310 = por %p308, %p309
    %s312 = sadd.s32 %s311, 1
    %p315 = scmp.eq.s32.totalorder %s25, 8
    %p316 = scmp.ne.s32.totalorder %s311, %s313
    %p317 = scmp.eq.s32.totalorder %s25, 0
    %p318 = por %p316, %p317
    %p319 = scmp.ne.s32.totalorder %s311, %s313
    %p320 = scmp.eq.s32.totalorder %s30, 8
    %p321 = por %p319, %p320
    %p322 = scmp.ne.s32.totalorder %s313, %s314
    %p323 = scmp.eq.s32.totalorder %s30, 0
    %p324 = por %p322, %p323
    %p325 = scmp.ne.s32.totalorder %s313, %s314
    %p326 = scmp.eq.s32.totalorder %s31, 8
    %p327 = por %p325, %p326
    %p329 = scmp.ne.s32.totalorder %s314, %s328
    %p330 = scmp.eq.s32.totalorder %s31, 0
    %p331 = por %p329, %p330
    %s333 = sadd.s32 %s332, 1
    %p336 = scmp.eq.s32.totalorder %s25, 8
    %p337 = scmp.ne.s32.totalorder %s332, %s334
    %p338 = scmp.eq.s32.totalorder %s25, 0
    %p339 = por %p337, %p338
    %p340 = scmp.ne.s32.totalorder %s332, %s334
    %p341 = scmp.eq.s32.totalorder %s30, 8
    %p342 = por %p340, %p341
    %p343 = scmp.ne.s32.totalorder %s334, %s335
    %p344 = scmp.eq.s32.totalorder %s30, 0
    %p345 = por %p343, %p344
    %p346 = scmp.ne.s32.totalorder %s334, %s335
    %p347 = scmp.eq.s32.totalorder %s31, 8
    %p348 = por %p346, %p347
    %p350 = scmp.ne.s32.totalorder %s335, %s349
    %p351 = scmp.eq.s32.totalorder %s31, 0
    %p352 = por %p350, %p351
    %s354 = sadd.s32 %s353, 1
    %p357 = scmp.eq.s32.totalorder %s25, 8
    %p358 = scmp.ne.s32.totalorder %s353, %s355
    %p359 = scmp.eq.s32.totalorder %s25, 0
    %p360 = por %p358, %p359
    %p361 = scmp.ne.s32.totalorder %s353, %s355
    %p362 = scmp.eq.s32.totalorder %s30, 8
    %p363 = por %p361, %p362
    %p364 = scmp.ne.s32.totalorder %s355, %s356
    %p365 = scmp.eq.s32.totalorder %s30, 0
    %p366 = por %p364, %p365
    %p367 = scmp.ne.s32.totalorder %s355, %s356
    %p368 = scmp.eq.s32.totalorder %s31, 8
    %p369 = por %p367, %p368
    %p371 = scmp.ne.s32.totalorder %s356, %s370
    %p372 = scmp.eq.s32.totalorder %s31, 0
    %p373 = por %p371, %p372
    %s375 = sadd.s32 %s374, 1
    %p378 = scmp.eq.s32.totalorder %s25, 8
    %p379 = scmp.ne.s32.totalorder %s374, %s376
    %p380 = scmp.eq.s32.totalorder %s25, 0
    %p381 = por %p379, %p380
    %p382 = scmp.ne.s32.totalorder %s374, %s376
    %p383 = scmp.eq.s32.totalorder %s30, 8
    %p384 = por %p382, %p383
    %p385 = scmp.ne.s32.totalorder %s376, %s377
    %p386 = scmp.eq.s32.totalorder %s30, 0
    %p387 = por %p385, %p386
    %p388 = scmp.ne.s32.totalorder %s376, %s377
    %p389 = scmp.eq.s32.totalorder %s31, 8
    %p390 = por %p388, %p389
    %p392 = scmp.ne.s32.totalorder %s377, %s391
    %p393 = scmp.eq.s32.totalorder %s31, 0
    %p394 = por %p392, %p393
    %s396 = sadd.s32 %s395, 1
    %p399 = scmp.eq.s32.totalorder %s25, 8
    %p400 = scmp.ne.s32.totalorder %s395, %s397
    %p401 = scmp.eq.s32.totalorder %s25, 0
    %p402 = por %p400, %p401
    %p403 = scmp.ne.s32.totalorder %s395, %s397
    %p404 = scmp.eq.s32.totalorder %s30, 8
    %p405 = por %p403, %p404
    %p406 = scmp.ne.s32.totalorder %s397, %s398
    %p407 = scmp.eq.s32.totalorder %s30, 0
    %p408 = por %p406, %p407
    %p409 = scmp.ne.s32.totalorder %s397, %s398
    %p410 = scmp.eq.s32.totalorder %s31, 8
    %p411 = por %p409, %p410
    %p413 = scmp.ne.s32.totalorder %s398, %s412
    %p414 = scmp.eq.s32.totalorder %s31, 0
    %p415 = por %p413, %p414
    %s417 = sadd.s32 %s416, 1
    %p420 = scmp.eq.s32.totalorder %s25, 8
    %p421 = scmp.ne.s32.totalorder %s416, %s418
    %p422 = scmp.eq.s32.totalorder %s25, 0
    %p423 = por %p421, %p422
    %p424 = scmp.ne.s32.totalorder %s416, %s418
    %p425 = scmp.eq.s32.totalorder %s30, 8
    %p426 = por %p424, %p425
    %p427 = scmp.ne.s32.totalorder %s418, %s419
    %p428 = scmp.eq.s32.totalorder %s30, 0
    %p429 = por %p427, %p428
    %p430 = scmp.ne.s32.totalorder %s418, %s419
    %p431 = scmp.eq.s32.totalorder %s31, 8
    %p432 = por %p430, %p431
    %p434 = scmp.ne.s32.totalorder %s419, %s433
    %p435 = scmp.eq.s32.totalorder %s31, 0
    %p436 = por %p434, %p435
    %s437 = ssub.s32 %s25, %s32
    %p438 = scmp.eq.s32.totalorder %s437, 0
    %s440 = sadd.s32 %s439, 1
    %s441 = scalar_select %p438, %s439, %s440
    %p444 = pneg %p438
    %p445 = scmp.eq.s32.totalorder %s25, 8
    %p446 = por %p444, %p445
    %p447 = scmp.ne.s32.totalorder %s439, %s442
    %p448 = scmp.eq.s32.totalorder %s25, 0
    %p449 = por %p447, %p448
    %p450 = scmp.ne.s32.totalorder %s439, %s442
    %p451 = scmp.eq.s32.totalorder %s30, 8
    %p452 = por %p450, %p451
    %p453 = scmp.ne.s32.totalorder %s442, %s443
    %p454 = scmp.eq.s32.totalorder %s30, 0
    %p455 = por %p453, %p454
    %p456 = scmp.ne.s32.totalorder %s442, %s443
    %p457 = scmp.eq.s32.totalorder %s31, 8
    %p458 = por %p456, %p457
    %p460 = scmp.ne.s32.totalorder %s443, %s459
    %p461 = scmp.eq.s32.totalorder %s31, 0
    %p462 = por %p460, %p461
    %p463 = scmp.le.s32.totalorder 1, %s25
    %p464 = scmp.lt.s32.totalorder %s25, 10
    %p465 = pnand %p463, %p464
    %p466 = pneg %p465
    // Predicated region
    $region9: #{forward.4} parent=5 // pred_check
      _
    $region10: #{forward.4} parent=5 // pred_check_branch
      %468 = sbr.rel (%p465) target = $region12
    $region11: #{forward.4} parent=5 // pred_region
      %s469 = ssub.s32 %s25, 1
      // Predicated region
      $region13: #{forward.4} parent=11 // pred_check
        %p470 = pneg %p72
      $region14: #{forward.4} parent=11 // pred_check_branch
        %472 = sbr.rel (%p470) target = $region16
      $region15: #{forward.4} parent=11 // pred_region
        _
      $region16: #{forward.4} parent=11 // pred_fallthru
        _
      // Predicated region
      $region17: #{forward.4} parent=11 // pred_check
        %p473 = pneg %p93
      $region18: #{forward.4} parent=11 // pred_check_branch
        %475 = sbr.rel (%p473) target = $region20
      $region19: #{forward.4} parent=11 // pred_region
        _
      $region20: #{forward.4} parent=11 // pred_fallthru
        _
      // Predicated region
      $region21: #{forward.4} parent=11 // pred_check
        %p476 = pneg %p114
      $region22: #{forward.4} parent=11 // pred_check_branch
        %478 = sbr.rel (%p476) target = $region24
      $region23: #{forward.4} parent=11 // pred_region
        _
      $region24: #{forward.4} parent=11 // pred_fallthru
        _
      // Predicated region
      $region25: #{forward.4} parent=11 // pred_check
        %p479 = pneg %p135
      $region26: #{forward.4} parent=11 // pred_check_branch
        %481 = sbr.rel (%p479) target = $region28
      $region27: #{forward.4} parent=11 // pred_region
        _
      $region28: #{forward.4} parent=11 // pred_fallthru
        _
      // Predicated region
      $region29: #{forward.4} parent=11 // pred_check
        %p482 = pneg %p156
      $region30: #{forward.4} parent=11 // pred_check_branch
        %484 = sbr.rel (%p482) target = $region32
      $region31: #{forward.4} parent=11 // pred_region
        _
      $region32: #{forward.4} parent=11 // pred_fallthru
        _
      // Predicated region
      $region33: #{forward.4} parent=11 // pred_check
        %p485 = pneg %p177
      $region34: #{forward.4} parent=11 // pred_check_branch
        %487 = sbr.rel (%p485) target = $region36
      $region35: #{forward.4} parent=11 // pred_region
        _
      $region36: #{forward.4} parent=11 // pred_fallthru
        _
      // Predicated region
      $region37: #{forward.4} parent=11 // pred_check
        %p488 = pneg %p198
      $region38: #{forward.4} parent=11 // pred_check_branch
        %490 = sbr.rel (%p488) target = $region40
      $region39: #{forward.4} parent=11 // pred_region
        _
      $region40: #{forward.4} parent=11 // pred_fallthru
        _
      // Predicated region
      $region41: #{forward.4} parent=11 // pred_check
        %p491 = pneg %p219
      $region42: #{forward.4} parent=11 // pred_check_branch
        %493 = sbr.rel (%p491) target = $region44
      $region43: #{forward.4} parent=11 // pred_region
        _
      $region44: #{forward.4} parent=11 // pred_fallthru
        _
      // Predicated region
      $region45: #{forward.4} parent=11 // pred_check
        %p494 = pneg %p240
      $region46: #{forward.4} parent=11 // pred_check_branch
        %496 = sbr.rel (%p494) target = $region48
      $region47: #{forward.4} parent=11 // pred_region
        _
      $region48: #{forward.4} parent=11 // pred_fallthru
        _
      // Predicated region
      $region49: #{forward.4} parent=11 // pred_check
        %p497 = pneg %p261
      $region50: #{forward.4} parent=11 // pred_check_branch
        %499 = sbr.rel (%p497) target = $region52
      $region51: #{forward.4} parent=11 // pred_region
        _
      $region52: #{forward.4} parent=11 // pred_fallthru
        _
      // Predicated region
      $region53: #{forward.4} parent=11 // pred_check
        %p500 = pneg %p282
      $region54: #{forward.4} parent=11 // pred_check_branch
        %502 = sbr.rel (%p500) target = $region56
      $region55: #{forward.4} parent=11 // pred_region
        _
      $region56: #{forward.4} parent=11 // pred_fallthru
        _
      // Predicated region
      $region57: #{forward.4} parent=11 // pred_check
        %p503 = pneg %p303
      $region58: #{forward.4} parent=11 // pred_check_branch
        %505 = sbr.rel (%p503) target = $region60
      $region59: #{forward.4} parent=11 // pred_region
        _
      $region60: #{forward.4} parent=11 // pred_fallthru
        _
      // Predicated region
      $region61: #{forward.4} parent=11 // pred_check
        %p506 = pneg %p324
      $region62: #{forward.4} parent=11 // pred_check_branch
        %508 = sbr.rel (%p506) target = $region64
      $region63: #{forward.4} parent=11 // pred_region
        _
      $region64: #{forward.4} parent=11 // pred_fallthru
        _
      // Predicated region
      $region65: #{forward.4} parent=11 // pred_check
        %p509 = pneg %p345
      $region66: #{forward.4} parent=11 // pred_check_branch
        %511 = sbr.rel (%p509) target = $region68
      $region67: #{forward.4} parent=11 // pred_region
        _
      $region68: #{forward.4} parent=11 // pred_fallthru
        _
      // Predicated region
      $region69: #{forward.4} parent=11 // pred_check
        %p512 = pneg %p366
      $region70: #{forward.4} parent=11 // pred_check_branch
        %514 = sbr.rel (%p512) target = $region72
      $region71: #{forward.4} parent=11 // pred_region
        _
      $region72: #{forward.4} parent=11 // pred_fallthru
        _
      // Predicated region
      $region73: #{forward.4} parent=11 // pred_check
        %p515 = pneg %p387
      $region74: #{forward.4} parent=11 // pred_check_branch
        %517 = sbr.rel (%p515) target = $region76
      $region75: #{forward.4} parent=11 // pred_region
        _
      $region76: #{forward.4} parent=11 // pred_fallthru
        _
      // Predicated region
      $region77: #{forward.4} parent=11 // pred_check
        %p518 = pneg %p408
      $region78: #{forward.4} parent=11 // pred_check_branch
        %520 = sbr.rel (%p518) target = $region80
      $region79: #{forward.4} parent=11 // pred_region
        _
      $region80: #{forward.4} parent=11 // pred_fallthru
        _
      // Predicated region
      $region81: #{forward.4} parent=11 // pred_check
        %p521 = pneg %p429
      $region82: #{forward.4} parent=11 // pred_check_branch
        %523 = sbr.rel (%p521) target = $region84
      $region83: #{forward.4} parent=11 // pred_region
        _
      $region84: #{forward.4} parent=11 // pred_fallthru
        _
    $region12: #{forward.4} parent=5 // pred_fallthru
      _
    %p524 = scmp.lt.s32.totalorder %s25, 9
    // Predicated region
    $region85: #{forward.4} parent=5 // pred_check
      %p525 = pneg %p524
    $region86: #{forward.4} parent=5 // pred_check_branch
      %527 = sbr.rel (%p525) target = $region88
    $region87: #{forward.4} parent=5 // pred_region
      // Predicated region
      $region89: #{forward.4} parent=87 // pred_check
        %p528 = pneg %p45
      $region90: #{forward.4} parent=87 // pred_check_branch
        %530 = sbr.rel (%p528) target = $region92
      $region91: #{forward.4} parent=87 // pred_region
        %p531 = scmp.lt.s32.totalorder %s25, 8
        %s532 = scalar_select %p531, %s25, 8
        %s533 = smul.addr %s532, 2
        %s534 = smul.addr %s533, 8
        %s535 = scalar_lea.vmem %s0, %s534
      $region92: #{forward.4} parent=87 // pred_fallthru
        _
    $region88: #{forward.4} parent=5 // pred_fallthru
      _
    %p536 = scmp.le.s32.totalorder 1, %s25
    %p537 = scmp.lt.s32.totalorder %s25, 10
    %p538 = pnand %p536, %p537
    %p539 = pneg %p538
    // Predicated region
    $region93: #{forward.4} parent=5 // pred_check
      _
    $region94: #{forward.4} parent=5 // pred_check_branch
      %541 = sbr.rel (%p538) target = $region96
    $region95: #{forward.4} parent=5 // pred_region
      %s542 = ssub.s32 %s25, 1
      %p543 = scmp.lt.s32.totalorder %s30, 8
      %s544 = scalar_select %p543, %s30, 8
      %s545 = smul.addr %s544, 2
      %s546 = smul.addr %s545, 8
      %s547 = scalar_lea.vmem %s0, %s546
      %p548 = pneg %p51
      %p549 = pneg %p48
      %p550 = pneg %p72
      %p551 = pneg %p69
      %p552 = pneg %p93
      %p553 = pneg %p90
      %p554 = pneg %p114
      %p555 = pneg %p111
      %p556 = pneg %p135
      %p557 = pneg %p132
      %p558 = pneg %p156
      %p559 = pneg %p153
      %p560 = pneg %p177
      %p561 = pneg %p174
      %p562 = pneg %p198
      %p563 = pneg %p195
      %p564 = pneg %p219
      %p565 = pneg %p216
      %p566 = pneg %p240
      %p567 = pneg %p237
      %p568 = pneg %p261
      %p569 = pneg %p258
      %p570 = pneg %p282
      %p571 = pneg %p279
      %p572 = pneg %p303
      %p573 = pneg %p300
      %p574 = pneg %p324
      %p575 = pneg %p321
      %p576 = pneg %p345
      %p577 = pneg %p342
      %p578 = pneg %p366
      %p579 = pneg %p363
      %p580 = pneg %p387
      %p581 = pneg %p384
      %p582 = pneg %p408
      %p583 = pneg %p405
      %p584 = pneg %p429
      %p585 = pneg %p426
      %p586 = pneg %p455
      %p587 = pneg %p452
      %p588 = scmp.lt.s32.totalorder %s30, 8
      %s589 = scalar_select %p588, %s30, 8
      %s590 = smul.addr %s589, 2
      %s591 = scalar_lea.vmem %s19, %s590
      %p592 = scmp.lt.s32.totalorder %s30, 8
      %s593 = scalar_select %p592, %s30, 8
      %s594 = smul.addr %s593, 2
      %s595 = smul.addr %s594, 8
      %s596 = scalar_lea.vmem %s0, %s595
      %p597 = scmp.lt.s32.totalorder %s30, 8
      %s598 = scalar_select %p597, %s30, 8
      %s599 = smul.addr %s598, 2
      %s600 = scalar_lea.vmem %s19, %s599
      %v601 = vld [vmem:[%s1] sm:$0xff]
      %v602 = vld [vmem:[%s1 + $0x8] sm:$0xff]
      %v603 = vld [vmem:[%s596] sm:$0xff]
      %v604 = vld [vmem:[%s596 + $0x8] sm:$0xff]
      %s605 = smul.u32 %s30, 8
      %s606 = scalar_lea.vmem %s2, %s605
      %v607 = vld [vmem:[%s606] sm:$0xff]
      %s608 = scalar_lea.vmem %s3, %s30
      %v609 = vld [vmem:[%s608] sm:$0x1]
      %611 = vset.pattern.permute.xlu0 0
      %612 = vperm.xlu0 %611, %v603
      %v613 = vpop.permute.xlu0 %612
      %616 = vset.pattern.permute.xlu0 0
      %617 = vperm.xlu0 %616, %v604
      %v618 = vpop.permute.xlu0 %617
      %v621 = vlaneseq
      %v622 = vshrl.u32 %v621, 7
      %v623 = vsub.s32 0, %v622
      %v624 = vrot.slane %v609, %v623
      %v626 = vmul.f32 %v613, %v624
      %v627 = vmul.f32 %v618, %v624
      %vm628 = vcmask 64512
      %v630 = vsel %vm628, %v601, 0
      %v633 = vsel %vm628, %v602, 0
      %635 = vmatprep.subr.mxu0 0.0
      %636 = vmatpush1.msra.mxu0 %v607
      %637 = vmatprep.subr.mxu0 0.0
      %638 = vmatpush1.msra.mxu0 0.0
      %639 = vmatprep.subr.mxu0 0.0
      %640 = vmatpush1.msra.mxu0 0.0
      %641 = vmatprep.subr.mxu0 0.0
      %642 = vmatpush1.msra.mxu0 0.0
      %643 = vmatprep.subr.mxu0 0.0
      %644 = vmatpush1.msra.mxu0 0.0
      %645 = vmatprep.subr.mxu0 0.0
      %646 = vmatpush1.msra.mxu0 0.0
      %647 = vmatprep.subr.mxu0 0.0
      %648 = vmatpush1.msra.mxu0 0.0
      %649 = vmatprep.subr.mxu0 0.0
      %650 = vmatpush1.msra.mxu0 0.0
      %651 = vmatprep.subr.mxu0 0.0
      %652 = vmatpush1.msra.mxu0 0.0
      %653 = vmatprep.subr.mxu0 0.0
      %654 = vmatpush1.msra.mxu0 0.0
      %655 = vmatprep.subr.mxu0 0.0
      %656 = vmatpush1.msra.mxu0 0.0
      %657 = vmatprep.subr.mxu0 0.0
      %658 = vmatpush1.msra.mxu0 0.0
      %659 = vmatprep.subr.mxu0 0.0
      %660 = vmatpush1.msra.mxu0 0.0
      %661 = vmatprep.subr.mxu0 0.0
      %662 = vmatpush1.msra.mxu0 0.0
      %663 = vmatprep.subr.mxu0 0.0
      %664 = vmatpush1.msra.mxu0 0.0
      %665 = vmatprep.subr.mxu0 0.0
      %666 = vmatpush1.msra.mxu0 0.0
      %667 = vmatprep.subr.mxu0 0.0
      %668 = vmatpush1.msra.mxu0 0.0
      %669 = vmatprep.subr.mxu0 0.0
      %670 = vmatpush1.msra.mxu0 0.0
      %671 = vmatprep.subr.mxu0 0.0
      %672 = vmatpush1.msra.mxu0 0.0
      %673 = vmatprep.subr.mxu0 0.0
      %674 = vmatpush1.msra.mxu0 0.0
      %675 = vmatprep.subr.mxu0 0.0
      %676 = vmatpush1.msra.mxu0 0.0
      %677 = vmatprep.subr.mxu0 0.0
      %678 = vmatpush1.msra.mxu0 0.0
      %679 = vmatprep.subr.mxu0 0.0
      %680 = vmatpush1.msra.mxu0 0.0
      %681 = vmatprep.subr.mxu0 0.0
      %682 = vmatpush1.msra.mxu0 0.0
      %683 = vmatprep.subr.mxu0 0.0
      %684 = vmatpush1.msra.mxu0 0.0
      %685 = vmatprep.subr.mxu0 0.0
      %686 = vmatpush1.msra.mxu0 0.0
      %687 = vmatprep.subr.mxu0 0.0
      %688 = vmatpush1.msra.mxu0 0.0
      %689 = vmatprep.subr.mxu0 0.0
      %690 = vmatpush1.msra.mxu0 0.0
      %691 = vmatprep.subr.mxu0 0.0
      %692 = vmatpush1.msra.mxu0 0.0
      %693 = vmatprep.subr.mxu0 0.0
      %694 = vmatpush1.msra.mxu0 0.0
      %695 = vmatprep.subr.mxu0 0.0
      %696 = vmatpush1.msra.mxu0 0.0
      %697 = vmatprep.subr.mxu0 0.0
      %698 = vmatpush1.msra.mxu0 0.0
      %699 = vmatprep.mubr.f32.mxu0 0.0
      %700 = vmatmul.mubr.f32.gmra.mrb[0].mxu0 %v630
      %v701 = vpop.f32.mrb[0].mxu0
      %v702 = vadd.f32 %v626, %v701
      %v703 = vpop.f32.mrb[0].mxu0
      %704 = vmatprep.mubr.f32.mxu0 0.0
      %705 = vmatmul.mubr.f32.gmra.mrb[0].mxu0 %v633
      %v706 = vpop.f32.mrb[0].mxu0
      %v707 = vadd.f32 %v627, %v706
      %v708 = vpop.f32.mrb[0].mxu0
      %709 = vdwg.mxu0
      %s710 = scalar_lea.vmem %s4, %s30
      %v711 = vld [vmem:[%s710] sm:$0x1]
      %v713 = vlaneseq
      %v714 = vshrl.u32 %v713, 7
      %v715 = vsub.s32 0, %v714
      %v716 = vrot.slane %v711, %v715
      %v718 = vadd.f32 %v702, %v716
      %v719 = vadd.f32 %v707, %v716
      %v720 = vtanh.pop %v718
      %v721 = vtanh.pop %v719
      %s722 = smul.u32 %s30, 64
      %s723 = scalar_lea.vmem %s5, %s722
      %v724 = vld [vmem:[%s723] sm:$0xff]
      %v725 = vld [vmem:[%s723 + $0x8] sm:$0xff]
      %v726 = vld [vmem:[%s723 + $0x10] sm:$0xff]
      %v727 = vld [vmem:[%s723 + $0x18] sm:$0xff]
      %v728 = vld [vmem:[%s723 + $0x20] sm:$0xff]
      %v729 = vld [vmem:[%s723 + $0x28] sm:$0xff]
      %v730 = vld [vmem:[%s723 + $0x30] sm:$0xff]
      %v731 = vld [vmem:[%s723 + $0x38] sm:$0xf]
      %s732 = scalar_lea.vmem %s6, %s30
      %v733 = vld [vmem:[%s732] sm:$0x1]
      %v735 = vlaneseq
      %v736 = vshrl.u32 %v735, 7
      %v737 = vsub.s32 0, %v736
      %v738 = vrot.slane %v733, %v737
      %vm740 = vcmask 490496
      %v742 = vsel %vm740, %v720, 0
      %v745 = vsel %vm740, %v721, 0
      %vm747 = vcmask 1043456
      %v749 = vsel %vm747, %v731, 0
      %751 = vmatprep.subr.mxu0 0.0
      %752 = vmatpush1.msra.mxu0 %v724
      %753 = vmatprep.subr.mxu0 0.0
      %754 = vmatpush1.msra.mxu0 %v725
      %755 = vmatprep.subr.mxu0 0.0
      %756 = vmatpush1.msra.mxu0 %v726
      %757 = vmatprep.subr.mxu0 0.0
      %758 = vmatpush1.msra.mxu0 %v727
      %759 = vmatprep.subr.mxu0 0.0
      %760 = vmatpush1.msra.mxu0 %v728
      %761 = vmatprep.subr.mxu0 0.0
      %762 = vmatpush1.msra.mxu0 %v729
      %763 = vmatprep.subr.mxu0 0.0
      %764 = vmatpush1.msra.mxu0 %v730
      %765 = vmatprep.subr.mxu0 0.0
      %766 = vmatpush1.msra.mxu0 %v749
      %767 = vmatprep.subr.mxu0 0.0
      %768 = vmatpush1.msra.mxu0 0.0
      %769 = vmatprep.subr.mxu0 0.0
      %770 = vmatpush1.msra.mxu0 0.0
      %771 = vmatprep.subr.mxu0 0.0
      %772 = vmatpush1.msra.mxu0 0.0
      %773 = vmatprep.subr.mxu0 0.0
      %774 = vmatpush1.msra.mxu0 0.0
      %775 = vmatprep.subr.mxu0 0.0
      %776 = vmatpush1.msra.mxu0 0.0
      %777 = vmatprep.subr.mxu0 0.0
      %778 = vmatpush1.msra.mxu0 0.0
      %779 = vmatprep.subr.mxu0 0.0
      %780 = vmatpush1.msra.mxu0 0.0
      %781 = vmatprep.subr.mxu0 0.0
      %782 = vmatpush1.msra.mxu0 0.0
      %783 = vmatprep.subr.mxu0 0.0
      %784 = vmatpush1.msra.mxu0 0.0
      %785 = vmatprep.subr.mxu0 0.0
      %786 = vmatpush1.msra.mxu0 0.0
      %787 = vmatprep.subr.mxu0 0.0
      %788 = vmatpush1.msra.mxu0 0.0
      %789 = vmatprep.subr.mxu0 0.0
      %790 = vmatpush1.msra.mxu0 0.0
      %791 = vmatprep.subr.mxu0 0.0
      %792 = vmatpush1.msra.mxu0 0.0
      %793 = vmatprep.subr.mxu0 0.0
      %794 = vmatpush1.msra.mxu0 0.0
      %795 = vmatprep.subr.mxu0 0.0
      %796 = vmatpush1.msra.mxu0 0.0
      %797 = vmatprep.subr.mxu0 0.0
      %798 = vmatpush1.msra.mxu0 0.0
      %799 = vmatprep.subr.mxu0 0.0
      %800 = vmatpush1.msra.mxu0 0.0
      %801 = vmatprep.subr.mxu0 0.0
      %802 = vmatpush1.msra.mxu0 0.0
      %803 = vmatprep.subr.mxu0 0.0
      %804 = vmatpush1.msra.mxu0 0.0
      %805 = vmatprep.subr.mxu0 0.0
      %806 = vmatpush1.msra.mxu0 0.0
      %807 = vmatprep.subr.mxu0 0.0
      %808 = vmatpush1.msra.mxu0 0.0
      %809 = vmatprep.subr.mxu0 0.0
      %810 = vmatpush1.msra.mxu0 0.0
      %811 = vmatprep.subr.mxu0 0.0
      %812 = vmatpush1.msra.mxu0 0.0
      %813 = vmatprep.subr.mxu0 0.0
      %814 = vmatpush1.msra.mxu0 0.0
      %815 = vmatprep.mubr.f32.mxu0 0.0
      %816 = vmatmul.mubr.f32.gmra.mrb[0].mxu0 %v742
      %v817 = vpop.f32.mrb[0].mxu0
      %v818 = vadd.f32 %v738, %v817
      %v819 = vpop.f32.mrb[0].mxu0
      %820 = vmatprep.mubr.f32.mxu0 0.0
      %821 = vmatmul.mubr.f32.gmra.mrb[0].mxu0 %v745
      %v822 = vpop.f32.mrb[0].mxu0
      %v823 = vadd.f32 %v738, %v822
      %v824 = vpop.f32.mrb[0].mxu0
      %825 = vdwg.mxu0
      %v826 = vtanh.pop %v818
      %v827 = vtanh.pop %v823
      %s828 = scalar_lea.vmem %s7, %s722
      %v829 = vld [vmem:[%s828] sm:$0xff]
      %v830 = vld [vmem:[%s828 + $0x8] sm:$0xff]
      %v831 = vld [vmem:[%s828 + $0x10] sm:$0xff]
      %v832 = vld [vmem:[%s828 + $0x18] sm:$0xff]
      %v833 = vld [vmem:[%s828 + $0x20] sm:$0xff]
      %v834 = vld [vmem:[%s828 + $0x28] sm:$0xff]
      %v835 = vld [vmem:[%s828 + $0x30] sm:$0xff]
      %v836 = vld [vmem:[%s828 + $0x38] sm:$0xf]
      %s837 = scalar_lea.vmem %s8, %s30
      %v838 = vld [vmem:[%s837] sm:$0x1]
      %v840 = vlaneseq
      %v841 = vshrl.u32 %v840, 7
      %v842 = vsub.s32 0, %v841
      %v843 = vrot.slane %v838, %v842
      %v846 = vsel %vm740, %v826, 0
      %v849 = vsel %vm740, %v827, 0
      %v852 = vsel %vm747, %v836, 0
      %854 = vmatprep.subr.mxu0 0.0
      %855 = vmatpush1.msra.mxu0 %v829
      %856 = vmatprep.subr.mxu0 0.0
      %857 = vmatpush1.msra.mxu0 %v830
      %858 = vmatprep.subr.mxu0 0.0
      %859 = vmatpush1.msra.mxu0 %v831
      %860 = vmatprep.subr.mxu0 0.0
      %861 = vmatpush1.msra.mxu0 %v832
      %862 = vmatprep.subr.mxu0 0.0
      %863 = vmatpush1.msra.mxu0 %v833
      %864 = vmatprep.subr.mxu0 0.0
      %865 = vmatpush1.msra.mxu0 %v834
      %866 = vmatprep.subr.mxu0 0.0
      %867 = vmatpush1.msra.mxu0 %v835
      %868 = vmatprep.subr.mxu0 0.0
      %869 = vmatpush1.msra.mxu0 %v852
      %870 = vmatprep.subr.mxu0 0.0
      %871 = vmatpush1.msra.mxu0 0.0
      %872 = vmatprep.subr.mxu0 0.0
      %873 = vmatpush1.msra.mxu0 0.0
      %874 = vmatprep.subr.mxu0 0.0
      %875 = vmatpush1.msra.mxu0 0.0
      %876 = vmatprep.subr.mxu0 0.0
      %877 = vmatpush1.msra.mxu0 0.0
      %878 = vmatprep.subr.mxu0 0.0
      %879 = vmatpush1.msra.mxu0 0.0
      %880 = vmatprep.subr.mxu0 0.0
      %881 = vmatpush1.msra.mxu0 0.0
      %882 = vmatprep.subr.mxu0 0.0
      %883 = vmatpush1.msra.mxu0 0.0
      %884 = vmatprep.subr.mxu0 0.0
      %885 = vmatpush1.msra.mxu0 0.0
      %886 = vmatprep.subr.mxu0 0.0
      %887 = vmatpush1.msra.mxu0 0.0
      %888 = vmatprep.subr.mxu0 0.0
      %889 = vmatpush1.msra.mxu0 0.0
      %890 = vmatprep.subr.mxu0 0.0
      %891 = vmatpush1.msra.mxu0 0.0
      %892 = vmatprep.subr.mxu0 0.0
      %893 = vmatpush1.msra.mxu0 0.0
      %894 = vmatprep.subr.mxu0 0.0
      %895 = vmatpush1.msra.mxu0 0.0
      %896 = vmatprep.subr.mxu0 0.0
      %897 = vmatpush1.msra.mxu0 0.0
      %898 = vmatprep.subr.mxu0 0.0
      %899 = vmatpush1.msra.mxu0 0.0
      %900 = vmatprep.subr.mxu0 0.0
      %901 = vmatpush1.msra.mxu0 0.0
      %902 = vmatprep.subr.mxu0 0.0
      %903 = vmatpush1.msra.mxu0 0.0
      %904 = vmatprep.subr.mxu0 0.0
      %905 = vmatpush1.msra.mxu0 0.0
      %906 = vmatprep.subr.mxu0 0.0
      %907 = vmatpush1.msra.mxu0 0.0
      %908 = vmatprep.subr.mxu0 0.0
      %909 = vmatpush1.msra.mxu0 0.0
      %910 = vmatprep.subr.mxu0 0.0
      %911 = vmatpush1.msra.mxu0 0.0
      %912 = vmatprep.subr.mxu0 0.0
      %913 = vmatpush1.msra.mxu0 0.0
      %914 = vmatprep.subr.mxu0 0.0
      %915 = vmatpush1.msra.mxu0 0.0
      %916 = vmatprep.subr.mxu0 0.0
      %917 = vmatpush1.msra.mxu0 0.0
      %918 = vmatprep.mubr.f32.mxu0 0.0
      %919 = vmatmul.mubr.f32.gmra.mrb[0].mxu0 %v846
      %v920 = vpop.f32.mrb[0].mxu0
      %v921 = vadd.f32 %v843, %v920
      %v922 = vpop.f32.mrb[0].mxu0
      %923 = vmatprep.mubr.f32.mxu0 0.0
      %924 = vmatmul.mubr.f32.gmra.mrb[0].mxu0 %v849
      %v925 = vpop.f32.mrb[0].mxu0
      %v926 = vadd.f32 %v843, %v925
      %v927 = vpop.f32.mrb[0].mxu0
      %928 = vdwg.mxu0
      %v929 = vxor.u32 %v921, 2147483648
      %v930 = vxor.u32 %v926, 2147483648
      %v931 = vmul.f32 %v929, 1.442695
      %v932 = vpow.pop %v931
      %v933 = vmul.f32 %v930, 1.442695
      %v934 = vpow.pop %v933
      %v935 = vadd.f32 %v932, 1.0
      %v936 = vadd.f32 %v934, 1.0
      %v937 = vrcp.pop %v935
      %v938 = vmul.f32 1.0, %v937
      %v939 = vrcp.pop %v936
      %v940 = vmul.f32 1.0, %v939
      %s941 = smul.u32 %s30, 2
      %s942 = smul.u32 %s941, 16
      %s943 = scalar_lea.vmem %s9, %s942
      %v944 = vld [vmem:[%s943] sm:$0xff]
      %v945 = vld [vmem:[%s943 + $0x8] sm:$0xff]
      %s946 = scalar_lea.vmem %s10, %s941
      %v947 = vld [vmem:[%s946] sm:$0x1]
      %v949 = vlaneseq
      %v950 = vshrl.u32 %v949, 7
      %v951 = vsub.s32 0, %v950
      %v952 = vrot.slane %v947, %v951
      %vm954 = vcmask 130048
      %v956 = vsel %vm954, %v938, 0
      %v959 = vsel %vm954, %v940, 0
      %961 = vmatprep.subr.mxu0 0.0
      %962 = vmatpush1.msra.mxu0 %v944
      %963 = vmatprep.subr.mxu0 0.0
      %964 = vmatpush1.msra.mxu0 %v945
      %965 = vmatprep.subr.mxu0 0.0
      %966 = vmatpush1.msra.mxu0 0.0
      %967 = vmatprep.subr.mxu0 0.0
      %968 = vmatpush1.msra.mxu0 0.0
      %969 = vmatprep.subr.mxu0 0.0
      %970 = vmatpush1.msra.mxu0 0.0
      %971 = vmatprep.subr.mxu0 0.0
      %972 = vmatpush1.msra.mxu0 0.0
      %973 = vmatprep.subr.mxu0 0.0
      %974 = vmatpush1.msra.mxu0 0.0
      %975 = vmatprep.subr.mxu0 0.0
      %976 = vmatpush1.msra.mxu0 0.0
      %977 = vmatprep.subr.mxu0 0.0
      %978 = vmatpush1.msra.mxu0 0.0
      %979 = vmatprep.subr.mxu0 0.0
      %980 = vmatpush1.msra.mxu0 0.0
      %981 = vmatprep.subr.mxu0 0.0
      %982 = vmatpush1.msra.mxu0 0.0
      %983 = vmatprep.subr.mxu0 0.0
      %984 = vmatpush1.msra.mxu0 0.0
      %985 = vmatprep.subr.mxu0 0.0
      %986 = vmatpush1.msra.mxu0 0.0
      %987 = vmatprep.subr.mxu0 0.0
      %988 = vmatpush1.msra.mxu0 0.0
      %989 = vmatprep.subr.mxu0 0.0
      %990 = vmatpush1.msra.mxu0 0.0
      %991 = vmatprep.subr.mxu0 0.0
      %992 = vmatpush1.msra.mxu0 0.0
      %993 = vmatprep.subr.mxu0 0.0
      %994 = vmatpush1.msra.mxu0 0.0
      %995 = vmatprep.subr.mxu0 0.0
      %996 = vmatpush1.msra.mxu0 0.0
      %997 = vmatprep.subr.mxu0 0.0
      %998 = vmatpush1.msra.mxu0 0.0
      %999 = vmatprep.subr.mxu0 0.0
      %1000 = vmatpush1.msra.mxu0 0.0
      %1001 = vmatprep.subr.mxu0 0.0
      %1002 = vmatpush1.msra.mxu0 0.0
      %1003 = vmatprep.subr.mxu0 0.0
      %1004 = vmatpush1.msra.mxu0 0.0
      %1005 = vmatprep.subr.mxu0 0.0
      %1006 = vmatpush1.msra.mxu0 0.0
      %1007 = vmatprep.subr.mxu0 0.0
      %1008 = vmatpush1.msra.mxu0 0.0
      %1009 = vmatprep.subr.mxu0 0.0
      %1010 = vmatpush1.msra.mxu0 0.0
      %1011 = vmatprep.subr.mxu0 0.0
      %1012 = vmatpush1.msra.mxu0 0.0
      %1013 = vmatprep.subr.mxu0 0.0
      %1014 = vmatpush1.msra.mxu0 0.0
      %1015 = vmatprep.subr.mxu0 0.0
      %1016 = vmatpush1.msra.mxu0 0.0
      %1017 = vmatprep.subr.mxu0 0.0
      %1018 = vmatpush1.msra.mxu0 0.0
      %1019 = vmatprep.subr.mxu0 0.0
      %1020 = vmatpush1.msra.mxu0 0.0
      %1021 = vmatprep.subr.mxu0 0.0
      %1022 = vmatpush1.msra.mxu0 0.0
      %1023 = vmatprep.subr.mxu0 0.0
      %1024 = vmatpush1.msra.mxu0 0.0
      %1025 = vmatprep.mubr.f32.mxu0 0.0
      %1026 = vmatmul.mubr.f32.gmra.mrb[0].mxu0 %v956
      %v1027 = vpop.f32.mrb[0].mxu0
      %v1028 = vadd.f32 %v952, %v1027
      %v1029 = vpop.f32.mrb[0].mxu0
      %1030 = vmatprep.mubr.f32.mxu0 0.0
      %1031 = vmatmul.mubr.f32.gmra.mrb[0].mxu0 %v959
      %v1032 = vpop.f32.mrb[0].mxu0
      %v1033 = vadd.f32 %v952, %v1032
      %v1034 = vpop.f32.mrb[0].mxu0
      %1035 = vdwg.mxu0
      %1037 = vrot.lane.b32.xlu0 %v1028, 96
      %v1038 = vpop.permute.xlu0 %1037
      %v1039 = vsel %vm954, %v1028, 0
      %v1041 = vsel %vm954, %v1038, 0
      %1043 = vmatprep.subr.mxu0 0.0
      %1044 = vmatpush1.xpose.msra.mxu0 %v1041
      %1045 = vmatprep.subr.mxu0 0.0
      %1046 = vmatpush1.xpose.msra.mxu0 0.0
      %1047 = vmatprep.subr.mxu0 0.0
      %1048 = vmatpush1.xpose.msra.mxu0 0.0
      %1049 = vmatprep.subr.mxu0 0.0
      %1050 = vmatpush1.xpose.msra.mxu0 0.0
      %1051 = vmatprep.subr.mxu0 0.0
      %1052 = vmatpush1.xpose.msra.mxu0 0.0
      %1053 = vmatprep.subr.mxu0 0.0
      %1054 = vmatpush1.xpose.msra.mxu0 0.0
      %1055 = vmatprep.subr.mxu0 0.0
      %1056 = vmatpush1.xpose.msra.mxu0 0.0
      %1057 = vmatprep.subr.mxu0 0.0
      %1058 = vmatpush1.xpose.msra.mxu0 0.0
      %1059 = vmatprep.subr.mxu0 0.0
      %1060 = vmatpush1.xpose.msra.mxu0 0.0
      %1061 = vmatprep.subr.mxu0 0.0
      %1062 = vmatpush1.xpose.msra.mxu0 0.0
      %1063 = vmatprep.subr.mxu0 0.0
      %1064 = vmatpush1.xpose.msra.mxu0 0.0
      %1065 = vmatprep.subr.mxu0 0.0
      %1066 = vmatpush1.xpose.msra.mxu0 0.0
      %1067 = vmatprep.subr.mxu0 0.0
      %1068 = vmatpush1.xpose.msra.mxu0 0.0
      %1069 = vmatprep.subr.mxu0 0.0
      %1070 = vmatpush1.xpose.msra.mxu0 0.0
      %1071 = vmatprep.subr.mxu0 0.0
      %1072 = vmatpush1.xpose.msra.mxu0 0.0
      %1073 = vmatprep.subr.mxu0 0.0
      %1074 = vmatpush1.xpose.msra.mxu0 0.0
      %1075 = vmatprep.subr.mxu0 0.0
      %1076 = vmatpush1.xpose.msra.mxu0 0.0
      %1077 = vmatprep.subr.mxu0 0.0
      %1078 = vmatpush1.xpose.msra.mxu0 0.0
      %1079 = vmatprep.subr.mxu0 0.0
      %1080 = vmatpush1.xpose.msra.mxu0 0.0
      %1081 = vmatprep.subr.mxu0 0.0
      %1082 = vmatpush1.xpose.msra.mxu0 0.0
      %1083 = vmatprep.subr.mxu0 0.0
      %1084 = vmatpush1.xpose.msra.mxu0 0.0
      %1085 = vmatprep.subr.mxu0 0.0
      %1086 = vmatpush1.xpose.msra.mxu0 0.0
      %1087 = vmatprep.subr.mxu0 0.0
      %1088 = vmatpush1.xpose.msra.mxu0 0.0
      %1089 = vmatprep.subr.mxu0 0.0
      %1090 = vmatpush1.xpose.msra.mxu0 0.0
      %1091 = vmatprep.subr.mxu0 0.0
      %1092 = vmatpush1.xpose.msra.mxu0 0.0
      %1093 = vmatprep.subr.mxu0 0.0
      %1094 = vmatpush1.xpose.msra.mxu0 0.0
      %1095 = vmatprep.subr.mxu0 0.0
      %1096 = vmatpush1.xpose.msra.mxu0 0.0
      %1097 = vmatprep.subr.mxu0 0.0
      %1098 = vmatpush1.xpose.msra.mxu0 0.0
      %1099 = vmatprep.subr.mxu0 0.0
      %1100 = vmatpush1.xpose.msra.mxu0 0.0
      %1101 = vmatprep.subr.mxu0 0.0
      %1102 = vmatpush1.xpose.msra.mxu0 0.0
      %1103 = vmatprep.subr.mxu0 0.0
      %1104 = vmatpush1.xpose.msra.mxu0 0.0
      %1105 = vmatprep.subr.mxu0 0.0
      %1106 = vmatpush1.xpose.msra.mxu0 0.0
      %1107 = vmatprep.mubr.f32.mxu0 0.0
      %1108 = vmatmul.mubr.f32.gmra.mrb[0].mxu0 %v1039
      %v1109 = vpop.f32.mrb[0].mxu0
      %v1110 = vadd.f32 0.0, %v1109
      %v1111 = vpop.f32.mrb[0].mxu0
      %1112 = vdwg.mxu0
      %v1113 = vmul.f32 %v1110, 0.25
      %v1114 = vsel %vm628, %v1113, -inf
      %1115 = vmax.xlane.f32.xlu0 %v1114
      %v1116 = vpop.xlane.xlu0 %1115
      %v1117 = vsub.f32 %v1113, %v1116
      %v1118 = vmul.f32 %v1117, 1.442695
      %v1119 = vpow.pop %v1118
      %v1120 = vsel %vm628, %v1119, 0.0
      %1121 = vadd.xlane.f32.xlu0 %v1120
      %v1122 = vpop.xlane.xlu0 %1121
      %v1123 = vrcp.pop %v1122
      %v1124 = vmul.f32 %v1119, %v1123
      %1125 = vrot.lane.b32.xlu0 %v1028, 64
      %v1126 = vpop.permute.xlu0 %1125
      %v1129 = vsel %vm628, %v1124, 0
      %1131 = vmatprep.subr.mxu0 0.0
      %1132 = vmatpush1.msra.mxu0 %v1126
      %1133 = vmatprep.subr.mxu0 0.0
      %1134 = vmatpush1.msra.mxu0 0.0
      %1135 = vmatprep.subr.mxu0 0.0
      %1136 = vmatpush1.msra.mxu0 0.0
      %1137 = vmatprep.subr.mxu0 0.0
      %1138 = vmatpush1.msra.mxu0 0.0
      %1139 = vmatprep.subr.mxu0 0.0
      %1140 = vmatpush1.msra.mxu0 0.0
      %1141 = vmatprep.subr.mxu0 0.0
      %1142 = vmatpush1.msra.mxu0 0.0
      %1143 = vmatprep.subr.mxu0 0.0
      %1144 = vmatpush1.msra.mxu0 0.0
      %1145 = vmatprep.subr.mxu0 0.0
      %1146 = vmatpush1.msra.mxu0 0.0
      %1147 = vmatprep.subr.mxu0 0.0
      %1148 = vmatpush1.msra.mxu0 0.0
      %1149 = vmatprep.subr.mxu0 0.0
      %1150 = vmatpush1.msra.mxu0 0.0
      %1151 = vmatprep.subr.mxu0 0.0
      %1152 = vmatpush1.msra.mxu0 0.0
      %1153 = vmatprep.subr.mxu0 0.0
      %1154 = vmatpush1.msra.mxu0 0.0
      %1155 = vmatprep.subr.mxu0 0.0
      %1156 = vmatpush1.msra.mxu0 0.0
      %1157 = vmatprep.subr.mxu0 0.0
      %1158 = vmatpush1.msra.mxu0 0.0
      %1159 = vmatprep.subr.mxu0 0.0
      %1160 = vmatpush1.msra.mxu0 0.0
      %1161 = vmatprep.subr.mxu0 0.0
      %1162 = vmatpush1.msra.mxu0 0.0
      %1163 = vmatprep.subr.mxu0 0.0
      %1164 = vmatpush1.msra.mxu0 0.0
      %1165 = vmatprep.subr.mxu0 0.0
      %1166 = vmatpush1.msra.mxu0 0.0
      %1167 = vmatprep.subr.mxu0 0.0
      %1168 = vmatpush1.msra.mxu0 0.0
      %1169 = vmatprep.subr.mxu0 0.0
      %1170 = vmatpush1.msra.mxu0 0.0
      %1171 = vmatprep.subr.mxu0 0.0
      %1172 = vmatpush1.msra.mxu0 0.0
      %1173 = vmatprep.subr.mxu0 0.0
      %1174 = vmatpush1.msra.mxu0 0.0
      %1175 = vmatprep.subr.mxu0 0.0
      %1176 = vmatpush1.msra.mxu0 0.0
      %1177 = vmatprep.subr.mxu0 0.0
      %1178 = vmatpush1.msra.mxu0 0.0
      %1179 = vmatprep.subr.mxu0 0.0
      %1180 = vmatpush1.msra.mxu0 0.0
      %1181 = vmatprep.subr.mxu0 0.0
      %1182 = vmatpush1.msra.mxu0 0.0
      %1183 = vmatprep.subr.mxu0 0.0
      %1184 = vmatpush1.msra.mxu0 0.0
      %1185 = vmatprep.subr.mxu0 0.0
      %1186 = vmatpush1.msra.mxu0 0.0
      %1187 = vmatprep.subr.mxu0 0.0
      %1188 = vmatpush1.msra.mxu0 0.0
      %1189 = vmatprep.subr.mxu0 0.0
      %1190 = vmatpush1.msra.mxu0 0.0
      %1191 = vmatprep.subr.mxu0 0.0
      %1192 = vmatpush1.msra.mxu0 0.0
      %1193 = vmatprep.subr.mxu0 0.0
      %1194 = vmatpush1.msra.mxu0 0.0
      %1195 = vmatprep.mubr.f32.mxu0 0.0
      %1196 = vmatmul.mubr.f32.gmra.mrb[0].mxu0 %v1129
      %v1197 = vpop.f32.mrb[0].mxu0
      %v1198 = vadd.f32 0.0, %v1197
      %v1199 = vpop.f32.mrb[0].mxu0
      %1200 = vdwg.mxu0
      %1201 = vrot.lane.b32.xlu0 %v1028, 112
      %v1202 = vpop.permute.xlu0 %1201
      %1203 = vrot.lane.b32.xlu0 %v1028, 80
      %v1204 = vpop.permute.xlu0 %1203
      %v1205 = vsel %vm954, %v1202, 0
      %v1207 = vsel %vm954, %v1204, 0
      %1209 = vmatprep.subr.mxu0 0.0
      %1210 = vmatpush1.xpose.msra.mxu0 %v1207
      %1211 = vmatprep.subr.mxu0 0.0
      %1212 = vmatpush1.xpose.msra.mxu0 0.0
      %1213 = vmatprep.subr.mxu0 0.0
      %1214 = vmatpush1.xpose.msra.mxu0 0.0
      %1215 = vmatprep.subr.mxu0 0.0
      %1216 = vmatpush1.xpose.msra.mxu0 0.0
      %1217 = vmatprep.subr.mxu0 0.0
      %1218 = vmatpush1.xpose.msra.mxu0 0.0
      %1219 = vmatprep.subr.mxu0 0.0
      %1220 = vmatpush1.xpose.msra.mxu0 0.0
      %1221 = vmatprep.subr.mxu0 0.0
      %1222 = vmatpush1.xpose.msra.mxu0 0.0
      %1223 = vmatprep.subr.mxu0 0.0
      %1224 = vmatpush1.xpose.msra.mxu0 0.0
      %1225 = vmatprep.subr.mxu0 0.0
      %1226 = vmatpush1.xpose.msra.mxu0 0.0
      %1227 = vmatprep.subr.mxu0 0.0
      %1228 = vmatpush1.xpose.msra.mxu0 0.0
      %1229 = vmatprep.subr.mxu0 0.0
      %1230 = vmatpush1.xpose.msra.mxu0 0.0
      %1231 = vmatprep.subr.mxu0 0.0
      %1232 = vmatpush1.xpose.msra.mxu0 0.0
      %1233 = vmatprep.subr.mxu0 0.0
      %1234 = vmatpush1.xpose.msra.mxu0 0.0
      %1235 = vmatprep.subr.mxu0 0.0
      %1236 = vmatpush1.xpose.msra.mxu0 0.0
      %1237 = vmatprep.subr.mxu0 0.0
      %1238 = vmatpush1.xpose.msra.mxu0 0.0
      %1239 = vmatprep.subr.mxu0 0.0
      %1240 = vmatpush1.xpose.msra.mxu0 0.0
      %1241 = vmatprep.subr.mxu0 0.0
      %1242 = vmatpush1.xpose.msra.mxu0 0.0
      %1243 = vmatprep.subr.mxu0 0.0
      %1244 = vmatpush1.xpose.msra.mxu0 0.0
      %1245 = vmatprep.subr.mxu0 0.0
      %1246 = vmatpush1.xpose.msra.mxu0 0.0
      %1247 = vmatprep.subr.mxu0 0.0
      %1248 = vmatpush1.xpose.msra.mxu0 0.0
      %1249 = vmatprep.subr.mxu0 0.0
      %1250 = vmatpush1.xpose.msra.mxu0 0.0
      %1251 = vmatprep.subr.mxu0 0.0
      %1252 = vmatpush1.xpose.msra.mxu0 0.0
      %1253 = vmatprep.subr.mxu0 0.0
      %1254 = vmatpush1.xpose.msra.mxu0 0.0
      %1255 = vmatprep.subr.mxu0 0.0
      %1256 = vmatpush1.xpose.msra.mxu0 0.0
      %1257 = vmatprep.subr.mxu0 0.0
      %1258 = vmatpush1.xpose.msra.mxu0 0.0
      %1259 = vmatprep.subr.mxu0 0.0
      %1260 = vmatpush1.xpose.msra.mxu0 0.0
      %1261 = vmatprep.subr.mxu0 0.0
      %1262 = vmatpush1.xpose.msra.mxu0 0.0
      %1263 = vmatprep.subr.mxu0 0.0
      %1264 = vmatpush1.xpose.msra.mxu0 0.0
      %1265 = vmatprep.subr.mxu0 0.0
      %1266 = vmatpush1.xpose.msra.mxu0 0.0
      %1267 = vmatprep.subr.mxu0 0.0
      %1268 = vmatpush1.xpose.msra.mxu0 0.0
      %1269 = vmatprep.subr.mxu0 0.0
      %1270 = vmatpush1.xpose.msra.mxu0 0.0
      %1271 = vmatprep.subr.mxu0 0.0
      %1272 = vmatpush1.xpose.msra.mxu0 0.0
      %1273 = vmatprep.mubr.f32.mxu0 0.0
      %1274 = vmatmul.mubr.f32.gmra.mrb[0].mxu0 %v1205
      %v1275 = vpop.f32.mrb[0].mxu0
      %v1276 = vadd.f32 0.0, %v1275
      %v1277 = vpop.f32.mrb[0].mxu0
      %1278 = vdwg.mxu0
      %v1279 = vmul.f32 %v1276, 0.25
      %v1280 = vsel %vm628, %v1279, -inf
      %1281 = vmax.xlane.f32.xlu0 %v1280
      %v1282 = vpop.xlane.xlu0 %1281
      %v1283 = vsub.f32 %v1279, %v1282
      %v1284 = vmul.f32 %v1283, 1.442695
      %v1285 = vpow.pop %v1284
      %v1286 = vsel %vm628, %v1285, 0.0
      %1287 = vadd.xlane.f32.xlu0 %v1286
      %v1288 = vpop.xlane.xlu0 %1287
      %v1289 = vrcp.pop %v1288
      %v1290 = vmul.f32 %v1285, %v1289
      %1291 = vrot.lane.b32.xlu0 %v1028, 48
      %v1292 = vpop.permute.xlu0 %1291
      %v1295 = vsel %vm628, %v1290, 0
      %1297 = vmatprep.subr.mxu0 0.0
      %1298 = vmatpush1.msra.mxu0 %v1292
      %1299 = vmatprep.subr.mxu0 0.0
      %1300 = vmatpush1.msra.mxu0 0.0
      %1301 = vmatprep.subr.mxu0 0.0
      %1302 = vmatpush1.msra.mxu0 0.0
      %1303 = vmatprep.subr.mxu0 0.0
      %1304 = vmatpush1.msra.mxu0 0.0
      %1305 = vmatprep.subr.mxu0 0.0
      %1306 = vmatpush1.msra.mxu0 0.0
      %1307 = vmatprep.subr.mxu0 0.0
      %1308 = vmatpush1.msra.mxu0 0.0
      %1309 = vmatprep.subr.mxu0 0.0
      %1310 = vmatpush1.msra.mxu0 0.0
      %1311 = vmatprep.subr.mxu0 0.0
      %1312 = vmatpush1.msra.mxu0 0.0
      %1313 = vmatprep.subr.mxu0 0.0
      %1314 = vmatpush1.msra.mxu0 0.0
      %1315 = vmatprep.subr.mxu0 0.0
      %1316 = vmatpush1.msra.mxu0 0.0
      %1317 = vmatprep.subr.mxu0 0.0
      %1318 = vmatpush1.msra.mxu0 0.0
      %1319 = vmatprep.subr.mxu0 0.0
      %1320 = vmatpush1.msra.mxu0 0.0
      %1321 = vmatprep.subr.mxu0 0.0
      %1322 = vmatpush1.msra.mxu0 0.0
      %1323 = vmatprep.subr.mxu0 0.0
      %1324 = vmatpush1.msra.mxu0 0.0
      %1325 = vmatprep.subr.mxu0 0.0
      %1326 = vmatpush1.msra.mxu0 0.0
      %1327 = vmatprep.subr.mxu0 0.0
      %1328 = vmatpush1.msra.mxu0 0.0
      %1329 = vmatprep.subr.mxu0 0.0
      %1330 = vmatpush1.msra.mxu0 0.0
      %1331 = vmatprep.subr.mxu0 0.0
      %1332 = vmatpush1.msra.mxu0 0.0
      %1333 = vmatprep.subr.mxu0 0.0
      %1334 = vmatpush1.msra.mxu0 0.0
      %1335 = vmatprep.subr.mxu0 0.0
      %1336 = vmatpush1.msra.mxu0 0.0
      %1337 = vmatprep.subr.mxu0 0.0
      %1338 = vmatpush1.msra.mxu0 0.0
      %1339 = vmatprep.subr.mxu0 0.0
      %1340 = vmatpush1.msra.mxu0 0.0
      %1341 = vmatprep.subr.mxu0 0.0
      %1342 = vmatpush1.msra.mxu0 0.0
      %1343 = vmatprep.subr.mxu0 0.0
      %1344 = vmatpush1.msra.mxu0 0.0
      %1345 = vmatprep.subr.mxu0 0.0
      %1346 = vmatpush1.msra.mxu0 0.0
      %1347 = vmatprep.subr.mxu0 0.0
      %1348 = vmatpush1.msra.mxu0 0.0
      %1349 = vmatprep.subr.mxu0 0.0
      %1350 = vmatpush1.msra.mxu0 0.0
      %1351 = vmatprep.subr.mxu0 0.0
      %1352 = vmatpush1.msra.mxu0 0.0
      %1353 = vmatprep.subr.mxu0 0.0
      %1354 = vmatpush1.msra.mxu0 0.0
      %1355 = vmatprep.subr.mxu0 0.0
      %1356 = vmatpush1.msra.mxu0 0.0
      %1357 = vmatprep.subr.mxu0 0.0
      %1358 = vmatpush1.msra.mxu0 0.0
      %1359 = vmatprep.subr.mxu0 0.0
      %1360 = vmatpush1.msra.mxu0 0.0
      %1361 = vmatprep.mubr.f32.mxu0 0.0
      %1362 = vmatmul.mubr.f32.gmra.mrb[0].mxu0 %v1295
      %v1363 = vpop.f32.mrb[0].mxu0
      %v1364 = vadd.f32 0.0, %v1363
      %v1365 = vpop.f32.mrb[0].mxu0
      %1366 = vdwg.mxu0
      %1368 = vrot.lane.b32.xlu0 %v1364, 16
      %v1369 = vpop.permute.xlu0 %1368
      %v1371 = vsel %vm954, %v1198, %v1369
      %1373 = vrot.lane.b32.xlu0 %v1033, 96
      %v1374 = vpop.permute.xlu0 %1373
      %v1375 = vsel %vm954, %v1033, 0
      %v1377 = vsel %vm954, %v1374, 0
      %1379 = vmatprep.subr.mxu0 0.0
      %1380 = vmatpush1.xpose.msra.mxu0 %v1377
      %1381 = vmatprep.subr.mxu0 0.0
      %1382 = vmatpush1.xpose.msra.mxu0 0.0
      %1383 = vmatprep.subr.mxu0 0.0
      %1384 = vmatpush1.xpose.msra.mxu0 0.0
      %1385 = vmatprep.subr.mxu0 0.0
      %1386 = vmatpush1.xpose.msra.mxu0 0.0
      %1387 = vmatprep.subr.mxu0 0.0
      %1388 = vmatpush1.xpose.msra.mxu0 0.0
      %1389 = vmatprep.subr.mxu0 0.0
      %1390 = vmatpush1.xpose.msra.mxu0 0.0
      %1391 = vmatprep.subr.mxu0 0.0
      %1392 = vmatpush1.xpose.msra.mxu0 0.0
      %1393 = vmatprep.subr.mxu0 0.0
      %1394 = vmatpush1.xpose.msra.mxu0 0.0
      %1395 = vmatprep.subr.mxu0 0.0
      %1396 = vmatpush1.xpose.msra.mxu0 0.0
      %1397 = vmatprep.subr.mxu0 0.0
      %1398 = vmatpush1.xpose.msra.mxu0 0.0
      %1399 = vmatprep.subr.mxu0 0.0
      %1400 = vmatpush1.xpose.msra.mxu0 0.0
      %1401 = vmatprep.subr.mxu0 0.0
      %1402 = vmatpush1.xpose.msra.mxu0 0.0
      %1403 = vmatprep.subr.mxu0 0.0
      %1404 = vmatpush1.xpose.msra.mxu0 0.0
      %1405 = vmatprep.subr.mxu0 0.0
      %1406 = vmatpush1.xpose.msra.mxu0 0.0
      %1407 = vmatprep.subr.mxu0 0.0
      %1408 = vmatpush1.xpose.msra.mxu0 0.0
      %1409 = vmatprep.subr.mxu0 0.0
      %1410 = vmatpush1.xpose.msra.mxu0 0.0
      %1411 = vmatprep.subr.mxu0 0.0
      %1412 = vmatpush1.xpose.msra.mxu0 0.0
      %1413 = vmatprep.subr.mxu0 0.0
      %1414 = vmatpush1.xpose.msra.mxu0 0.0
      %1415 = vmatprep.subr.mxu0 0.0
      %1416 = vmatpush1.xpose.msra.mxu0 0.0
      %1417 = vmatprep.subr.mxu0 0.0
      %1418 = vmatpush1.xpose.msra.mxu0 0.0
      %1419 = vmatprep.subr.mxu0 0.0
      %1420 = vmatpush1.xpose.msra.mxu0 0.0
      %1421 = vmatprep.subr.mxu0 0.0
      %1422 = vmatpush1.xpose.msra.mxu0 0.0
      %1423 = vmatprep.subr.mxu0 0.0
      %1424 = vmatpush1.xpose.msra.mxu0 0.0
      %1425 = vmatprep.subr.mxu0 0.0
      %1426 = vmatpush1.xpose.msra.mxu0 0.0
      %1427 = vmatprep.subr.mxu0 0.0
      %1428 = vmatpush1.xpose.msra.mxu0 0.0
      %1429 = vmatprep.subr.mxu0 0.0
      %1430 = vmatpush1.xpose.msra.mxu0 0.0
      %1431 = vmatprep.subr.mxu0 0.0
      %1432 = vmatpush1.xpose.msra.mxu0 0.0
      %1433 = vmatprep.subr.mxu0 0.0
      %1434 = vmatpush1.xpose.msra.mxu0 0.0
      %1435 = vmatprep.subr.mxu0 0.0
      %1436 = vmatpush1.xpose.msra.mxu0 0.0
      %1437 = vmatprep.subr.mxu0 0.0
      %1438 = vmatpush1.xpose.msra.mxu0 0.0
      %1439 = vmatprep.subr.mxu0 0.0
      %1440 = vmatpush1.xpose.msra.mxu0 0.0
      %1441 = vmatprep.subr.mxu0 0.0
      %1442 = vmatpush1.xpose.msra.mxu0 0.0
      %1443 = vmatprep.mubr.f32.mxu0 0.0
      %1444 = vmatmul.mubr.f32.gmra.mrb[0].mxu0 %v1375
      %v1445 = vpop.f32.mrb[0].mxu0
      %v1446 = vadd.f32 0.0, %v1445
      %v1447 = vpop.f32.mrb[0].mxu0
      %1448 = vdwg.mxu0
      %v1449 = vmul.f32 %v1446, 0.25
      %v1450 = vsel %vm628, %v1449, -inf
      %1451 = vmax.xlane.f32.xlu0 %v1450
      %v1452 = vpop.xlane.xlu0 %1451
      %v1453 = vsub.f32 %v1449, %v1452
      %v1454 = vmul.f32 %v1453, 1.442695
      %v1455 = vpow.pop %v1454
      %v1456 = vsel %vm628, %v1455, 0.0
      %1457 = vadd.xlane.f32.xlu0 %v1456
      %v1458 = vpop.xlane.xlu0 %1457
      %v1459 = vrcp.pop %v1458
      %v1460 = vmul.f32 %v1455, %v1459
      %1461 = vrot.lane.b32.xlu0 %v1033, 64
      %v1462 = vpop.permute.xlu0 %1461
      %v1465 = vsel %vm628, %v1460, 0
      %1467 = vmatprep.subr.mxu0 0.0
      %1468 = vmatpush1.msra.mxu0 %v1462
      %1469 = vmatprep.subr.mxu0 0.0
      %1470 = vmatpush1.msra.mxu0 0.0
      %1471 = vmatprep.subr.mxu0 0.0
      %1472 = vmatpush1.msra.mxu0 0.0
      %1473 = vmatprep.subr.mxu0 0.0
      %1474 = vmatpush1.msra.mxu0 0.0
      %1475 = vmatprep.subr.mxu0 0.0
      %1476 = vmatpush1.msra.mxu0 0.0
      %1477 = vmatprep.subr.mxu0 0.0
      %1478 = vmatpush1.msra.mxu0 0.0
      %1479 = vmatprep.subr.mxu0 0.0
      %1480 = vmatpush1.msra.mxu0 0.0
      %1481 = vmatprep.subr.mxu0 0.0
      %1482 = vmatpush1.msra.mxu0 0.0
      %1483 = vmatprep.subr.mxu0 0.0
      %1484 = vmatpush1.msra.mxu0 0.0
      %1485 = vmatprep.subr.mxu0 0.0
      %1486 = vmatpush1.msra.mxu0 0.0
      %1487 = vmatprep.subr.mxu0 0.0
      %1488 = vmatpush1.msra.mxu0 0.0
      %1489 = vmatprep.subr.mxu0 0.0
      %1490 = vmatpush1.msra.mxu0 0.0
      %1491 = vmatprep.subr.mxu0 0.0
      %1492 = vmatpush1.msra.mxu0 0.0
      %1493 = vmatprep.subr.mxu0 0.0
      %1494 = vmatpush1.msra.mxu0 0.0
      %1495 = vmatprep.subr.mxu0 0.0
      %1496 = vmatpush1.msra.mxu0 0.0
      %1497 = vmatprep.subr.mxu0 0.0
      %1498 = vmatpush1.msra.mxu0 0.0
      %1499 = vmatprep.subr.mxu0 0.0
      %1500 = vmatpush1.msra.mxu0 0.0
      %1501 = vmatprep.subr.mxu0 0.0
      %1502 = vmatpush1.msra.mxu0 0.0
      %1503 = vmatprep.subr.mxu0 0.0
      %1504 = vmatpush1.msra.mxu0 0.0
      %1505 = vmatprep.subr.mxu0 0.0
      %1506 = vmatpush1.msra.mxu0 0.0
      %1507 = vmatprep.subr.mxu0 0.0
      %1508 = vmatpush1.msra.mxu0 0.0
      %1509 = vmatprep.subr.mxu0 0.0
      %1510 = vmatpush1.msra.mxu0 0.0
      %1511 = vmatprep.subr.mxu0 0.0
      %1512 = vmatpush1.msra.mxu0 0.0
      %1513 = vmatprep.subr.mxu0 0.0
      %1514 = vmatpush1.msra.mxu0 0.0
      %1515 = vmatprep.subr.mxu0 0.0
      %1516 = vmatpush1.msra.mxu0 0.0
      %1517 = vmatprep.subr.mxu0 0.0
      %1518 = vmatpush1.msra.mxu0 0.0
      %1519 = vmatprep.subr.mxu0 0.0
      %1520 = vmatpush1.msra.mxu0 0.0
      %1521 = vmatprep.subr.mxu0 0.0
      %1522 = vmatpush1.msra.mxu0 0.0
      %1523 = vmatprep.subr.mxu0 0.0
      %1524 = vmatpush1.msra.mxu0 0.0
      %1525 = vmatprep.subr.mxu0 0.0
      %1526 = vmatpush1.msra.mxu0 0.0
      %1527 = vmatprep.subr.mxu0 0.0
      %1528 = vmatpush1.msra.mxu0 0.0
      %1529 = vmatprep.subr.mxu0 0.0
      %1530 = vmatpush1.msra.mxu0 0.0
      %1531 = vmatprep.mubr.f32.mxu0 0.0
      %1532 = vmatmul.mubr.f32.gmra.mrb[0].mxu0 %v1465
      %v1533 = vpop.f32.mrb[0].mxu0
      %v1534 = vadd.f32 0.0, %v1533
      %v1535 = vpop.f32.mrb[0].mxu0
      %1536 = vdwg.mxu0
      %1537 = vrot.lane.b32.xlu0 %v1033, 112
      %v1538 = vpop.permute.xlu0 %1537
      %1539 = vrot.lane.b32.xlu0 %v1033, 80
      %v1540 = vpop.permute.xlu0 %1539
      %v1541 = vsel %vm954, %v1538, 0
      %v1543 = vsel %vm954, %v1540, 0
      %1545 = vmatprep.subr.mxu0 0.0
      %1546 = vmatpush1.xpose.msra.mxu0 %v1543
      %1547 = vmatprep.subr.mxu0 0.0
      %1548 = vmatpush1.xpose.msra.mxu0 0.0
      %1549 = vmatprep.subr.mxu0 0.0
      %1550 = vmatpush1.xpose.msra.mxu0 0.0
      %1551 = vmatprep.subr.mxu0 0.0
      %1552 = vmatpush1.xpose.msra.mxu0 0.0
      %1553 = vmatprep.subr.mxu0 0.0
      %1554 = vmatpush1.xpose.msra.mxu0 0.0
      %1555 = vmatprep.subr.mxu0 0.0
      %1556 = vmatpush1.xpose.msra.mxu0 0.0
      %1557 = vmatprep.subr.mxu0 0.0
      %1558 = vmatpush1.xpose.msra.mxu0 0.0
      %1559 = vmatprep.subr.mxu0 0.0
      %1560 = vmatpush1.xpose.msra.mxu0 0.0
      %1561 = vmatprep.subr.mxu0 0.0
      %1562 = vmatpush1.xpose.msra.mxu0 0.0
      %1563 = vmatprep.subr.mxu0 0.0
      %1564 = vmatpush1.xpose.msra.mxu0 0.0
      %1565 = vmatprep.subr.mxu0 0.0
      %1566 = vmatpush1.xpose.msra.mxu0 0.0
      %1567 = vmatprep.subr.mxu0 0.0
      %1568 = vmatpush1.xpose.msra.mxu0 0.0
      %1569 = vmatprep.subr.mxu0 0.0
      %1570 = vmatpush1.xpose.msra.mxu0 0.0
      %1571 = vmatprep.subr.mxu0 0.0
      %1572 = vmatpush1.xpose.msra.mxu0 0.0
      %1573 = vmatprep.subr.mxu0 0.0
      %1574 = vmatpush1.xpose.msra.mxu0 0.0
      %1575 = vmatprep.subr.mxu0 0.0
      %1576 = vmatpush1.xpose.msra.mxu0 0.0
      %1577 = vmatprep.subr.mxu0 0.0
      %1578 = vmatpush1.xpose.msra.mxu0 0.0
      %1579 = vmatprep.subr.mxu0 0.0
      %1580 = vmatpush1.xpose.msra.mxu0 0.0
      %1581 = vmatprep.subr.mxu0 0.0
      %1582 = vmatpush1.xpose.msra.mxu0 0.0
      %1583 = vmatprep.subr.mxu0 0.0
      %1584 = vmatpush1.xpose.msra.mxu0 0.0
      %1585 = vmatprep.subr.mxu0 0.0
      %1586 = vmatpush1.xpose.msra.mxu0 0.0
      %1587 = vmatprep.subr.mxu0 0.0
      %1588 = vmatpush1.xpose.msra.mxu0 0.0
      %1589 = vmatprep.subr.mxu0 0.0
      %1590 = vmatpush1.xpose.msra.mxu0 0.0
      %1591 = vmatprep.subr.mxu0 0.0
      %1592 = vmatpush1.xpose.msra.mxu0 0.0
      %1593 = vmatprep.subr.mxu0 0.0
      %1594 = vmatpush1.xpose.msra.mxu0 0.0
      %1595 = vmatprep.subr.mxu0 0.0
      %1596 = vmatpush1.xpose.msra.mxu0 0.0
      %1597 = vmatprep.subr.mxu0 0.0
      %1598 = vmatpush1.xpose.msra.mxu0 0.0
      %1599 = vmatprep.subr.mxu0 0.0
      %1600 = vmatpush1.xpose.msra.mxu0 0.0
      %1601 = vmatprep.subr.mxu0 0.0
      %1602 = vmatpush1.xpose.msra.mxu0 0.0
      %1603 = vmatprep.subr.mxu0 0.0
      %1604 = vmatpush1.xpose.msra.mxu0 0.0
      %1605 = vmatprep.subr.mxu0 0.0
      %1606 = vmatpush1.xpose.msra.mxu0 0.0
      %1607 = vmatprep.subr.mxu0 0.0
      %1608 = vmatpush1.xpose.msra.mxu0 0.0
      %1609 = vmatprep.mubr.f32.mxu0 0.0
      %1610 = vmatmul.mubr.f32.gmra.mrb[0].mxu0 %v1541
      %v1611 = vpop.f32.mrb[0].mxu0
      %v1612 = vadd.f32 0.0, %v1611
      %v1613 = vpop.f32.mrb[0].mxu0
      %1614 = vdwg.mxu0
      %v1615 = vmul.f32 %v1612, 0.25
      %v1616 = vsel %vm628, %v1615, -inf
      %1617 = vmax.xlane.f32.xlu0 %v1616
      %v1618 = vpop.xlane.xlu0 %1617
      %v1619 = vsub.f32 %v1615, %v1618
      %v1620 = vmul.f32 %v1619, 1.442695
      %v1621 = vpow.pop %v1620
      %v1622 = vsel %vm628, %v1621, 0.0
      %1623 = vadd.xlane.f32.xlu0 %v1622
      %v1624 = vpop.xlane.xlu0 %1623
      %v1625 = vrcp.pop %v1624
      %v1626 = vmul.f32 %v1621, %v1625
      %1627 = vrot.lane.b32.xlu0 %v1033, 48
      %v1628 = vpop.permute.xlu0 %1627
      %v1631 = vsel %vm628, %v1626, 0
      %1633 = vmatprep.subr.mxu0 0.0
      %1634 = vmatpush1.msra.mxu0 %v1628
      %1635 = vmatprep.subr.mxu0 0.0
      %1636 = vmatpush1.msra.mxu0 0.0
      %1637 = vmatprep.subr.mxu0 0.0
      %1638 = vmatpush1.msra.mxu0 0.0
      %1639 = vmatprep.subr.mxu0 0.0
      %1640 = vmatpush1.msra.mxu0 0.0
      %1641 = vmatprep.subr.mxu0 0.0
      %1642 = vmatpush1.msra.mxu0 0.0
      %1643 = vmatprep.subr.mxu0 0.0
      %1644 = vmatpush1.msra.mxu0 0.0
      %1645 = vmatprep.subr.mxu0 0.0
      %1646 = vmatpush1.msra.mxu0 0.0
      %1647 = vmatprep.subr.mxu0 0.0
      %1648 = vmatpush1.msra.mxu0 0.0
      %1649 = vmatprep.subr.mxu0 0.0
      %1650 = vmatpush1.msra.mxu0 0.0
      %1651 = vmatprep.subr.mxu0 0.0
      %1652 = vmatpush1.msra.mxu0 0.0
      %1653 = vmatprep.subr.mxu0 0.0
      %1654 = vmatpush1.msra.mxu0 0.0
      %1655 = vmatprep.subr.mxu0 0.0
      %1656 = vmatpush1.msra.mxu0 0.0
      %1657 = vmatprep.subr.mxu0 0.0
      %1658 = vmatpush1.msra.mxu0 0.0
      %1659 = vmatprep.subr.mxu0 0.0
      %1660 = vmatpush1.msra.mxu0 0.0
      %1661 = vmatprep.subr.mxu0 0.0
      %1662 = vmatpush1.msra.mxu0 0.0
      %1663 = vmatprep.subr.mxu0 0.0
      %1664 = vmatpush1.msra.mxu0 0.0
      %1665 = vmatprep.subr.mxu0 0.0
      %1666 = vmatpush1.msra.mxu0 0.0
      %1667 = vmatprep.subr.mxu0 0.0
      %1668 = vmatpush1.msra.mxu0 0.0
      %1669 = vmatprep.subr.mxu0 0.0
      %1670 = vmatpush1.msra.mxu0 0.0
      %1671 = vmatprep.subr.mxu0 0.0
      %1672 = vmatpush1.msra.mxu0 0.0
      %1673 = vmatprep.subr.mxu0 0.0
      %1674 = vmatpush1.msra.mxu0 0.0
      %1675 = vmatprep.subr.mxu0 0.0
      %1676 = vmatpush1.msra.mxu0 0.0
      %1677 = vmatprep.subr.mxu0 0.0
      %1678 = vmatpush1.msra.mxu0 0.0
      %1679 = vmatprep.subr.mxu0 0.0
      %1680 = vmatpush1.msra.mxu0 0.0
      %1681 = vmatprep.subr.mxu0 0.0
      %1682 = vmatpush1.msra.mxu0 0.0
      %1683 = vmatprep.subr.mxu0 0.0
      %1684 = vmatpush1.msra.mxu0 0.0
      %1685 = vmatprep.subr.mxu0 0.0
      %1686 = vmatpush1.msra.mxu0 0.0
      %1687 = vmatprep.subr.mxu0 0.0
      %1688 = vmatpush1.msra.mxu0 0.0
      %1689 = vmatprep.subr.mxu0 0.0
      %1690 = vmatpush1.msra.mxu0 0.0
      %1691 = vmatprep.subr.mxu0 0.0
      %1692 = vmatpush1.msra.mxu0 0.0
      %1693 = vmatprep.subr.mxu0 0.0
      %1694 = vmatpush1.msra.mxu0 0.0
      %1695 = vmatprep.subr.mxu0 0.0
      %1696 = vmatpush1.msra.mxu0 0.0
      %1697 = vmatprep.mubr.f32.mxu0 0.0
      %1698 = vmatmul.mubr.f32.gmra.mrb[0].mxu0 %v1631
      %v1699 = vpop.f32.mrb[0].mxu0
      %v1700 = vadd.f32 0.0, %v1699
      %v1701 = vpop.f32.mrb[0].mxu0
      %1702 = vdwg.mxu0
      %1704 = vrot.lane.b32.xlu0 %v1700, 16
      %v1705 = vpop.permute.xlu0 %1704
      %v1707 = vsel %vm954, %v1534, %v1705
      %s1708 = smul.u32 %s941, 32
      %s1709 = scalar_lea.vmem %s11, %s1708
      %v1710 = vld [vmem:[%s1709] sm:$0xff]
      %v1711 = vld [vmem:[%s1709 + $0x8] sm:$0xff]
      %v1712 = vld [vmem:[%s1709 + $0x10] sm:$0xff]
      %v1713 = vld [vmem:[%s1709 + $0x18] sm:$0xff]
      %s1714 = scalar_lea.vmem %s12, %s941
      %v1715 = vld [vmem:[%s1714] sm:$0x1]
      %v1717 = vlaneseq
      %v1718 = vshrl.u32 %v1717, 7
      %v1719 = vsub.s32 0, %v1718
      %v1720 = vrot.slane %v1715, %v1719
      %vm1722 = vcmask 261120
      %v1724 = vsel %vm1722, %v1371, 0
      %v1727 = vsel %vm1722, %v1707, 0
      %1729 = vmatprep.subr.mxu0 0.0
      %1730 = vmatpush1.msra.mxu0 %v1710
      %1731 = vmatprep.subr.mxu0 0.0
      %1732 = vmatpush1.msra.mxu0 %v1711
      %1733 = vmatprep.subr.mxu0 0.0
      %1734 = vmatpush1.msra.mxu0 %v1712
      %1735 = vmatprep.subr.mxu0 0.0
      %1736 = vmatpush1.msra.mxu0 %v1713
      %1737 = vmatprep.subr.mxu0 0.0
      %1738 = vmatpush1.msra.mxu0 0.0
      %1739 = vmatprep.subr.mxu0 0.0
      %1740 = vmatpush1.msra.mxu0 0.0
      %1741 = vmatprep.subr.mxu0 0.0
      %1742 = vmatpush1.msra.mxu0 0.0
      %1743 = vmatprep.subr.mxu0 0.0
      %1744 = vmatpush1.msra.mxu0 0.0
      %1745 = vmatprep.subr.mxu0 0.0
      %1746 = vmatpush1.msra.mxu0 0.0
      %1747 = vmatprep.subr.mxu0 0.0
      %1748 = vmatpush1.msra.mxu0 0.0
      %1749 = vmatprep.subr.mxu0 0.0
      %1750 = vmatpush1.msra.mxu0 0.0
      %1751 = vmatprep.subr.mxu0 0.0
      %1752 = vmatpush1.msra.mxu0 0.0
      %1753 = vmatprep.subr.mxu0 0.0
      %1754 = vmatpush1.msra.mxu0 0.0
      %1755 = vmatprep.subr.mxu0 0.0
      %1756 = vmatpush1.msra.mxu0 0.0
      %1757 = vmatprep.subr.mxu0 0.0
      %1758 = vmatpush1.msra.mxu0 0.0
      %1759 = vmatprep.subr.mxu0 0.0
      %1760 = vmatpush1.msra.mxu0 0.0
      %1761 = vmatprep.subr.mxu0 0.0
      %1762 = vmatpush1.msra.mxu0 0.0
      %1763 = vmatprep.subr.mxu0 0.0
      %1764 = vmatpush1.msra.mxu0 0.0
      %1765 = vmatprep.subr.mxu0 0.0
      %1766 = vmatpush1.msra.mxu0 0.0
      %1767 = vmatprep.subr.mxu0 0.0
      %1768 = vmatpush1.msra.mxu0 0.0
      %1769 = vmatprep.subr.mxu0 0.0
      %1770 = vmatpush1.msra.mxu0 0.0
      %1771 = vmatprep.subr.mxu0 0.0
      %1772 = vmatpush1.msra.mxu0 0.0
      %1773 = vmatprep.subr.mxu0 0.0
      %1774 = vmatpush1.msra.mxu0 0.0
      %1775 = vmatprep.subr.mxu0 0.0
      %1776 = vmatpush1.msra.mxu0 0.0
      %1777 = vmatprep.subr.mxu0 0.0
      %1778 = vmatpush1.msra.mxu0 0.0
      %1779 = vmatprep.subr.mxu0 0.0
      %1780 = vmatpush1.msra.mxu0 0.0
      %1781 = vmatprep.subr.mxu0 0.0
      %1782 = vmatpush1.msra.mxu0 0.0
      %1783 = vmatprep.subr.mxu0 0.0
      %1784 = vmatpush1.msra.mxu0 0.0
      %1785 = vmatprep.subr.mxu0 0.0
      %1786 = vmatpush1.msra.mxu0 0.0
      %1787 = vmatprep.subr.mxu0 0.0
      %1788 = vmatpush1.msra.mxu0 0.0
      %1789 = vmatprep.subr.mxu0 0.0
      %1790 = vmatpush1.msra.mxu0 0.0
      %1791 = vmatprep.subr.mxu0 0.0
      %1792 = vmatpush1.msra.mxu0 0.0
      %1793 = vmatprep.mubr.f32.mxu0 0.0
      %1794 = vmatmul.mubr.f32.gmra.mrb[0].mxu0 %v1724
      %v1795 = vpop.f32.mrb[0].mxu0
      %v1796 = vadd.f32 %v1720, %v1795
      %v1797 = vpop.f32.mrb[0].mxu0
      %1798 = vmatprep.mubr.f32.mxu0 0.0
      %1799 = vmatmul.mubr.f32.gmra.mrb[0].mxu0 %v1727
      %v1800 = vpop.f32.mrb[0].mxu0
      %v1801 = vadd.f32 %v1720, %v1800
      %v1802 = vpop.f32.mrb[0].mxu0
      %1803 = vdwg.mxu0
      %s1804 = scalar_lea.vmem %s13, %s942
      %v1805 = vld [vmem:[%s1804] sm:$0xff]
      %v1806 = vld [vmem:[%s1804 + $0x8] sm:$0xff]
      %s1807 = scalar_lea.vmem %s14, %s941
      %v1808 = vld [vmem:[%s1807] sm:$0x1]
      %v1810 = vlaneseq
      %v1811 = vshrl.u32 %v1810, 7
      %v1812 = vsub.s32 0, %v1811
      %v1813 = vrot.slane %v1808, %v1812
      %v1816 = vsel %vm954, %v1796, 0
      %v1819 = vsel %vm954, %v1801, 0
      %1821 = vmatprep.subr.mxu0 0.0
      %1822 = vmatpush1.msra.mxu0 %v1805
      %1823 = vmatprep.subr.mxu0 0.0
      %1824 = vmatpush1.msra.mxu0 %v1806
      %1825 = vmatprep.subr.mxu0 0.0
      %1826 = vmatpush1.msra.mxu0 0.0
      %1827 = vmatprep.subr.mxu0 0.0
      %1828 = vmatpush1.msra.mxu0 0.0
      %1829 = vmatprep.subr.mxu0 0.0
      %1830 = vmatpush1.msra.mxu0 0.0
      %1831 = vmatprep.subr.mxu0 0.0
      %1832 = vmatpush1.msra.mxu0 0.0
      %1833 = vmatprep.subr.mxu0 0.0
      %1834 = vmatpush1.msra.mxu0 0.0
      %1835 = vmatprep.subr.mxu0 0.0
      %1836 = vmatpush1.msra.mxu0 0.0
      %1837 = vmatprep.subr.mxu0 0.0
      %1838 = vmatpush1.msra.mxu0 0.0
      %1839 = vmatprep.subr.mxu0 0.0
      %1840 = vmatpush1.msra.mxu0 0.0
      %1841 = vmatprep.subr.mxu0 0.0
      %1842 = vmatpush1.msra.mxu0 0.0
      %1843 = vmatprep.subr.mxu0 0.0
      %1844 = vmatpush1.msra.mxu0 0.0
      %1845 = vmatprep.subr.mxu0 0.0
      %1846 = vmatpush1.msra.mxu0 0.0
      %1847 = vmatprep.subr.mxu0 0.0
      %1848 = vmatpush1.msra.mxu0 0.0
      %1849 = vmatprep.subr.mxu0 0.0
      %1850 = vmatpush1.msra.mxu0 0.0
      %1851 = vmatprep.subr.mxu0 0.0
      %1852 = vmatpush1.msra.mxu0 0.0
      %1853 = vmatprep.subr.mxu0 0.0
      %1854 = vmatpush1.msra.mxu0 0.0
      %1855 = vmatprep.subr.mxu0 0.0
      %1856 = vmatpush1.msra.mxu0 0.0
      %1857 = vmatprep.subr.mxu0 0.0
      %1858 = vmatpush1.msra.mxu0 0.0
      %1859 = vmatprep.subr.mxu0 0.0
      %1860 = vmatpush1.msra.mxu0 0.0
      %1861 = vmatprep.subr.mxu0 0.0
      %1862 = vmatpush1.msra.mxu0 0.0
      %1863 = vmatprep.subr.mxu0 0.0
      %1864 = vmatpush1.msra.mxu0 0.0
      %1865 = vmatprep.subr.mxu0 0.0
      %1866 = vmatpush1.msra.mxu0 0.0
      %1867 = vmatprep.subr.mxu0 0.0
      %1868 = vmatpush1.msra.mxu0 0.0
      %1869 = vmatprep.subr.mxu0 0.0
      %1870 = vmatpush1.msra.mxu0 0.0
      %1871 = vmatprep.subr.mxu0 0.0
      %1872 = vmatpush1.msra.mxu0 0.0
      %1873 = vmatprep.subr.mxu0 0.0
      %1874 = vmatpush1.msra.mxu0 0.0
      %1875 = vmatprep.subr.mxu0 0.0
      %1876 = vmatpush1.msra.mxu0 0.0
      %1877 = vmatprep.subr.mxu0 0.0
      %1878 = vmatpush1.msra.mxu0 0.0
      %1879 = vmatprep.subr.mxu0 0.0
      %1880 = vmatpush1.msra.mxu0 0.0
      %1881 = vmatprep.subr.mxu0 0.0
      %1882 = vmatpush1.msra.mxu0 0.0
      %1883 = vmatprep.subr.mxu0 0.0
      %1884 = vmatpush1.msra.mxu0 0.0
      %1885 = vmatprep.mubr.f32.mxu0 0.0
      %1886 = vmatmul.mubr.f32.gmra.mrb[0].mxu0 %v1816
      %v1887 = vpop.f32.mrb[0].mxu0
      %v1888 = vadd.f32 %v1813, %v1887
      %v1889 = vpop.f32.mrb[0].mxu0
      %1890 = vmatprep.mubr.f32.mxu0 0.0
      %1891 = vmatmul.mubr.f32.gmra.mrb[0].mxu0 %v1819
      %v1892 = vpop.f32.mrb[0].mxu0
      %v1893 = vadd.f32 %v1813, %v1892
      %v1894 = vpop.f32.mrb[0].mxu0
      %1895 = vdwg.mxu0
      %v1896 = vmax.f32 %v1888, 0.0
      %v1897 = vmax.f32 %v1893, 0.0
      %s1898 = scalar_lea.vmem %s15, %s1708
      %v1899 = vld [vmem:[%s1898] sm:$0xff]
      %v1900 = vld [vmem:[%s1898 + $0x8] sm:$0xff]
      %v1901 = vld [vmem:[%s1898 + $0x10] sm:$0xff]
      %v1902 = vld [vmem:[%s1898 + $0x18] sm:$0xff]
      %s1903 = scalar_lea.vmem %s16, %s941
      %v1904 = vld [vmem:[%s1903] sm:$0x1]
      %v1906 = vlaneseq
      %v1907 = vshrl.u32 %v1906, 7
      %v1908 = vsub.s32 0, %v1907
      %v1909 = vrot.slane %v1904, %v1908
      %v1912 = vsel %vm1722, %v1896, 0
      %v1915 = vsel %vm1722, %v1897, 0
      %1917 = vmatprep.subr.mxu0 0.0
      %1918 = vmatpush1.msra.mxu0 %v1899
      %1919 = vmatprep.subr.mxu0 0.0
      %1920 = vmatpush1.msra.mxu0 %v1900
      %1921 = vmatprep.subr.mxu0 0.0
      %1922 = vmatpush1.msra.mxu0 %v1901
      %1923 = vmatprep.subr.mxu0 0.0
      %1924 = vmatpush1.msra.mxu0 %v1902
      %1925 = vmatprep.subr.mxu0 0.0
      %1926 = vmatpush1.msra.mxu0 0.0
      %1927 = vmatprep.subr.mxu0 0.0
      %1928 = vmatpush1.msra.mxu0 0.0
      %1929 = vmatprep.subr.mxu0 0.0
      %1930 = vmatpush1.msra.mxu0 0.0
      %1931 = vmatprep.subr.mxu0 0.0
      %1932 = vmatpush1.msra.mxu0 0.0
      %1933 = vmatprep.subr.mxu0 0.0
      %1934 = vmatpush1.msra.mxu0 0.0
      %1935 = vmatprep.subr.mxu0 0.0
      %1936 = vmatpush1.msra.mxu0 0.0
      %1937 = vmatprep.subr.mxu0 0.0
      %1938 = vmatpush1.msra.mxu0 0.0
      %1939 = vmatprep.subr.mxu0 0.0
      %1940 = vmatpush1.msra.mxu0 0.0
      %1941 = vmatprep.subr.mxu0 0.0
      %1942 = vmatpush1.msra.mxu0 0.0
      %1943 = vmatprep.subr.mxu0 0.0
      %1944 = vmatpush1.msra.mxu0 0.0
      %1945 = vmatprep.subr.mxu0 0.0
      %1946 = vmatpush1.msra.mxu0 0.0
      %1947 = vmatprep.subr.mxu0 0.0
      %1948 = vmatpush1.msra.mxu0 0.0
      %1949 = vmatprep.subr.mxu0 0.0
      %1950 = vmatpush1.msra.mxu0 0.0
      %1951 = vmatprep.subr.mxu0 0.0
      %1952 = vmatpush1.msra.mxu0 0.0
      %1953 = vmatprep.subr.mxu0 0.0
      %1954 = vmatpush1.msra.mxu0 0.0
      %1955 = vmatprep.subr.mxu0 0.0
      %1956 = vmatpush1.msra.mxu0 0.0
      %1957 = vmatprep.subr.mxu0 0.0
      %1958 = vmatpush1.msra.mxu0 0.0
      %1959 = vmatprep.subr.mxu0 0.0
      %1960 = vmatpush1.msra.mxu0 0.0
      %1961 = vmatprep.subr.mxu0 0.0
      %1962 = vmatpush1.msra.mxu0 0.0
      %1963 = vmatprep.subr.mxu0 0.0
      %1964 = vmatpush1.msra.mxu0 0.0
      %1965 = vmatprep.subr.mxu0 0.0
      %1966 = vmatpush1.msra.mxu0 0.0
      %1967 = vmatprep.subr.mxu0 0.0
      %1968 = vmatpush1.msra.mxu0 0.0
      %1969 = vmatprep.subr.mxu0 0.0
      %1970 = vmatpush1.msra.mxu0 0.0
      %1971 = vmatprep.subr.mxu0 0.0
      %1972 = vmatpush1.msra.mxu0 0.0
      %1973 = vmatprep.subr.mxu0 0.0
      %1974 = vmatpush1.msra.mxu0 0.0
      %1975 = vmatprep.subr.mxu0 0.0
      %1976 = vmatpush1.msra.mxu0 0.0
      %1977 = vmatprep.subr.mxu0 0.0
      %1978 = vmatpush1.msra.mxu0 0.0
      %1979 = vmatprep.subr.mxu0 0.0
      %1980 = vmatpush1.msra.mxu0 0.0
      %1981 = vmatprep.mubr.f32.mxu0 0.0
      %1982 = vmatmul.mubr.f32.gmra.mrb[0].mxu0 %v1912
      %v1983 = vpop.f32.mrb[0].mxu0
      %v1984 = vadd.f32 %v1909, %v1983
      %v1985 = vpop.f32.mrb[0].mxu0
      %1986 = vmatprep.mubr.f32.mxu0 0.0
      %1987 = vmatmul.mubr.f32.gmra.mrb[0].mxu0 %v1915
      %v1988 = vpop.f32.mrb[0].mxu0
      %v1989 = vadd.f32 %v1909, %v1988
      %v1990 = vpop.f32.mrb[0].mxu0
      %1991 = vdwg.mxu0
      %v1992 = vadd.f32 %v938, %v1984
      %v1993 = vadd.f32 %v940, %v1989
      %v1994 = vsel %vm954, %v1992, 0.0
      %1995 = vadd.xlane.f32.xlu0 %v1994
      %v1996 = vpop.xlane.xlu0 %1995
      %v1997 = vsel %vm954, %v1993, 0.0
      %1998 = vadd.xlane.f32.xlu0 %v1997
      %v1999 = vpop.xlane.xlu0 %1998
      %v2000 = vrcp.pop 16.0
      %v2001 = vmul.f32 %v1996, %v2000
      %v2002 = vmul.f32 %v1999, %v2000
      %v2003 = vsub.f32 %v1992, %v2001
      %v2004 = vsub.f32 %v1993, %v2002
      %v2005 = vmul.f32 %v2003, %v2003
      %v2006 = vmul.f32 %v2004, %v2004
      %v2007 = vsel %vm954, %v2005, 0.0
      %2008 = vadd.xlane.f32.xlu0 %v2007
      %v2009 = vpop.xlane.xlu0 %2008
      %v2010 = vsel %vm954, %v2006, 0.0
      %2011 = vadd.xlane.f32.xlu0 %v2010
      %v2012 = vpop.xlane.xlu0 %2011
      %v2013 = vmul.f32 %v2009, %v2000
      %v2014 = vmul.f32 %v2012, %v2000
      %v2015 = vadd.f32 %v2013, 1e-05
      %v2016 = vadd.f32 %v2014, 1e-05
      %v2017 = vrsqrt.pop %v2015
      %v2018 = vrsqrt.pop %v2016
      %v2019 = vmul.f32 %v2003, %v2017
      %v2020 = vmul.f32 %v2004, %v2018
      %s2021 = scalar_lea.vmem %s17, %s941
      %v2022 = vld [vmem:[%s2021] sm:$0x1]
      %v2024 = vlaneseq
      %v2025 = vshrl.u32 %v2024, 7
      %v2026 = vsub.s32 0, %v2025
      %v2027 = vrot.slane %v2022, %v2026
      %v2029 = vmul.f32 %v2019, %v2027
      %v2030 = vmul.f32 %v2020, %v2027
      %s2031 = scalar_lea.vmem %s18, %s941
      %v2032 = vld [vmem:[%s2031] sm:$0x1]
      %v2034 = vlaneseq
      %v2035 = vshrl.u32 %v2034, 7
      %v2036 = vsub.s32 0, %v2035
      %v2037 = vrot.slane %v2032, %v2036
      %v2039 = vadd.f32 %v2029, %v2037
      %v2040 = vadd.f32 %v2030, %v2037
      %s2041 = sadd.s32 %s941, 1
      %s2042 = smul.u32 %s2041, 16
      %s2043 = scalar_lea.vmem %s9, %s2042
      %v2044 = vld [vmem:[%s2043] sm:$0xff]
      %v2045 = vld [vmem:[%s2043 + $0x8] sm:$0xff]
      %s2046 = scalar_lea.vmem %s10, %s2041
      %v2047 = vld [vmem:[%s2046] sm:$0x1]
      %v2049 = vlaneseq
      %v2050 = vshrl.u32 %v2049, 7
      %v2051 = vsub.s32 0, %v2050
      %v2052 = vrot.slane %v2047, %v2051
      %v2055 = vsel %vm954, %v2039, 0
      %v2058 = vsel %vm954, %v2040, 0
      %2060 = vmatprep.subr.mxu0 0.0
      %2061 = vmatpush1.msra.mxu0 %v2044
      %2062 = vmatprep.subr.mxu0 0.0
      %2063 = vmatpush1.msra.mxu0 %v2045
      %2064 = vmatprep.subr.mxu0 0.0
      %2065 = vmatpush1.msra.mxu0 0.0
      %2066 = vmatprep.subr.mxu0 0.0
      %2067 = vmatpush1.msra.mxu0 0.0
      %2068 = vmatprep.subr.mxu0 0.0
      %2069 = vmatpush1.msra.mxu0 0.0
      %2070 = vmatprep.subr.mxu0 0.0
      %2071 = vmatpush1.msra.mxu0 0.0
      %2072 = vmatprep.subr.mxu0 0.0
      %2073 = vmatpush1.msra.mxu0 0.0
      %2074 = vmatprep.subr.mxu0 0.0
      %2075 = vmatpush1.msra.mxu0 0.0
      %2076 = vmatprep.subr.mxu0 0.0
      %2077 = vmatpush1.msra.mxu0 0.0
      %2078 = vmatprep.subr.mxu0 0.0
      %2079 = vmatpush1.msra.mxu0 0.0
      %2080 = vmatprep.subr.mxu0 0.0
      %2081 = vmatpush1.msra.mxu0 0.0
      %2082 = vmatprep.subr.mxu0 0.0
      %2083 = vmatpush1.msra.mxu0 0.0
      %2084 = vmatprep.subr.mxu0 0.0
      %2085 = vmatpush1.msra.mxu0 0.0
      %2086 = vmatprep.subr.mxu0 0.0
      %2087 = vmatpush1.msra.mxu0 0.0
      %2088 = vmatprep.subr.mxu0 0.0
      %2089 = vmatpush1.msra.mxu0 0.0
      %2090 = vmatprep.subr.mxu0 0.0
      %2091 = vmatpush1.msra.mxu0 0.0
      %2092 = vmatprep.subr.mxu0 0.0
      %2093 = vmatpush1.msra.mxu0 0.0
      %2094 = vmatprep.subr.mxu0 0.0
      %2095 = vmatpush1.msra.mxu0 0.0
      %2096 = vmatprep.subr.mxu0 0.0
      %2097 = vmatpush1.msra.mxu0 0.0
      %2098 = vmatprep.subr.mxu0 0.0
      %2099 = vmatpush1.msra.mxu0 0.0
      %2100 = vmatprep.subr.mxu0 0.0
      %2101 = vmatpush1.msra.mxu0 0.0
      %2102 = vmatprep.subr.mxu0 0.0
      %2103 = vmatpush1.msra.mxu0 0.0
      %2104 = vmatprep.subr.mxu0 0.0
      %2105 = vmatpush1.msra.mxu0 0.0
      %2106 = vmatprep.subr.mxu0 0.0
      %2107 = vmatpush1.msra.mxu0 0.0
      %2108 = vmatprep.subr.mxu0 0.0
      %2109 = vmatpush1.msra.mxu0 0.0
      %2110 = vmatprep.subr.mxu0 0.0
      %2111 = vmatpush1.msra.mxu0 0.0
      %2112 = vmatprep.subr.mxu0 0.0
      %2113 = vmatpush1.msra.mxu0 0.0
      %2114 = vmatprep.subr.mxu0 0.0
      %2115 = vmatpush1.msra.mxu0 0.0
      %2116 = vmatprep.subr.mxu0 0.0
      %2117 = vmatpush1.msra.mxu0 0.0
      %2118 = vmatprep.subr.mxu0 0.0
      %2119 = vmatpush1.msra.mxu0 0.0
      %2120 = vmatprep.subr.mxu0 0.0
      %2121 = vmatpush1.msra.mxu0 0.0
      %2122 = vmatprep.subr.mxu0 0.0
      %2123 = vmatpush1.msra.mxu0 0.0
      %2124 = vmatprep.mubr.f32.mxu0 0.0
      %2125 = vmatmul.mubr.f32.gmra.mrb[0].mxu0 %v2055
      %v2126 = vpop.f32.mrb[0].mxu0
      %v2127 = vadd.f32 %v2052, %v2126
      %v2128 = vpop.f32.mrb[0].mxu0
      %2129 = vmatprep.mubr.f32.mxu0 0.0
      %2130 = vmatmul.mubr.f32.gmra.mrb[0].mxu0 %v2058
      %v2131 = vpop.f32.mrb[0].mxu0
      %v2132 = vadd.f32 %v2052, %v2131
      %v2133 = vpop.f32.mrb[0].mxu0
      %2134 = vdwg.mxu0
      %2136 = vrot.lane.b32.xlu0 %v2127, 96
      %v2137 = vpop.permute.xlu0 %2136
      %v2138 = vsel %vm954, %v2127, 0
      %v2140 = vsel %vm954, %v2137, 0
      %2142 = vmatprep.subr.mxu0 0.0
      %2143 = vmatpush1.xpose.msra.mxu0 %v2140
      %2144 = vmatprep.subr.mxu0 0.0
      %2145 = vmatpush1.xpose.msra.mxu0 0.0
      %2146 = vmatprep.subr.mxu0 0.0
      %2147 = vmatpush1.xpose.msra.mxu0 0.0
      %2148 = vmatprep.subr.mxu0 0.0
      %2149 = vmatpush1.xpose.msra.mxu0 0.0
      %2150 = vmatprep.subr.mxu0 0.0
      %2151 = vmatpush1.xpose.msra.mxu0 0.0
      %2152 = vmatprep.subr.mxu0 0.0
      %2153 = vmatpush1.xpose.msra.mxu0 0.0
      %2154 = vmatprep.subr.mxu0 0.0
      %2155 = vmatpush1.xpose.msra.mxu0 0.0
      %2156 = vmatprep.subr.mxu0 0.0
      %2157 = vmatpush1.xpose.msra.mxu0 0.0
      %2158 = vmatprep.subr.mxu0 0.0
      %2159 = vmatpush1.xpose.msra.mxu0 0.0
      %2160 = vmatprep.subr.mxu0 0.0
      %2161 = vmatpush1.xpose.msra.mxu0 0.0
      %2162 = vmatprep.subr.mxu0 0.0
      %2163 = vmatpush1.xpose.msra.mxu0 0.0
      %2164 = vmatprep.subr.mxu0 0.0
      %2165 = vmatpush1.xpose.msra.mxu0 0.0
      %2166 = vmatprep.subr.mxu0 0.0
      %2167 = vmatpush1.xpose.msra.mxu0 0.0
      %2168 = vmatprep.subr.mxu0 0.0
      %2169 = vmatpush1.xpose.msra.mxu0 0.0
      %2170 = vmatprep.subr.mxu0 0.0
      %2171 = vmatpush1.xpose.msra.mxu0 0.0
      %2172 = vmatprep.subr.mxu0 0.0
      %2173 = vmatpush1.xpose.msra.mxu0 0.0
      %2174 = vmatprep.subr.mxu0 0.0
      %2175 = vmatpush1.xpose.msra.mxu0 0.0
      %2176 = vmatprep.subr.mxu0 0.0
      %2177 = vmatpush1.xpose.msra.mxu0 0.0
      %2178 = vmatprep.subr.mxu0 0.0
      %2179 = vmatpush1.xpose.msra.mxu0 0.0
      %2180 = vmatprep.subr.mxu0 0.0
      %2181 = vmatpush1.xpose.msra.mxu0 0.0
      %2182 = vmatprep.subr.mxu0 0.0
      %2183 = vmatpush1.xpose.msra.mxu0 0.0
      %2184 = vmatprep.subr.mxu0 0.0
      %2185 = vmatpush1.xpose.msra.mxu0 0.0
      %2186 = vmatprep.subr.mxu0 0.0
      %2187 = vmatpush1.xpose.msra.mxu0 0.0
      %2188 = vmatprep.subr.mxu0 0.0
      %2189 = vmatpush1.xpose.msra.mxu0 0.0
      %2190 = vmatprep.subr.mxu0 0.0
      %2191 = vmatpush1.xpose.msra.mxu0 0.0
      %2192 = vmatprep.subr.mxu0 0.0
      %2193 = vmatpush1.xpose.msra.mxu0 0.0
      %2194 = vmatprep.subr.mxu0 0.0
      %2195 = vmatpush1.xpose.msra.mxu0 0.0
      %2196 = vmatprep.subr.mxu0 0.0
      %2197 = vmatpush1.xpose.msra.mxu0 0.0
      %2198 = vmatprep.subr.mxu0 0.0
      %2199 = vmatpush1.xpose.msra.mxu0 0.0
      %2200 = vmatprep.subr.mxu0 0.0
      %2201 = vmatpush1.xpose.msra.mxu0 0.0
      %2202 = vmatprep.subr.mxu0 0.0
      %2203 = vmatpush1.xpose.msra.mxu0 0.0
      %2204 = vmatprep.subr.mxu0 0.0
      %2205 = vmatpush1.xpose.msra.mxu0 0.0
      %2206 = vmatprep.mubr.f32.mxu0 0.0
      %2207 = vmatmul.mubr.f32.gmra.mrb[0].mxu0 %v2138
      %v2208 = vpop.f32.mrb[0].mxu0
      %v2209 = vadd.f32 0.0, %v2208
      %v2210 = vpop.f32.mrb[0].mxu0
      %2211 = vdwg.mxu0
      %v2212 = vmul.f32 %v2209, 0.25
      %v2213 = vsel %vm628, %v2212, -inf
      %2214 = vmax.xlane.f32.xlu0 %v2213
      %v2215 = vpop.xlane.xlu0 %2214
      %v2216 = vsub.f32 %v2212, %v2215
      %v2217 = vmul.f32 %v2216, 1.442695
      %v2218 = vpow.pop %v2217
      %v2219 = vsel %vm628, %v2218, 0.0
      %2220 = vadd.xlane.f32.xlu0 %v2219
      %v2221 = vpop.xlane.xlu0 %2220
      %v2222 = vrcp.pop %v2221
      %v2223 = vmul.f32 %v2218, %v2222
      %2224 = vrot.lane.b32.xlu0 %v2127, 64
      %v2225 = vpop.permute.xlu0 %2224
      %v2228 = vsel %vm628, %v2223, 0
      %2230 = vmatprep.subr.mxu0 0.0
      %2231 = vmatpush1.msra.mxu0 %v2225
      %2232 = vmatprep.subr.mxu0 0.0
      %2233 = vmatpush1.msra.mxu0 0.0
      %2234 = vmatprep.subr.mxu0 0.0
      %2235 = vmatpush1.msra.mxu0 0.0
      %2236 = vmatprep.subr.mxu0 0.0
      %2237 = vmatpush1.msra.mxu0 0.0
      %2238 = vmatprep.subr.mxu0 0.0
      %2239 = vmatpush1.msra.mxu0 0.0
      %2240 = vmatprep.subr.mxu0 0.0
      %2241 = vmatpush1.msra.mxu0 0.0
      %2242 = vmatprep.subr.mxu0 0.0
      %2243 = vmatpush1.msra.mxu0 0.0
      %2244 = vmatprep.subr.mxu0 0.0
      %2245 = vmatpush1.msra.mxu0 0.0
      %2246 = vmatprep.subr.mxu0 0.0
      %2247 = vmatpush1.msra.mxu0 0.0
      %2248 = vmatprep.subr.mxu0 0.0
      %2249 = vmatpush1.msra.mxu0 0.0
      %2250 = vmatprep.subr.mxu0 0.0
      %2251 = vmatpush1.msra.mxu0 0.0
      %2252 = vmatprep.subr.mxu0 0.0
      %2253 = vmatpush1.msra.mxu0 0.0
      %2254 = vmatprep.subr.mxu0 0.0
      %2255 = vmatpush1.msra.mxu0 0.0
      %2256 = vmatprep.subr.mxu0 0.0
      %2257 = vmatpush1.msra.mxu0 0.0
      %2258 = vmatprep.subr.mxu0 0.0
      %2259 = vmatpush1.msra.mxu0 0.0
      %2260 = vmatprep.subr.mxu0 0.0
      %2261 = vmatpush1.msra.mxu0 0.0
      %2262 = vmatprep.subr.mxu0 0.0
      %2263 = vmatpush1.msra.mxu0 0.0
      %2264 = vmatprep.subr.mxu0 0.0
      %2265 = vmatpush1.msra.mxu0 0.0
      %2266 = vmatprep.subr.mxu0 0.0
      %2267 = vmatpush1.msra.mxu0 0.0
      %2268 = vmatprep.subr.mxu0 0.0
      %2269 = vmatpush1.msra.mxu0 0.0
      %2270 = vmatprep.subr.mxu0 0.0
      %2271 = vmatpush1.msra.mxu0 0.0
      %2272 = vmatprep.subr.mxu0 0.0
      %2273 = vmatpush1.msra.mxu0 0.0
      %2274 = vmatprep.subr.mxu0 0.0
      %2275 = vmatpush1.msra.mxu0 0.0
      %2276 = vmatprep.subr.mxu0 0.0
      %2277 = vmatpush1.msra.mxu0 0.0
      %2278 = vmatprep.subr.mxu0 0.0
      %2279 = vmatpush1.msra.mxu0 0.0
      %2280 = vmatprep.subr.mxu0 0.0
      %2281 = vmatpush1.msra.mxu0 0.0
      %2282 = vmatprep.subr.mxu0 0.0
      %2283 = vmatpush1.msra.mxu0 0.0
      %2284 = vmatprep.subr.mxu0 0.0
      %2285 = vmatpush1.msra.mxu0 0.0
      %2286 = vmatprep.subr.mxu0 0.0
      %2287 = vmatpush1.msra.mxu0 0.0
      %2288 = vmatprep.subr.mxu0 0.0
      %2289 = vmatpush1.msra.mxu0 0.0
      %2290 = vmatprep.subr.mxu0 0.0
      %2291 = vmatpush1.msra.mxu0 0.0
      %2292 = vmatprep.subr.mxu0 0.0
      %2293 = vmatpush1.msra.mxu0 0.0
      %2294 = vmatprep.mubr.f32.mxu0 0.0
      %2295 = vmatmul.mubr.f32.gmra.mrb[0].mxu0 %v2228
      %v2296 = vpop.f32.mrb[0].mxu0
      %v2297 = vadd.f32 0.0, %v2296
      %v2298 = vpop.f32.mrb[0].mxu0
      %2299 = vdwg.mxu0
      %2300 = vrot.lane.b32.xlu0 %v2127, 112
      %v2301 = vpop.permute.xlu0 %2300
      %2302 = vrot.lane.b32.xlu0 %v2127, 80
      %v2303 = vpop.permute.xlu0 %2302
      %v2304 = vsel %vm954, %v2301, 0
      %v2306 = vsel %vm954, %v2303, 0
      %2308 = vmatprep.subr.mxu0 0.0
      %2309 = vmatpush1.xpose.msra.mxu0 %v2306
      %2310 = vmatprep.subr.mxu0 0.0
      %2311 = vmatpush1.xpose.msra.mxu0 0.0
      %2312 = vmatprep.subr.mxu0 0.0
      %2313 = vmatpush1.xpose.msra.mxu0 0.0
      %2314 = vmatprep.subr.mxu0 0.0
      %2315 = vmatpush1.xpose.msra.mxu0 0.0
      %2316 = vmatprep.subr.mxu0 0.0
      %2317 = vmatpush1.xpose.msra.mxu0 0.0
      %2318 = vmatprep.subr.mxu0 0.0
      %2319 = vmatpush1.xpose.msra.mxu0 0.0
      %2320 = vmatprep.subr.mxu0 0.0
      %2321 = vmatpush1.xpose.msra.mxu0 0.0
      %2322 = vmatprep.subr.mxu0 0.0
      %2323 = vmatpush1.xpose.msra.mxu0 0.0
      %2324 = vmatprep.subr.mxu0 0.0
      %2325 = vmatpush1.xpose.msra.mxu0 0.0
      %2326 = vmatprep.subr.mxu0 0.0
      %2327 = vmatpush1.xpose.msra.mxu0 0.0
      %2328 = vmatprep.subr.mxu0 0.0
      %2329 = vmatpush1.xpose.msra.mxu0 0.0
      %2330 = vmatprep.subr.mxu0 0.0
      %2331 = vmatpush1.xpose.msra.mxu0 0.0
      %2332 = vmatprep.subr.mxu0 0.0
      %2333 = vmatpush1.xpose.msra.mxu0 0.0
      %2334 = vmatprep.subr.mxu0 0.0
      %2335 = vmatpush1.xpose.msra.mxu0 0.0
      %2336 = vmatprep.subr.mxu0 0.0
      %2337 = vmatpush1.xpose.msra.mxu0 0.0
      %2338 = vmatprep.subr.mxu0 0.0
      %2339 = vmatpush1.xpose.msra.mxu0 0.0
      %2340 = vmatprep.subr.mxu0 0.0
      %2341 = vmatpush1.xpose.msra.mxu0 0.0
      %2342 = vmatprep.subr.mxu0 0.0
      %2343 = vmatpush1.xpose.msra.mxu0 0.0
      %2344 = vmatprep.subr.mxu0 0.0
      %2345 = vmatpush1.xpose.msra.mxu0 0.0
      %2346 = vmatprep.subr.mxu0 0.0
      %2347 = vmatpush1.xpose.msra.mxu0 0.0
      %2348 = vmatprep.subr.mxu0 0.0
      %2349 = vmatpush1.xpose.msra.mxu0 0.0
      %2350 = vmatprep.subr.mxu0 0.0
      %2351 = vmatpush1.xpose.msra.mxu0 0.0
      %2352 = vmatprep.subr.mxu0 0.0
      %2353 = vmatpush1.xpose.msra.mxu0 0.0
      %2354 = vmatprep.subr.mxu0 0.0
      %2355 = vmatpush1.xpose.msra.mxu0 0.0
      %2356 = vmatprep.subr.mxu0 0.0
      %2357 = vmatpush1.xpose.msra.mxu0 0.0
      %2358 = vmatprep.subr.mxu0 0.0
      %2359 = vmatpush1.xpose.msra.mxu0 0.0
      %2360 = vmatprep.subr.mxu0 0.0
      %2361 = vmatpush1.xpose.msra.mxu0 0.0
      %2362 = vmatprep.subr.mxu0 0.0
      %2363 = vmatpush1.xpose.msra.mxu0 0.0
      %2364 = vmatprep.subr.mxu0 0.0
      %2365 = vmatpush1.xpose.msra.mxu0 0.0
      %2366 = vmatprep.subr.mxu0 0.0
      %2367 = vmatpush1.xpose.msra.mxu0 0.0
      %2368 = vmatprep.subr.mxu0 0.0
      %2369 = vmatpush1.xpose.msra.mxu0 0.0
      %2370 = vmatprep.subr.mxu0 0.0
      %2371 = vmatpush1.xpose.msra.mxu0 0.0
      %2372 = vmatprep.mubr.f32.mxu0 0.0
      %2373 = vmatmul.mubr.f32.gmra.mrb[0].mxu0 %v2304
      %v2374 = vpop.f32.mrb[0].mxu0
      %v2375 = vadd.f32 0.0, %v2374
      %v2376 = vpop.f32.mrb[0].mxu0
      %2377 = vdwg.mxu0
      %v2378 = vmul.f32 %v2375, 0.25
      %v2379 = vsel %vm628, %v2378, -inf
      %2380 = vmax.xlane.f32.xlu0 %v2379
      %v2381 = vpop.xlane.xlu0 %2380
      %v2382 = vsub.f32 %v2378, %v2381
      %v2383 = vmul.f32 %v2382, 1.442695
      %v2384 = vpow.pop %v2383
      %v2385 = vsel %vm628, %v2384, 0.0
      %2386 = vadd.xlane.f32.xlu0 %v2385
      %v2387 = vpop.xlane.xlu0 %2386
      %v2388 = vrcp.pop %v2387
      %v2389 = vmul.f32 %v2384, %v2388
      %2390 = vrot.lane.b32.xlu0 %v2127, 48
      %v2391 = vpop.permute.xlu0 %2390
      %v2394 = vsel %vm628, %v2389, 0
      %2396 = vmatprep.subr.mxu0 0.0
      %2397 = vmatpush1.msra.mxu0 %v2391
      %2398 = vmatprep.subr.mxu0 0.0
      %2399 = vmatpush1.msra.mxu0 0.0
      %2400 = vmatprep.subr.mxu0 0.0
      %2401 = vmatpush1.msra.mxu0 0.0
      %2402 = vmatprep.subr.mxu0 0.0
      %2403 = vmatpush1.msra.mxu0 0.0
      %2404 = vmatprep.subr.mxu0 0.0
      %2405 = vmatpush1.msra.mxu0 0.0
      %2406 = vmatprep.subr.mxu0 0.0
      %2407 = vmatpush1.msra.mxu0 0.0
      %2408 = vmatprep.subr.mxu0 0.0
      %2409 = vmatpush1.msra.mxu0 0.0
      %2410 = vmatprep.subr.mxu0 0.0
      %2411 = vmatpush1.msra.mxu0 0.0
      %2412 = vmatprep.subr.mxu0 0.0
      %2413 = vmatpush1.msra.mxu0 0.0
      %2414 = vmatprep.subr.mxu0 0.0
      %2415 = vmatpush1.msra.mxu0 0.0
      %2416 = vmatprep.subr.mxu0 0.0
      %2417 = vmatpush1.msra.mxu0 0.0
      %2418 = vmatprep.subr.mxu0 0.0
      %2419 = vmatpush1.msra.mxu0 0.0
      %2420 = vmatprep.subr.mxu0 0.0
      %2421 = vmatpush1.msra.mxu0 0.0
      %2422 = vmatprep.subr.mxu0 0.0
      %2423 = vmatpush1.msra.mxu0 0.0
      %2424 = vmatprep.subr.mxu0 0.0
      %2425 = vmatpush1.msra.mxu0 0.0
      %2426 = vmatprep.subr.mxu0 0.0
      %2427 = vmatpush1.msra.mxu0 0.0
      %2428 = vmatprep.subr.mxu0 0.0
      %2429 = vmatpush1.msra.mxu0 0.0
      %2430 = vmatprep.subr.mxu0 0.0
      %2431 = vmatpush1.msra.mxu0 0.0
      %2432 = vmatprep.subr.mxu0 0.0
      %2433 = vmatpush1.msra.mxu0 0.0
      %2434 = vmatprep.subr.mxu0 0.0
      %2435 = vmatpush1.msra.mxu0 0.0
      %2436 = vmatprep.subr.mxu0 0.0
      %2437 = vmatpush1.msra.mxu0 0.0
      %2438 = vmatprep.subr.mxu0 0.0
      %2439 = vmatpush1.msra.mxu0 0.0
      %2440 = vmatprep.subr.mxu0 0.0
      %2441 = vmatpush1.msra.mxu0 0.0
      %2442 = vmatprep.subr.mxu0 0.0
      %2443 = vmatpush1.msra.mxu0 0.0
      %2444 = vmatprep.subr.mxu0 0.0
      %2445 = vmatpush1.msra.mxu0 0.0
      %2446 = vmatprep.subr.mxu0 0.0
      %2447 = vmatpush1.msra.mxu0 0.0
      %2448 = vmatprep.subr.mxu0 0.0
      %2449 = vmatpush1.msra.mxu0 0.0
      %2450 = vmatprep.subr.mxu0 0.0
      %2451 = vmatpush1.msra.mxu0 0.0
      %2452 = vmatprep.subr.mxu0 0.0
      %2453 = vmatpush1.msra.mxu0 0.0
      %2454 = vmatprep.subr.mxu0 0.0
      %2455 = vmatpush1.msra.mxu0 0.0
      %2456 = vmatprep.subr.mxu0 0.0
      %2457 = vmatpush1.msra.mxu0 0.0
      %2458 = vmatprep.subr.mxu0 0.0
      %2459 = vmatpush1.msra.mxu0 0.0
      %2460 = vmatprep.mubr.f32.mxu0 0.0
      %2461 = vmatmul.mubr.f32.gmra.mrb[0].mxu0 %v2394
      %v2462 = vpop.f32.mrb[0].mxu0
      %v2463 = vadd.f32 0.0, %v2462
      %v2464 = vpop.f32.mrb[0].mxu0
      %2465 = vdwg.mxu0
      %2467 = vrot.lane.b32.xlu0 %v2463, 16
      %v2468 = vpop.permute.xlu0 %2467
      %v2470 = vsel %vm954, %v2297, %v2468
      %2472 = vrot.lane.b32.xlu0 %v2132, 96
      %v2473 = vpop.permute.xlu0 %2472
      %v2474 = vsel %vm954, %v2132, 0
      %v2476 = vsel %vm954, %v2473, 0
      %2478 = vmatprep.subr.mxu0 0.0
      %2479 = vmatpush1.xpose.msra.mxu0 %v2476
      %2480 = vmatprep.subr.mxu0 0.0
      %2481 = vmatpush1.xpose.msra.mxu0 0.0
      %2482 = vmatprep.subr.mxu0 0.0
      %2483 = vmatpush1.xpose.msra.mxu0 0.0
      %2484 = vmatprep.subr.mxu0 0.0
      %2485 = vmatpush1.xpose.msra.mxu0 0.0
      %2486 = vmatprep.subr.mxu0 0.0
      %2487 = vmatpush1.xpose.msra.mxu0 0.0
      %2488 = vmatprep.subr.mxu0 0.0
      %2489 = vmatpush1.xpose.msra.mxu0 0.0
      %2490 = vmatprep.subr.mxu0 0.0
      %2491 = vmatpush1.xpose.msra.mxu0 0.0
      %2492 = vmatprep.subr.mxu0 0.0
      %2493 = vmatpush1.xpose.msra.mxu0 0.0
      %2494 = vmatprep.subr.mxu0 0.0
      %2495 = vmatpush1.xpose.msra.mxu0 0.0
      %2496 = vmatprep.subr.mxu0 0.0
      %2497 = vmatpush1.xpose.msra.mxu0 0.0
      %2498 = vmatprep.subr.mxu0 0.0
      %2499 = vmatpush1.xpose.msra.mxu0 0.0
      %2500 = vmatprep.subr.mxu0 0.0
      %2501 = vmatpush1.xpose.msra.mxu0 0.0
      %2502 = vmatprep.subr.mxu0 0.0
      %2503 = vmatpush1.xpose.msra.mxu0 0.0
      %2504 = vmatprep.subr.mxu0 0.0
      %2505 = vmatpush1.xpose.msra.mxu0 0.0
      %2506 = vmatprep.subr.mxu0 0.0
      %2507 = vmatpush1.xpose.msra.mxu0 0.0
      %2508 = vmatprep.subr.mxu0 0.0
      %2509 = vmatpush1.xpose.msra.mxu0 0.0
      %2510 = vmatprep.subr.mxu0 0.0
      %2511 = vmatpush1.xpose.msra.mxu0 0.0
      %2512 = vmatprep.subr.mxu0 0.0
      %2513 = vmatpush1.xpose.msra.mxu0 0.0
      %2514 = vmatprep.subr.mxu0 0.0
      %2515 = vmatpush1.xpose.msra.mxu0 0.0
      %2516 = vmatprep.subr.mxu0 0.0
      %2517 = vmatpush1.xpose.msra.mxu0 0.0
      %2518 = vmatprep.subr.mxu0 0.0
      %2519 = vmatpush1.xpose.msra.mxu0 0.0
      %2520 = vmatprep.subr.mxu0 0.0
      %2521 = vmatpush1.xpose.msra.mxu0 0.0
      %2522 = vmatprep.subr.mxu0 0.0
      %2523 = vmatpush1.xpose.msra.mxu0 0.0
      %2524 = vmatprep.subr.mxu0 0.0
      %2525 = vmatpush1.xpose.msra.mxu0 0.0
      %2526 = vmatprep.subr.mxu0 0.0
      %2527 = vmatpush1.xpose.msra.mxu0 0.0
      %2528 = vmatprep.subr.mxu0 0.0
      %2529 = vmatpush1.xpose.msra.mxu0 0.0
      %2530 = vmatprep.subr.mxu0 0.0
      %2531 = vmatpush1.xpose.msra.mxu0 0.0
      %2532 = vmatprep.subr.mxu0 0.0
      %2533 = vmatpush1.xpose.msra.mxu0 0.0
      %2534 = vmatprep.subr.mxu0 0.0
      %2535 = vmatpush1.xpose.msra.mxu0 0.0
      %2536 = vmatprep.subr.mxu0 0.0
      %2537 = vmatpush1.xpose.msra.mxu0 0.0
      %2538 = vmatprep.subr.mxu0 0.0
      %2539 = vmatpush1.xpose.msra.mxu0 0.0
      %2540 = vmatprep.subr.mxu0 0.0
      %2541 = vmatpush1.xpose.msra.mxu0 0.0
      %2542 = vmatprep.mubr.f32.mxu0 0.0
      %2543 = vmatmul.mubr.f32.gmra.mrb[0].mxu0 %v2474
      %v2544 = vpop.f32.mrb[0].mxu0
      %v2545 = vadd.f32 0.0, %v2544
      %v2546 = vpop.f32.mrb[0].mxu0
      %2547 = vdwg.mxu0
      %v2548 = vmul.f32 %v2545, 0.25
      %v2549 = vsel %vm628, %v2548, -inf
      %2550 = vmax.xlane.f32.xlu0 %v2549
      %v2551 = vpop.xlane.xlu0 %2550
      %v2552 = vsub.f32 %v2548, %v2551
      %v2553 = vmul.f32 %v2552, 1.442695
      %v2554 = vpow.pop %v2553
      %v2555 = vsel %vm628, %v2554, 0.0
      %2556 = vadd.xlane.f32.xlu0 %v2555
      %v2557 = vpop.xlane.xlu0 %2556
      %v2558 = vrcp.pop %v2557
      %v2559 = vmul.f32 %v2554, %v2558
      %2560 = vrot.lane.b32.xlu0 %v2132, 64
      %v2561 = vpop.permute.xlu0 %2560
      %v2564 = vsel %vm628, %v2559, 0
      %2566 = vmatprep.subr.mxu0 0.0
      %2567 = vmatpush1.msra.mxu0 %v2561
      %2568 = vmatprep.subr.mxu0 0.0
      %2569 = vmatpush1.msra.mxu0 0.0
      %2570 = vmatprep.subr.mxu0 0.0
      %2571 = vmatpush1.msra.mxu0 0.0
      %2572 = vmatprep.subr.mxu0 0.0
      %2573 = vmatpush1.msra.mxu0 0.0
      %2574 = vmatprep.subr.mxu0 0.0
      %2575 = vmatpush1.msra.mxu0 0.0
      %2576 = vmatprep.subr.mxu0 0.0
      %2577 = vmatpush1.msra.mxu0 0.0
      %2578 = vmatprep.subr.mxu0 0.0
      %2579 = vmatpush1.msra.mxu0 0.0
      %2580 = vmatprep.subr.mxu0 0.0
      %2581 = vmatpush1.msra.mxu0 0.0
      %2582 = vmatprep.subr.mxu0 0.0
      %2583 = vmatpush1.msra.mxu0 0.0
      %2584 = vmatprep.subr.mxu0 0.0
      %2585 = vmatpush1.msra.mxu0 0.0
      %2586 = vmatprep.subr.mxu0 0.0
      %2587 = vmatpush1.msra.mxu0 0.0
      %2588 = vmatprep.subr.mxu0 0.0
      %2589 = vmatpush1.msra.mxu0 0.0
      %2590 = vmatprep.subr.mxu0 0.0
      %2591 = vmatpush1.msra.mxu0 0.0
      %2592 = vmatprep.subr.mxu0 0.0
      %2593 = vmatpush1.msra.mxu0 0.0
      %2594 = vmatprep.subr.mxu0 0.0
      %2595 = vmatpush1.msra.mxu0 0.0
      %2596 = vmatprep.subr.mxu0 0.0
      %2597 = vmatpush1.msra.mxu0 0.0
      %2598 = vmatprep.subr.mxu0 0.0
      %2599 = vmatpush1.msra.mxu0 0.0
      %2600 = vmatprep.subr.mxu0 0.0
      %2601 = vmatpush1.msra.mxu0 0.0
      %2602 = vmatprep.subr.mxu0 0.0
      %2603 = vmatpush1.msra.mxu0 0.0
      %2604 = vmatprep.subr.mxu0 0.0
      %2605 = vmatpush1.msra.mxu0 0.0
      %2606 = vmatprep.subr.mxu0 0.0
      %2607 = vmatpush1.msra.mxu0 0.0
      %2608 = vmatprep.subr.mxu0 0.0
      %2609 = vmatpush1.msra.mxu0 0.0
      %2610 = vmatprep.subr.mxu0 0.0
      %2611 = vmatpush1.msra.mxu0 0.0
      %2612 = vmatprep.subr.mxu0 0.0
      %2613 = vmatpush1.msra.mxu0 0.0
      %2614 = vmatprep.subr.mxu0 0.0
      %2615 = vmatpush1.msra.mxu0 0.0
      %2616 = vmatprep.subr.mxu0 0.0
      %2617 = vmatpush1.msra.mxu0 0.0
      %2618 = vmatprep.subr.mxu0 0.0
      %2619 = vmatpush1.msra.mxu0 0.0
      %2620 = vmatprep.subr.mxu0 0.0
      %2621 = vmatpush1.msra.mxu0 0.0
      %2622 = vmatprep.subr.mxu0 0.0
      %2623 = vmatpush1.msra.mxu0 0.0
      %2624 = vmatprep.subr.mxu0 0.0
      %2625 = vmatpush1.msra.mxu0 0.0
      %2626 = vmatprep.subr.mxu0 0.0
      %2627 = vmatpush1.msra.mxu0 0.0
      %2628 = vmatprep.subr.mxu0 0.0
      %2629 = vmatpush1.msra.mxu0 0.0
      %2630 = vmatprep.mubr.f32.mxu0 0.0
      %2631 = vmatmul.mubr.f32.gmra.mrb[0].mxu0 %v2564
      %v2632 = vpop.f32.mrb[0].mxu0
      %v2633 = vadd.f32 0.0, %v2632
      %v2634 = vpop.f32.mrb[0].mxu0
      %2635 = vdwg.mxu0
      %2636 = vrot.lane.b32.xlu0 %v2132, 112
      %v2637 = vpop.permute.xlu0 %2636
      %2638 = vrot.lane.b32.xlu0 %v2132, 80
      %v2639 = vpop.permute.xlu0 %2638
      %v2640 = vsel %vm954, %v2637, 0
      %v2642 = vsel %vm954, %v2639, 0
      %2644 = vmatprep.subr.mxu0 0.0
      %2645 = vmatpush1.xpose.msra.mxu0 %v2642
      %2646 = vmatprep.subr.mxu0 0.0
      %2647 = vmatpush1.xpose.msra.mxu0 0.0
      %2648 = vmatprep.subr.mxu0 0.0
      %2649 = vmatpush1.xpose.msra.mxu0 0.0
      %2650 = vmatprep.subr.mxu0 0.0
      %2651 = vmatpush1.xpose.msra.mxu0 0.0
      %2652 = vmatprep.subr.mxu0 0.0
      %2653 = vmatpush1.xpose.msra.mxu0 0.0
      %2654 = vmatprep.subr.mxu0 0.0
      %2655 = vmatpush1.xpose.msra.mxu0 0.0
      %2656 = vmatprep.subr.mxu0 0.0
      %2657 = vmatpush1.xpose.msra.mxu0 0.0
      %2658 = vmatprep.subr.mxu0 0.0
      %2659 = vmatpush1.xpose.msra.mxu0 0.0
      %2660 = vmatprep.subr.mxu0 0.0
      %2661 = vmatpush1.xpose.msra.mxu0 0.0
      %2662 = vmatprep.subr.mxu0 0.0
      %2663 = vmatpush1.xpose.msra.mxu0 0.0
      %2664 = vmatprep.subr.mxu0 0.0
      %2665 = vmatpush1.xpose.msra.mxu0 0.0
      %2666 = vmatprep.subr.mxu0 0.0
      %2667 = vmatpush1.xpose.msra.mxu0 0.0
      %2668 = vmatprep.subr.mxu0 0.0
      %2669 = vmatpush1.xpose.msra.mxu0 0.0
      %2670 = vmatprep.subr.mxu0 0.0
      %2671 = vmatpush1.xpose.msra.mxu0 0.0
      %2672 = vmatprep.subr.mxu0 0.0
      %2673 = vmatpush1.xpose.msra.mxu0 0.0
      %2674 = vmatprep.subr.mxu0 0.0
      %2675 = vmatpush1.xpose.msra.mxu0 0.0
      %2676 = vmatprep.subr.mxu0 0.0
      %2677 = vmatpush1.xpose.msra.mxu0 0.0
      %2678 = vmatprep.subr.mxu0 0.0
      %2679 = vmatpush1.xpose.msra.mxu0 0.0
      %2680 = vmatprep.subr.mxu0 0.0
      %2681 = vmatpush1.xpose.msra.mxu0 0.0
      %2682 = vmatprep.subr.mxu0 0.0
      %2683 = vmatpush1.xpose.msra.mxu0 0.0
      %2684 = vmatprep.subr.mxu0 0.0
      %2685 = vmatpush1.xpose.msra.mxu0 0.0
      %2686 = vmatprep.subr.mxu0 0.0
      %2687 = vmatpush1.xpose.msra.mxu0 0.0
      %2688 = vmatprep.subr.mxu0 0.0
      %2689 = vmatpush1.xpose.msra.mxu0 0.0
      %2690 = vmatprep.subr.mxu0 0.0
      %2691 = vmatpush1.xpose.msra.mxu0 0.0
      %2692 = vmatprep.subr.mxu0 0.0
      %2693 = vmatpush1.xpose.msra.mxu0 0.0
      %2694 = vmatprep.subr.mxu0 0.0
      %2695 = vmatpush1.xpose.msra.mxu0 0.0
      %2696 = vmatprep.subr.mxu0 0.0
      %2697 = vmatpush1.xpose.msra.mxu0 0.0
      %2698 = vmatprep.subr.mxu0 0.0
      %2699 = vmatpush1.xpose.msra.mxu0 0.0
      %2700 = vmatprep.subr.mxu0 0.0
      %2701 = vmatpush1.xpose.msra.mxu0 0.0
      %2702 = vmatprep.subr.mxu0 0.0
      %2703 = vmatpush1.xpose.msra.mxu0 0.0
      %2704 = vmatprep.subr.mxu0 0.0
      %2705 = vmatpush1.xpose.msra.mxu0 0.0
      %2706 = vmatprep.subr.mxu0 0.0
      %2707 = vmatpush1.xpose.msra.mxu0 0.0
      %2708 = vmatprep.mubr.f32.mxu0 0.0
      %2709 = vmatmul.mubr.f32.gmra.mrb[0].mxu0 %v2640
      %v2710 = vpop.f32.mrb[0].mxu0
      %v2711 = vadd.f32 0.0, %v2710
      %v2712 = vpop.f32.mrb[0].mxu0
      %2713 = vdwg.mxu0
      %v2714 = vmul.f32 %v2711, 0.25
      %v2715 = vsel %vm628, %v2714, -inf
      %2716 = vmax.xlane.f32.xlu0 %v2715
      %v2717 = vpop.xlane.xlu0 %2716
      %v2718 = vsub.f32 %v2714, %v2717
      %v2719 = vmul.f32 %v2718, 1.442695
      %v2720 = vpow.pop %v2719
      %v2721 = vsel %vm628, %v2720, 0.0
      %2722 = vadd.xlane.f32.xlu0 %v2721
      %v2723 = vpop.xlane.xlu0 %2722
      %v2724 = vrcp.pop %v2723
      %v2725 = vmul.f32 %v2720, %v2724
      %2726 = vrot.lane.b32.xlu0 %v2132, 48
      %v2727 = vpop.permute.xlu0 %2726
      %v2730 = vsel %vm628, %v2725, 0
      %2732 = vmatprep.subr.mxu0 0.0
      %2733 = vmatpush1.msra.mxu0 %v2727
      %2734 = vmatprep.subr.mxu0 0.0
      %2735 = vmatpush1.msra.mxu0 0.0
      %2736 = vmatprep.subr.mxu0 0.0
      %2737 = vmatpush1.msra.mxu0 0.0
      %2738 = vmatprep.subr.mxu0 0.0
      %2739 = vmatpush1.msra.mxu0 0.0
      %2740 = vmatprep.subr.mxu0 0.0
      %2741 = vmatpush1.msra.mxu0 0.0
      %2742 = vmatprep.subr.mxu0 0.0
      %2743 = vmatpush1.msra.mxu0 0.0
      %2744 = vmatprep.subr.mxu0 0.0
      %2745 = vmatpush1.msra.mxu0 0.0
      %2746 = vmatprep.subr.mxu0 0.0
      %2747 = vmatpush1.msra.mxu0 0.0
      %2748 = vmatprep.subr.mxu0 0.0
      %2749 = vmatpush1.msra.mxu0 0.0
      %2750 = vmatprep.subr.mxu0 0.0
      %2751 = vmatpush1.msra.mxu0 0.0
      %2752 = vmatprep.subr.mxu0 0.0
      %2753 = vmatpush1.msra.mxu0 0.0
      %2754 = vmatprep.subr.mxu0 0.0
      %2755 = vmatpush1.msra.mxu0 0.0
      %2756 = vmatprep.subr.mxu0 0.0
      %2757 = vmatpush1.msra.mxu0 0.0
      %2758 = vmatprep.subr.mxu0 0.0
      %2759 = vmatpush1.msra.mxu0 0.0
      %2760 = vmatprep.subr.mxu0 0.0
      %2761 = vmatpush1.msra.mxu0 0.0
      %2762 = vmatprep.subr.mxu0 0.0
      %2763 = vmatpush1.msra.mxu0 0.0
      %2764 = vmatprep.subr.mxu0 0.0
      %2765 = vmatpush1.msra.mxu0 0.0
      %2766 = vmatprep.subr.mxu0 0.0
      %2767 = vmatpush1.msra.mxu0 0.0
      %2768 = vmatprep.subr.mxu0 0.0
      %2769 = vmatpush1.msra.mxu0 0.0
      %2770 = vmatprep.subr.mxu0 0.0
      %2771 = vmatpush1.msra.mxu0 0.0
      %2772 = vmatprep.subr.mxu0 0.0
      %2773 = vmatpush1.msra.mxu0 0.0
      %2774 = vmatprep.subr.mxu0 0.0
      %2775 = vmatpush1.msra.mxu0 0.0
      %2776 = vmatprep.subr.mxu0 0.0
      %2777 = vmatpush1.msra.mxu0 0.0
      %2778 = vmatprep.subr.mxu0 0.0
      %2779 = vmatpush1.msra.mxu0 0.0
      %2780 = vmatprep.subr.mxu0 0.0
      %2781 = vmatpush1.msra.mxu0 0.0
      %2782 = vmatprep.subr.mxu0 0.0
      %2783 = vmatpush1.msra.mxu0 0.0
      %2784 = vmatprep.subr.mxu0 0.0
      %2785 = vmatpush1.msra.mxu0 0.0
      %2786 = vmatprep.subr.mxu0 0.0
      %2787 = vmatpush1.msra.mxu0 0.0
      %2788 = vmatprep.subr.mxu0 0.0
      %2789 = vmatpush1.msra.mxu0 0.0
      %2790 = vmatprep.subr.mxu0 0.0
      %2791 = vmatpush1.msra.mxu0 0.0
      %2792 = vmatprep.subr.mxu0 0.0
      %2793 = vmatpush1.msra.mxu0 0.0
      %2794 = vmatprep.subr.mxu0 0.0
      %2795 = vmatpush1.msra.mxu0 0.0
      %2796 = vmatprep.mubr.f32.mxu0 0.0
      %2797 = vmatmul.mubr.f32.gmra.mrb[0].mxu0 %v2730
      %v2798 = vpop.f32.mrb[0].mxu0
      %v2799 = vadd.f32 0.0, %v2798
      %v2800 = vpop.f32.mrb[0].mxu0
      %2801 = vdwg.mxu0
      %2803 = vrot.lane.b32.xlu0 %v2799, 16
      %v2804 = vpop.permute.xlu0 %2803
      %v2806 = vsel %vm954, %v2633, %v2804
      %s2807 = smul.u32 %s2041, 32
      %s2808 = scalar_lea.vmem %s11, %s2807
      %v2809 = vld [vmem:[%s2808] sm:$0xff]
      %v2810 = vld [vmem:[%s2808 + $0x8] sm:$0xff]
      %v2811 = vld [vmem:[%s2808 + $0x10] sm:$0xff]
      %v2812 = vld [vmem:[%s2808 + $0x18] sm:$0xff]
      %s2813 = scalar_lea.vmem %s12, %s2041
      %v2814 = vld [vmem:[%s2813] sm:$0x1]
      %v2816 = vlaneseq
      %v2817 = vshrl.u32 %v2816, 7
      %v2818 = vsub.s32 0, %v2817
      %v2819 = vrot.slane %v2814, %v2818
      %v2822 = vsel %vm1722, %v2470, 0
      %v2825 = vsel %vm1722, %v2806, 0
      %2827 = vmatprep.subr.mxu0 0.0
      %2828 = vmatpush1.msra.mxu0 %v2809
      %2829 = vmatprep.subr.mxu0 0.0
      %2830 = vmatpush1.msra.mxu0 %v2810
      %2831 = vmatprep.subr.mxu0 0.0
      %2832 = vmatpush1.msra.mxu0 %v2811
      %2833 = vmatprep.subr.mxu0 0.0
      %2834 = vmatpush1.msra.mxu0 %v2812
      %2835 = vmatprep.subr.mxu0 0.0
      %2836 = vmatpush1.msra.mxu0 0.0
      %2837 = vmatprep.subr.mxu0 0.0
      %2838 = vmatpush1.msra.mxu0 0.0
      %2839 = vmatprep.subr.mxu0 0.0
      %2840 = vmatpush1.msra.mxu0 0.0
      %2841 = vmatprep.subr.mxu0 0.0
      %2842 = vmatpush1.msra.mxu0 0.0
      %2843 = vmatprep.subr.mxu0 0.0
      %2844 = vmatpush1.msra.mxu0 0.0
      %2845 = vmatprep.subr.mxu0 0.0
      %2846 = vmatpush1.msra.mxu0 0.0
      %2847 = vmatprep.subr.mxu0 0.0
      %2848 = vmatpush1.msra.mxu0 0.0
      %2849 = vmatprep.subr.mxu0 0.0
      %2850 = vmatpush1.msra.mxu0 0.0
      %2851 = vmatprep.subr.mxu0 0.0
      %2852 = vmatpush1.msra.mxu0 0.0
      %2853 = vmatprep.subr.mxu0 0.0
      %2854 = vmatpush1.msra.mxu0 0.0
      %2855 = vmatprep.subr.mxu0 0.0
      %2856 = vmatpush1.msra.mxu0 0.0
      %2857 = vmatprep.subr.mxu0 0.0
      %2858 = vmatpush1.msra.mxu0 0.0
      %2859 = vmatprep.subr.mxu0 0.0
      %2860 = vmatpush1.msra.mxu0 0.0
      %2861 = vmatprep.subr.mxu0 0.0
      %2862 = vmatpush1.msra.mxu0 0.0
      %2863 = vmatprep.subr.mxu0 0.0
      %2864 = vmatpush1.msra.mxu0 0.0
      %2865 = vmatprep.subr.mxu0 0.0
      %2866 = vmatpush1.msra.mxu0 0.0
      %2867 = vmatprep.subr.mxu0 0.0
      %2868 = vmatpush1.msra.mxu0 0.0
      %2869 = vmatprep.subr.mxu0 0.0
      %2870 = vmatpush1.msra.mxu0 0.0
      %2871 = vmatprep.subr.mxu0 0.0
      %2872 = vmatpush1.msra.mxu0 0.0
      %2873 = vmatprep.subr.mxu0 0.0
      %2874 = vmatpush1.msra.mxu0 0.0
      %2875 = vmatprep.subr.mxu0 0.0
      %2876 = vmatpush1.msra.mxu0 0.0
      %2877 = vmatprep.subr.mxu0 0.0
      %2878 = vmatpush1.msra.mxu0 0.0
      %2879 = vmatprep.subr.mxu0 0.0
      %2880 = vmatpush1.msra.mxu0 0.0
      %2881 = vmatprep.subr.mxu0 0.0
      %2882 = vmatpush1.msra.mxu0 0.0
      %2883 = vmatprep.subr.mxu0 0.0
      %2884 = vmatpush1.msra.mxu0 0.0
      %2885 = vmatprep.subr.mxu0 0.0
      %2886 = vmatpush1.msra.mxu0 0.0
      %2887 = vmatprep.subr.mxu0 0.0
      %2888 = vmatpush1.msra.mxu0 0.0
      %2889 = vmatprep.subr.mxu0 0.0
      %2890 = vmatpush1.msra.mxu0 0.0
      %2891 = vmatprep.mubr.f32.mxu0 0.0
      %2892 = vmatmul.mubr.f32.gmra.mrb[0].mxu0 %v2822
      %v2893 = vpop.f32.mrb[0].mxu0
      %v2894 = vadd.f32 %v2819, %v2893
      %v2895 = vpop.f32.mrb[0].mxu0
      %2896 = vmatprep.mubr.f32.mxu0 0.0
      %2897 = vmatmul.mubr.f32.gmra.mrb[0].mxu0 %v2825
      %v2898 = vpop.f32.mrb[0].mxu0
      %v2899 = vadd.f32 %v2819, %v2898
      %v2900 = vpop.f32.mrb[0].mxu0
      %2901 = vdwg.mxu0
      %s2902 = scalar_lea.vmem %s13, %s2042
      %v2903 = vld [vmem:[%s2902] sm:$0xff]
      %v2904 = vld [vmem:[%s2902 + $0x8] sm:$0xff]
      %s2905 = scalar_lea.vmem %s14, %s2041
      %v2906 = vld [vmem:[%s2905] sm:$0x1]
      %v2908 = vlaneseq
      %v2909 = vshrl.u32 %v2908, 7
      %v2910 = vsub.s32 0, %v2909
      %v2911 = vrot.slane %v2906, %v2910
      %v2914 = vsel %vm954, %v2894, 0
      %v2917 = vsel %vm954, %v2899, 0
      %2919 = vmatprep.subr.mxu0 0.0
      %2920 = vmatpush1.msra.mxu0 %v2903
      %2921 = vmatprep.subr.mxu0 0.0
      %2922 = vmatpush1.msra.mxu0 %v2904
      %2923 = vmatprep.subr.mxu0 0.0
      %2924 = vmatpush1.msra.mxu0 0.0
      %2925 = vmatprep.subr.mxu0 0.0
      %2926 = vmatpush1.msra.mxu0 0.0
      %2927 = vmatprep.subr.mxu0 0.0
      %2928 = vmatpush1.msra.mxu0 0.0
      %2929 = vmatprep.subr.mxu0 0.0
      %2930 = vmatpush1.msra.mxu0 0.0
      %2931 = vmatprep.subr.mxu0 0.0
      %2932 = vmatpush1.msra.mxu0 0.0
      %2933 = vmatprep.subr.mxu0 0.0
      %2934 = vmatpush1.msra.mxu0 0.0
      %2935 = vmatprep.subr.mxu0 0.0
      %2936 = vmatpush1.msra.mxu0 0.0
      %2937 = vmatprep.subr.mxu0 0.0
      %2938 = vmatpush1.msra.mxu0 0.0
      %2939 = vmatprep.subr.mxu0 0.0
      %2940 = vmatpush1.msra.mxu0 0.0
      %2941 = vmatprep.subr.mxu0 0.0
      %2942 = vmatpush1.msra.mxu0 0.0
      %2943 = vmatprep.subr.mxu0 0.0
      %2944 = vmatpush1.msra.mxu0 0.0
      %2945 = vmatprep.subr.mxu0 0.0
      %2946 = vmatpush1.msra.mxu0 0.0
      %2947 = vmatprep.subr.mxu0 0.0
      %2948 = vmatpush1.msra.mxu0 0.0
      %2949 = vmatprep.subr.mxu0 0.0
      %2950 = vmatpush1.msra.mxu0 0.0
      %2951 = vmatprep.subr.mxu0 0.0
      %2952 = vmatpush1.msra.mxu0 0.0
      %2953 = vmatprep.subr.mxu0 0.0
      %2954 = vmatpush1.msra.mxu0 0.0
      %2955 = vmatprep.subr.mxu0 0.0
      %2956 = vmatpush1.msra.mxu0 0.0
      %2957 = vmatprep.subr.mxu0 0.0
      %2958 = vmatpush1.msra.mxu0 0.0
      %2959 = vmatprep.subr.mxu0 0.0
      %2960 = vmatpush1.msra.mxu0 0.0
      %2961 = vmatprep.subr.mxu0 0.0
      %2962 = vmatpush1.msra.mxu0 0.0
      %2963 = vmatprep.subr.mxu0 0.0
      %2964 = vmatpush1.msra.mxu0 0.0
      %2965 = vmatprep.subr.mxu0 0.0
      %2966 = vmatpush1.msra.mxu0 0.0
      %2967 = vmatprep.subr.mxu0 0.0
      %2968 = vmatpush1.msra.mxu0 0.0
      %2969 = vmatprep.subr.mxu0 0.0
      %2970 = vmatpush1.msra.mxu0 0.0
      %2971 = vmatprep.subr.mxu0 0.0
      %2972 = vmatpush1.msra.mxu0 0.0
      %2973 = vmatprep.subr.mxu0 0.0
      %2974 = vmatpush1.msra.mxu0 0.0
      %2975 = vmatprep.subr.mxu0 0.0
      %2976 = vmatpush1.msra.mxu0 0.0
      %2977 = vmatprep.subr.mxu0 0.0
      %2978 = vmatpush1.msra.mxu0 0.0
      %2979 = vmatprep.subr.mxu0 0.0
      %2980 = vmatpush1.msra.mxu0 0.0
      %2981 = vmatprep.subr.mxu0 0.0
      %2982 = vmatpush1.msra.mxu0 0.0
      %2983 = vmatprep.mubr.f32.mxu0 0.0
      %2984 = vmatmul.mubr.f32.gmra.mrb[0].mxu0 %v2914
      %v2985 = vpop.f32.mrb[0].mxu0
      %v2986 = vadd.f32 %v2911, %v2985
      %v2987 = vpop.f32.mrb[0].mxu0
      %2988 = vmatprep.mubr.f32.mxu0 0.0
      %2989 = vmatmul.mubr.f32.gmra.mrb[0].mxu0 %v2917
      %v2990 = vpop.f32.mrb[0].mxu0
      %v2991 = vadd.f32 %v2911, %v2990
      %v2992 = vpop.f32.mrb[0].mxu0
      %2993 = vdwg.mxu0
      %v2994 = vmax.f32 %v2986, 0.0
      %v2995 = vmax.f32 %v2991, 0.0
      %s2996 = scalar_lea.vmem %s15, %s2807
      %v2997 = vld [vmem:[%s2996] sm:$0xff]
      %v2998 = vld [vmem:[%s2996 + $0x8] sm:$0xff]
      %v2999 = vld [vmem:[%s2996 + $0x10] sm:$0xff]
      %v3000 = vld [vmem:[%s2996 + $0x18] sm:$0xff]
      %s3001 = scalar_lea.vmem %s16, %s2041
      %v3002 = vld [vmem:[%s3001] sm:$0x1]
      %v3004 = vlaneseq
      %v3005 = vshrl.u32 %v3004, 7
      %v3006 = vsub.s32 0, %v3005
      %v3007 = vrot.slane %v3002, %v3006
      %v3010 = vsel %vm1722, %v2994, 0
      %v3013 = vsel %vm1722, %v2995, 0
      %3015 = vmatprep.subr.mxu0 0.0
      %3016 = vmatpush1.msra.mxu0 %v2997
      %3017 = vmatprep.subr.mxu0 0.0
      %3018 = vmatpush1.msra.mxu0 %v2998
      %3019 = vmatprep.subr.mxu0 0.0
      %3020 = vmatpush1.msra.mxu0 %v2999
      %3021 = vmatprep.subr.mxu0 0.0
      %3022 = vmatpush1.msra.mxu0 %v3000
      %3023 = vmatprep.subr.mxu0 0.0
      %3024 = vmatpush1.msra.mxu0 0.0
      %3025 = vmatprep.subr.mxu0 0.0
      %3026 = vmatpush1.msra.mxu0 0.0
      %3027 = vmatprep.subr.mxu0 0.0
      %3028 = vmatpush1.msra.mxu0 0.0
      %3029 = vmatprep.subr.mxu0 0.0
      %3030 = vmatpush1.msra.mxu0 0.0
      %3031 = vmatprep.subr.mxu0 0.0
      %3032 = vmatpush1.msra.mxu0 0.0
      %3033 = vmatprep.subr.mxu0 0.0
      %3034 = vmatpush1.msra.mxu0 0.0
      %3035 = vmatprep.subr.mxu0 0.0
      %3036 = vmatpush1.msra.mxu0 0.0
      %3037 = vmatprep.subr.mxu0 0.0
      %3038 = vmatpush1.msra.mxu0 0.0
      %3039 = vmatprep.subr.mxu0 0.0
      %3040 = vmatpush1.msra.mxu0 0.0
      %3041 = vmatprep.subr.mxu0 0.0
      %3042 = vmatpush1.msra.mxu0 0.0
      %3043 = vmatprep.subr.mxu0 0.0
      %3044 = vmatpush1.msra.mxu0 0.0
      %3045 = vmatprep.subr.mxu0 0.0
      %3046 = vmatpush1.msra.mxu0 0.0
      %3047 = vmatprep.subr.mxu0 0.0
      %3048 = vmatpush1.msra.mxu0 0.0
      %3049 = vmatprep.subr.mxu0 0.0
      %3050 = vmatpush1.msra.mxu0 0.0
      %3051 = vmatprep.subr.mxu0 0.0
      %3052 = vmatpush1.msra.mxu0 0.0
      %3053 = vmatprep.subr.mxu0 0.0
      %3054 = vmatpush1.msra.mxu0 0.0
      %3055 = vmatprep.subr.mxu0 0.0
      %3056 = vmatpush1.msra.mxu0 0.0
      %3057 = vmatprep.subr.mxu0 0.0
      %3058 = vmatpush1.msra.mxu0 0.0
      %3059 = vmatprep.subr.mxu0 0.0
      %3060 = vmatpush1.msra.mxu0 0.0
      %3061 = vmatprep.subr.mxu0 0.0
      %3062 = vmatpush1.msra.mxu0 0.0
      %3063 = vmatprep.subr.mxu0 0.0
      %3064 = vmatpush1.msra.mxu0 0.0
      %3065 = vmatprep.subr.mxu0 0.0
      %3066 = vmatpush1.msra.mxu0 0.0
      %3067 = vmatprep.subr.mxu0 0.0
      %3068 = vmatpush1.msra.mxu0 0.0
      %3069 = vmatprep.subr.mxu0 0.0
      %3070 = vmatpush1.msra.mxu0 0.0
      %3071 = vmatprep.subr.mxu0 0.0
      %3072 = vmatpush1.msra.mxu0 0.0
      %3073 = vmatprep.subr.mxu0 0.0
      %3074 = vmatpush1.msra.mxu0 0.0
      %3075 = vmatprep.subr.mxu0 0.0
      %3076 = vmatpush1.msra.mxu0 0.0
      %3077 = vmatprep.subr.mxu0 0.0
      %3078 = vmatpush1.msra.mxu0 0.0
      %3079 = vmatprep.mubr.f32.mxu0 0.0
      %3080 = vmatmul.mubr.f32.gmra.mrb[0].mxu0 %v3010
      %v3081 = vpop.f32.mrb[0].mxu0
      %v3082 = vadd.f32 %v3007, %v3081
      %v3083 = vpop.f32.mrb[0].mxu0
      %3084 = vmatprep.mubr.f32.mxu0 0.0
      %3085 = vmatmul.mubr.f32.gmra.mrb[0].mxu0 %v3013
      %v3086 = vpop.f32.mrb[0].mxu0
      %v3087 = vadd.f32 %v3007, %v3086
      %v3088 = vpop.f32.mrb[0].mxu0
      %3089 = vdwg.mxu0
      %v3090 = vadd.f32 %v2039, %v3082
      %v3091 = vadd.f32 %v2040, %v3087
      %v3092 = vsel %vm954, %v3090, 0.0
      %3093 = vadd.xlane.f32.xlu0 %v3092
      %v3094 = vpop.xlane.xlu0 %3093
      %v3095 = vsel %vm954, %v3091, 0.0
      %3096 = vadd.xlane.f32.xlu0 %v3095
      %v3097 = vpop.xlane.xlu0 %3096
      %v3098 = vmul.f32 %v3094, %v2000
      %v3099 = vmul.f32 %v3097, %v2000
      %v3100 = vsub.f32 %v3090, %v3098
      %v3101 = vsub.f32 %v3091, %v3099
      %v3102 = vmul.f32 %v3100, %v3100
      %v3103 = vmul.f32 %v3101, %v3101
      %v3104 = vsel %vm954, %v3102, 0.0
      %3105 = vadd.xlane.f32.xlu0 %v3104
      %v3106 = vpop.xlane.xlu0 %3105
      %v3107 = vsel %vm954, %v3103, 0.0
      %3108 = vadd.xlane.f32.xlu0 %v3107
      %v3109 = vpop.xlane.xlu0 %3108
      %v3110 = vmul.f32 %v3106, %v2000
      %v3111 = vmul.f32 %v3109, %v2000
      %v3112 = vadd.f32 %v3110, 1e-05
      %v3113 = vadd.f32 %v3111, 1e-05
      %v3114 = vrsqrt.pop %v3112
      %v3115 = vrsqrt.pop %v3113
      %v3116 = vmul.f32 %v3100, %v3114
      %v3117 = vmul.f32 %v3101, %v3115
      %s3118 = scalar_lea.vmem %s17, %s2041
      %v3119 = vld [vmem:[%s3118] sm:$0x1]
      %v3121 = vlaneseq
      %v3122 = vshrl.u32 %v3121, 7
      %v3123 = vsub.s32 0, %v3122
      %v3124 = vrot.slane %v3119, %v3123
      %v3126 = vmul.f32 %v3116, %v3124
      %v3127 = vmul.f32 %v3117, %v3124
      %s3128 = scalar_lea.vmem %s18, %s2041
      %v3129 = vld [vmem:[%s3128] sm:$0x1]
      %v3131 = vlaneseq
      %v3132 = vshrl.u32 %v3131, 7
      %v3133 = vsub.s32 0, %v3132
      %v3134 = vrot.slane %v3129, %v3133
      %v3136 = vadd.f32 %v3126, %v3134
      %v3137 = vadd.f32 %v3127, %v3134
      %v3138 = vsel %vm954, %v3136, 0.0
      %v3139 = vrot.slane %v3138, 4
      %v3140 = vadd.f32 %v3138, %v3139
      %v3141 = vrot.slane %v3140, 2
      %v3142 = vadd.f32 %v3140, %v3141
      %v3143 = vrot.slane %v3142, 1
      %v3144 = vadd.f32 %v3142, %v3143
      %v3145 = vrcp.pop 8.0
      %v3146 = vmul.f32 %v3144, %v3145
      %v3147 = vsel %vm954, %v3137, 0.0
      %v3148 = vrot.slane %v3147, 4
      %v3149 = vadd.f32 %v3147, %v3148
      %v3150 = vrot.slane %v3149, 2
      %v3151 = vadd.f32 %v3149, %v3150
      %v3152 = vrot.slane %v3151, 1
      %v3153 = vadd.f32 %v3151, %v3152
      %v3154 = vmul.f32 %v3153, %v3145
      %vm3155 = vcmask 1040384
      %v3156 = vsel %vm3155, %v3146, %v3154
      %vm3157 = vcmask 123904
      %3158 = vst.msk [vmem:[%s600] sm:$0x3] %vm3157, %v3156
      %p3159 = scmp.lt.s32.totalorder %s30, 8
      %s3160 = scalar_select %p3159, %s30, 8
      %s3161 = smul.addr %s3160, 2
      %s3162 = scalar_lea.vmem %s19, %s3161
      // Predicated region
      $region97: #{forward.4} parent=95 // pred_check
        %p3163 = pneg %p452
      $region98: #{forward.4} parent=95 // pred_check_branch
        %3165 = sbr.rel (%p3163) target = $region100
      $region99: #{forward.4} parent=95 // pred_region
        _
      $region100: #{forward.4} parent=95 // pred_fallthru
        _
    $region96: #{forward.4} parent=5 // pred_fallthru
      _
    %p3166 = scmp.le.s32.totalorder 2, %s25
    // Predicated region
    $region101: #{forward.4} parent=5 // pred_check
      %p3167 = pneg %p3166
    $region102: #{forward.4} parent=5 // pred_check_branch
      %3169 = sbr.rel (%p3167) target = $region104
    $region103: #{forward.4} parent=5 // pred_region
      %s3170 = ssub.s32 %s25, 2
      // Predicated region
      $region105: #{forward.4} parent=103 // pred_check
        %p3171 = pneg %p458
      $region106: #{forward.4} parent=103 // pred_check_branch
        %3173 = sbr.rel (%p3171) target = $region108
      $region107: #{forward.4} parent=103 // pred_region
        %p3174 = scmp.lt.s32.totalorder %s31, 8
        %s3175 = scalar_select %p3174, %s31, 8
        %s3176 = smul.addr %s3175, 2
        %s3177 = scalar_lea.vmem %s19, %s3176
      $region108: #{forward.4} parent=103 // pred_fallthru
        _
    $region104: #{forward.4} parent=5 // pred_fallthru
      _
  $region6: #{forward.4} parent=0 // loop_footer
    %s29 = sadd.s32 1, %s25
  $region7: #{forward.4} parent=0 // loop_footer_branch
    %24 = sbr.rel target = $region3
  $region8: #{forward.4} parent=0 // loop_exit
    _

</llo_original>
